<compile_context>
chip_gen: v7x
topology: tpu7x:2x2x1
jax: 0.10.0
libtpu: 0.0.40
codegen_flags: <defaults>
</compile_context>

<pallas_src>
import jax
import jax.numpy as jnp
import numpy as np
from jax.experimental import pallas as pl
from jax.experimental.pallas import tpu as pltpu


# ------------------------------ Pallas kernel -------------------------------

def _net_kernel(x_ref, w1_ref, b1_ref, w2_ref, b2_ref,
                fc1w_ref, fc1b_ref, fc2w_ref, fc2b_ref,
                o_ref, y1_s, y2_s):
    """One image per grid step.  x_ref: [1,28,32] f32, rows in (h mod 4)-major
    order, width zero-padded to 32.  w1_ref: [5,32,768] bf16 (Toeplitz, columns
    ordered (pj1, pw1, oc)).  w2_ref: [5,384,512] bf16 (block-Toeplitz, rows
    (pw1, ic), columns (pj2, pw2, oc2)).  fc1w_ref: [1024,512] bf16 (rows
    (ph2, pw2, oc2), PyTorch flatten order folded in).  fc2w_ref: [512,128]."""

    # ---- conv1 (5x5, 1->20ch) + bias + ReLU + 2x2 max-pool ------------------
    # Output rows are produced in ph1-parity order (s, q1) so that conv2's
    # pooled window reads below are contiguous slices.
    for s in range(2):                       # parity of pooled output row ph1
        acc = [None, None]
        for pi in range(2):                  # pool offset along rows
            for ki in range(5):              # kernel tap along rows
                a = 2 * s + pi + ki          # image row offset, 0..7
                r0 = (a % 4) * 7 + a // 4    # start row in mod-4-ordered image
                lhs = x_ref[0, r0:r0 + 6, :].astype(jnp.bfloat16)      # [6, 32]
                part = jnp.dot(lhs, w1_ref[ki],
                               preferred_element_type=jnp.float32)     # [6, 768]
                acc[pi] = part if acc[pi] is None else acc[pi] + part
        t = jnp.maximum(acc[0], acc[1]) + b1_ref[...]   # pool over row offset
        t = jnp.maximum(t, 0.0)                         # ReLU
        # pool over column offset: columns are (pj1, pw1, oc); the two halves
        # are vreg aligned (384 = 3*128) so this is a lane-dense max.
        y1_s[s] = jnp.maximum(t[:, :384], t[:, 384:]).astype(jnp.bfloat16)

    # ---- conv2 (5x5, 20->50ch) + bias + ReLU + 2x2 max-pool ------------------
    acc = [None, None]
    for pi in range(2):                      # pool offset along rows
        for ki in range(5):                  # kernel tap along rows
            a = pi + ki                      # y1 row offset, 0..5
            lhs = y1_s[a % 2, (a // 2):(a // 2) + 4, :]                # [4, 384]
            part = jnp.dot(lhs, w2_ref[ki],
                           preferred_element_type=jnp.float32)         # [4, 512]
            acc[pi] = part if acc[pi] is None else acc[pi] + part
    t = jnp.maximum(acc[0], acc[1]) + b2_ref[...]
    t = jnp.maximum(t, 0.0)
    y2_s[...] = jnp.maximum(t[:, :256], t[:, 256:]).astype(jnp.bfloat16)  # [4,256]

    # ---- fc1 + ReLU (flatten order folded into the weight row order) --------
    h = None
    for r in range(4):                       # r = pooled output row ph2
        part = jnp.dot(y2_s[r:r + 1, :], fc1w_ref[r * 256:(r + 1) * 256, :],
                       preferred_element_type=jnp.float32)              # [1, 512]
        h = part if h is None else h + part
    h = jnp.maximum(h + fc1b_ref[...], 0.0)

    # ---- fc2 + log_softmax (padded logit lanes masked) -----------------------
    logits = jnp.dot(h.astype(jnp.bfloat16), fc2w_ref[...],
                     preferred_element_type=jnp.float32) + fc2b_ref[...]  # [1,128]
    col = jax.lax.broadcasted_iota(jnp.int32, logits.shape, 1)
    logits = jnp.where(col < 10, logits, jnp.float32(-1e30))
    m = jnp.max(logits, axis=-1, keepdims=True)
    sh = logits - m
    lse = jnp.log(jnp.sum(jnp.exp(sh), axis=-1, keepdims=True))
    o_ref[0] = sh - lse


# --------------------------- weight preparation ------------------------------

def prepare_params(p):
    """One-time transform of PyTorch-convention params into the block-Toeplitz,
    lane-dense, bf16 layout consumed by the fused kernel."""
    w1 = np.asarray(p["conv1_w"], np.float32)   # [20, 1, 5, 5]
    b1 = np.asarray(p["conv1_b"], np.float32)   # [20]
    w2 = np.asarray(p["conv2_w"], np.float32)   # [50, 20, 5, 5]
    b2 = np.asarray(p["conv2_b"], np.float32)   # [50]
    f1 = np.asarray(p["fc1_w"], np.float32)     # [800, 500]  (in, out)
    f1b = np.asarray(p["fc1_b"], np.float32)    # [500]
    f2 = np.asarray(p["fc2_w"], np.float32)     # [500, 10]   (in, out)
    f2b = np.asarray(p["fc2_b"], np.float32)    # [10]

    # conv1: bigw1[ki, wi, pj1*384 + pw1*32 + oc] = w1[oc, 0, ki, wi-(2*pw1+pj1)]
    bigw1 = np.zeros((5, 32, 768), np.float32)
    for ki in range(5):
        for pj1 in range(2):
            for pw1 in range(12):
                for kj in range(5):
                    wi = 2 * pw1 + pj1 + kj
                    c0 = pj1 * 384 + pw1 * 32
                    bigw1[ki, wi, c0:c0 + 20] = w1[:, 0, ki, kj]
    b1row = np.tile(np.pad(b1, (0, 12)), 24).reshape(1, 768)

    # conv2: bigw2[ki2, pw1*32+ic, pj2*256+pw2*64+oc2] = w2[oc2, ic, ki2, pw1-(2*pw2+pj2)]
    bigw2 = np.zeros((5, 384, 512), np.float32)
    for ki2 in range(5):
        for pj2 in range(2):
            for pw2 in range(4):
                for kj2 in range(5):
                    pw1 = 2 * pw2 + pj2 + kj2
                    r0 = pw1 * 32
                    c0 = pj2 * 256 + pw2 * 64
                    bigw2[ki2, r0:r0 + 20, c0:c0 + 50] = w2[:, :, ki2, kj2].T
    b2row = np.tile(np.pad(b2, (0, 14)), 8).reshape(1, 512)

    # fc1: PyTorch flatten index c*16 + h*4 + w  ->  kernel row ph2*256 + pw2*64 + oc2
    fc1p = np.zeros((1024, 512), np.float32)
    for c in range(50):
        for h in range(4):
            for w in range(4):
                fc1p[(h * 4 + w) * 64 + c, :500] = f1[c * 16 + h * 4 + w]
    fc1b = np.zeros((1, 512), np.float32)
    fc1b[0, :500] = f1b

    fc2p = np.zeros((512, 128), np.float32)
    fc2p[:500, :10] = f2
    fc2b = np.zeros((1, 128), np.float32)
    fc2b[0, :10] = f2b

    bf = jnp.bfloat16
    return dict(
        bigw1=jnp.asarray(bigw1, bf), b1=jnp.asarray(b1row),
        bigw2=jnp.asarray(bigw2, bf), b2=jnp.asarray(b2row),
        fc1w=jnp.asarray(fc1p, bf), fc1b=jnp.asarray(fc1b),
        fc2w=jnp.asarray(fc2p, bf), fc2b=jnp.asarray(fc2b),
    )


# ------------------------------- forward -------------------------------------

def net_forward(prepared, x):
    # x: [B, 1, 28, 28] f32 (PyTorch NCHW convention; single input channel).
    B = x.shape[0]
    # Tiny XLA-side prep (3 ops on a 6 KB tensor): drop the channel dim, reorder
    # rows to (h mod 4)-major order (enables stride-free window reads in-kernel)
    # and zero-pad the width to 32 lanes.  The f32->bf16 cast happens in-kernel.
    xi = x.reshape(B, 28, 28)
    xi = xi.reshape(B, 7, 4, 28).transpose(0, 2, 1, 3).reshape(B, 28, 28)
    xi = jnp.pad(xi, ((0, 0), (0, 0), (0, 4)))                    # [B, 28, 32]

    out = pl.pallas_call(
        _net_kernel,
        out_shape=jax.ShapeDtypeStruct((B, 1, 128), jnp.float32),
        grid=(B,),
        in_specs=[
            pl.BlockSpec((1, 28, 32), lambda b: (b, 0, 0)),       # image
            pl.BlockSpec((5, 32, 768), lambda b: (0, 0, 0)),      # conv1 Toeplitz
            pl.BlockSpec((1, 768), lambda b: (0, 0)),             # conv1 bias
            pl.BlockSpec((5, 384, 512), lambda b: (0, 0, 0)),     # conv2 Toeplitz
            pl.BlockSpec((1, 512), lambda b: (0, 0)),             # conv2 bias
            pl.BlockSpec((1024, 512), lambda b: (0, 0)),          # fc1 weight
            pl.BlockSpec((1, 512), lambda b: (0, 0)),             # fc1 bias
            pl.BlockSpec((512, 128), lambda b: (0, 0)),           # fc2 weight
            pl.BlockSpec((1, 128), lambda b: (0, 0)),             # fc2 bias
        ],
        out_specs=pl.BlockSpec((1, 1, 128), lambda b: (b, 0, 0)),
        scratch_shapes=[
            pltpu.VMEM((2, 6, 384), jnp.bfloat16),   # conv1 output, parity rows
            pltpu.VMEM((4, 256), jnp.bfloat16),      # conv2 output
        ],
        compiler_params=pltpu.CompilerParams(
            dimension_semantics=("parallel",),        # v7x: 2 TCs split the batch
            vmem_limit_bytes=32 * 1024 * 1024,
        ),
    )(xi, prepared["bigw1"], prepared["b1"], prepared["bigw2"], prepared["b2"],
      prepared["fc1w"], prepared["fc1b"], prepared["fc2w"], prepared["fc2b"])
    # NOTE: raw kernel output has 118 padded (masked) logit lanes; slice them off.
    return out.reshape(B, 128)[:, :10]


# ------------------------- pure-JAX f32 reference ----------------------------

def net_reference(p, x):
    hi = jax.lax.Precision.HIGHEST
    B = x.shape[0]
    y = jax.lax.conv_general_dilated(
        x, p["conv1_w"], (1, 1), "VALID",
        dimension_numbers=("NCHW", "OIHW", "NCHW"), precision=hi)
    y = jax.nn.relu(y + p["conv1_b"][None, :, None, None])
    y = y.reshape(B, 20, 12, 2, 12, 2).max(axis=(3, 5))
    y = jax.lax.conv_general_dilated(
        y, p["conv2_w"], (1, 1), "VALID",
        dimension_numbers=("NCHW", "OIHW", "NCHW"), precision=hi)
    y = jax.nn.relu(y + p["conv2_b"][None, :, None, None])
    y = y.reshape(B, 50, 4, 2, 4, 2).max(axis=(3, 5))
    y = y.reshape(B, 800)
    y = jax.nn.relu(jnp.dot(y, p["fc1_w"], precision=hi) + p["fc1_b"])
    y = jnp.dot(y, p["fc2_w"], precision=hi) + p["fc2_b"]
    return jax.nn.log_softmax(y, axis=-1)


# --------------------------------- main ---------------------------------------

if __name__ == "__main__":
    key = jax.random.PRNGKey(0)
    keys = jax.random.split(key, 9)
    # Deterministic synthetic parameters (shapes from Net.__init__).
    # Linear weights stored as [in, out] since we compute x @ W.
    params = {
        "conv1_w": 0.10 * jax.random.normal(keys[0], (20, 1, 5, 5), jnp.float32),
        "conv1_b": 0.10 * jax.random.normal(keys[1], (20,), jnp.float32),
        "conv2_w": 0.05 * jax.random.normal(keys[2], (50, 20, 5, 5), jnp.float32),
        "conv2_b": 0.05 * jax.random.normal(keys[3], (50,), jnp.float32),
        "fc1_w":   0.03 * jax.random.normal(keys[4], (800, 500), jnp.float32),
        "fc1_b":   0.03 * jax.random.normal(keys[5], (500,), jnp.float32),
        "fc2_w":   0.05 * jax.random.normal(keys[6], (500, 10), jnp.float32),
        "fc2_b":   0.05 * jax.random.normal(keys[7], (10,), jnp.float32),
    }
    x = jax.random.normal(keys[8], (2, 1, 28, 28), jnp.float32)

    prepared = prepare_params(params)                 # one-time weight prep
    out = jax.jit(net_forward)(prepared, x)
    out = jax.block_until_ready(out)
    assert out.shape == (2, 10)

    # sanity: log_softmax rows sum to ~1 in prob space
    assert bool(jnp.allclose(jnp.sum(jnp.exp(out), axis=1), 1.0, atol=1e-3))
    # correctness vs. pure-JAX f32 reference (kernel uses bf16 matmul operands)
    ref = net_reference(params, x)
    err = float(jnp.max(jnp.abs(out - ref)))
    assert err < 0.15, f"max |out - ref| = {err}"
    print("KERNEL_OK")
</pallas_src>

<mosaic_0001>
module attributes {stable_mosaic.version = 11 : i64} {
  func.func @_net_kernel(%arg0: i32, %arg1: memref<1x28x32xf32, #tpu.memory_space<vmem>>, %arg2: memref<5x32x768xbf16, #tpu.memory_space<vmem>>, %arg3: memref<1x768xf32, #tpu.memory_space<vmem>>, %arg4: memref<5x384x512xbf16, #tpu.memory_space<vmem>>, %arg5: memref<1x512xf32, #tpu.memory_space<vmem>>, %arg6: memref<1024x512xbf16, #tpu.memory_space<vmem>>, %arg7: memref<1x512xf32, #tpu.memory_space<vmem>>, %arg8: memref<512x128xbf16, #tpu.memory_space<vmem>>, %arg9: memref<1x128xf32, #tpu.memory_space<vmem>>, %arg10: memref<1x1x128xf32, #tpu.memory_space<vmem>>, %arg11: memref<2x6x384xbf16, #tpu.memory_space<vmem>>, %arg12: memref<4x256xbf16, #tpu.memory_space<vmem>>) attributes {dimension_semantics = [#tpu.dimension_semantics<parallel>], iteration_bounds = array<i64: 2>, scalar_prefetch = 0 : i64, scratch_operands = 2 : i64, tpu.core_type = #tpu.core_type<tc>, window_params = [{transform_indices = @transform_0, window_bounds = array<i64: 1, 28, 32>}, {pipeline_mode = #tpu.pipeline_mode<synchronous>, transform_indices = @transform_1, window_bounds = array<i64: 5, 32, 768>}, {pipeline_mode = #tpu.pipeline_mode<synchronous>, transform_indices = @transform_2, window_bounds = array<i64: 1, 768>}, {pipeline_mode = #tpu.pipeline_mode<synchronous>, transform_indices = @transform_3, window_bounds = array<i64: 5, 384, 512>}, {pipeline_mode = #tpu.pipeline_mode<synchronous>, transform_indices = @transform_4, window_bounds = array<i64: 1, 512>}, {pipeline_mode = #tpu.pipeline_mode<synchronous>, transform_indices = @transform_5, window_bounds = array<i64: 1024, 512>}, {pipeline_mode = #tpu.pipeline_mode<synchronous>, transform_indices = @transform_6, window_bounds = array<i64: 1, 512>}, {pipeline_mode = #tpu.pipeline_mode<synchronous>, transform_indices = @transform_7, window_bounds = array<i64: 512, 128>}, {pipeline_mode = #tpu.pipeline_mode<synchronous>, transform_indices = @transform_8, window_bounds = array<i64: 1, 128>}, {transform_indices = @transform_9, window_bounds = array<i64: 1, 1, 128>}]} {
    %c0 = arith.constant 0 : index
    %c0_0 = arith.constant 0 : index
    %c0_1 = arith.constant 0 : index
    %0 = vector.load %arg1[%c0, %c0_0, %c0_1] : memref<1x28x32xf32, #tpu.memory_space<vmem>>, vector<1x6x32xf32>
    %1 = vector.shape_cast %0 : vector<1x6x32xf32> to vector<6x32xf32>
    %2 = arith.truncf %1 : vector<6x32xf32> to vector<6x32xbf16>
    %c0_2 = arith.constant 0 : index
    %c0_3 = arith.constant 0 : index
    %c0_4 = arith.constant 0 : index
    %3 = vector.load %arg2[%c0_2, %c0_3, %c0_4] : memref<5x32x768xbf16, #tpu.memory_space<vmem>>, vector<1x32x768xbf16>
    %4 = vector.shape_cast %3 : vector<1x32x768xbf16> to vector<32x768xbf16>
    %cst = arith.constant dense<0.000000e+00> : vector<6x768xf32>
    %5 = tpu.matmul %2, %4, %cst {dimension_numbers = #tpu.dot_dimension_numbers<[1], [0], [0], [1], [0, 0, 1, 1], [], []>} : vector<6x32xbf16>, vector<32x768xbf16>, vector<6x768xf32> -> vector<6x768xf32>
    %c0_5 = arith.constant 0 : index
    %c7 = arith.constant 7 : index
    %c0_6 = arith.constant 0 : index
    %6 = vector.load %arg1[%c0_5, %c7, %c0_6] : memref<1x28x32xf32, #tpu.memory_space<vmem>>, vector<1x6x32xf32>
    %7 = vector.shape_cast %6 : vector<1x6x32xf32> to vector<6x32xf32>
    %8 = arith.truncf %7 : vector<6x32xf32> to vector<6x32xbf16>
    %c1 = arith.constant 1 : index
    %c0_7 = arith.constant 0 : index
    %c0_8 = arith.constant 0 : index
    %9 = vector.load %arg2[%c1, %c0_7, %c0_8] : memref<5x32x768xbf16, #tpu.memory_space<vmem>>, vector<1x32x768xbf16>
    %10 = vector.shape_cast %9 : vector<1x32x768xbf16> to vector<32x768xbf16>
    %cst_9 = arith.constant dense<0.000000e+00> : vector<6x768xf32>
    %11 = tpu.matmul %8, %10, %cst_9 {dimension_numbers = #tpu.dot_dimension_numbers<[1], [0], [0], [1], [0, 0, 1, 1], [], []>} : vector<6x32xbf16>, vector<32x768xbf16>, vector<6x768xf32> -> vector<6x768xf32>
    %12 = arith.addf %5, %11 : vector<6x768xf32>
    %c0_10 = arith.constant 0 : index
    %c14 = arith.constant 14 : index
    %c0_11 = arith.constant 0 : index
    %13 = vector.load %arg1[%c0_10, %c14, %c0_11] : memref<1x28x32xf32, #tpu.memory_space<vmem>>, vector<1x6x32xf32>
    %14 = vector.shape_cast %13 : vector<1x6x32xf32> to vector<6x32xf32>
    %15 = arith.truncf %14 : vector<6x32xf32> to vector<6x32xbf16>
    %c2 = arith.constant 2 : index
    %c0_12 = arith.constant 0 : index
    %c0_13 = arith.constant 0 : index
    %16 = vector.load %arg2[%c2, %c0_12, %c0_13] : memref<5x32x768xbf16, #tpu.memory_space<vmem>>, vector<1x32x768xbf16>
    %17 = vector.shape_cast %16 : vector<1x32x768xbf16> to vector<32x768xbf16>
    %cst_14 = arith.constant dense<0.000000e+00> : vector<6x768xf32>
    %18 = tpu.matmul %15, %17, %cst_14 {dimension_numbers = #tpu.dot_dimension_numbers<[1], [0], [0], [1], [0, 0, 1, 1], [], []>} : vector<6x32xbf16>, vector<32x768xbf16>, vector<6x768xf32> -> vector<6x768xf32>
    %19 = arith.addf %12, %18 : vector<6x768xf32>
    %c0_15 = arith.constant 0 : index
    %c21 = arith.constant 21 : index
    %c0_16 = arith.constant 0 : index
    %20 = vector.load %arg1[%c0_15, %c21, %c0_16] : memref<1x28x32xf32, #tpu.memory_space<vmem>>, vector<1x6x32xf32>
    %21 = vector.shape_cast %20 : vector<1x6x32xf32> to vector<6x32xf32>
    %22 = arith.truncf %21 : vector<6x32xf32> to vector<6x32xbf16>
    %c3 = arith.constant 3 : index
    %c0_17 = arith.constant 0 : index
    %c0_18 = arith.constant 0 : index
    %23 = vector.load %arg2[%c3, %c0_17, %c0_18] : memref<5x32x768xbf16, #tpu.memory_space<vmem>>, vector<1x32x768xbf16>
    %24 = vector.shape_cast %23 : vector<1x32x768xbf16> to vector<32x768xbf16>
    %cst_19 = arith.constant dense<0.000000e+00> : vector<6x768xf32>
    %25 = tpu.matmul %22, %24, %cst_19 {dimension_numbers = #tpu.dot_dimension_numbers<[1], [0], [0], [1], [0, 0, 1, 1], [], []>} : vector<6x32xbf16>, vector<32x768xbf16>, vector<6x768xf32> -> vector<6x768xf32>
    %26 = arith.addf %19, %25 : vector<6x768xf32>
    %c0_20 = arith.constant 0 : index
    %c1_21 = arith.constant 1 : index
    %c0_22 = arith.constant 0 : index
    %27 = vector.load %arg1[%c0_20, %c1_21, %c0_22] : memref<1x28x32xf32, #tpu.memory_space<vmem>>, vector<1x6x32xf32>
    %28 = vector.shape_cast %27 : vector<1x6x32xf32> to vector<6x32xf32>
    %29 = arith.truncf %28 : vector<6x32xf32> to vector<6x32xbf16>
    %c4 = arith.constant 4 : index
    %c0_23 = arith.constant 0 : index
    %c0_24 = arith.constant 0 : index
    %30 = vector.load %arg2[%c4, %c0_23, %c0_24] : memref<5x32x768xbf16, #tpu.memory_space<vmem>>, vector<1x32x768xbf16>
    %31 = vector.shape_cast %30 : vector<1x32x768xbf16> to vector<32x768xbf16>
    %cst_25 = arith.constant dense<0.000000e+00> : vector<6x768xf32>
    %32 = tpu.matmul %29, %31, %cst_25 {dimension_numbers = #tpu.dot_dimension_numbers<[1], [0], [0], [1], [0, 0, 1, 1], [], []>} : vector<6x32xbf16>, vector<32x768xbf16>, vector<6x768xf32> -> vector<6x768xf32>
    %33 = arith.addf %26, %32 : vector<6x768xf32>
    %c0_26 = arith.constant 0 : index
    %c7_27 = arith.constant 7 : index
    %c0_28 = arith.constant 0 : index
    %34 = vector.load %arg1[%c0_26, %c7_27, %c0_28] : memref<1x28x32xf32, #tpu.memory_space<vmem>>, vector<1x6x32xf32>
    %35 = vector.shape_cast %34 : vector<1x6x32xf32> to vector<6x32xf32>
    %36 = arith.truncf %35 : vector<6x32xf32> to vector<6x32xbf16>
    %c0_29 = arith.constant 0 : index
    %c0_30 = arith.constant 0 : index
    %c0_31 = arith.constant 0 : index
    %37 = vector.load %arg2[%c0_29, %c0_30, %c0_31] : memref<5x32x768xbf16, #tpu.memory_space<vmem>>, vector<1x32x768xbf16>
    %38 = vector.shape_cast %37 : vector<1x32x768xbf16> to vector<32x768xbf16>
    %cst_32 = arith.constant dense<0.000000e+00> : vector<6x768xf32>
    %39 = tpu.matmul %36, %38, %cst_32 {dimension_numbers = #tpu.dot_dimension_numbers<[1], [0], [0], [1], [0, 0, 1, 1], [], []>} : vector<6x32xbf16>, vector<32x768xbf16>, vector<6x768xf32> -> vector<6x768xf32>
    %c0_33 = arith.constant 0 : index
    %c14_34 = arith.constant 14 : index
    %c0_35 = arith.constant 0 : index
    %40 = vector.load %arg1[%c0_33, %c14_34, %c0_35] : memref<1x28x32xf32, #tpu.memory_space<vmem>>, vector<1x6x32xf32>
    %41 = vector.shape_cast %40 : vector<1x6x32xf32> to vector<6x32xf32>
    %42 = arith.truncf %41 : vector<6x32xf32> to vector<6x32xbf16>
    %c1_36 = arith.constant 1 : index
    %c0_37 = arith.constant 0 : index
    %c0_38 = arith.constant 0 : index
    %43 = vector.load %arg2[%c1_36, %c0_37, %c0_38] : memref<5x32x768xbf16, #tpu.memory_space<vmem>>, vector<1x32x768xbf16>
    %44 = vector.shape_cast %43 : vector<1x32x768xbf16> to vector<32x768xbf16>
    %cst_39 = arith.constant dense<0.000000e+00> : vector<6x768xf32>
    %45 = tpu.matmul %42, %44, %cst_39 {dimension_numbers = #tpu.dot_dimension_numbers<[1], [0], [0], [1], [0, 0, 1, 1], [], []>} : vector<6x32xbf16>, vector<32x768xbf16>, vector<6x768xf32> -> vector<6x768xf32>
    %46 = arith.addf %39, %45 : vector<6x768xf32>
    %c0_40 = arith.constant 0 : index
    %c21_41 = arith.constant 21 : index
    %c0_42 = arith.constant 0 : index
    %47 = vector.load %arg1[%c0_40, %c21_41, %c0_42] : memref<1x28x32xf32, #tpu.memory_space<vmem>>, vector<1x6x32xf32>
    %48 = vector.shape_cast %47 : vector<1x6x32xf32> to vector<6x32xf32>
    %49 = arith.truncf %48 : vector<6x32xf32> to vector<6x32xbf16>
    %c2_43 = arith.constant 2 : index
    %c0_44 = arith.constant 0 : index
    %c0_45 = arith.constant 0 : index
    %50 = vector.load %arg2[%c2_43, %c0_44, %c0_45] : memref<5x32x768xbf16, #tpu.memory_space<vmem>>, vector<1x32x768xbf16>
    %51 = vector.shape_cast %50 : vector<1x32x768xbf16> to vector<32x768xbf16>
    %cst_46 = arith.constant dense<0.000000e+00> : vector<6x768xf32>
    %52 = tpu.matmul %49, %51, %cst_46 {dimension_numbers = #tpu.dot_dimension_numbers<[1], [0], [0], [1], [0, 0, 1, 1], [], []>} : vector<6x32xbf16>, vector<32x768xbf16>, vector<6x768xf32> -> vector<6x768xf32>
    %53 = arith.addf %46, %52 : vector<6x768xf32>
    %c0_47 = arith.constant 0 : index
    %c1_48 = arith.constant 1 : index
    %c0_49 = arith.constant 0 : index
    %54 = vector.load %arg1[%c0_47, %c1_48, %c0_49] : memref<1x28x32xf32, #tpu.memory_space<vmem>>, vector<1x6x32xf32>
    %55 = vector.shape_cast %54 : vector<1x6x32xf32> to vector<6x32xf32>
    %56 = arith.truncf %55 : vector<6x32xf32> to vector<6x32xbf16>
    %c3_50 = arith.constant 3 : index
    %c0_51 = arith.constant 0 : index
    %c0_52 = arith.constant 0 : index
    %57 = vector.load %arg2[%c3_50, %c0_51, %c0_52] : memref<5x32x768xbf16, #tpu.memory_space<vmem>>, vector<1x32x768xbf16>
    %58 = vector.shape_cast %57 : vector<1x32x768xbf16> to vector<32x768xbf16>
    %cst_53 = arith.constant dense<0.000000e+00> : vector<6x768xf32>
    %59 = tpu.matmul %56, %58, %cst_53 {dimension_numbers = #tpu.dot_dimension_numbers<[1], [0], [0], [1], [0, 0, 1, 1], [], []>} : vector<6x32xbf16>, vector<32x768xbf16>, vector<6x768xf32> -> vector<6x768xf32>
    %60 = arith.addf %53, %59 : vector<6x768xf32>
    %c0_54 = arith.constant 0 : index
    %c8 = arith.constant 8 : index
    %c0_55 = arith.constant 0 : index
    %61 = vector.load %arg1[%c0_54, %c8, %c0_55] : memref<1x28x32xf32, #tpu.memory_space<vmem>>, vector<1x6x32xf32>
    %62 = vector.shape_cast %61 : vector<1x6x32xf32> to vector<6x32xf32>
    %63 = arith.truncf %62 : vector<6x32xf32> to vector<6x32xbf16>
    %c4_56 = arith.constant 4 : index
    %c0_57 = arith.constant 0 : index
    %c0_58 = arith.constant 0 : index
    %64 = vector.load %arg2[%c4_56, %c0_57, %c0_58] : memref<5x32x768xbf16, #tpu.memory_space<vmem>>, vector<1x32x768xbf16>
    %65 = vector.shape_cast %64 : vector<1x32x768xbf16> to vector<32x768xbf16>
    %cst_59 = arith.constant dense<0.000000e+00> : vector<6x768xf32>
    %66 = tpu.matmul %63, %65, %cst_59 {dimension_numbers = #tpu.dot_dimension_numbers<[1], [0], [0], [1], [0, 0, 1, 1], [], []>} : vector<6x32xbf16>, vector<32x768xbf16>, vector<6x768xf32> -> vector<6x768xf32>
    %67 = arith.addf %60, %66 : vector<6x768xf32>
    %68 = arith.maximumf %33, %67 : vector<6x768xf32>
    %c0_60 = arith.constant 0 : index
    %c0_61 = arith.constant 0 : index
    %69 = vector.load %arg3[%c0_60, %c0_61] : memref<1x768xf32, #tpu.memory_space<vmem>>, vector<1x768xf32>
    %70 = vector.broadcast %69 : vector<1x768xf32> to vector<6x768xf32>
    %71 = arith.addf %68, %70 : vector<6x768xf32>
    %cst_62 = arith.constant 0.000000e+00 : f32
    %72 = vector.broadcast %cst_62 : f32 to vector<6x768xf32>
    %73 = arith.maximumf %71, %72 : vector<6x768xf32>
    %74 = vector.extract_strided_slice %73 {offsets = [0, 0], sizes = [6, 384], strides = [1, 1]} : vector<6x768xf32> to vector<6x384xf32>
    %75 = vector.extract_strided_slice %73 {offsets = [0, 384], sizes = [6, 384], strides = [1, 1]} : vector<6x768xf32> to vector<6x384xf32>
    %76 = arith.maximumf %74, %75 : vector<6x384xf32>
    %77 = arith.truncf %76 : vector<6x384xf32> to vector<6x384xbf16>
    %c0_63 = arith.constant 0 : index
    %c0_64 = arith.constant 0 : index
    %c0_65 = arith.constant 0 : index
    %78 = vector.load %arg11[%c0_63, %c0_64, %c0_65] : memref<2x6x384xbf16, #tpu.memory_space<vmem>>, vector<1x6x384xbf16>
    %79 = vector.shape_cast %78 : vector<1x6x384xbf16> to vector<6x384xbf16>
    %80 = vector.shape_cast %77 : vector<6x384xbf16> to vector<1x6x384xbf16>
    tpu.vector_store %arg11[%c0_63, %c0_64, %c0_65], %80 {strides = array<i32>} : memref<2x6x384xbf16, #tpu.memory_space<vmem>>, vector<1x6x384xbf16>,
    %c0_66 = arith.constant 0 : index
    %c14_67 = arith.constant 14 : index
    %c0_68 = arith.constant 0 : index
    %81 = vector.load %arg1[%c0_66, %c14_67, %c0_68] : memref<1x28x32xf32, #tpu.memory_space<vmem>>, vector<1x6x32xf32>
    %82 = vector.shape_cast %81 : vector<1x6x32xf32> to vector<6x32xf32>
    %83 = arith.truncf %82 : vector<6x32xf32> to vector<6x32xbf16>
    %c0_69 = arith.constant 0 : index
    %c0_70 = arith.constant 0 : index
    %c0_71 = arith.constant 0 : index
    %84 = vector.load %arg2[%c0_69, %c0_70, %c0_71] : memref<5x32x768xbf16, #tpu.memory_space<vmem>>, vector<1x32x768xbf16>
    %85 = vector.shape_cast %84 : vector<1x32x768xbf16> to vector<32x768xbf16>
    %cst_72 = arith.constant dense<0.000000e+00> : vector<6x768xf32>
    %86 = tpu.matmul %83, %85, %cst_72 {dimension_numbers = #tpu.dot_dimension_numbers<[1], [0], [0], [1], [0, 0, 1, 1], [], []>} : vector<6x32xbf16>, vector<32x768xbf16>, vector<6x768xf32> -> vector<6x768xf32>
    %c0_73 = arith.constant 0 : index
    %c21_74 = arith.constant 21 : index
    %c0_75 = arith.constant 0 : index
    %87 = vector.load %arg1[%c0_73, %c21_74, %c0_75] : memref<1x28x32xf32, #tpu.memory_space<vmem>>, vector<1x6x32xf32>
    %88 = vector.shape_cast %87 : vector<1x6x32xf32> to vector<6x32xf32>
    %89 = arith.truncf %88 : vector<6x32xf32> to vector<6x32xbf16>
    %c1_76 = arith.constant 1 : index
    %c0_77 = arith.constant 0 : index
    %c0_78 = arith.constant 0 : index
    %90 = vector.load %arg2[%c1_76, %c0_77, %c0_78] : memref<5x32x768xbf16, #tpu.memory_space<vmem>>, vector<1x32x768xbf16>
    %91 = vector.shape_cast %90 : vector<1x32x768xbf16> to vector<32x768xbf16>
    %cst_79 = arith.constant dense<0.000000e+00> : vector<6x768xf32>
    %92 = tpu.matmul %89, %91, %cst_79 {dimension_numbers = #tpu.dot_dimension_numbers<[1], [0], [0], [1], [0, 0, 1, 1], [], []>} : vector<6x32xbf16>, vector<32x768xbf16>, vector<6x768xf32> -> vector<6x768xf32>
    %93 = arith.addf %86, %92 : vector<6x768xf32>
    %c0_80 = arith.constant 0 : index
    %c1_81 = arith.constant 1 : index
    %c0_82 = arith.constant 0 : index
    %94 = vector.load %arg1[%c0_80, %c1_81, %c0_82] : memref<1x28x32xf32, #tpu.memory_space<vmem>>, vector<1x6x32xf32>
    %95 = vector.shape_cast %94 : vector<1x6x32xf32> to vector<6x32xf32>
    %96 = arith.truncf %95 : vector<6x32xf32> to vector<6x32xbf16>
    %c2_83 = arith.constant 2 : index
    %c0_84 = arith.constant 0 : index
    %c0_85 = arith.constant 0 : index
    %97 = vector.load %arg2[%c2_83, %c0_84, %c0_85] : memref<5x32x768xbf16, #tpu.memory_space<vmem>>, vector<1x32x768xbf16>
    %98 = vector.shape_cast %97 : vector<1x32x768xbf16> to vector<32x768xbf16>
    %cst_86 = arith.constant dense<0.000000e+00> : vector<6x768xf32>
    %99 = tpu.matmul %96, %98, %cst_86 {dimension_numbers = #tpu.dot_dimension_numbers<[1], [0], [0], [1], [0, 0, 1, 1], [], []>} : vector<6x32xbf16>, vector<32x768xbf16>, vector<6x768xf32> -> vector<6x768xf32>
    %100 = arith.addf %93, %99 : vector<6x768xf32>
    %c0_87 = arith.constant 0 : index
    %c8_88 = arith.constant 8 : index
    %c0_89 = arith.constant 0 : index
    %101 = vector.load %arg1[%c0_87, %c8_88, %c0_89] : memref<1x28x32xf32, #tpu.memory_space<vmem>>, vector<1x6x32xf32>
    %102 = vector.shape_cast %101 : vector<1x6x32xf32> to vector<6x32xf32>
    %103 = arith.truncf %102 : vector<6x32xf32> to vector<6x32xbf16>
    %c3_90 = arith.constant 3 : index
    %c0_91 = arith.constant 0 : index
    %c0_92 = arith.constant 0 : index
    %104 = vector.load %arg2[%c3_90, %c0_91, %c0_92] : memref<5x32x768xbf16, #tpu.memory_space<vmem>>, vector<1x32x768xbf16>
    %105 = vector.shape_cast %104 : vector<1x32x768xbf16> to vector<32x768xbf16>
    %cst_93 = arith.constant dense<0.000000e+00> : vector<6x768xf32>
    %106 = tpu.matmul %103, %105, %cst_93 {dimension_numbers = #tpu.dot_dimension_numbers<[1], [0], [0], [1], [0, 0, 1, 1], [], []>} : vector<6x32xbf16>, vector<32x768xbf16>, vector<6x768xf32> -> vector<6x768xf32>
    %107 = arith.addf %100, %106 : vector<6x768xf32>
    %c0_94 = arith.constant 0 : index
    %c15 = arith.constant 15 : index
    %c0_95 = arith.constant 0 : index
    %108 = vector.load %arg1[%c0_94, %c15, %c0_95] : memref<1x28x32xf32, #tpu.memory_space<vmem>>, vector<1x6x32xf32>
    %109 = vector.shape_cast %108 : vector<1x6x32xf32> to vector<6x32xf32>
    %110 = arith.truncf %109 : vector<6x32xf32> to vector<6x32xbf16>
    %c4_96 = arith.constant 4 : index
    %c0_97 = arith.constant 0 : index
    %c0_98 = arith.constant 0 : index
    %111 = vector.load %arg2[%c4_96, %c0_97, %c0_98] : memref<5x32x768xbf16, #tpu.memory_space<vmem>>, vector<1x32x768xbf16>
    %112 = vector.shape_cast %111 : vector<1x32x768xbf16> to vector<32x768xbf16>
    %cst_99 = arith.constant dense<0.000000e+00> : vector<6x768xf32>
    %113 = tpu.matmul %110, %112, %cst_99 {dimension_numbers = #tpu.dot_dimension_numbers<[1], [0], [0], [1], [0, 0, 1, 1], [], []>} : vector<6x32xbf16>, vector<32x768xbf16>, vector<6x768xf32> -> vector<6x768xf32>
    %114 = arith.addf %107, %113 : vector<6x768xf32>
    %c0_100 = arith.constant 0 : index
    %c21_101 = arith.constant 21 : index
    %c0_102 = arith.constant 0 : index
    %115 = vector.load %arg1[%c0_100, %c21_101, %c0_102] : memref<1x28x32xf32, #tpu.memory_space<vmem>>, vector<1x6x32xf32>
    %116 = vector.shape_cast %115 : vector<1x6x32xf32> to vector<6x32xf32>
    %117 = arith.truncf %116 : vector<6x32xf32> to vector<6x32xbf16>
    %c0_103 = arith.constant 0 : index
    %c0_104 = arith.constant 0 : index
    %c0_105 = arith.constant 0 : index
    %118 = vector.load %arg2[%c0_103, %c0_104, %c0_105] : memref<5x32x768xbf16, #tpu.memory_space<vmem>>, vector<1x32x768xbf16>
    %119 = vector.shape_cast %118 : vector<1x32x768xbf16> to vector<32x768xbf16>
    %cst_106 = arith.constant dense<0.000000e+00> : vector<6x768xf32>
    %120 = tpu.matmul %117, %119, %cst_106 {dimension_numbers = #tpu.dot_dimension_numbers<[1], [0], [0], [1], [0, 0, 1, 1], [], []>} : vector<6x32xbf16>, vector<32x768xbf16>, vector<6x768xf32> -> vector<6x768xf32>
    %c0_107 = arith.constant 0 : index
    %c1_108 = arith.constant 1 : index
    %c0_109 = arith.constant 0 : index
    %121 = vector.load %arg1[%c0_107, %c1_108, %c0_109] : memref<1x28x32xf32, #tpu.memory_space<vmem>>, vector<1x6x32xf32>
    %122 = vector.shape_cast %121 : vector<1x6x32xf32> to vector<6x32xf32>
    %123 = arith.truncf %122 : vector<6x32xf32> to vector<6x32xbf16>
    %c1_110 = arith.constant 1 : index
    %c0_111 = arith.constant 0 : index
    %c0_112 = arith.constant 0 : index
    %124 = vector.load %arg2[%c1_110, %c0_111, %c0_112] : memref<5x32x768xbf16, #tpu.memory_space<vmem>>, vector<1x32x768xbf16>
    %125 = vector.shape_cast %124 : vector<1x32x768xbf16> to vector<32x768xbf16>
    %cst_113 = arith.constant dense<0.000000e+00> : vector<6x768xf32>
    %126 = tpu.matmul %123, %125, %cst_113 {dimension_numbers = #tpu.dot_dimension_numbers<[1], [0], [0], [1], [0, 0, 1, 1], [], []>} : vector<6x32xbf16>, vector<32x768xbf16>, vector<6x768xf32> -> vector<6x768xf32>
    %127 = arith.addf %120, %126 : vector<6x768xf32>
    %c0_114 = arith.constant 0 : index
    %c8_115 = arith.constant 8 : index
    %c0_116 = arith.constant 0 : index
    %128 = vector.load %arg1[%c0_114, %c8_115, %c0_116] : memref<1x28x32xf32, #tpu.memory_space<vmem>>, vector<1x6x32xf32>
    %129 = vector.shape_cast %128 : vector<1x6x32xf32> to vector<6x32xf32>
    %130 = arith.truncf %129 : vector<6x32xf32> to vector<6x32xbf16>
    %c2_117 = arith.constant 2 : index
    %c0_118 = arith.constant 0 : index
    %c0_119 = arith.constant 0 : index
    %131 = vector.load %arg2[%c2_117, %c0_118, %c0_119] : memref<5x32x768xbf16, #tpu.memory_space<vmem>>, vector<1x32x768xbf16>
    %132 = vector.shape_cast %131 : vector<1x32x768xbf16> to vector<32x768xbf16>
    %cst_120 = arith.constant dense<0.000000e+00> : vector<6x768xf32>
    %133 = tpu.matmul %130, %132, %cst_120 {dimension_numbers = #tpu.dot_dimension_numbers<[1], [0], [0], [1], [0, 0, 1, 1], [], []>} : vector<6x32xbf16>, vector<32x768xbf16>, vector<6x768xf32> -> vector<6x768xf32>
    %134 = arith.addf %127, %133 : vector<6x768xf32>
    %c0_121 = arith.constant 0 : index
    %c15_122 = arith.constant 15 : index
    %c0_123 = arith.constant 0 : index
    %135 = vector.load %arg1[%c0_121, %c15_122, %c0_123] : memref<1x28x32xf32, #tpu.memory_space<vmem>>, vector<1x6x32xf32>
    %136 = vector.shape_cast %135 : vector<1x6x32xf32> to vector<6x32xf32>
    %137 = arith.truncf %136 : vector<6x32xf32> to vector<6x32xbf16>
    %c3_124 = arith.constant 3 : index
    %c0_125 = arith.constant 0 : index
    %c0_126 = arith.constant 0 : index
    %138 = vector.load %arg2[%c3_124, %c0_125, %c0_126] : memref<5x32x768xbf16, #tpu.memory_space<vmem>>, vector<1x32x768xbf16>
    %139 = vector.shape_cast %138 : vector<1x32x768xbf16> to vector<32x768xbf16>
    %cst_127 = arith.constant dense<0.000000e+00> : vector<6x768xf32>
    %140 = tpu.matmul %137, %139, %cst_127 {dimension_numbers = #tpu.dot_dimension_numbers<[1], [0], [0], [1], [0, 0, 1, 1], [], []>} : vector<6x32xbf16>, vector<32x768xbf16>, vector<6x768xf32> -> vector<6x768xf32>
    %141 = arith.addf %134, %140 : vector<6x768xf32>
    %c0_128 = arith.constant 0 : index
    %c22 = arith.constant 22 : index
    %c0_129 = arith.constant 0 : index
    %142 = vector.load %arg1[%c0_128, %c22, %c0_129] : memref<1x28x32xf32, #tpu.memory_space<vmem>>, vector<1x6x32xf32>
    %143 = vector.shape_cast %142 : vector<1x6x32xf32> to vector<6x32xf32>
    %144 = arith.truncf %143 : vector<6x32xf32> to vector<6x32xbf16>
    %c4_130 = arith.constant 4 : index
    %c0_131 = arith.constant 0 : index
    %c0_132 = arith.constant 0 : index
    %145 = vector.load %arg2[%c4_130, %c0_131, %c0_132] : memref<5x32x768xbf16, #tpu.memory_space<vmem>>, vector<1x32x768xbf16>
    %146 = vector.shape_cast %145 : vector<1x32x768xbf16> to vector<32x768xbf16>
    %cst_133 = arith.constant dense<0.000000e+00> : vector<6x768xf32>
    %147 = tpu.matmul %144, %146, %cst_133 {dimension_numbers = #tpu.dot_dimension_numbers<[1], [0], [0], [1], [0, 0, 1, 1], [], []>} : vector<6x32xbf16>, vector<32x768xbf16>, vector<6x768xf32> -> vector<6x768xf32>
    %148 = arith.addf %141, %147 : vector<6x768xf32>
    %149 = arith.maximumf %114, %148 : vector<6x768xf32>
    %c0_134 = arith.constant 0 : index
    %c0_135 = arith.constant 0 : index
    %150 = vector.load %arg3[%c0_134, %c0_135] : memref<1x768xf32, #tpu.memory_space<vmem>>, vector<1x768xf32>
    %151 = vector.broadcast %150 : vector<1x768xf32> to vector<6x768xf32>
    %152 = arith.addf %149, %151 : vector<6x768xf32>
    %cst_136 = arith.constant 0.000000e+00 : f32
    %153 = vector.broadcast %cst_136 : f32 to vector<6x768xf32>
    %154 = arith.maximumf %152, %153 : vector<6x768xf32>
    %155 = vector.extract_strided_slice %154 {offsets = [0, 0], sizes = [6, 384], strides = [1, 1]} : vector<6x768xf32> to vector<6x384xf32>
    %156 = vector.extract_strided_slice %154 {offsets = [0, 384], sizes = [6, 384], strides = [1, 1]} : vector<6x768xf32> to vector<6x384xf32>
    %157 = arith.maximumf %155, %156 : vector<6x384xf32>
    %158 = arith.truncf %157 : vector<6x384xf32> to vector<6x384xbf16>
    %c1_137 = arith.constant 1 : index
    %c0_138 = arith.constant 0 : index
    %c0_139 = arith.constant 0 : index
    %159 = vector.load %arg11[%c1_137, %c0_138, %c0_139] : memref<2x6x384xbf16, #tpu.memory_space<vmem>>, vector<1x6x384xbf16>
    %160 = vector.shape_cast %159 : vector<1x6x384xbf16> to vector<6x384xbf16>
    %161 = vector.shape_cast %158 : vector<6x384xbf16> to vector<1x6x384xbf16>
    tpu.vector_store %arg11[%c1_137, %c0_138, %c0_139], %161 {strides = array<i32>} : memref<2x6x384xbf16, #tpu.memory_space<vmem>>, vector<1x6x384xbf16>,
    %c0_140 = arith.constant 0 : index
    %c0_141 = arith.constant 0 : index
    %c0_142 = arith.constant 0 : index
    %162 = vector.load %arg11[%c0_140, %c0_141, %c0_142] : memref<2x6x384xbf16, #tpu.memory_space<vmem>>, vector<1x4x384xbf16>
    %163 = vector.shape_cast %162 : vector<1x4x384xbf16> to vector<4x384xbf16>
    %c0_143 = arith.constant 0 : index
    %c0_144 = arith.constant 0 : index
    %c0_145 = arith.constant 0 : index
    %164 = vector.load %arg4[%c0_143, %c0_144, %c0_145] : memref<5x384x512xbf16, #tpu.memory_space<vmem>>, vector<1x384x512xbf16>
    %165 = vector.shape_cast %164 : vector<1x384x512xbf16> to vector<384x512xbf16>
    %cst_146 = arith.constant dense<0.000000e+00> : vector<4x512xf32>
    %166 = tpu.matmul %163, %165, %cst_146 {dimension_numbers = #tpu.dot_dimension_numbers<[1], [0], [0], [1], [0, 0, 1, 1], [], []>} : vector<4x384xbf16>, vector<384x512xbf16>, vector<4x512xf32> -> vector<4x512xf32>
    %c1_147 = arith.constant 1 : index
    %c0_148 = arith.constant 0 : index
    %c0_149 = arith.constant 0 : index
    %167 = vector.load %arg11[%c1_147, %c0_148, %c0_149] : memref<2x6x384xbf16, #tpu.memory_space<vmem>>, vector<1x4x384xbf16>
    %168 = vector.shape_cast %167 : vector<1x4x384xbf16> to vector<4x384xbf16>
    %c1_150 = arith.constant 1 : index
    %c0_151 = arith.constant 0 : index
    %c0_152 = arith.constant 0 : index
    %169 = vector.load %arg4[%c1_150, %c0_151, %c0_152] : memref<5x384x512xbf16, #tpu.memory_space<vmem>>, vector<1x384x512xbf16>
    %170 = vector.shape_cast %169 : vector<1x384x512xbf16> to vector<384x512xbf16>
    %cst_153 = arith.constant dense<0.000000e+00> : vector<4x512xf32>
    %171 = tpu.matmul %168, %170, %cst_153 {dimension_numbers = #tpu.dot_dimension_numbers<[1], [0], [0], [1], [0, 0, 1, 1], [], []>} : vector<4x384xbf16>, vector<384x512xbf16>, vector<4x512xf32> -> vector<4x512xf32>
    %172 = arith.addf %166, %171 : vector<4x512xf32>
    %c0_154 = arith.constant 0 : index
    %c1_155 = arith.constant 1 : index
    %c0_156 = arith.constant 0 : index
    %173 = vector.load %arg11[%c0_154, %c1_155, %c0_156] : memref<2x6x384xbf16, #tpu.memory_space<vmem>>, vector<1x4x384xbf16>
    %174 = vector.shape_cast %173 : vector<1x4x384xbf16> to vector<4x384xbf16>
    %c2_157 = arith.constant 2 : index
    %c0_158 = arith.constant 0 : index
    %c0_159 = arith.constant 0 : index
    %175 = vector.load %arg4[%c2_157, %c0_158, %c0_159] : memref<5x384x512xbf16, #tpu.memory_space<vmem>>, vector<1x384x512xbf16>
    %176 = vector.shape_cast %175 : vector<1x384x512xbf16> to vector<384x512xbf16>
    %cst_160 = arith.constant dense<0.000000e+00> : vector<4x512xf32>
    %177 = tpu.matmul %174, %176, %cst_160 {dimension_numbers = #tpu.dot_dimension_numbers<[1], [0], [0], [1], [0, 0, 1, 1], [], []>} : vector<4x384xbf16>, vector<384x512xbf16>, vector<4x512xf32> -> vector<4x512xf32>
    %178 = arith.addf %172, %177 : vector<4x512xf32>
    %c1_161 = arith.constant 1 : index
    %c1_162 = arith.constant 1 : index
    %c0_163 = arith.constant 0 : index
    %179 = vector.load %arg11[%c1_161, %c1_162, %c0_163] : memref<2x6x384xbf16, #tpu.memory_space<vmem>>, vector<1x4x384xbf16>
    %180 = vector.shape_cast %179 : vector<1x4x384xbf16> to vector<4x384xbf16>
    %c3_164 = arith.constant 3 : index
    %c0_165 = arith.constant 0 : index
    %c0_166 = arith.constant 0 : index
    %181 = vector.load %arg4[%c3_164, %c0_165, %c0_166] : memref<5x384x512xbf16, #tpu.memory_space<vmem>>, vector<1x384x512xbf16>
    %182 = vector.shape_cast %181 : vector<1x384x512xbf16> to vector<384x512xbf16>
    %cst_167 = arith.constant dense<0.000000e+00> : vector<4x512xf32>
    %183 = tpu.matmul %180, %182, %cst_167 {dimension_numbers = #tpu.dot_dimension_numbers<[1], [0], [0], [1], [0, 0, 1, 1], [], []>} : vector<4x384xbf16>, vector<384x512xbf16>, vector<4x512xf32> -> vector<4x512xf32>
    %184 = arith.addf %178, %183 : vector<4x512xf32>
    %c0_168 = arith.constant 0 : index
    %c2_169 = arith.constant 2 : index
    %c0_170 = arith.constant 0 : index
    %185 = vector.load %arg11[%c0_168, %c2_169, %c0_170] : memref<2x6x384xbf16, #tpu.memory_space<vmem>>, vector<1x4x384xbf16>
    %186 = vector.shape_cast %185 : vector<1x4x384xbf16> to vector<4x384xbf16>
    %c4_171 = arith.constant 4 : index
    %c0_172 = arith.constant 0 : index
    %c0_173 = arith.constant 0 : index
    %187 = vector.load %arg4[%c4_171, %c0_172, %c0_173] : memref<5x384x512xbf16, #tpu.memory_space<vmem>>, vector<1x384x512xbf16>
    %188 = vector.shape_cast %187 : vector<1x384x512xbf16> to vector<384x512xbf16>
    %cst_174 = arith.constant dense<0.000000e+00> : vector<4x512xf32>
    %189 = tpu.matmul %186, %188, %cst_174 {dimension_numbers = #tpu.dot_dimension_numbers<[1], [0], [0], [1], [0, 0, 1, 1], [], []>} : vector<4x384xbf16>, vector<384x512xbf16>, vector<4x512xf32> -> vector<4x512xf32>
    %190 = arith.addf %184, %189 : vector<4x512xf32>
    %c1_175 = arith.constant 1 : index
    %c0_176 = arith.constant 0 : index
    %c0_177 = arith.constant 0 : index
    %191 = vector.load %arg11[%c1_175, %c0_176, %c0_177] : memref<2x6x384xbf16, #tpu.memory_space<vmem>>, vector<1x4x384xbf16>
    %192 = vector.shape_cast %191 : vector<1x4x384xbf16> to vector<4x384xbf16>
    %c0_178 = arith.constant 0 : index
    %c0_179 = arith.constant 0 : index
    %c0_180 = arith.constant 0 : index
    %193 = vector.load %arg4[%c0_178, %c0_179, %c0_180] : memref<5x384x512xbf16, #tpu.memory_space<vmem>>, vector<1x384x512xbf16>
    %194 = vector.shape_cast %193 : vector<1x384x512xbf16> to vector<384x512xbf16>
    %cst_181 = arith.constant dense<0.000000e+00> : vector<4x512xf32>
    %195 = tpu.matmul %192, %194, %cst_181 {dimension_numbers = #tpu.dot_dimension_numbers<[1], [0], [0], [1], [0, 0, 1, 1], [], []>} : vector<4x384xbf16>, vector<384x512xbf16>, vector<4x512xf32> -> vector<4x512xf32>
    %c0_182 = arith.constant 0 : index
    %c1_183 = arith.constant 1 : index
    %c0_184 = arith.constant 0 : index
    %196 = vector.load %arg11[%c0_182, %c1_183, %c0_184] : memref<2x6x384xbf16, #tpu.memory_space<vmem>>, vector<1x4x384xbf16>
    %197 = vector.shape_cast %196 : vector<1x4x384xbf16> to vector<4x384xbf16>
    %c1_185 = arith.constant 1 : index
    %c0_186 = arith.constant 0 : index
    %c0_187 = arith.constant 0 : index
    %198 = vector.load %arg4[%c1_185, %c0_186, %c0_187] : memref<5x384x512xbf16, #tpu.memory_space<vmem>>, vector<1x384x512xbf16>
    %199 = vector.shape_cast %198 : vector<1x384x512xbf16> to vector<384x512xbf16>
    %cst_188 = arith.constant dense<0.000000e+00> : vector<4x512xf32>
    %200 = tpu.matmul %197, %199, %cst_188 {dimension_numbers = #tpu.dot_dimension_numbers<[1], [0], [0], [1], [0, 0, 1, 1], [], []>} : vector<4x384xbf16>, vector<384x512xbf16>, vector<4x512xf32> -> vector<4x512xf32>
    %201 = arith.addf %195, %200 : vector<4x512xf32>
    %c1_189 = arith.constant 1 : index
    %c1_190 = arith.constant 1 : index
    %c0_191 = arith.constant 0 : index
    %202 = vector.load %arg11[%c1_189, %c1_190, %c0_191] : memref<2x6x384xbf16, #tpu.memory_space<vmem>>, vector<1x4x384xbf16>
    %203 = vector.shape_cast %202 : vector<1x4x384xbf16> to vector<4x384xbf16>
    %c2_192 = arith.constant 2 : index
    %c0_193 = arith.constant 0 : index
    %c0_194 = arith.constant 0 : index
    %204 = vector.load %arg4[%c2_192, %c0_193, %c0_194] : memref<5x384x512xbf16, #tpu.memory_space<vmem>>, vector<1x384x512xbf16>
    %205 = vector.shape_cast %204 : vector<1x384x512xbf16> to vector<384x512xbf16>
    %cst_195 = arith.constant dense<0.000000e+00> : vector<4x512xf32>
    %206 = tpu.matmul %203, %205, %cst_195 {dimension_numbers = #tpu.dot_dimension_numbers<[1], [0], [0], [1], [0, 0, 1, 1], [], []>} : vector<4x384xbf16>, vector<384x512xbf16>, vector<4x512xf32> -> vector<4x512xf32>
    %207 = arith.addf %201, %206 : vector<4x512xf32>
    %c0_196 = arith.constant 0 : index
    %c2_197 = arith.constant 2 : index
    %c0_198 = arith.constant 0 : index
    %208 = vector.load %arg11[%c0_196, %c2_197, %c0_198] : memref<2x6x384xbf16, #tpu.memory_space<vmem>>, vector<1x4x384xbf16>
    %209 = vector.shape_cast %208 : vector<1x4x384xbf16> to vector<4x384xbf16>
    %c3_199 = arith.constant 3 : index
    %c0_200 = arith.constant 0 : index
    %c0_201 = arith.constant 0 : index
    %210 = vector.load %arg4[%c3_199, %c0_200, %c0_201] : memref<5x384x512xbf16, #tpu.memory_space<vmem>>, vector<1x384x512xbf16>
    %211 = vector.shape_cast %210 : vector<1x384x512xbf16> to vector<384x512xbf16>
    %cst_202 = arith.constant dense<0.000000e+00> : vector<4x512xf32>
    %212 = tpu.matmul %209, %211, %cst_202 {dimension_numbers = #tpu.dot_dimension_numbers<[1], [0], [0], [1], [0, 0, 1, 1], [], []>} : vector<4x384xbf16>, vector<384x512xbf16>, vector<4x512xf32> -> vector<4x512xf32>
    %213 = arith.addf %207, %212 : vector<4x512xf32>
    %c1_203 = arith.constant 1 : index
    %c2_204 = arith.constant 2 : index
    %c0_205 = arith.constant 0 : index
    %214 = vector.load %arg11[%c1_203, %c2_204, %c0_205] : memref<2x6x384xbf16, #tpu.memory_space<vmem>>, vector<1x4x384xbf16>
    %215 = vector.shape_cast %214 : vector<1x4x384xbf16> to vector<4x384xbf16>
    %c4_206 = arith.constant 4 : index
    %c0_207 = arith.constant 0 : index
    %c0_208 = arith.constant 0 : index
    %216 = vector.load %arg4[%c4_206, %c0_207, %c0_208] : memref<5x384x512xbf16, #tpu.memory_space<vmem>>, vector<1x384x512xbf16>
    %217 = vector.shape_cast %216 : vector<1x384x512xbf16> to vector<384x512xbf16>
    %cst_209 = arith.constant dense<0.000000e+00> : vector<4x512xf32>
    %218 = tpu.matmul %215, %217, %cst_209 {dimension_numbers = #tpu.dot_dimension_numbers<[1], [0], [0], [1], [0, 0, 1, 1], [], []>} : vector<4x384xbf16>, vector<384x512xbf16>, vector<4x512xf32> -> vector<4x512xf32>
    %219 = arith.addf %213, %218 : vector<4x512xf32>
    %220 = arith.maximumf %190, %219 : vector<4x512xf32>
    %c0_210 = arith.constant 0 : index
    %c0_211 = arith.constant 0 : index
    %221 = vector.load %arg5[%c0_210, %c0_211] : memref<1x512xf32, #tpu.memory_space<vmem>>, vector<1x512xf32>
    %222 = vector.broadcast %221 : vector<1x512xf32> to vector<4x512xf32>
    %223 = arith.addf %220, %222 : vector<4x512xf32>
    %cst_212 = arith.constant 0.000000e+00 : f32
    %224 = vector.broadcast %cst_212 : f32 to vector<4x512xf32>
    %225 = arith.maximumf %223, %224 : vector<4x512xf32>
    %226 = vector.extract_strided_slice %225 {offsets = [0, 0], sizes = [4, 256], strides = [1, 1]} : vector<4x512xf32> to vector<4x256xf32>
    %227 = vector.extract_strided_slice %225 {offsets = [0, 256], sizes = [4, 256], strides = [1, 1]} : vector<4x512xf32> to vector<4x256xf32>
    %228 = arith.maximumf %226, %227 : vector<4x256xf32>
    %229 = arith.truncf %228 : vector<4x256xf32> to vector<4x256xbf16>
    %c0_213 = arith.constant 0 : index
    %c0_214 = arith.constant 0 : index
    %230 = vector.load %arg12[%c0_213, %c0_214] : memref<4x256xbf16, #tpu.memory_space<vmem>>, vector<4x256xbf16>
    tpu.vector_store %arg12[%c0_213, %c0_214], %229 {strides = array<i32>} : memref<4x256xbf16, #tpu.memory_space<vmem>>, vector<4x256xbf16>,
    %c0_215 = arith.constant 0 : index
    %c0_216 = arith.constant 0 : index
    %231 = vector.load %arg12[%c0_215, %c0_216] : memref<4x256xbf16, #tpu.memory_space<vmem>>, vector<1x256xbf16>
    %c0_217 = arith.constant 0 : index
    %c0_218 = arith.constant 0 : index
    %232 = vector.load %arg6[%c0_217, %c0_218] : memref<1024x512xbf16, #tpu.memory_space<vmem>>, vector<256x512xbf16>
    %cst_219 = arith.constant dense<0.000000e+00> : vector<1x512xf32>
    %233 = tpu.matmul %231, %232, %cst_219 {dimension_numbers = #tpu.dot_dimension_numbers<[1], [0], [0], [1], [0, 0, 1, 1], [], []>} : vector<1x256xbf16>, vector<256x512xbf16>, vector<1x512xf32> -> vector<1x512xf32>
    %c1_220 = arith.constant 1 : index
    %c0_221 = arith.constant 0 : index
    %234 = vector.load %arg12[%c1_220, %c0_221] : memref<4x256xbf16, #tpu.memory_space<vmem>>, vector<1x256xbf16>
    %c256 = arith.constant 256 : index
    %c0_222 = arith.constant 0 : index
    %235 = vector.load %arg6[%c256, %c0_222] : memref<1024x512xbf16, #tpu.memory_space<vmem>>, vector<256x512xbf16>
    %cst_223 = arith.constant dense<0.000000e+00> : vector<1x512xf32>
    %236 = tpu.matmul %234, %235, %cst_223 {dimension_numbers = #tpu.dot_dimension_numbers<[1], [0], [0], [1], [0, 0, 1, 1], [], []>} : vector<1x256xbf16>, vector<256x512xbf16>, vector<1x512xf32> -> vector<1x512xf32>
    %237 = arith.addf %233, %236 : vector<1x512xf32>
    %c2_224 = arith.constant 2 : index
    %c0_225 = arith.constant 0 : index
    %238 = vector.load %arg12[%c2_224, %c0_225] : memref<4x256xbf16, #tpu.memory_space<vmem>>, vector<1x256xbf16>
    %c512 = arith.constant 512 : index
    %c0_226 = arith.constant 0 : index
    %239 = vector.load %arg6[%c512, %c0_226] : memref<1024x512xbf16, #tpu.memory_space<vmem>>, vector<256x512xbf16>
    %cst_227 = arith.constant dense<0.000000e+00> : vector<1x512xf32>
    %240 = tpu.matmul %238, %239, %cst_227 {dimension_numbers = #tpu.dot_dimension_numbers<[1], [0], [0], [1], [0, 0, 1, 1], [], []>} : vector<1x256xbf16>, vector<256x512xbf16>, vector<1x512xf32> -> vector<1x512xf32>
    %241 = arith.addf %237, %240 : vector<1x512xf32>
    %c3_228 = arith.constant 3 : index
    %c0_229 = arith.constant 0 : index
    %242 = vector.load %arg12[%c3_228, %c0_229] : memref<4x256xbf16, #tpu.memory_space<vmem>>, vector<1x256xbf16>
    %c768 = arith.constant 768 : index
    %c0_230 = arith.constant 0 : index
    %243 = vector.load %arg6[%c768, %c0_230] : memref<1024x512xbf16, #tpu.memory_space<vmem>>, vector<256x512xbf16>
    %cst_231 = arith.constant dense<0.000000e+00> : vector<1x512xf32>
    %244 = tpu.matmul %242, %243, %cst_231 {dimension_numbers = #tpu.dot_dimension_numbers<[1], [0], [0], [1], [0, 0, 1, 1], [], []>} : vector<1x256xbf16>, vector<256x512xbf16>, vector<1x512xf32> -> vector<1x512xf32>
    %245 = arith.addf %241, %244 : vector<1x512xf32>
    %c0_232 = arith.constant 0 : index
    %c0_233 = arith.constant 0 : index
    %246 = vector.load %arg7[%c0_232, %c0_233] : memref<1x512xf32, #tpu.memory_space<vmem>>, vector<1x512xf32>
    %247 = arith.addf %245, %246 : vector<1x512xf32>
    %cst_234 = arith.constant 0.000000e+00 : f32
    %248 = vector.broadcast %cst_234 : f32 to vector<1x512xf32>
    %249 = arith.maximumf %247, %248 : vector<1x512xf32>
    %250 = arith.truncf %249 : vector<1x512xf32> to vector<1x512xbf16>
    %c0_235 = arith.constant 0 : index
    %c0_236 = arith.constant 0 : index
    %251 = vector.load %arg8[%c0_235, %c0_236] : memref<512x128xbf16, #tpu.memory_space<vmem>>, vector<512x128xbf16>
    %cst_237 = arith.constant dense<0.000000e+00> : vector<1x128xf32>
    %252 = tpu.matmul %250, %251, %cst_237 {dimension_numbers = #tpu.dot_dimension_numbers<[1], [0], [0], [1], [0, 0, 1, 1], [], []>} : vector<1x512xbf16>, vector<512x128xbf16>, vector<1x128xf32> -> vector<1x128xf32>
    %c0_238 = arith.constant 0 : index
    %c0_239 = arith.constant 0 : index
    %253 = vector.load %arg9[%c0_238, %c0_239] : memref<1x128xf32, #tpu.memory_space<vmem>>, vector<1x128xf32>
    %254 = arith.addf %252, %253 : vector<1x128xf32>
    %255 = tpu.iota {dimensions = array<i32: 1>} : vector<1x128xi32>
    %c10_i32 = arith.constant 10 : i32
    %256 = vector.broadcast %c10_i32 : i32 to vector<1x128xi32>
    %257 = arith.cmpi slt, %255, %256 : vector<1x128xi32>
    %cst_240 = arith.constant -1.000000e+30 : f32
    %258 = vector.broadcast %cst_240 : f32 to vector<1x128xf32>
    %259 = arith.select %257, %254, %258 : vector<1x128xi1>, vector<1x128xf32>
    %cst_241 = arith.constant dense<0xFF800000> : vector<1xf32>
    %260 = vector.multi_reduction <maximumf>, %259, %cst_241 [1] : vector<1x128xf32> to vector<1xf32>
    %261 = vector.shape_cast %260 : vector<1xf32> to vector<1x1xf32>
    %262 = vector.broadcast %261 : vector<1x1xf32> to vector<1x128xf32>
    %263 = arith.subf %259, %262 : vector<1x128xf32>
    %264 = math.exp %263 : vector<1x128xf32>
    %cst_242 = arith.constant dense<0.000000e+00> : vector<1xf32>
    %265 = vector.multi_reduction <add>, %264, %cst_242 [1] : vector<1x128xf32> to vector<1xf32>
    %266 = vector.shape_cast %265 : vector<1xf32> to vector<1x1xf32>
    %267 = math.log %266 : vector<1x1xf32>
    %268 = vector.broadcast %267 : vector<1x1xf32> to vector<1x128xf32>
    %269 = arith.subf %263, %268 : vector<1x128xf32>
    %c0_243 = arith.constant 0 : index
    %c0_244 = arith.constant 0 : index
    %c0_245 = arith.constant 0 : index
    %270 = vector.load %arg10[%c0_243, %c0_244, %c0_245] : memref<1x1x128xf32, #tpu.memory_space<vmem>>, vector<1x1x128xf32>
    %271 = vector.shape_cast %270 : vector<1x1x128xf32> to vector<1x128xf32>
    %272 = vector.shape_cast %269 : vector<1x128xf32> to vector<1x1x128xf32>
    tpu.vector_store %arg10[%c0_243, %c0_244, %c0_245], %272 {strides = array<i32>} : memref<1x1x128xf32, #tpu.memory_space<vmem>>, vector<1x1x128xf32>,
    return
  }
  func.func @transform_0(%arg0: i32) -> (i32, i32, i32) {
    %c0_i32 = arith.constant 0 : i32
    %c0_i32_0 = arith.constant 0 : i32
    %c0_i32_1 = arith.constant 0 : i32
    return %arg0, %c0_i32, %c0_i32_0 : i32, i32, i32
  }
  func.func @transform_1(%arg0: i32) -> (i32, i32, i32) {
    %c0_i32 = arith.constant 0 : i32
    %c0_i32_0 = arith.constant 0 : i32
    %c0_i32_1 = arith.constant 0 : i32
    %c0_i32_2 = arith.constant 0 : i32
    return %c0_i32, %c0_i32_0, %c0_i32_1 : i32, i32, i32
  }
  func.func @transform_2(%arg0: i32) -> (i32, i32) {
    %c0_i32 = arith.constant 0 : i32
    %c0_i32_0 = arith.constant 0 : i32
    %c0_i32_1 = arith.constant 0 : i32
    return %c0_i32, %c0_i32_0 : i32, i32
  }
  func.func @transform_3(%arg0: i32) -> (i32, i32, i32) {
    %c0_i32 = arith.constant 0 : i32
    %c0_i32_0 = arith.constant 0 : i32
    %c0_i32_1 = arith.constant 0 : i32
    %c0_i32_2 = arith.constant 0 : i32
    return %c0_i32, %c0_i32_0, %c0_i32_1 : i32, i32, i32
  }
  func.func @transform_4(%arg0: i32) -> (i32, i32) {
    %c0_i32 = arith.constant 0 : i32
    %c0_i32_0 = arith.constant 0 : i32
    %c0_i32_1 = arith.constant 0 : i32
    return %c0_i32, %c0_i32_0 : i32, i32
  }
  func.func @transform_5(%arg0: i32) -> (i32, i32) {
    %c0_i32 = arith.constant 0 : i32
    %c0_i32_0 = arith.constant 0 : i32
    %c0_i32_1 = arith.constant 0 : i32
    return %c0_i32, %c0_i32_0 : i32, i32
  }
  func.func @transform_6(%arg0: i32) -> (i32, i32) {
    %c0_i32 = arith.constant 0 : i32
    %c0_i32_0 = arith.constant 0 : i32
    %c0_i32_1 = arith.constant 0 : i32
    return %c0_i32, %c0_i32_0 : i32, i32
  }
  func.func @transform_7(%arg0: i32) -> (i32, i32) {
    %c0_i32 = arith.constant 0 : i32
    %c0_i32_0 = arith.constant 0 : i32
    %c0_i32_1 = arith.constant 0 : i32
    return %c0_i32, %c0_i32_0 : i32, i32
  }
  func.func @transform_8(%arg0: i32) -> (i32, i32) {
    %c0_i32 = arith.constant 0 : i32
    %c0_i32_0 = arith.constant 0 : i32
    %c0_i32_1 = arith.constant 0 : i32
    return %c0_i32, %c0_i32_0 : i32, i32
  }
  func.func @transform_9(%arg0: i32) -> (i32, i32, i32) {
    %c0_i32 = arith.constant 0 : i32
    %c0_i32_0 = arith.constant 0 : i32
    %c0_i32_1 = arith.constant 0 : i32
    return %arg0, %c0_i32, %c0_i32_0 : i32, i32, i32
  }
}

</mosaic_0001>

<llo_original>
// kernel: net_forward.1
$region0: #{net_forward.1}
  #allocation0 [shape = 'u32[]', space=smem, size = 0x4, offset = 0x4, fixed_abs, tag = 'smem constant byte address 0x4 - core index']
  #allocation1 [shape = 'u32[144,128]{1,0:T(1,128)}', space=vmem, size = 0x12000, scoped, tag = 'internal scratch']
  #allocation2 [shape = 'bf16[2,6,384]{2,1,0:T(8,128)(2,1)}', space=vmem, size = 0x3000, scoped, tag = 'scratch operand']
  #allocation3 [shape = 'bf16[4,256]{1,0:T(4,128)(2,1)}', space=vmem, size = 0x800, scoped, tag = 'scratch operand']
  %s0 = inlined_call_operand.vmem [shape: f32[2,28,32], index: 0, kind: input, shape index: {}]
  %s1 = inlined_call_operand.hbm [shape: bf16[5,32,768], index: 1, kind: input, shape index: {}]
  %s2 = inlined_call_operand.hbm [shape: f32[1,768], index: 2, kind: input, shape index: {}]
  %s3 = inlined_call_operand.hbm [shape: bf16[5,384,512], index: 3, kind: input, shape index: {}]
  %s4 = inlined_call_operand.hbm [shape: f32[1,512], index: 4, kind: input, shape index: {}]
  %s5 = inlined_call_operand.hbm [shape: bf16[1024,512], index: 5, kind: input, shape index: {}]
  %s6 = inlined_call_operand.hbm [shape: f32[1,512], index: 6, kind: input, shape index: {}]
  %s7 = inlined_call_operand.hbm [shape: bf16[512,128], index: 7, kind: input, shape index: {}]
  %s8 = inlined_call_operand.hbm [shape: f32[1,128], index: 8, kind: input, shape index: {}]
  %s9 = inlined_call_operand.hbm [shape: f32[2,1,128], index: 9, kind: output, shape index: {}]
  %s10 = sld [smem:[#allocation0]]
  $region101: #{net_forward.1} parent=0
    _
  %s12 = ssub.s32 1, %s10
  %s13 = scalar_select 0, %s12, %s10
  $region1: #{net_forward.1} parent=0
    #allocation4 [shape = 'u8[245760]{0}', space=vmem, size = 0x3c000, scoped, tag = 'input window, operand 1, single buffered']
    #allocation5 [shape = 's32[2]{0}', space=sflag, size = 0x8, scoped, tag = 'scoped memory for net_forward.1']
    #allocation6 [shape = 's32[2]{0}', space=sflag, size = 0x8, scoped, tag = 'scoped memory for net_forward.1']
    #allocation7 [shape = 'u8[3072]{0}', space=vmem, size = 0xc00, scoped, tag = 'input window, operand 2, single buffered']
    #allocation8 [shape = 's32[1]{0}', space=sflag, size = 0x4, scoped, tag = 'scoped memory for net_forward.1']
    #allocation9 [shape = 'u8[1966080]{0}', space=vmem, size = 0x1e0000, scoped, tag = 'input window, operand 3, single buffered']
    #allocation10 [shape = 'u8[2048]{0}', space=vmem, size = 0x800, scoped, tag = 'input window, operand 4, single buffered']
    #allocation11 [shape = 's32[1]{0}', space=sflag, size = 0x4, scoped, tag = 'scoped memory for net_forward.1']
    #allocation12 [shape = 'u8[1048576]{0}', space=vmem, size = 0x100000, scoped, tag = 'input window, operand 5, single buffered']
    #allocation13 [shape = 'u8[2048]{0}', space=vmem, size = 0x800, scoped, tag = 'input window, operand 6, single buffered']
    #allocation14 [shape = 's32[1]{0}', space=sflag, size = 0x4, scoped, tag = 'scoped memory for net_forward.1']
    #allocation15 [shape = 'u8[131072]{0}', space=vmem, size = 0x20000, scoped, tag = 'input window, operand 7, single buffered']
    #allocation16 [shape = 'u8[512]{0}', space=vmem, size = 0x400, scoped, tag = 'input window, operand 8, single buffered']
    #allocation17 [shape = 's32[1]{0}', space=sflag, size = 0x4, scoped, tag = 'scoped memory for net_forward.1']
    #allocation18 [shape = 'u8[1024]{0}', space=vmem, size = 0x400, scoped, tag = 'output window, operand 0']
    %14 = vsyncpa [#allocation5], 0
    %15 = vsyncpa [#allocation8], 0
    %16 = vsyncpa [#allocation11], 0
    %17 = vsyncpa [#allocation14], 0
    %18 = vsyncpa [#allocation17], 0
    %19 = vsyncpa [#allocation6], 0
    %s20 = scalar_lea.sflag [#allocation6], 1
    %21 = vsyncpa %s20, 0
    loop: start=0, step=1, limit=4
    $region2: #{net_forward.1} parent=1 // loop_pre_header
      _
    $region3: #{net_forward.1} parent=1 // loop_header
      %s23 = sphi 0, %s27
      %p24 = scmp.ge.s32.totalorder %s23, 4
      %s33 = sphi 0, %s35
      %s36 = sphi 0, %s33
      %s37 = sphi 0, %s36
      %s53 = sphi 0, %s37
      %s57 = sphi 0, %s57
      %s59 = sphi 0, %s57
      %s60 = sphi 0, %s59
      %s74 = sphi 0, %s60
      %s78 = sphi 0, %s78
      %s80 = sphi 0, %s78
      %s81 = sphi 0, %s80
      %s95 = sphi 0, %s81
      %s99 = sphi 0, %s99
      %s101 = sphi 0, %s99
      %s102 = sphi 0, %s101
      %s116 = sphi 0, %s102
      %s120 = sphi 0, %s120
      %s122 = sphi 0, %s120
      %s123 = sphi 0, %s122
      %s137 = sphi 0, %s123
      %s141 = sphi 0, %s141
      %s143 = sphi 0, %s141
      %s144 = sphi 0, %s143
      %s158 = sphi 0, %s144
      %s162 = sphi 0, %s162
      %s164 = sphi 0, %s162
      %s165 = sphi 0, %s164
      %s179 = sphi 0, %s165
      %s183 = sphi 0, %s183
      %s185 = sphi 0, %s183
      %s186 = sphi 0, %s185
      %s200 = sphi 0, %s186
      %s204 = sphi 0, %s204
      %s206 = sphi 0, %s204
      %s207 = sphi 0, %s206
      %s221 = sphi 0, %s207
      %s227 = sphi 0, %s229
      %s230 = sphi 0, %s227
      %s231 = sphi 0, %s230
      %s247 = sphi 0, %s231
    $region4: #{net_forward.1} parent=1 // loop_header_branch
      %26 = sbr.rel (%p24) target = $region8
    $region5: #{net_forward.1} parent=1 // loop_body
      %s28 = ssub.s32 %s23, 1
      %s29 = ssub.s32 %s23, 2
      %s30 = sadd.s32 %s23, 1
      %s31 = ssub.s32 %s23, %s30
      %p32 = scmp.eq.s32.totalorder %s31, 0
      %s34 = sadd.s32 %s33, 1
      %s35 = scalar_select %p32, %s33, %s34
      %p38 = pneg %p32
      %p39 = scmp.eq.s32.totalorder %s23, 1
      %p40 = por %p38, %p39
      %p41 = scmp.ne.s32.totalorder %s33, %s36
      %p42 = scmp.eq.s32.totalorder %s23, 0
      %p43 = por %p41, %p42
      %p44 = scmp.ne.s32.totalorder %s33, %s36
      %p45 = scmp.eq.s32.totalorder %s28, 1
      %p46 = por %p44, %p45
      %p47 = scmp.ne.s32.totalorder %s36, %s37
      %p48 = scmp.eq.s32.totalorder %s28, 0
      %p49 = por %p47, %p48
      %p50 = scmp.ne.s32.totalorder %s36, %s37
      %p51 = scmp.eq.s32.totalorder %s29, 1
      %p52 = por %p50, %p51
      %p54 = scmp.ne.s32.totalorder %s37, %s53
      %p55 = scmp.eq.s32.totalorder %s29, 0
      %p56 = por %p54, %p55
      %s58 = sadd.s32 %s57, 1
      %p61 = scmp.eq.s32.totalorder %s23, 1
      %p62 = scmp.ne.s32.totalorder %s57, %s59
      %p63 = scmp.eq.s32.totalorder %s23, 0
      %p64 = por %p62, %p63
      %p65 = scmp.ne.s32.totalorder %s57, %s59
      %p66 = scmp.eq.s32.totalorder %s28, 1
      %p67 = por %p65, %p66
      %p68 = scmp.ne.s32.totalorder %s59, %s60
      %p69 = scmp.eq.s32.totalorder %s28, 0
      %p70 = por %p68, %p69
      %p71 = scmp.ne.s32.totalorder %s59, %s60
      %p72 = scmp.eq.s32.totalorder %s29, 1
      %p73 = por %p71, %p72
      %p75 = scmp.ne.s32.totalorder %s60, %s74
      %p76 = scmp.eq.s32.totalorder %s29, 0
      %p77 = por %p75, %p76
      %s79 = sadd.s32 %s78, 1
      %p82 = scmp.eq.s32.totalorder %s23, 1
      %p83 = scmp.ne.s32.totalorder %s78, %s80
      %p84 = scmp.eq.s32.totalorder %s23, 0
      %p85 = por %p83, %p84
      %p86 = scmp.ne.s32.totalorder %s78, %s80
      %p87 = scmp.eq.s32.totalorder %s28, 1
      %p88 = por %p86, %p87
      %p89 = scmp.ne.s32.totalorder %s80, %s81
      %p90 = scmp.eq.s32.totalorder %s28, 0
      %p91 = por %p89, %p90
      %p92 = scmp.ne.s32.totalorder %s80, %s81
      %p93 = scmp.eq.s32.totalorder %s29, 1
      %p94 = por %p92, %p93
      %p96 = scmp.ne.s32.totalorder %s81, %s95
      %p97 = scmp.eq.s32.totalorder %s29, 0
      %p98 = por %p96, %p97
      %s100 = sadd.s32 %s99, 1
      %p103 = scmp.eq.s32.totalorder %s23, 1
      %p104 = scmp.ne.s32.totalorder %s99, %s101
      %p105 = scmp.eq.s32.totalorder %s23, 0
      %p106 = por %p104, %p105
      %p107 = scmp.ne.s32.totalorder %s99, %s101
      %p108 = scmp.eq.s32.totalorder %s28, 1
      %p109 = por %p107, %p108
      %p110 = scmp.ne.s32.totalorder %s101, %s102
      %p111 = scmp.eq.s32.totalorder %s28, 0
      %p112 = por %p110, %p111
      %p113 = scmp.ne.s32.totalorder %s101, %s102
      %p114 = scmp.eq.s32.totalorder %s29, 1
      %p115 = por %p113, %p114
      %p117 = scmp.ne.s32.totalorder %s102, %s116
      %p118 = scmp.eq.s32.totalorder %s29, 0
      %p119 = por %p117, %p118
      %s121 = sadd.s32 %s120, 1
      %p124 = scmp.eq.s32.totalorder %s23, 1
      %p125 = scmp.ne.s32.totalorder %s120, %s122
      %p126 = scmp.eq.s32.totalorder %s23, 0
      %p127 = por %p125, %p126
      %p128 = scmp.ne.s32.totalorder %s120, %s122
      %p129 = scmp.eq.s32.totalorder %s28, 1
      %p130 = por %p128, %p129
      %p131 = scmp.ne.s32.totalorder %s122, %s123
      %p132 = scmp.eq.s32.totalorder %s28, 0
      %p133 = por %p131, %p132
      %p134 = scmp.ne.s32.totalorder %s122, %s123
      %p135 = scmp.eq.s32.totalorder %s29, 1
      %p136 = por %p134, %p135
      %p138 = scmp.ne.s32.totalorder %s123, %s137
      %p139 = scmp.eq.s32.totalorder %s29, 0
      %p140 = por %p138, %p139
      %s142 = sadd.s32 %s141, 1
      %p145 = scmp.eq.s32.totalorder %s23, 1
      %p146 = scmp.ne.s32.totalorder %s141, %s143
      %p147 = scmp.eq.s32.totalorder %s23, 0
      %p148 = por %p146, %p147
      %p149 = scmp.ne.s32.totalorder %s141, %s143
      %p150 = scmp.eq.s32.totalorder %s28, 1
      %p151 = por %p149, %p150
      %p152 = scmp.ne.s32.totalorder %s143, %s144
      %p153 = scmp.eq.s32.totalorder %s28, 0
      %p154 = por %p152, %p153
      %p155 = scmp.ne.s32.totalorder %s143, %s144
      %p156 = scmp.eq.s32.totalorder %s29, 1
      %p157 = por %p155, %p156
      %p159 = scmp.ne.s32.totalorder %s144, %s158
      %p160 = scmp.eq.s32.totalorder %s29, 0
      %p161 = por %p159, %p160
      %s163 = sadd.s32 %s162, 1
      %p166 = scmp.eq.s32.totalorder %s23, 1
      %p167 = scmp.ne.s32.totalorder %s162, %s164
      %p168 = scmp.eq.s32.totalorder %s23, 0
      %p169 = por %p167, %p168
      %p170 = scmp.ne.s32.totalorder %s162, %s164
      %p171 = scmp.eq.s32.totalorder %s28, 1
      %p172 = por %p170, %p171
      %p173 = scmp.ne.s32.totalorder %s164, %s165
      %p174 = scmp.eq.s32.totalorder %s28, 0
      %p175 = por %p173, %p174
      %p176 = scmp.ne.s32.totalorder %s164, %s165
      %p177 = scmp.eq.s32.totalorder %s29, 1
      %p178 = por %p176, %p177
      %p180 = scmp.ne.s32.totalorder %s165, %s179
      %p181 = scmp.eq.s32.totalorder %s29, 0
      %p182 = por %p180, %p181
      %s184 = sadd.s32 %s183, 1
      %p187 = scmp.eq.s32.totalorder %s23, 1
      %p188 = scmp.ne.s32.totalorder %s183, %s185
      %p189 = scmp.eq.s32.totalorder %s23, 0
      %p190 = por %p188, %p189
      %p191 = scmp.ne.s32.totalorder %s183, %s185
      %p192 = scmp.eq.s32.totalorder %s28, 1
      %p193 = por %p191, %p192
      %p194 = scmp.ne.s32.totalorder %s185, %s186
      %p195 = scmp.eq.s32.totalorder %s28, 0
      %p196 = por %p194, %p195
      %p197 = scmp.ne.s32.totalorder %s185, %s186
      %p198 = scmp.eq.s32.totalorder %s29, 1
      %p199 = por %p197, %p198
      %p201 = scmp.ne.s32.totalorder %s186, %s200
      %p202 = scmp.eq.s32.totalorder %s29, 0
      %p203 = por %p201, %p202
      %s205 = sadd.s32 %s204, 1
      %p208 = scmp.eq.s32.totalorder %s23, 1
      %p209 = scmp.ne.s32.totalorder %s204, %s206
      %p210 = scmp.eq.s32.totalorder %s23, 0
      %p211 = por %p209, %p210
      %p212 = scmp.ne.s32.totalorder %s204, %s206
      %p213 = scmp.eq.s32.totalorder %s28, 1
      %p214 = por %p212, %p213
      %p215 = scmp.ne.s32.totalorder %s206, %s207
      %p216 = scmp.eq.s32.totalorder %s28, 0
      %p217 = por %p215, %p216
      %p218 = scmp.ne.s32.totalorder %s206, %s207
      %p219 = scmp.eq.s32.totalorder %s29, 1
      %p220 = por %p218, %p219
      %p222 = scmp.ne.s32.totalorder %s207, %s221
      %p223 = scmp.eq.s32.totalorder %s29, 0
      %p224 = por %p222, %p223
      %s225 = ssub.s32 %s23, %s30
      %p226 = scmp.eq.s32.totalorder %s225, 0
      %s228 = sadd.s32 %s227, 1
      %s229 = scalar_select %p226, %s227, %s228
      %p232 = pneg %p226
      %p233 = scmp.eq.s32.totalorder %s23, 1
      %p234 = por %p232, %p233
      %p235 = scmp.ne.s32.totalorder %s227, %s230
      %p236 = scmp.eq.s32.totalorder %s23, 0
      %p237 = por %p235, %p236
      %p238 = scmp.ne.s32.totalorder %s227, %s230
      %p239 = scmp.eq.s32.totalorder %s28, 1
      %p240 = por %p238, %p239
      %p241 = scmp.ne.s32.totalorder %s230, %s231
      %p242 = scmp.eq.s32.totalorder %s28, 0
      %p243 = por %p241, %p242
      %p244 = scmp.ne.s32.totalorder %s230, %s231
      %p245 = scmp.eq.s32.totalorder %s29, 1
      %p246 = por %p244, %p245
      %p248 = scmp.ne.s32.totalorder %s231, %s247
      %p249 = scmp.eq.s32.totalorder %s29, 0
      %p250 = por %p248, %p249
      %p251 = scmp.le.s32.totalorder 1, %s23
      %p252 = scmp.lt.s32.totalorder %s23, 3
      %p253 = pnand %p251, %p252
      %p254 = pneg %p253
      // Predicated region
      $region9: #{net_forward.1} parent=5 // pred_check
        _
      $region10: #{net_forward.1} parent=5 // pred_check_branch
        %256 = sbr.rel (%p253) target = $region12
      $region11: #{net_forward.1} parent=5 // pred_region
        %s257 = ssub.s32 %s23, 1
        // Predicated region
        $region13: #{net_forward.1} parent=11 // pred_check
          %p258 = pneg %p70
        $region14: #{net_forward.1} parent=11 // pred_check_branch
          %260 = sbr.rel (%p258) target = $region16
        $region15: #{net_forward.1} parent=11 // pred_region
          %s262 = ssub.s32 7680, 7680
          %263 = vsyncadd [#allocation5], %s262
          %s264 = sshll.u32 [#allocation4], 4
          %s265 = int_to_ptr.vmem [resolvable:$true] %s264
          %270 = dma.hbm_to_vmem [thread:$0]  %s1, 7680, %s265, [#allocation5], 384, 384, 24
        $region16: #{net_forward.1} parent=11 // pred_fallthru
          _
        // Predicated region
        $region17: #{net_forward.1} parent=11 // pred_check
          %p271 = pneg %p91
        $region18: #{net_forward.1} parent=11 // pred_check_branch
          %273 = sbr.rel (%p271) target = $region20
        $region19: #{net_forward.1} parent=11 // pred_region
          %s275 = ssub.s32 96, 96
          %276 = vsyncadd [#allocation8], %s275
          %s278 = sshll.u32 [#allocation7], 4
          %s279 = int_to_ptr.vmem [resolvable:$true] %s278
          %281 = dma.hbm_to_vmem [thread:$0]  %s2, 96, %s279, [#allocation8]
        $region20: #{net_forward.1} parent=11 // pred_fallthru
          _
        // Predicated region
        $region21: #{net_forward.1} parent=11 // pred_check
          %p282 = pneg %p112
        $region22: #{net_forward.1} parent=11 // pred_check_branch
          %284 = sbr.rel (%p282) target = $region24
        $region23: #{net_forward.1} parent=11 // pred_region
          %s286 = ssub.s32 61440, 61440
          %287 = vsyncadd [#allocation8], %s286
          %s288 = sshll.u32 [#allocation9], 4
          %s289 = int_to_ptr.vmem [resolvable:$true] %s288
          %294 = dma.hbm_to_vmem [thread:$0]  %s3, 61440, %s289, [#allocation8], 256, 256, 16
        $region24: #{net_forward.1} parent=11 // pred_fallthru
          _
        // Predicated region
        $region25: #{net_forward.1} parent=11 // pred_check
          %p295 = pneg %p133
        $region26: #{net_forward.1} parent=11 // pred_check_branch
          %297 = sbr.rel (%p295) target = $region28
        $region27: #{net_forward.1} parent=11 // pred_region
          %s299 = ssub.s32 64, 64
          %300 = vsyncadd [#allocation11], %s299
          %s302 = sshll.u32 [#allocation10], 4
          %s303 = int_to_ptr.vmem [resolvable:$true] %s302
          %305 = dma.hbm_to_vmem [thread:$0]  %s4, 64, %s303, [#allocation11]
        $region28: #{net_forward.1} parent=11 // pred_fallthru
          _
        // Predicated region
        $region29: #{net_forward.1} parent=11 // pred_check
          %p306 = pneg %p154
        $region30: #{net_forward.1} parent=11 // pred_check_branch
          %308 = sbr.rel (%p306) target = $region32
        $region31: #{net_forward.1} parent=11 // pred_region
          %s310 = ssub.s32 32768, 32768
          %311 = vsyncadd [#allocation11], %s310
          %s312 = sshll.u32 [#allocation12], 4
          %s313 = int_to_ptr.vmem [resolvable:$true] %s312
          %318 = dma.hbm_to_vmem [thread:$0]  %s5, 32768, %s313, [#allocation11], 256, 256, 16
        $region32: #{net_forward.1} parent=11 // pred_fallthru
          _
        // Predicated region
        $region33: #{net_forward.1} parent=11 // pred_check
          %p319 = pneg %p175
        $region34: #{net_forward.1} parent=11 // pred_check_branch
          %321 = sbr.rel (%p319) target = $region36
        $region35: #{net_forward.1} parent=11 // pred_region
          %s323 = ssub.s32 64, 64
          %324 = vsyncadd [#allocation14], %s323
          %s326 = sshll.u32 [#allocation13], 4
          %s327 = int_to_ptr.vmem [resolvable:$true] %s326
          %329 = dma.hbm_to_vmem [thread:$0]  %s6, 64, %s327, [#allocation14]
        $region36: #{net_forward.1} parent=11 // pred_fallthru
          _
        // Predicated region
        $region37: #{net_forward.1} parent=11 // pred_check
          %p330 = pneg %p196
        $region38: #{net_forward.1} parent=11 // pred_check_branch
          %332 = sbr.rel (%p330) target = $region40
        $region39: #{net_forward.1} parent=11 // pred_region
          %s334 = ssub.s32 4096, 4096
          %335 = vsyncadd [#allocation14], %s334
          %s336 = sshll.u32 [#allocation15], 4
          %s337 = int_to_ptr.vmem [resolvable:$true] %s336
          %342 = dma.hbm_to_vmem [thread:$0]  %s7, 4096, %s337, [#allocation14], 64, 64, 4
        $region40: #{net_forward.1} parent=11 // pred_fallthru
          _
        // Predicated region
        $region41: #{net_forward.1} parent=11 // pred_check
          %p343 = pneg %p217
        $region42: #{net_forward.1} parent=11 // pred_check_branch
          %345 = sbr.rel (%p343) target = $region44
        $region43: #{net_forward.1} parent=11 // pred_region
          %s347 = ssub.s32 16, 16
          %348 = vsyncadd [#allocation17], %s347
          %s350 = sshll.u32 [#allocation16], 4
          %s351 = int_to_ptr.vmem [resolvable:$true] %s350
          %353 = dma.hbm_to_vmem [thread:$0]  %s8, 16, %s351, [#allocation17]
        $region44: #{net_forward.1} parent=11 // pred_fallthru
          _
      $region12: #{net_forward.1} parent=5 // pred_fallthru
        _
      %p354 = scmp.lt.s32.totalorder %s23, 2
      // Predicated region
      $region45: #{net_forward.1} parent=5 // pred_check
        %p355 = pneg %p354
      $region46: #{net_forward.1} parent=5 // pred_check_branch
        %357 = sbr.rel (%p355) target = $region48
      $region47: #{net_forward.1} parent=5 // pred_region
        // Predicated region
        $region49: #{net_forward.1} parent=47 // pred_check
          %p358 = pneg %p43
        $region50: #{net_forward.1} parent=47 // pred_check_branch
          %360 = sbr.rel (%p358) target = $region52
        $region51: #{net_forward.1} parent=47 // pred_region
          %p361 = scmp.lt.s32.totalorder %s23, 1
          %s362 = scalar_select %p361, %s23, 1
          %s363 = smul.addr %s362, 4
          %s364 = smul.addr %s363, 8
          %s365 = scalar_lea.vmem %s0, %s364
        $region52: #{net_forward.1} parent=47 // pred_fallthru
          _
      $region48: #{net_forward.1} parent=5 // pred_fallthru
        _
      %p366 = scmp.le.s32.totalorder 1, %s23
      %p367 = scmp.lt.s32.totalorder %s23, 3
      %p368 = pnand %p366, %p367
      %p369 = pneg %p368
      // Predicated region
      $region53: #{net_forward.1} parent=5 // pred_check
        _
      $region54: #{net_forward.1} parent=5 // pred_check_branch
        %371 = sbr.rel (%p368) target = $region56
      $region55: #{net_forward.1} parent=5 // pred_region
        %s372 = ssub.s32 %s23, 1
        // Predicated region
        $region57: #{net_forward.1} parent=55 // pred_check
          %p373 = pneg %p70
        $region58: #{net_forward.1} parent=55 // pred_check_branch
          %375 = sbr.rel (%p373) target = $region60
        $region59: #{net_forward.1} parent=55 // pred_region
          %376 = dma.done [#allocation5], 7680
        $region60: #{net_forward.1} parent=55 // pred_fallthru
          _
        // Predicated region
        $region61: #{net_forward.1} parent=55 // pred_check
          %p377 = pneg %p91
        $region62: #{net_forward.1} parent=55 // pred_check_branch
          %379 = sbr.rel (%p377) target = $region64
        $region63: #{net_forward.1} parent=55 // pred_region
          %380 = dma.done [#allocation8], 96
        $region64: #{net_forward.1} parent=55 // pred_fallthru
          _
        // Predicated region
        $region65: #{net_forward.1} parent=55 // pred_check
          %p381 = pneg %p112
        $region66: #{net_forward.1} parent=55 // pred_check_branch
          %383 = sbr.rel (%p381) target = $region68
        $region67: #{net_forward.1} parent=55 // pred_region
          %384 = dma.done [#allocation8], 61440
        $region68: #{net_forward.1} parent=55 // pred_fallthru
          _
        // Predicated region
        $region69: #{net_forward.1} parent=55 // pred_check
          %p385 = pneg %p133
        $region70: #{net_forward.1} parent=55 // pred_check_branch
          %387 = sbr.rel (%p385) target = $region72
        $region71: #{net_forward.1} parent=55 // pred_region
          %388 = dma.done [#allocation11], 64
        $region72: #{net_forward.1} parent=55 // pred_fallthru
          _
        // Predicated region
        $region73: #{net_forward.1} parent=55 // pred_check
          %p389 = pneg %p154
        $region74: #{net_forward.1} parent=55 // pred_check_branch
          %391 = sbr.rel (%p389) target = $region76
        $region75: #{net_forward.1} parent=55 // pred_region
          %392 = dma.done [#allocation11], 32768
        $region76: #{net_forward.1} parent=55 // pred_fallthru
          _
        // Predicated region
        $region77: #{net_forward.1} parent=55 // pred_check
          %p393 = pneg %p175
        $region78: #{net_forward.1} parent=55 // pred_check_branch
          %395 = sbr.rel (%p393) target = $region80
        $region79: #{net_forward.1} parent=55 // pred_region
          %396 = dma.done [#allocation14], 64
        $region80: #{net_forward.1} parent=55 // pred_fallthru
          _
        // Predicated region
        $region81: #{net_forward.1} parent=55 // pred_check
          %p397 = pneg %p196
        $region82: #{net_forward.1} parent=55 // pred_check_branch
          %399 = sbr.rel (%p397) target = $region84
        $region83: #{net_forward.1} parent=55 // pred_region
          %400 = dma.done [#allocation14], 4096
        $region84: #{net_forward.1} parent=55 // pred_fallthru
          _
        // Predicated region
        $region85: #{net_forward.1} parent=55 // pred_check
          %p401 = pneg %p217
        $region86: #{net_forward.1} parent=55 // pred_check_branch
          %403 = sbr.rel (%p401) target = $region88
        $region87: #{net_forward.1} parent=55 // pred_region
          %404 = dma.done [#allocation17], 16
        $region88: #{net_forward.1} parent=55 // pred_fallthru
          _
        %p405 = scmp.lt.s32.totalorder %s28, 1
        %s406 = scalar_select %p405, %s28, 1
        %s407 = smul.addr %s406, 4
        %s408 = smul.addr %s407, 8
        %s409 = scalar_lea.vmem %s0, %s408
        %p410 = pneg %p49
        %p411 = pneg %p46
        %p412 = pneg %p70
        %p413 = pneg %p67
        %p414 = pneg %p91
        %p415 = pneg %p88
        %p416 = pneg %p112
        %p417 = pneg %p109
        %p418 = pneg %p133
        %p419 = pneg %p130
        %p420 = pneg %p154
        %p421 = pneg %p151
        %p422 = pneg %p175
        %p423 = pneg %p172
        %p424 = pneg %p196
        %p425 = pneg %p193
        %p426 = pneg %p217
        %p427 = pneg %p214
        %p428 = pneg %p243
        %p429 = pneg %p240
        %s430 = sand.u32 %s230, 1
        %s431 = scalar_lea.sflag [#allocation6], %s430
        %s432 = sand.u32 %s230, 1
        %s433 = scalar_lea.vmem [#allocation18], %s432
        %p434 = scmp.lt.s32.totalorder %s28, 1
        %s435 = scalar_select %p434, %s28, 1
        %s436 = smul.addr %s435, 4
        %s437 = smul.addr %s436, 8
        %s438 = scalar_lea.vmem %s0, %s437
        %v440 = vld [vmem:[%s438] sm:$0x3f]
        %v441 = vpack.c.bf16 %v440, %v440
        %v442 = vld [vmem:[#allocation4] sm:$0xff]
        %v443 = vld [vmem:[#allocation4 + $0x8] sm:$0xff]
        %v444 = vld [vmem:[#allocation4 + $0x10] sm:$0xff]
        %v445 = vld [vmem:[#allocation4 + $0x18] sm:$0xff]
        %v446 = vld [vmem:[#allocation4 + $0x20] sm:$0xff]
        %v447 = vld [vmem:[#allocation4 + $0x28] sm:$0xff]
        %v448 = vld [vmem:[#allocation4 + $0x30] sm:$0xff]
        %v449 = vld [vmem:[#allocation4 + $0x38] sm:$0xff]
        %v450 = vld [vmem:[#allocation4 + $0x40] sm:$0xff]
        %v451 = vld [vmem:[#allocation4 + $0x48] sm:$0xff]
        %v452 = vld [vmem:[#allocation4 + $0x50] sm:$0xff]
        %v453 = vld [vmem:[#allocation4 + $0x58] sm:$0xff]
        %v454 = vld [vmem:[%s438 + $0x7] sm:$0x3f]
        %v455 = vpack.c.bf16 %v454, %v454
        %s456 = scalar_lea.vmem [#allocation4], 96
        %v457 = vld [vmem:[%s456] sm:$0xff]
        %v458 = vld [vmem:[%s456 + $0x8] sm:$0xff]
        %v459 = vld [vmem:[%s456 + $0x10] sm:$0xff]
        %v460 = vld [vmem:[%s456 + $0x18] sm:$0xff]
        %v461 = vld [vmem:[%s456 + $0x20] sm:$0xff]
        %v462 = vld [vmem:[%s456 + $0x28] sm:$0xff]
        %v463 = vld [vmem:[%s456 + $0x30] sm:$0xff]
        %v464 = vld [vmem:[%s456 + $0x38] sm:$0xff]
        %v465 = vld [vmem:[%s456 + $0x40] sm:$0xff]
        %v466 = vld [vmem:[%s456 + $0x48] sm:$0xff]
        %v467 = vld [vmem:[%s456 + $0x50] sm:$0xff]
        %v468 = vld [vmem:[%s456 + $0x58] sm:$0xff]
        %v481 = vunpack.c.l.b16 %v457
        %v482 = vunpack.c.h.b16 %v457
        %v483 = vunpack.c.l.b16 %v458
        %v484 = vunpack.c.h.b16 %v458
        %v485 = vunpack.c.l.b16 %v459
        %v486 = vunpack.c.h.b16 %v459
        %v487 = vunpack.c.l.b16 %v460
        %v488 = vunpack.c.h.b16 %v460
        %v489 = vunpack.c.l.b16 %v461
        %v490 = vunpack.c.h.b16 %v461
        %v491 = vunpack.c.l.b16 %v462
        %v492 = vunpack.c.h.b16 %v462
        %v493 = vunpack.c.l.b16 %v463
        %v494 = vunpack.c.h.b16 %v463
        %v495 = vunpack.c.l.b16 %v464
        %v496 = vunpack.c.h.b16 %v464
        %v497 = vunpack.c.l.b16 %v465
        %v498 = vunpack.c.h.b16 %v465
        %v499 = vunpack.c.l.b16 %v466
        %v500 = vunpack.c.h.b16 %v466
        %v501 = vunpack.c.l.b16 %v467
        %v502 = vunpack.c.h.b16 %v467
        %v503 = vunpack.c.l.b16 %v468
        %v504 = vunpack.c.h.b16 %v468
        %v505 = vpack.c.b16 %v487, %v481
        %v506 = vpack.c.b16 %v488, %v482
        %v507 = vpack.c.b16 %v489, %v483
        %v508 = vpack.c.b16 %v490, %v484
        %v509 = vpack.c.b16 %v491, %v485
        %v510 = vpack.c.b16 %v492, %v486
        %v511 = vpack.c.b16 %v499, %v493
        %v512 = vpack.c.b16 %v500, %v494
        %v513 = vpack.c.b16 %v501, %v495
        %v514 = vpack.c.b16 %v502, %v496
        %v515 = vpack.c.b16 %v503, %v497
        %v516 = vpack.c.b16 %v504, %v498
        %vm529 = vcmask 261120
        %v531 = vsel %vm529, %v455, 0
        %533 = vmatprep.subr.bf16.mxu0 %v506
        %534 = vmatpush1.bf16.msra.mxu0 %v505
        %535 = vmatprep.subr.bf16.mxu0 %v512
        %536 = vmatpush1.bf16.msra.mxu0 %v511
        %537 = vmatprep.subr.bf16.mxu0 0
        %538 = vmatpush1.bf16.msra.mxu0 0
        %539 = vmatprep.subr.bf16.mxu0 0
        %540 = vmatpush1.bf16.msra.mxu0 0
        %541 = vmatprep.subr.bf16.mxu0 0
        %542 = vmatpush1.bf16.msra.mxu0 0
        %543 = vmatprep.subr.bf16.mxu0 0
        %544 = vmatpush1.bf16.msra.mxu0 0
        %545 = vmatprep.subr.bf16.mxu0 0
        %546 = vmatpush1.bf16.msra.mxu0 0
        %547 = vmatprep.subr.bf16.mxu0 0
        %548 = vmatpush1.bf16.msra.mxu0 0
        %549 = vmatprep.subr.bf16.mxu0 0
        %550 = vmatpush1.bf16.msra.mxu0 0
        %551 = vmatprep.subr.bf16.mxu0 0
        %552 = vmatpush1.bf16.msra.mxu0 0
        %553 = vmatprep.subr.bf16.mxu0 0
        %554 = vmatpush1.bf16.msra.mxu0 0
        %555 = vmatprep.subr.bf16.mxu0 0
        %556 = vmatpush1.bf16.msra.mxu0 0
        %557 = vmatprep.subr.bf16.mxu0 0
        %558 = vmatpush1.bf16.msra.mxu0 0
        %559 = vmatprep.subr.bf16.mxu0 0
        %560 = vmatpush1.bf16.msra.mxu0 0
        %561 = vmatprep.subr.bf16.mxu0 0
        %562 = vmatpush1.bf16.msra.mxu0 0
        %563 = vmatprep.subr.bf16.mxu0 0
        %564 = vmatpush1.bf16.msra.mxu0 0
        %565 = vmatprep.mubr.bf16.mxu0 0
        %566 = vmatmul.mubr.bf16.gmra.mrb[0].mxu0 %v531
        %v567 = vpop.f32.mrb[0].mxu0
        %v568 = vadd.f32 0.0, %v567
        %v569 = vpop.f32.mrb[0].mxu0
        %v570 = vadd.f32 0.0, %v569
        %v571 = vpop.f32.mrb[0].mxu0
        %v572 = vpop.f32.mrb[0].mxu0
        %573 = vdwg.mxu0
        %574 = vmatprep.subr.bf16.mxu0 %v508
        %575 = vmatpush1.bf16.msra.mxu0 %v507
        %576 = vmatprep.subr.bf16.mxu0 %v514
        %577 = vmatpush1.bf16.msra.mxu0 %v513
        %578 = vmatprep.subr.bf16.mxu0 0
        %579 = vmatpush1.bf16.msra.mxu0 0
        %580 = vmatprep.subr.bf16.mxu0 0
        %581 = vmatpush1.bf16.msra.mxu0 0
        %582 = vmatprep.subr.bf16.mxu0 0
        %583 = vmatpush1.bf16.msra.mxu0 0
        %584 = vmatprep.subr.bf16.mxu0 0
        %585 = vmatpush1.bf16.msra.mxu0 0
        %586 = vmatprep.subr.bf16.mxu0 0
        %587 = vmatpush1.bf16.msra.mxu0 0
        %588 = vmatprep.subr.bf16.mxu0 0
        %589 = vmatpush1.bf16.msra.mxu0 0
        %590 = vmatprep.subr.bf16.mxu0 0
        %591 = vmatpush1.bf16.msra.mxu0 0
        %592 = vmatprep.subr.bf16.mxu0 0
        %593 = vmatpush1.bf16.msra.mxu0 0
        %594 = vmatprep.subr.bf16.mxu0 0
        %595 = vmatpush1.bf16.msra.mxu0 0
        %596 = vmatprep.subr.bf16.mxu0 0
        %597 = vmatpush1.bf16.msra.mxu0 0
        %598 = vmatprep.subr.bf16.mxu0 0
        %599 = vmatpush1.bf16.msra.mxu0 0
        %600 = vmatprep.subr.bf16.mxu0 0
        %601 = vmatpush1.bf16.msra.mxu0 0
        %602 = vmatprep.subr.bf16.mxu0 0
        %603 = vmatpush1.bf16.msra.mxu0 0
        %604 = vmatprep.subr.bf16.mxu0 0
        %605 = vmatpush1.bf16.msra.mxu0 0
        %606 = vmatprep.mubr.bf16.mxu0 0
        %607 = vmatmul.mubr.bf16.gmra.mrb[0].mxu0 %v531
        %v608 = vpop.f32.mrb[0].mxu0
        %v609 = vadd.f32 0.0, %v608
        %v610 = vpop.f32.mrb[0].mxu0
        %v611 = vadd.f32 0.0, %v610
        %v612 = vpop.f32.mrb[0].mxu0
        %v613 = vpop.f32.mrb[0].mxu0
        %614 = vdwg.mxu0
        %615 = vmatprep.subr.bf16.mxu0 %v510
        %616 = vmatpush1.bf16.msra.mxu0 %v509
        %617 = vmatprep.subr.bf16.mxu0 %v516
        %618 = vmatpush1.bf16.msra.mxu0 %v515
        %619 = vmatprep.subr.bf16.mxu0 0
        %620 = vmatpush1.bf16.msra.mxu0 0
        %621 = vmatprep.subr.bf16.mxu0 0
        %622 = vmatpush1.bf16.msra.mxu0 0
        %623 = vmatprep.subr.bf16.mxu0 0
        %624 = vmatpush1.bf16.msra.mxu0 0
        %625 = vmatprep.subr.bf16.mxu0 0
        %626 = vmatpush1.bf16.msra.mxu0 0
        %627 = vmatprep.subr.bf16.mxu0 0
        %628 = vmatpush1.bf16.msra.mxu0 0
        %629 = vmatprep.subr.bf16.mxu0 0
        %630 = vmatpush1.bf16.msra.mxu0 0
        %631 = vmatprep.subr.bf16.mxu0 0
        %632 = vmatpush1.bf16.msra.mxu0 0
        %633 = vmatprep.subr.bf16.mxu0 0
        %634 = vmatpush1.bf16.msra.mxu0 0
        %635 = vmatprep.subr.bf16.mxu0 0
        %636 = vmatpush1.bf16.msra.mxu0 0
        %637 = vmatprep.subr.bf16.mxu0 0
        %638 = vmatpush1.bf16.msra.mxu0 0
        %639 = vmatprep.subr.bf16.mxu0 0
        %640 = vmatpush1.bf16.msra.mxu0 0
        %641 = vmatprep.subr.bf16.mxu0 0
        %642 = vmatpush1.bf16.msra.mxu0 0
        %643 = vmatprep.subr.bf16.mxu0 0
        %644 = vmatpush1.bf16.msra.mxu0 0
        %645 = vmatprep.subr.bf16.mxu0 0
        %646 = vmatpush1.bf16.msra.mxu0 0
        %647 = vmatprep.mubr.bf16.mxu0 0
        %648 = vmatmul.mubr.bf16.gmra.mrb[0].mxu0 %v531
        %v649 = vpop.f32.mrb[0].mxu0
        %v650 = vadd.f32 0.0, %v649
        %v651 = vpop.f32.mrb[0].mxu0
        %v652 = vadd.f32 0.0, %v651
        %v653 = vpop.f32.mrb[0].mxu0
        %v654 = vpop.f32.mrb[0].mxu0
        %655 = vdwg.mxu0
        %v668 = vunpack.c.l.b16 %v442
        %v669 = vunpack.c.h.b16 %v442
        %v670 = vunpack.c.l.b16 %v443
        %v671 = vunpack.c.h.b16 %v443
        %v672 = vunpack.c.l.b16 %v444
        %v673 = vunpack.c.h.b16 %v444
        %v674 = vunpack.c.l.b16 %v445
        %v675 = vunpack.c.h.b16 %v445
        %v676 = vunpack.c.l.b16 %v446
        %v677 = vunpack.c.h.b16 %v446
        %v678 = vunpack.c.l.b16 %v447
        %v679 = vunpack.c.h.b16 %v447
        %v680 = vunpack.c.l.b16 %v448
        %v681 = vunpack.c.h.b16 %v448
        %v682 = vunpack.c.l.b16 %v449
        %v683 = vunpack.c.h.b16 %v449
        %v684 = vunpack.c.l.b16 %v450
        %v685 = vunpack.c.h.b16 %v450
        %v686 = vunpack.c.l.b16 %v451
        %v687 = vunpack.c.h.b16 %v451
        %v688 = vunpack.c.l.b16 %v452
        %v689 = vunpack.c.h.b16 %v452
        %v690 = vunpack.c.l.b16 %v453
        %v691 = vunpack.c.h.b16 %v453
        %v692 = vpack.c.b16 %v674, %v668
        %v693 = vpack.c.b16 %v675, %v669
        %v694 = vpack.c.b16 %v676, %v670
        %v695 = vpack.c.b16 %v677, %v671
        %v696 = vpack.c.b16 %v678, %v672
        %v697 = vpack.c.b16 %v679, %v673
        %v698 = vpack.c.b16 %v686, %v680
        %v699 = vpack.c.b16 %v687, %v681
        %v700 = vpack.c.b16 %v688, %v682
        %v701 = vpack.c.b16 %v689, %v683
        %v702 = vpack.c.b16 %v690, %v684
        %v703 = vpack.c.b16 %v691, %v685
        %v717 = vsel %vm529, %v441, 0
        %719 = vmatprep.subr.bf16.mxu0 %v693
        %720 = vmatpush1.bf16.msra.mxu0 %v692
        %721 = vmatprep.subr.bf16.mxu0 %v699
        %722 = vmatpush1.bf16.msra.mxu0 %v698
        %723 = vmatprep.subr.bf16.mxu0 0
        %724 = vmatpush1.bf16.msra.mxu0 0
        %725 = vmatprep.subr.bf16.mxu0 0
        %726 = vmatpush1.bf16.msra.mxu0 0
        %727 = vmatprep.subr.bf16.mxu0 0
        %728 = vmatpush1.bf16.msra.mxu0 0
        %729 = vmatprep.subr.bf16.mxu0 0
        %730 = vmatpush1.bf16.msra.mxu0 0
        %731 = vmatprep.subr.bf16.mxu0 0
        %732 = vmatpush1.bf16.msra.mxu0 0
        %733 = vmatprep.subr.bf16.mxu0 0
        %734 = vmatpush1.bf16.msra.mxu0 0
        %735 = vmatprep.subr.bf16.mxu0 0
        %736 = vmatpush1.bf16.msra.mxu0 0
        %737 = vmatprep.subr.bf16.mxu0 0
        %738 = vmatpush1.bf16.msra.mxu0 0
        %739 = vmatprep.subr.bf16.mxu0 0
        %740 = vmatpush1.bf16.msra.mxu0 0
        %741 = vmatprep.subr.bf16.mxu0 0
        %742 = vmatpush1.bf16.msra.mxu0 0
        %743 = vmatprep.subr.bf16.mxu0 0
        %744 = vmatpush1.bf16.msra.mxu0 0
        %745 = vmatprep.subr.bf16.mxu0 0
        %746 = vmatpush1.bf16.msra.mxu0 0
        %747 = vmatprep.subr.bf16.mxu0 0
        %748 = vmatpush1.bf16.msra.mxu0 0
        %749 = vmatprep.subr.bf16.mxu0 0
        %750 = vmatpush1.bf16.msra.mxu0 0
        %751 = vmatprep.mubr.bf16.mxu0 0
        %752 = vmatmul.mubr.bf16.gmra.mrb[0].mxu0 %v717
        %v753 = vpop.f32.mrb[0].mxu0
        %v754 = vadd.f32 %v568, %v753
        %v755 = vpop.f32.mrb[0].mxu0
        %v756 = vadd.f32 %v570, %v755
        %v757 = vpop.f32.mrb[0].mxu0
        %v758 = vpop.f32.mrb[0].mxu0
        %759 = vdwg.mxu0
        %760 = vmatprep.subr.bf16.mxu0 %v695
        %761 = vmatpush1.bf16.msra.mxu0 %v694
        %762 = vmatprep.subr.bf16.mxu0 %v701
        %763 = vmatpush1.bf16.msra.mxu0 %v700
        %764 = vmatprep.subr.bf16.mxu0 0
        %765 = vmatpush1.bf16.msra.mxu0 0
        %766 = vmatprep.subr.bf16.mxu0 0
        %767 = vmatpush1.bf16.msra.mxu0 0
        %768 = vmatprep.subr.bf16.mxu0 0
        %769 = vmatpush1.bf16.msra.mxu0 0
        %770 = vmatprep.subr.bf16.mxu0 0
        %771 = vmatpush1.bf16.msra.mxu0 0
        %772 = vmatprep.subr.bf16.mxu0 0
        %773 = vmatpush1.bf16.msra.mxu0 0
        %774 = vmatprep.subr.bf16.mxu0 0
        %775 = vmatpush1.bf16.msra.mxu0 0
        %776 = vmatprep.subr.bf16.mxu0 0
        %777 = vmatpush1.bf16.msra.mxu0 0
        %778 = vmatprep.subr.bf16.mxu0 0
        %779 = vmatpush1.bf16.msra.mxu0 0
        %780 = vmatprep.subr.bf16.mxu0 0
        %781 = vmatpush1.bf16.msra.mxu0 0
        %782 = vmatprep.subr.bf16.mxu0 0
        %783 = vmatpush1.bf16.msra.mxu0 0
        %784 = vmatprep.subr.bf16.mxu0 0
        %785 = vmatpush1.bf16.msra.mxu0 0
        %786 = vmatprep.subr.bf16.mxu0 0
        %787 = vmatpush1.bf16.msra.mxu0 0
        %788 = vmatprep.subr.bf16.mxu0 0
        %789 = vmatpush1.bf16.msra.mxu0 0
        %790 = vmatprep.subr.bf16.mxu0 0
        %791 = vmatpush1.bf16.msra.mxu0 0
        %792 = vmatprep.mubr.bf16.mxu0 0
        %793 = vmatmul.mubr.bf16.gmra.mrb[0].mxu0 %v717
        %v794 = vpop.f32.mrb[0].mxu0
        %v795 = vadd.f32 %v609, %v794
        %v796 = vpop.f32.mrb[0].mxu0
        %v797 = vadd.f32 %v611, %v796
        %v798 = vpop.f32.mrb[0].mxu0
        %v799 = vpop.f32.mrb[0].mxu0
        %800 = vdwg.mxu0
        %801 = vmatprep.subr.bf16.mxu0 %v697
        %802 = vmatpush1.bf16.msra.mxu0 %v696
        %803 = vmatprep.subr.bf16.mxu0 %v703
        %804 = vmatpush1.bf16.msra.mxu0 %v702
        %805 = vmatprep.subr.bf16.mxu0 0
        %806 = vmatpush1.bf16.msra.mxu0 0
        %807 = vmatprep.subr.bf16.mxu0 0
        %808 = vmatpush1.bf16.msra.mxu0 0
        %809 = vmatprep.subr.bf16.mxu0 0
        %810 = vmatpush1.bf16.msra.mxu0 0
        %811 = vmatprep.subr.bf16.mxu0 0
        %812 = vmatpush1.bf16.msra.mxu0 0
        %813 = vmatprep.subr.bf16.mxu0 0
        %814 = vmatpush1.bf16.msra.mxu0 0
        %815 = vmatprep.subr.bf16.mxu0 0
        %816 = vmatpush1.bf16.msra.mxu0 0
        %817 = vmatprep.subr.bf16.mxu0 0
        %818 = vmatpush1.bf16.msra.mxu0 0
        %819 = vmatprep.subr.bf16.mxu0 0
        %820 = vmatpush1.bf16.msra.mxu0 0
        %821 = vmatprep.subr.bf16.mxu0 0
        %822 = vmatpush1.bf16.msra.mxu0 0
        %823 = vmatprep.subr.bf16.mxu0 0
        %824 = vmatpush1.bf16.msra.mxu0 0
        %825 = vmatprep.subr.bf16.mxu0 0
        %826 = vmatpush1.bf16.msra.mxu0 0
        %827 = vmatprep.subr.bf16.mxu0 0
        %828 = vmatpush1.bf16.msra.mxu0 0
        %829 = vmatprep.subr.bf16.mxu0 0
        %830 = vmatpush1.bf16.msra.mxu0 0
        %831 = vmatprep.subr.bf16.mxu0 0
        %832 = vmatpush1.bf16.msra.mxu0 0
        %833 = vmatprep.mubr.bf16.mxu0 0
        %834 = vmatmul.mubr.bf16.gmra.mrb[0].mxu0 %v717
        %v835 = vpop.f32.mrb[0].mxu0
        %v836 = vadd.f32 %v650, %v835
        %v837 = vpop.f32.mrb[0].mxu0
        %v838 = vadd.f32 %v652, %v837
        %v839 = vpop.f32.mrb[0].mxu0
        %v840 = vpop.f32.mrb[0].mxu0
        %841 = vdwg.mxu0
        %v842 = vld [vmem:[%s438 + $0xe] sm:$0x3f]
        %v843 = vpack.c.bf16 %v842, %v842
        %s844 = scalar_lea.vmem [#allocation4], 192
        %v845 = vld [vmem:[%s844] sm:$0xff]
        %v846 = vld [vmem:[%s844 + $0x8] sm:$0xff]
        %v847 = vld [vmem:[%s844 + $0x10] sm:$0xff]
        %v848 = vld [vmem:[%s844 + $0x18] sm:$0xff]
        %v849 = vld [vmem:[%s844 + $0x20] sm:$0xff]
        %v850 = vld [vmem:[%s844 + $0x28] sm:$0xff]
        %v851 = vld [vmem:[%s844 + $0x30] sm:$0xff]
        %v852 = vld [vmem:[%s844 + $0x38] sm:$0xff]
        %v853 = vld [vmem:[%s844 + $0x40] sm:$0xff]
        %v854 = vld [vmem:[%s844 + $0x48] sm:$0xff]
        %v855 = vld [vmem:[%s844 + $0x50] sm:$0xff]
        %v856 = vld [vmem:[%s844 + $0x58] sm:$0xff]
        %v869 = vunpack.c.l.b16 %v845
        %v870 = vunpack.c.h.b16 %v845
        %v871 = vunpack.c.l.b16 %v846
        %v872 = vunpack.c.h.b16 %v846
        %v873 = vunpack.c.l.b16 %v847
        %v874 = vunpack.c.h.b16 %v847
        %v875 = vunpack.c.l.b16 %v848
        %v876 = vunpack.c.h.b16 %v848
        %v877 = vunpack.c.l.b16 %v849
        %v878 = vunpack.c.h.b16 %v849
        %v879 = vunpack.c.l.b16 %v850
        %v880 = vunpack.c.h.b16 %v850
        %v881 = vunpack.c.l.b16 %v851
        %v882 = vunpack.c.h.b16 %v851
        %v883 = vunpack.c.l.b16 %v852
        %v884 = vunpack.c.h.b16 %v852
        %v885 = vunpack.c.l.b16 %v853
        %v886 = vunpack.c.h.b16 %v853
        %v887 = vunpack.c.l.b16 %v854
        %v888 = vunpack.c.h.b16 %v854
        %v889 = vunpack.c.l.b16 %v855
        %v890 = vunpack.c.h.b16 %v855
        %v891 = vunpack.c.l.b16 %v856
        %v892 = vunpack.c.h.b16 %v856
        %v893 = vpack.c.b16 %v875, %v869
        %v894 = vpack.c.b16 %v876, %v870
        %v895 = vpack.c.b16 %v877, %v871
        %v896 = vpack.c.b16 %v878, %v872
        %v897 = vpack.c.b16 %v879, %v873
        %v898 = vpack.c.b16 %v880, %v874
        %v899 = vpack.c.b16 %v887, %v881
        %v900 = vpack.c.b16 %v888, %v882
        %v901 = vpack.c.b16 %v889, %v883
        %v902 = vpack.c.b16 %v890, %v884
        %v903 = vpack.c.b16 %v891, %v885
        %v904 = vpack.c.b16 %v892, %v886
        %v918 = vsel %vm529, %v843, 0
        %920 = vmatprep.subr.bf16.mxu0 %v894
        %921 = vmatpush1.bf16.msra.mxu0 %v893
        %922 = vmatprep.subr.bf16.mxu0 %v900
        %923 = vmatpush1.bf16.msra.mxu0 %v899
        %924 = vmatprep.subr.bf16.mxu0 0
        %925 = vmatpush1.bf16.msra.mxu0 0
        %926 = vmatprep.subr.bf16.mxu0 0
        %927 = vmatpush1.bf16.msra.mxu0 0
        %928 = vmatprep.subr.bf16.mxu0 0
        %929 = vmatpush1.bf16.msra.mxu0 0
        %930 = vmatprep.subr.bf16.mxu0 0
        %931 = vmatpush1.bf16.msra.mxu0 0
        %932 = vmatprep.subr.bf16.mxu0 0
        %933 = vmatpush1.bf16.msra.mxu0 0
        %934 = vmatprep.subr.bf16.mxu0 0
        %935 = vmatpush1.bf16.msra.mxu0 0
        %936 = vmatprep.subr.bf16.mxu0 0
        %937 = vmatpush1.bf16.msra.mxu0 0
        %938 = vmatprep.subr.bf16.mxu0 0
        %939 = vmatpush1.bf16.msra.mxu0 0
        %940 = vmatprep.subr.bf16.mxu0 0
        %941 = vmatpush1.bf16.msra.mxu0 0
        %942 = vmatprep.subr.bf16.mxu0 0
        %943 = vmatpush1.bf16.msra.mxu0 0
        %944 = vmatprep.subr.bf16.mxu0 0
        %945 = vmatpush1.bf16.msra.mxu0 0
        %946 = vmatprep.subr.bf16.mxu0 0
        %947 = vmatpush1.bf16.msra.mxu0 0
        %948 = vmatprep.subr.bf16.mxu0 0
        %949 = vmatpush1.bf16.msra.mxu0 0
        %950 = vmatprep.subr.bf16.mxu0 0
        %951 = vmatpush1.bf16.msra.mxu0 0
        %952 = vmatprep.mubr.bf16.mxu0 0
        %953 = vmatmul.mubr.bf16.gmra.mrb[0].mxu0 %v918
        %v954 = vpop.f32.mrb[0].mxu0
        %v955 = vadd.f32 0.0, %v954
        %v956 = vpop.f32.mrb[0].mxu0
        %v957 = vadd.f32 0.0, %v956
        %v958 = vpop.f32.mrb[0].mxu0
        %v959 = vpop.f32.mrb[0].mxu0
        %960 = vdwg.mxu0
        %961 = vmatprep.subr.bf16.mxu0 %v896
        %962 = vmatpush1.bf16.msra.mxu0 %v895
        %963 = vmatprep.subr.bf16.mxu0 %v902
        %964 = vmatpush1.bf16.msra.mxu0 %v901
        %965 = vmatprep.subr.bf16.mxu0 0
        %966 = vmatpush1.bf16.msra.mxu0 0
        %967 = vmatprep.subr.bf16.mxu0 0
        %968 = vmatpush1.bf16.msra.mxu0 0
        %969 = vmatprep.subr.bf16.mxu0 0
        %970 = vmatpush1.bf16.msra.mxu0 0
        %971 = vmatprep.subr.bf16.mxu0 0
        %972 = vmatpush1.bf16.msra.mxu0 0
        %973 = vmatprep.subr.bf16.mxu0 0
        %974 = vmatpush1.bf16.msra.mxu0 0
        %975 = vmatprep.subr.bf16.mxu0 0
        %976 = vmatpush1.bf16.msra.mxu0 0
        %977 = vmatprep.subr.bf16.mxu0 0
        %978 = vmatpush1.bf16.msra.mxu0 0
        %979 = vmatprep.subr.bf16.mxu0 0
        %980 = vmatpush1.bf16.msra.mxu0 0
        %981 = vmatprep.subr.bf16.mxu0 0
        %982 = vmatpush1.bf16.msra.mxu0 0
        %983 = vmatprep.subr.bf16.mxu0 0
        %984 = vmatpush1.bf16.msra.mxu0 0
        %985 = vmatprep.subr.bf16.mxu0 0
        %986 = vmatpush1.bf16.msra.mxu0 0
        %987 = vmatprep.subr.bf16.mxu0 0
        %988 = vmatpush1.bf16.msra.mxu0 0
        %989 = vmatprep.subr.bf16.mxu0 0
        %990 = vmatpush1.bf16.msra.mxu0 0
        %991 = vmatprep.subr.bf16.mxu0 0
        %992 = vmatpush1.bf16.msra.mxu0 0
        %993 = vmatprep.mubr.bf16.mxu0 0
        %994 = vmatmul.mubr.bf16.gmra.mrb[0].mxu0 %v918
        %v995 = vpop.f32.mrb[0].mxu0
        %v996 = vadd.f32 0.0, %v995
        %v997 = vpop.f32.mrb[0].mxu0
        %v998 = vadd.f32 0.0, %v997
        %v999 = vpop.f32.mrb[0].mxu0
        %v1000 = vpop.f32.mrb[0].mxu0
        %1001 = vdwg.mxu0
        %1002 = vmatprep.subr.bf16.mxu0 %v898
        %1003 = vmatpush1.bf16.msra.mxu0 %v897
        %1004 = vmatprep.subr.bf16.mxu0 %v904
        %1005 = vmatpush1.bf16.msra.mxu0 %v903
        %1006 = vmatprep.subr.bf16.mxu0 0
        %1007 = vmatpush1.bf16.msra.mxu0 0
        %1008 = vmatprep.subr.bf16.mxu0 0
        %1009 = vmatpush1.bf16.msra.mxu0 0
        %1010 = vmatprep.subr.bf16.mxu0 0
        %1011 = vmatpush1.bf16.msra.mxu0 0
        %1012 = vmatprep.subr.bf16.mxu0 0
        %1013 = vmatpush1.bf16.msra.mxu0 0
        %1014 = vmatprep.subr.bf16.mxu0 0
        %1015 = vmatpush1.bf16.msra.mxu0 0
        %1016 = vmatprep.subr.bf16.mxu0 0
        %1017 = vmatpush1.bf16.msra.mxu0 0
        %1018 = vmatprep.subr.bf16.mxu0 0
        %1019 = vmatpush1.bf16.msra.mxu0 0
        %1020 = vmatprep.subr.bf16.mxu0 0
        %1021 = vmatpush1.bf16.msra.mxu0 0
        %1022 = vmatprep.subr.bf16.mxu0 0
        %1023 = vmatpush1.bf16.msra.mxu0 0
        %1024 = vmatprep.subr.bf16.mxu0 0
        %1025 = vmatpush1.bf16.msra.mxu0 0
        %1026 = vmatprep.subr.bf16.mxu0 0
        %1027 = vmatpush1.bf16.msra.mxu0 0
        %1028 = vmatprep.subr.bf16.mxu0 0
        %1029 = vmatpush1.bf16.msra.mxu0 0
        %1030 = vmatprep.subr.bf16.mxu0 0
        %1031 = vmatpush1.bf16.msra.mxu0 0
        %1032 = vmatprep.subr.bf16.mxu0 0
        %1033 = vmatpush1.bf16.msra.mxu0 0
        %1034 = vmatprep.mubr.bf16.mxu0 0
        %1035 = vmatmul.mubr.bf16.gmra.mrb[0].mxu0 %v918
        %v1036 = vpop.f32.mrb[0].mxu0
        %v1037 = vadd.f32 0.0, %v1036
        %v1038 = vpop.f32.mrb[0].mxu0
        %v1039 = vadd.f32 0.0, %v1038
        %v1040 = vpop.f32.mrb[0].mxu0
        %v1041 = vpop.f32.mrb[0].mxu0
        %1042 = vdwg.mxu0
        %v1043 = vadd.f32 %v754, %v955
        %v1044 = vadd.f32 %v756, %v957
        %v1045 = vadd.f32 %v795, %v996
        %v1046 = vadd.f32 %v797, %v998
        %v1047 = vadd.f32 %v836, %v1037
        %v1048 = vadd.f32 %v838, %v1039
        %v1049 = vld [vmem:[%s438 + $0x15] sm:$0x3f]
        %v1050 = vpack.c.bf16 %v1049, %v1049
        %s1051 = scalar_lea.vmem [#allocation4], 288
        %v1052 = vld [vmem:[%s1051] sm:$0xff]
        %v1053 = vld [vmem:[%s1051 + $0x8] sm:$0xff]
        %v1054 = vld [vmem:[%s1051 + $0x10] sm:$0xff]
        %v1055 = vld [vmem:[%s1051 + $0x18] sm:$0xff]
        %v1056 = vld [vmem:[%s1051 + $0x20] sm:$0xff]
        %v1057 = vld [vmem:[%s1051 + $0x28] sm:$0xff]
        %v1058 = vld [vmem:[%s1051 + $0x30] sm:$0xff]
        %v1059 = vld [vmem:[%s1051 + $0x38] sm:$0xff]
        %v1060 = vld [vmem:[%s1051 + $0x40] sm:$0xff]
        %v1061 = vld [vmem:[%s1051 + $0x48] sm:$0xff]
        %v1062 = vld [vmem:[%s1051 + $0x50] sm:$0xff]
        %v1063 = vld [vmem:[%s1051 + $0x58] sm:$0xff]
        %v1076 = vunpack.c.l.b16 %v1052
        %v1077 = vunpack.c.h.b16 %v1052
        %v1078 = vunpack.c.l.b16 %v1053
        %v1079 = vunpack.c.h.b16 %v1053
        %v1080 = vunpack.c.l.b16 %v1054
        %v1081 = vunpack.c.h.b16 %v1054
        %v1082 = vunpack.c.l.b16 %v1055
        %v1083 = vunpack.c.h.b16 %v1055
        %v1084 = vunpack.c.l.b16 %v1056
        %v1085 = vunpack.c.h.b16 %v1056
        %v1086 = vunpack.c.l.b16 %v1057
        %v1087 = vunpack.c.h.b16 %v1057
        %v1088 = vunpack.c.l.b16 %v1058
        %v1089 = vunpack.c.h.b16 %v1058
        %v1090 = vunpack.c.l.b16 %v1059
        %v1091 = vunpack.c.h.b16 %v1059
        %v1092 = vunpack.c.l.b16 %v1060
        %v1093 = vunpack.c.h.b16 %v1060
        %v1094 = vunpack.c.l.b16 %v1061
        %v1095 = vunpack.c.h.b16 %v1061
        %v1096 = vunpack.c.l.b16 %v1062
        %v1097 = vunpack.c.h.b16 %v1062
        %v1098 = vunpack.c.l.b16 %v1063
        %v1099 = vunpack.c.h.b16 %v1063
        %v1100 = vpack.c.b16 %v1082, %v1076
        %v1101 = vpack.c.b16 %v1083, %v1077
        %v1102 = vpack.c.b16 %v1084, %v1078
        %v1103 = vpack.c.b16 %v1085, %v1079
        %v1104 = vpack.c.b16 %v1086, %v1080
        %v1105 = vpack.c.b16 %v1087, %v1081
        %v1106 = vpack.c.b16 %v1094, %v1088
        %v1107 = vpack.c.b16 %v1095, %v1089
        %v1108 = vpack.c.b16 %v1096, %v1090
        %v1109 = vpack.c.b16 %v1097, %v1091
        %v1110 = vpack.c.b16 %v1098, %v1092
        %v1111 = vpack.c.b16 %v1099, %v1093
        %v1125 = vsel %vm529, %v1050, 0
        %1127 = vmatprep.subr.bf16.mxu0 %v1101
        %1128 = vmatpush1.bf16.msra.mxu0 %v1100
        %1129 = vmatprep.subr.bf16.mxu0 %v1107
        %1130 = vmatpush1.bf16.msra.mxu0 %v1106
        %1131 = vmatprep.subr.bf16.mxu0 0
        %1132 = vmatpush1.bf16.msra.mxu0 0
        %1133 = vmatprep.subr.bf16.mxu0 0
        %1134 = vmatpush1.bf16.msra.mxu0 0
        %1135 = vmatprep.subr.bf16.mxu0 0
        %1136 = vmatpush1.bf16.msra.mxu0 0
        %1137 = vmatprep.subr.bf16.mxu0 0
        %1138 = vmatpush1.bf16.msra.mxu0 0
        %1139 = vmatprep.subr.bf16.mxu0 0
        %1140 = vmatpush1.bf16.msra.mxu0 0
        %1141 = vmatprep.subr.bf16.mxu0 0
        %1142 = vmatpush1.bf16.msra.mxu0 0
        %1143 = vmatprep.subr.bf16.mxu0 0
        %1144 = vmatpush1.bf16.msra.mxu0 0
        %1145 = vmatprep.subr.bf16.mxu0 0
        %1146 = vmatpush1.bf16.msra.mxu0 0
        %1147 = vmatprep.subr.bf16.mxu0 0
        %1148 = vmatpush1.bf16.msra.mxu0 0
        %1149 = vmatprep.subr.bf16.mxu0 0
        %1150 = vmatpush1.bf16.msra.mxu0 0
        %1151 = vmatprep.subr.bf16.mxu0 0
        %1152 = vmatpush1.bf16.msra.mxu0 0
        %1153 = vmatprep.subr.bf16.mxu0 0
        %1154 = vmatpush1.bf16.msra.mxu0 0
        %1155 = vmatprep.subr.bf16.mxu0 0
        %1156 = vmatpush1.bf16.msra.mxu0 0
        %1157 = vmatprep.subr.bf16.mxu0 0
        %1158 = vmatpush1.bf16.msra.mxu0 0
        %1159 = vmatprep.mubr.bf16.mxu0 0
        %1160 = vmatmul.mubr.bf16.gmra.mrb[0].mxu0 %v1125
        %v1161 = vpop.f32.mrb[0].mxu0
        %v1162 = vadd.f32 0.0, %v1161
        %v1163 = vpop.f32.mrb[0].mxu0
        %v1164 = vadd.f32 0.0, %v1163
        %v1165 = vpop.f32.mrb[0].mxu0
        %v1166 = vpop.f32.mrb[0].mxu0
        %1167 = vdwg.mxu0
        %1168 = vmatprep.subr.bf16.mxu0 %v1103
        %1169 = vmatpush1.bf16.msra.mxu0 %v1102
        %1170 = vmatprep.subr.bf16.mxu0 %v1109
        %1171 = vmatpush1.bf16.msra.mxu0 %v1108
        %1172 = vmatprep.subr.bf16.mxu0 0
        %1173 = vmatpush1.bf16.msra.mxu0 0
        %1174 = vmatprep.subr.bf16.mxu0 0
        %1175 = vmatpush1.bf16.msra.mxu0 0
        %1176 = vmatprep.subr.bf16.mxu0 0
        %1177 = vmatpush1.bf16.msra.mxu0 0
        %1178 = vmatprep.subr.bf16.mxu0 0
        %1179 = vmatpush1.bf16.msra.mxu0 0
        %1180 = vmatprep.subr.bf16.mxu0 0
        %1181 = vmatpush1.bf16.msra.mxu0 0
        %1182 = vmatprep.subr.bf16.mxu0 0
        %1183 = vmatpush1.bf16.msra.mxu0 0
        %1184 = vmatprep.subr.bf16.mxu0 0
        %1185 = vmatpush1.bf16.msra.mxu0 0
        %1186 = vmatprep.subr.bf16.mxu0 0
        %1187 = vmatpush1.bf16.msra.mxu0 0
        %1188 = vmatprep.subr.bf16.mxu0 0
        %1189 = vmatpush1.bf16.msra.mxu0 0
        %1190 = vmatprep.subr.bf16.mxu0 0
        %1191 = vmatpush1.bf16.msra.mxu0 0
        %1192 = vmatprep.subr.bf16.mxu0 0
        %1193 = vmatpush1.bf16.msra.mxu0 0
        %1194 = vmatprep.subr.bf16.mxu0 0
        %1195 = vmatpush1.bf16.msra.mxu0 0
        %1196 = vmatprep.subr.bf16.mxu0 0
        %1197 = vmatpush1.bf16.msra.mxu0 0
        %1198 = vmatprep.subr.bf16.mxu0 0
        %1199 = vmatpush1.bf16.msra.mxu0 0
        %1200 = vmatprep.mubr.bf16.mxu0 0
        %1201 = vmatmul.mubr.bf16.gmra.mrb[0].mxu0 %v1125
        %v1202 = vpop.f32.mrb[0].mxu0
        %v1203 = vadd.f32 0.0, %v1202
        %v1204 = vpop.f32.mrb[0].mxu0
        %v1205 = vadd.f32 0.0, %v1204
        %v1206 = vpop.f32.mrb[0].mxu0
        %v1207 = vpop.f32.mrb[0].mxu0
        %1208 = vdwg.mxu0
        %1209 = vmatprep.subr.bf16.mxu0 %v1105
        %1210 = vmatpush1.bf16.msra.mxu0 %v1104
        %1211 = vmatprep.subr.bf16.mxu0 %v1111
        %1212 = vmatpush1.bf16.msra.mxu0 %v1110
        %1213 = vmatprep.subr.bf16.mxu0 0
        %1214 = vmatpush1.bf16.msra.mxu0 0
        %1215 = vmatprep.subr.bf16.mxu0 0
        %1216 = vmatpush1.bf16.msra.mxu0 0
        %1217 = vmatprep.subr.bf16.mxu0 0
        %1218 = vmatpush1.bf16.msra.mxu0 0
        %1219 = vmatprep.subr.bf16.mxu0 0
        %1220 = vmatpush1.bf16.msra.mxu0 0
        %1221 = vmatprep.subr.bf16.mxu0 0
        %1222 = vmatpush1.bf16.msra.mxu0 0
        %1223 = vmatprep.subr.bf16.mxu0 0
        %1224 = vmatpush1.bf16.msra.mxu0 0
        %1225 = vmatprep.subr.bf16.mxu0 0
        %1226 = vmatpush1.bf16.msra.mxu0 0
        %1227 = vmatprep.subr.bf16.mxu0 0
        %1228 = vmatpush1.bf16.msra.mxu0 0
        %1229 = vmatprep.subr.bf16.mxu0 0
        %1230 = vmatpush1.bf16.msra.mxu0 0
        %1231 = vmatprep.subr.bf16.mxu0 0
        %1232 = vmatpush1.bf16.msra.mxu0 0
        %1233 = vmatprep.subr.bf16.mxu0 0
        %1234 = vmatpush1.bf16.msra.mxu0 0
        %1235 = vmatprep.subr.bf16.mxu0 0
        %1236 = vmatpush1.bf16.msra.mxu0 0
        %1237 = vmatprep.subr.bf16.mxu0 0
        %1238 = vmatpush1.bf16.msra.mxu0 0
        %1239 = vmatprep.subr.bf16.mxu0 0
        %1240 = vmatpush1.bf16.msra.mxu0 0
        %1241 = vmatprep.mubr.bf16.mxu0 0
        %1242 = vmatmul.mubr.bf16.gmra.mrb[0].mxu0 %v1125
        %v1243 = vpop.f32.mrb[0].mxu0
        %v1244 = vadd.f32 0.0, %v1243
        %v1245 = vpop.f32.mrb[0].mxu0
        %v1246 = vadd.f32 0.0, %v1245
        %v1247 = vpop.f32.mrb[0].mxu0
        %v1248 = vpop.f32.mrb[0].mxu0
        %1249 = vdwg.mxu0
        %v1250 = vadd.f32 %v1043, %v1162
        %v1251 = vadd.f32 %v1044, %v1164
        %v1252 = vadd.f32 %v1045, %v1203
        %v1253 = vadd.f32 %v1046, %v1205
        %v1254 = vadd.f32 %v1047, %v1244
        %v1255 = vadd.f32 %v1048, %v1246
        %v1256 = vld [vmem:[%s438 + $0x1] sm:$0x3f]
        %v1257 = vpack.c.bf16 %v1256, %v1256
        %s1258 = scalar_lea.vmem [#allocation4], 384
        %v1259 = vld [vmem:[%s1258] sm:$0xff]
        %v1260 = vld [vmem:[%s1258 + $0x8] sm:$0xff]
        %v1261 = vld [vmem:[%s1258 + $0x10] sm:$0xff]
        %v1262 = vld [vmem:[%s1258 + $0x18] sm:$0xff]
        %v1263 = vld [vmem:[%s1258 + $0x20] sm:$0xff]
        %v1264 = vld [vmem:[%s1258 + $0x28] sm:$0xff]
        %v1265 = vld [vmem:[%s1258 + $0x30] sm:$0xff]
        %v1266 = vld [vmem:[%s1258 + $0x38] sm:$0xff]
        %v1267 = vld [vmem:[%s1258 + $0x40] sm:$0xff]
        %v1268 = vld [vmem:[%s1258 + $0x48] sm:$0xff]
        %v1269 = vld [vmem:[%s1258 + $0x50] sm:$0xff]
        %v1270 = vld [vmem:[%s1258 + $0x58] sm:$0xff]
        %v1283 = vunpack.c.l.b16 %v1259
        %v1284 = vunpack.c.h.b16 %v1259
        %v1285 = vunpack.c.l.b16 %v1260
        %v1286 = vunpack.c.h.b16 %v1260
        %v1287 = vunpack.c.l.b16 %v1261
        %v1288 = vunpack.c.h.b16 %v1261
        %v1289 = vunpack.c.l.b16 %v1262
        %v1290 = vunpack.c.h.b16 %v1262
        %v1291 = vunpack.c.l.b16 %v1263
        %v1292 = vunpack.c.h.b16 %v1263
        %v1293 = vunpack.c.l.b16 %v1264
        %v1294 = vunpack.c.h.b16 %v1264
        %v1295 = vunpack.c.l.b16 %v1265
        %v1296 = vunpack.c.h.b16 %v1265
        %v1297 = vunpack.c.l.b16 %v1266
        %v1298 = vunpack.c.h.b16 %v1266
        %v1299 = vunpack.c.l.b16 %v1267
        %v1300 = vunpack.c.h.b16 %v1267
        %v1301 = vunpack.c.l.b16 %v1268
        %v1302 = vunpack.c.h.b16 %v1268
        %v1303 = vunpack.c.l.b16 %v1269
        %v1304 = vunpack.c.h.b16 %v1269
        %v1305 = vunpack.c.l.b16 %v1270
        %v1306 = vunpack.c.h.b16 %v1270
        %v1307 = vpack.c.b16 %v1289, %v1283
        %v1308 = vpack.c.b16 %v1290, %v1284
        %v1309 = vpack.c.b16 %v1291, %v1285
        %v1310 = vpack.c.b16 %v1292, %v1286
        %v1311 = vpack.c.b16 %v1293, %v1287
        %v1312 = vpack.c.b16 %v1294, %v1288
        %v1313 = vpack.c.b16 %v1301, %v1295
        %v1314 = vpack.c.b16 %v1302, %v1296
        %v1315 = vpack.c.b16 %v1303, %v1297
        %v1316 = vpack.c.b16 %v1304, %v1298
        %v1317 = vpack.c.b16 %v1305, %v1299
        %v1318 = vpack.c.b16 %v1306, %v1300
        %v1332 = vsel %vm529, %v1257, 0
        %1334 = vmatprep.subr.bf16.mxu0 %v1308
        %1335 = vmatpush1.bf16.msra.mxu0 %v1307
        %1336 = vmatprep.subr.bf16.mxu0 %v1314
        %1337 = vmatpush1.bf16.msra.mxu0 %v1313
        %1338 = vmatprep.subr.bf16.mxu0 0
        %1339 = vmatpush1.bf16.msra.mxu0 0
        %1340 = vmatprep.subr.bf16.mxu0 0
        %1341 = vmatpush1.bf16.msra.mxu0 0
        %1342 = vmatprep.subr.bf16.mxu0 0
        %1343 = vmatpush1.bf16.msra.mxu0 0
        %1344 = vmatprep.subr.bf16.mxu0 0
        %1345 = vmatpush1.bf16.msra.mxu0 0
        %1346 = vmatprep.subr.bf16.mxu0 0
        %1347 = vmatpush1.bf16.msra.mxu0 0
        %1348 = vmatprep.subr.bf16.mxu0 0
        %1349 = vmatpush1.bf16.msra.mxu0 0
        %1350 = vmatprep.subr.bf16.mxu0 0
        %1351 = vmatpush1.bf16.msra.mxu0 0
        %1352 = vmatprep.subr.bf16.mxu0 0
        %1353 = vmatpush1.bf16.msra.mxu0 0
        %1354 = vmatprep.subr.bf16.mxu0 0
        %1355 = vmatpush1.bf16.msra.mxu0 0
        %1356 = vmatprep.subr.bf16.mxu0 0
        %1357 = vmatpush1.bf16.msra.mxu0 0
        %1358 = vmatprep.subr.bf16.mxu0 0
        %1359 = vmatpush1.bf16.msra.mxu0 0
        %1360 = vmatprep.subr.bf16.mxu0 0
        %1361 = vmatpush1.bf16.msra.mxu0 0
        %1362 = vmatprep.subr.bf16.mxu0 0
        %1363 = vmatpush1.bf16.msra.mxu0 0
        %1364 = vmatprep.subr.bf16.mxu0 0
        %1365 = vmatpush1.bf16.msra.mxu0 0
        %1366 = vmatprep.mubr.bf16.mxu0 0
        %1367 = vmatmul.mubr.bf16.gmra.mrb[0].mxu0 %v1332
        %v1368 = vpop.f32.mrb[0].mxu0
        %v1369 = vadd.f32 0.0, %v1368
        %v1370 = vpop.f32.mrb[0].mxu0
        %v1371 = vadd.f32 0.0, %v1370
        %v1372 = vpop.f32.mrb[0].mxu0
        %v1373 = vpop.f32.mrb[0].mxu0
        %1374 = vdwg.mxu0
        %1375 = vmatprep.subr.bf16.mxu0 %v1310
        %1376 = vmatpush1.bf16.msra.mxu0 %v1309
        %1377 = vmatprep.subr.bf16.mxu0 %v1316
        %1378 = vmatpush1.bf16.msra.mxu0 %v1315
        %1379 = vmatprep.subr.bf16.mxu0 0
        %1380 = vmatpush1.bf16.msra.mxu0 0
        %1381 = vmatprep.subr.bf16.mxu0 0
        %1382 = vmatpush1.bf16.msra.mxu0 0
        %1383 = vmatprep.subr.bf16.mxu0 0
        %1384 = vmatpush1.bf16.msra.mxu0 0
        %1385 = vmatprep.subr.bf16.mxu0 0
        %1386 = vmatpush1.bf16.msra.mxu0 0
        %1387 = vmatprep.subr.bf16.mxu0 0
        %1388 = vmatpush1.bf16.msra.mxu0 0
        %1389 = vmatprep.subr.bf16.mxu0 0
        %1390 = vmatpush1.bf16.msra.mxu0 0
        %1391 = vmatprep.subr.bf16.mxu0 0
        %1392 = vmatpush1.bf16.msra.mxu0 0
        %1393 = vmatprep.subr.bf16.mxu0 0
        %1394 = vmatpush1.bf16.msra.mxu0 0
        %1395 = vmatprep.subr.bf16.mxu0 0
        %1396 = vmatpush1.bf16.msra.mxu0 0
        %1397 = vmatprep.subr.bf16.mxu0 0
        %1398 = vmatpush1.bf16.msra.mxu0 0
        %1399 = vmatprep.subr.bf16.mxu0 0
        %1400 = vmatpush1.bf16.msra.mxu0 0
        %1401 = vmatprep.subr.bf16.mxu0 0
        %1402 = vmatpush1.bf16.msra.mxu0 0
        %1403 = vmatprep.subr.bf16.mxu0 0
        %1404 = vmatpush1.bf16.msra.mxu0 0
        %1405 = vmatprep.subr.bf16.mxu0 0
        %1406 = vmatpush1.bf16.msra.mxu0 0
        %1407 = vmatprep.mubr.bf16.mxu0 0
        %1408 = vmatmul.mubr.bf16.gmra.mrb[0].mxu0 %v1332
        %v1409 = vpop.f32.mrb[0].mxu0
        %v1410 = vadd.f32 0.0, %v1409
        %v1411 = vpop.f32.mrb[0].mxu0
        %v1412 = vadd.f32 0.0, %v1411
        %v1413 = vpop.f32.mrb[0].mxu0
        %v1414 = vpop.f32.mrb[0].mxu0
        %1415 = vdwg.mxu0
        %1416 = vmatprep.subr.bf16.mxu0 %v1312
        %1417 = vmatpush1.bf16.msra.mxu0 %v1311
        %1418 = vmatprep.subr.bf16.mxu0 %v1318
        %1419 = vmatpush1.bf16.msra.mxu0 %v1317
        %1420 = vmatprep.subr.bf16.mxu0 0
        %1421 = vmatpush1.bf16.msra.mxu0 0
        %1422 = vmatprep.subr.bf16.mxu0 0
        %1423 = vmatpush1.bf16.msra.mxu0 0
        %1424 = vmatprep.subr.bf16.mxu0 0
        %1425 = vmatpush1.bf16.msra.mxu0 0
        %1426 = vmatprep.subr.bf16.mxu0 0
        %1427 = vmatpush1.bf16.msra.mxu0 0
        %1428 = vmatprep.subr.bf16.mxu0 0
        %1429 = vmatpush1.bf16.msra.mxu0 0
        %1430 = vmatprep.subr.bf16.mxu0 0
        %1431 = vmatpush1.bf16.msra.mxu0 0
        %1432 = vmatprep.subr.bf16.mxu0 0
        %1433 = vmatpush1.bf16.msra.mxu0 0
        %1434 = vmatprep.subr.bf16.mxu0 0
        %1435 = vmatpush1.bf16.msra.mxu0 0
        %1436 = vmatprep.subr.bf16.mxu0 0
        %1437 = vmatpush1.bf16.msra.mxu0 0
        %1438 = vmatprep.subr.bf16.mxu0 0
        %1439 = vmatpush1.bf16.msra.mxu0 0
        %1440 = vmatprep.subr.bf16.mxu0 0
        %1441 = vmatpush1.bf16.msra.mxu0 0
        %1442 = vmatprep.subr.bf16.mxu0 0
        %1443 = vmatpush1.bf16.msra.mxu0 0
        %1444 = vmatprep.subr.bf16.mxu0 0
        %1445 = vmatpush1.bf16.msra.mxu0 0
        %1446 = vmatprep.subr.bf16.mxu0 0
        %1447 = vmatpush1.bf16.msra.mxu0 0
        %1448 = vmatprep.mubr.bf16.mxu0 0
        %1449 = vmatmul.mubr.bf16.gmra.mrb[0].mxu0 %v1332
        %v1450 = vpop.f32.mrb[0].mxu0
        %v1451 = vadd.f32 0.0, %v1450
        %v1452 = vpop.f32.mrb[0].mxu0
        %v1453 = vadd.f32 0.0, %v1452
        %v1454 = vpop.f32.mrb[0].mxu0
        %v1455 = vpop.f32.mrb[0].mxu0
        %1456 = vdwg.mxu0
        %v1457 = vadd.f32 %v1250, %v1369
        %v1458 = vadd.f32 %v1251, %v1371
        %v1459 = vadd.f32 %v1252, %v1410
        %v1460 = vadd.f32 %v1253, %v1412
        %v1461 = vadd.f32 %v1254, %v1451
        %v1462 = vadd.f32 %v1255, %v1453
        %1463 = vmatprep.subr.bf16.mxu0 %v506
        %1464 = vmatpush1.bf16.msra.mxu0 %v505
        %1465 = vmatprep.subr.bf16.mxu0 %v512
        %1466 = vmatpush1.bf16.msra.mxu0 %v511
        %1467 = vmatprep.subr.bf16.mxu0 0
        %1468 = vmatpush1.bf16.msra.mxu0 0
        %1469 = vmatprep.subr.bf16.mxu0 0
        %1470 = vmatpush1.bf16.msra.mxu0 0
        %1471 = vmatprep.subr.bf16.mxu0 0
        %1472 = vmatpush1.bf16.msra.mxu0 0
        %1473 = vmatprep.subr.bf16.mxu0 0
        %1474 = vmatpush1.bf16.msra.mxu0 0
        %1475 = vmatprep.subr.bf16.mxu0 0
        %1476 = vmatpush1.bf16.msra.mxu0 0
        %1477 = vmatprep.subr.bf16.mxu0 0
        %1478 = vmatpush1.bf16.msra.mxu0 0
        %1479 = vmatprep.subr.bf16.mxu0 0
        %1480 = vmatpush1.bf16.msra.mxu0 0
        %1481 = vmatprep.subr.bf16.mxu0 0
        %1482 = vmatpush1.bf16.msra.mxu0 0
        %1483 = vmatprep.subr.bf16.mxu0 0
        %1484 = vmatpush1.bf16.msra.mxu0 0
        %1485 = vmatprep.subr.bf16.mxu0 0
        %1486 = vmatpush1.bf16.msra.mxu0 0
        %1487 = vmatprep.subr.bf16.mxu0 0
        %1488 = vmatpush1.bf16.msra.mxu0 0
        %1489 = vmatprep.subr.bf16.mxu0 0
        %1490 = vmatpush1.bf16.msra.mxu0 0
        %1491 = vmatprep.subr.bf16.mxu0 0
        %1492 = vmatpush1.bf16.msra.mxu0 0
        %1493 = vmatprep.subr.bf16.mxu0 0
        %1494 = vmatpush1.bf16.msra.mxu0 0
        %1495 = vmatprep.mubr.bf16.mxu0 0
        %1496 = vmatmul.mubr.bf16.gmra.mrb[0].mxu0 %v918
        %v1497 = vpop.f32.mrb[0].mxu0
        %v1498 = vadd.f32 0.0, %v1497
        %v1499 = vpop.f32.mrb[0].mxu0
        %v1500 = vadd.f32 0.0, %v1499
        %v1501 = vpop.f32.mrb[0].mxu0
        %v1502 = vpop.f32.mrb[0].mxu0
        %1503 = vdwg.mxu0
        %1504 = vmatprep.subr.bf16.mxu0 %v508
        %1505 = vmatpush1.bf16.msra.mxu0 %v507
        %1506 = vmatprep.subr.bf16.mxu0 %v514
        %1507 = vmatpush1.bf16.msra.mxu0 %v513
        %1508 = vmatprep.subr.bf16.mxu0 0
        %1509 = vmatpush1.bf16.msra.mxu0 0
        %1510 = vmatprep.subr.bf16.mxu0 0
        %1511 = vmatpush1.bf16.msra.mxu0 0
        %1512 = vmatprep.subr.bf16.mxu0 0
        %1513 = vmatpush1.bf16.msra.mxu0 0
        %1514 = vmatprep.subr.bf16.mxu0 0
        %1515 = vmatpush1.bf16.msra.mxu0 0
        %1516 = vmatprep.subr.bf16.mxu0 0
        %1517 = vmatpush1.bf16.msra.mxu0 0
        %1518 = vmatprep.subr.bf16.mxu0 0
        %1519 = vmatpush1.bf16.msra.mxu0 0
        %1520 = vmatprep.subr.bf16.mxu0 0
        %1521 = vmatpush1.bf16.msra.mxu0 0
        %1522 = vmatprep.subr.bf16.mxu0 0
        %1523 = vmatpush1.bf16.msra.mxu0 0
        %1524 = vmatprep.subr.bf16.mxu0 0
        %1525 = vmatpush1.bf16.msra.mxu0 0
        %1526 = vmatprep.subr.bf16.mxu0 0
        %1527 = vmatpush1.bf16.msra.mxu0 0
        %1528 = vmatprep.subr.bf16.mxu0 0
        %1529 = vmatpush1.bf16.msra.mxu0 0
        %1530 = vmatprep.subr.bf16.mxu0 0
        %1531 = vmatpush1.bf16.msra.mxu0 0
        %1532 = vmatprep.subr.bf16.mxu0 0
        %1533 = vmatpush1.bf16.msra.mxu0 0
        %1534 = vmatprep.subr.bf16.mxu0 0
        %1535 = vmatpush1.bf16.msra.mxu0 0
        %1536 = vmatprep.mubr.bf16.mxu0 0
        %1537 = vmatmul.mubr.bf16.gmra.mrb[0].mxu0 %v918
        %v1538 = vpop.f32.mrb[0].mxu0
        %v1539 = vadd.f32 0.0, %v1538
        %v1540 = vpop.f32.mrb[0].mxu0
        %v1541 = vadd.f32 0.0, %v1540
        %v1542 = vpop.f32.mrb[0].mxu0
        %v1543 = vpop.f32.mrb[0].mxu0
        %1544 = vdwg.mxu0
        %1545 = vmatprep.subr.bf16.mxu0 %v510
        %1546 = vmatpush1.bf16.msra.mxu0 %v509
        %1547 = vmatprep.subr.bf16.mxu0 %v516
        %1548 = vmatpush1.bf16.msra.mxu0 %v515
        %1549 = vmatprep.subr.bf16.mxu0 0
        %1550 = vmatpush1.bf16.msra.mxu0 0
        %1551 = vmatprep.subr.bf16.mxu0 0
        %1552 = vmatpush1.bf16.msra.mxu0 0
        %1553 = vmatprep.subr.bf16.mxu0 0
        %1554 = vmatpush1.bf16.msra.mxu0 0
        %1555 = vmatprep.subr.bf16.mxu0 0
        %1556 = vmatpush1.bf16.msra.mxu0 0
        %1557 = vmatprep.subr.bf16.mxu0 0
        %1558 = vmatpush1.bf16.msra.mxu0 0
        %1559 = vmatprep.subr.bf16.mxu0 0
        %1560 = vmatpush1.bf16.msra.mxu0 0
        %1561 = vmatprep.subr.bf16.mxu0 0
        %1562 = vmatpush1.bf16.msra.mxu0 0
        %1563 = vmatprep.subr.bf16.mxu0 0
        %1564 = vmatpush1.bf16.msra.mxu0 0
        %1565 = vmatprep.subr.bf16.mxu0 0
        %1566 = vmatpush1.bf16.msra.mxu0 0
        %1567 = vmatprep.subr.bf16.mxu0 0
        %1568 = vmatpush1.bf16.msra.mxu0 0
        %1569 = vmatprep.subr.bf16.mxu0 0
        %1570 = vmatpush1.bf16.msra.mxu0 0
        %1571 = vmatprep.subr.bf16.mxu0 0
        %1572 = vmatpush1.bf16.msra.mxu0 0
        %1573 = vmatprep.subr.bf16.mxu0 0
        %1574 = vmatpush1.bf16.msra.mxu0 0
        %1575 = vmatprep.subr.bf16.mxu0 0
        %1576 = vmatpush1.bf16.msra.mxu0 0
        %1577 = vmatprep.mubr.bf16.mxu0 0
        %1578 = vmatmul.mubr.bf16.gmra.mrb[0].mxu0 %v918
        %v1579 = vpop.f32.mrb[0].mxu0
        %v1580 = vadd.f32 0.0, %v1579
        %v1581 = vpop.f32.mrb[0].mxu0
        %v1582 = vadd.f32 0.0, %v1581
        %v1583 = vpop.f32.mrb[0].mxu0
        %v1584 = vpop.f32.mrb[0].mxu0
        %1585 = vdwg.mxu0
        %1586 = vmatprep.subr.bf16.mxu0 %v693
        %1587 = vmatpush1.bf16.msra.mxu0 %v692
        %1588 = vmatprep.subr.bf16.mxu0 %v699
        %1589 = vmatpush1.bf16.msra.mxu0 %v698
        %1590 = vmatprep.subr.bf16.mxu0 0
        %1591 = vmatpush1.bf16.msra.mxu0 0
        %1592 = vmatprep.subr.bf16.mxu0 0
        %1593 = vmatpush1.bf16.msra.mxu0 0
        %1594 = vmatprep.subr.bf16.mxu0 0
        %1595 = vmatpush1.bf16.msra.mxu0 0
        %1596 = vmatprep.subr.bf16.mxu0 0
        %1597 = vmatpush1.bf16.msra.mxu0 0
        %1598 = vmatprep.subr.bf16.mxu0 0
        %1599 = vmatpush1.bf16.msra.mxu0 0
        %1600 = vmatprep.subr.bf16.mxu0 0
        %1601 = vmatpush1.bf16.msra.mxu0 0
        %1602 = vmatprep.subr.bf16.mxu0 0
        %1603 = vmatpush1.bf16.msra.mxu0 0
        %1604 = vmatprep.subr.bf16.mxu0 0
        %1605 = vmatpush1.bf16.msra.mxu0 0
        %1606 = vmatprep.subr.bf16.mxu0 0
        %1607 = vmatpush1.bf16.msra.mxu0 0
        %1608 = vmatprep.subr.bf16.mxu0 0
        %1609 = vmatpush1.bf16.msra.mxu0 0
        %1610 = vmatprep.subr.bf16.mxu0 0
        %1611 = vmatpush1.bf16.msra.mxu0 0
        %1612 = vmatprep.subr.bf16.mxu0 0
        %1613 = vmatpush1.bf16.msra.mxu0 0
        %1614 = vmatprep.subr.bf16.mxu0 0
        %1615 = vmatpush1.bf16.msra.mxu0 0
        %1616 = vmatprep.subr.bf16.mxu0 0
        %1617 = vmatpush1.bf16.msra.mxu0 0
        %1618 = vmatprep.mubr.bf16.mxu0 0
        %1619 = vmatmul.mubr.bf16.gmra.mrb[0].mxu0 %v531
        %v1620 = vpop.f32.mrb[0].mxu0
        %v1621 = vadd.f32 %v1498, %v1620
        %v1622 = vpop.f32.mrb[0].mxu0
        %v1623 = vadd.f32 %v1500, %v1622
        %v1624 = vpop.f32.mrb[0].mxu0
        %v1625 = vpop.f32.mrb[0].mxu0
        %1626 = vdwg.mxu0
        %1627 = vmatprep.subr.bf16.mxu0 %v695
        %1628 = vmatpush1.bf16.msra.mxu0 %v694
        %1629 = vmatprep.subr.bf16.mxu0 %v701
        %1630 = vmatpush1.bf16.msra.mxu0 %v700
        %1631 = vmatprep.subr.bf16.mxu0 0
        %1632 = vmatpush1.bf16.msra.mxu0 0
        %1633 = vmatprep.subr.bf16.mxu0 0
        %1634 = vmatpush1.bf16.msra.mxu0 0
        %1635 = vmatprep.subr.bf16.mxu0 0
        %1636 = vmatpush1.bf16.msra.mxu0 0
        %1637 = vmatprep.subr.bf16.mxu0 0
        %1638 = vmatpush1.bf16.msra.mxu0 0
        %1639 = vmatprep.subr.bf16.mxu0 0
        %1640 = vmatpush1.bf16.msra.mxu0 0
        %1641 = vmatprep.subr.bf16.mxu0 0
        %1642 = vmatpush1.bf16.msra.mxu0 0
        %1643 = vmatprep.subr.bf16.mxu0 0
        %1644 = vmatpush1.bf16.msra.mxu0 0
        %1645 = vmatprep.subr.bf16.mxu0 0
        %1646 = vmatpush1.bf16.msra.mxu0 0
        %1647 = vmatprep.subr.bf16.mxu0 0
        %1648 = vmatpush1.bf16.msra.mxu0 0
        %1649 = vmatprep.subr.bf16.mxu0 0
        %1650 = vmatpush1.bf16.msra.mxu0 0
        %1651 = vmatprep.subr.bf16.mxu0 0
        %1652 = vmatpush1.bf16.msra.mxu0 0
        %1653 = vmatprep.subr.bf16.mxu0 0
        %1654 = vmatpush1.bf16.msra.mxu0 0
        %1655 = vmatprep.subr.bf16.mxu0 0
        %1656 = vmatpush1.bf16.msra.mxu0 0
        %1657 = vmatprep.subr.bf16.mxu0 0
        %1658 = vmatpush1.bf16.msra.mxu0 0
        %1659 = vmatprep.mubr.bf16.mxu0 0
        %1660 = vmatmul.mubr.bf16.gmra.mrb[0].mxu0 %v531
        %v1661 = vpop.f32.mrb[0].mxu0
        %v1662 = vadd.f32 %v1539, %v1661
        %v1663 = vpop.f32.mrb[0].mxu0
        %v1664 = vadd.f32 %v1541, %v1663
        %v1665 = vpop.f32.mrb[0].mxu0
        %v1666 = vpop.f32.mrb[0].mxu0
        %1667 = vdwg.mxu0
        %1668 = vmatprep.subr.bf16.mxu0 %v697
        %1669 = vmatpush1.bf16.msra.mxu0 %v696
        %1670 = vmatprep.subr.bf16.mxu0 %v703
        %1671 = vmatpush1.bf16.msra.mxu0 %v702
        %1672 = vmatprep.subr.bf16.mxu0 0
        %1673 = vmatpush1.bf16.msra.mxu0 0
        %1674 = vmatprep.subr.bf16.mxu0 0
        %1675 = vmatpush1.bf16.msra.mxu0 0
        %1676 = vmatprep.subr.bf16.mxu0 0
        %1677 = vmatpush1.bf16.msra.mxu0 0
        %1678 = vmatprep.subr.bf16.mxu0 0
        %1679 = vmatpush1.bf16.msra.mxu0 0
        %1680 = vmatprep.subr.bf16.mxu0 0
        %1681 = vmatpush1.bf16.msra.mxu0 0
        %1682 = vmatprep.subr.bf16.mxu0 0
        %1683 = vmatpush1.bf16.msra.mxu0 0
        %1684 = vmatprep.subr.bf16.mxu0 0
        %1685 = vmatpush1.bf16.msra.mxu0 0
        %1686 = vmatprep.subr.bf16.mxu0 0
        %1687 = vmatpush1.bf16.msra.mxu0 0
        %1688 = vmatprep.subr.bf16.mxu0 0
        %1689 = vmatpush1.bf16.msra.mxu0 0
        %1690 = vmatprep.subr.bf16.mxu0 0
        %1691 = vmatpush1.bf16.msra.mxu0 0
        %1692 = vmatprep.subr.bf16.mxu0 0
        %1693 = vmatpush1.bf16.msra.mxu0 0
        %1694 = vmatprep.subr.bf16.mxu0 0
        %1695 = vmatpush1.bf16.msra.mxu0 0
        %1696 = vmatprep.subr.bf16.mxu0 0
        %1697 = vmatpush1.bf16.msra.mxu0 0
        %1698 = vmatprep.subr.bf16.mxu0 0
        %1699 = vmatpush1.bf16.msra.mxu0 0
        %1700 = vmatprep.mubr.bf16.mxu0 0
        %1701 = vmatmul.mubr.bf16.gmra.mrb[0].mxu0 %v531
        %v1702 = vpop.f32.mrb[0].mxu0
        %v1703 = vadd.f32 %v1580, %v1702
        %v1704 = vpop.f32.mrb[0].mxu0
        %v1705 = vadd.f32 %v1582, %v1704
        %v1706 = vpop.f32.mrb[0].mxu0
        %v1707 = vpop.f32.mrb[0].mxu0
        %1708 = vdwg.mxu0
        %1709 = vmatprep.subr.bf16.mxu0 %v894
        %1710 = vmatpush1.bf16.msra.mxu0 %v893
        %1711 = vmatprep.subr.bf16.mxu0 %v900
        %1712 = vmatpush1.bf16.msra.mxu0 %v899
        %1713 = vmatprep.subr.bf16.mxu0 0
        %1714 = vmatpush1.bf16.msra.mxu0 0
        %1715 = vmatprep.subr.bf16.mxu0 0
        %1716 = vmatpush1.bf16.msra.mxu0 0
        %1717 = vmatprep.subr.bf16.mxu0 0
        %1718 = vmatpush1.bf16.msra.mxu0 0
        %1719 = vmatprep.subr.bf16.mxu0 0
        %1720 = vmatpush1.bf16.msra.mxu0 0
        %1721 = vmatprep.subr.bf16.mxu0 0
        %1722 = vmatpush1.bf16.msra.mxu0 0
        %1723 = vmatprep.subr.bf16.mxu0 0
        %1724 = vmatpush1.bf16.msra.mxu0 0
        %1725 = vmatprep.subr.bf16.mxu0 0
        %1726 = vmatpush1.bf16.msra.mxu0 0
        %1727 = vmatprep.subr.bf16.mxu0 0
        %1728 = vmatpush1.bf16.msra.mxu0 0
        %1729 = vmatprep.subr.bf16.mxu0 0
        %1730 = vmatpush1.bf16.msra.mxu0 0
        %1731 = vmatprep.subr.bf16.mxu0 0
        %1732 = vmatpush1.bf16.msra.mxu0 0
        %1733 = vmatprep.subr.bf16.mxu0 0
        %1734 = vmatpush1.bf16.msra.mxu0 0
        %1735 = vmatprep.subr.bf16.mxu0 0
        %1736 = vmatpush1.bf16.msra.mxu0 0
        %1737 = vmatprep.subr.bf16.mxu0 0
        %1738 = vmatpush1.bf16.msra.mxu0 0
        %1739 = vmatprep.subr.bf16.mxu0 0
        %1740 = vmatpush1.bf16.msra.mxu0 0
        %1741 = vmatprep.mubr.bf16.mxu0 0
        %1742 = vmatmul.mubr.bf16.gmra.mrb[0].mxu0 %v1125
        %v1743 = vpop.f32.mrb[0].mxu0
        %v1744 = vadd.f32 0.0, %v1743
        %v1745 = vpop.f32.mrb[0].mxu0
        %v1746 = vadd.f32 0.0, %v1745
        %v1747 = vpop.f32.mrb[0].mxu0
        %v1748 = vpop.f32.mrb[0].mxu0
        %1749 = vdwg.mxu0
        %1750 = vmatprep.subr.bf16.mxu0 %v896
        %1751 = vmatpush1.bf16.msra.mxu0 %v895
        %1752 = vmatprep.subr.bf16.mxu0 %v902
        %1753 = vmatpush1.bf16.msra.mxu0 %v901
        %1754 = vmatprep.subr.bf16.mxu0 0
        %1755 = vmatpush1.bf16.msra.mxu0 0
        %1756 = vmatprep.subr.bf16.mxu0 0
        %1757 = vmatpush1.bf16.msra.mxu0 0
        %1758 = vmatprep.subr.bf16.mxu0 0
        %1759 = vmatpush1.bf16.msra.mxu0 0
        %1760 = vmatprep.subr.bf16.mxu0 0
        %1761 = vmatpush1.bf16.msra.mxu0 0
        %1762 = vmatprep.subr.bf16.mxu0 0
        %1763 = vmatpush1.bf16.msra.mxu0 0
        %1764 = vmatprep.subr.bf16.mxu0 0
        %1765 = vmatpush1.bf16.msra.mxu0 0
        %1766 = vmatprep.subr.bf16.mxu0 0
        %1767 = vmatpush1.bf16.msra.mxu0 0
        %1768 = vmatprep.subr.bf16.mxu0 0
        %1769 = vmatpush1.bf16.msra.mxu0 0
        %1770 = vmatprep.subr.bf16.mxu0 0
        %1771 = vmatpush1.bf16.msra.mxu0 0
        %1772 = vmatprep.subr.bf16.mxu0 0
        %1773 = vmatpush1.bf16.msra.mxu0 0
        %1774 = vmatprep.subr.bf16.mxu0 0
        %1775 = vmatpush1.bf16.msra.mxu0 0
        %1776 = vmatprep.subr.bf16.mxu0 0
        %1777 = vmatpush1.bf16.msra.mxu0 0
        %1778 = vmatprep.subr.bf16.mxu0 0
        %1779 = vmatpush1.bf16.msra.mxu0 0
        %1780 = vmatprep.subr.bf16.mxu0 0
        %1781 = vmatpush1.bf16.msra.mxu0 0
        %1782 = vmatprep.mubr.bf16.mxu0 0
        %1783 = vmatmul.mubr.bf16.gmra.mrb[0].mxu0 %v1125
        %v1784 = vpop.f32.mrb[0].mxu0
        %v1785 = vadd.f32 0.0, %v1784
        %v1786 = vpop.f32.mrb[0].mxu0
        %v1787 = vadd.f32 0.0, %v1786
        %v1788 = vpop.f32.mrb[0].mxu0
        %v1789 = vpop.f32.mrb[0].mxu0
        %1790 = vdwg.mxu0
        %1791 = vmatprep.subr.bf16.mxu0 %v898
        %1792 = vmatpush1.bf16.msra.mxu0 %v897
        %1793 = vmatprep.subr.bf16.mxu0 %v904
        %1794 = vmatpush1.bf16.msra.mxu0 %v903
        %1795 = vmatprep.subr.bf16.mxu0 0
        %1796 = vmatpush1.bf16.msra.mxu0 0
        %1797 = vmatprep.subr.bf16.mxu0 0
        %1798 = vmatpush1.bf16.msra.mxu0 0
        %1799 = vmatprep.subr.bf16.mxu0 0
        %1800 = vmatpush1.bf16.msra.mxu0 0
        %1801 = vmatprep.subr.bf16.mxu0 0
        %1802 = vmatpush1.bf16.msra.mxu0 0
        %1803 = vmatprep.subr.bf16.mxu0 0
        %1804 = vmatpush1.bf16.msra.mxu0 0
        %1805 = vmatprep.subr.bf16.mxu0 0
        %1806 = vmatpush1.bf16.msra.mxu0 0
        %1807 = vmatprep.subr.bf16.mxu0 0
        %1808 = vmatpush1.bf16.msra.mxu0 0
        %1809 = vmatprep.subr.bf16.mxu0 0
        %1810 = vmatpush1.bf16.msra.mxu0 0
        %1811 = vmatprep.subr.bf16.mxu0 0
        %1812 = vmatpush1.bf16.msra.mxu0 0
        %1813 = vmatprep.subr.bf16.mxu0 0
        %1814 = vmatpush1.bf16.msra.mxu0 0
        %1815 = vmatprep.subr.bf16.mxu0 0
        %1816 = vmatpush1.bf16.msra.mxu0 0
        %1817 = vmatprep.subr.bf16.mxu0 0
        %1818 = vmatpush1.bf16.msra.mxu0 0
        %1819 = vmatprep.subr.bf16.mxu0 0
        %1820 = vmatpush1.bf16.msra.mxu0 0
        %1821 = vmatprep.subr.bf16.mxu0 0
        %1822 = vmatpush1.bf16.msra.mxu0 0
        %1823 = vmatprep.mubr.bf16.mxu0 0
        %1824 = vmatmul.mubr.bf16.gmra.mrb[0].mxu0 %v1125
        %v1825 = vpop.f32.mrb[0].mxu0
        %v1826 = vadd.f32 0.0, %v1825
        %v1827 = vpop.f32.mrb[0].mxu0
        %v1828 = vadd.f32 0.0, %v1827
        %v1829 = vpop.f32.mrb[0].mxu0
        %v1830 = vpop.f32.mrb[0].mxu0
        %1831 = vdwg.mxu0
        %v1832 = vadd.f32 %v1621, %v1744
        %v1833 = vadd.f32 %v1623, %v1746
        %v1834 = vadd.f32 %v1662, %v1785
        %v1835 = vadd.f32 %v1664, %v1787
        %v1836 = vadd.f32 %v1703, %v1826
        %v1837 = vadd.f32 %v1705, %v1828
        %1838 = vmatprep.subr.bf16.mxu0 %v1101
        %1839 = vmatpush1.bf16.msra.mxu0 %v1100
        %1840 = vmatprep.subr.bf16.mxu0 %v1107
        %1841 = vmatpush1.bf16.msra.mxu0 %v1106
        %1842 = vmatprep.subr.bf16.mxu0 0
        %1843 = vmatpush1.bf16.msra.mxu0 0
        %1844 = vmatprep.subr.bf16.mxu0 0
        %1845 = vmatpush1.bf16.msra.mxu0 0
        %1846 = vmatprep.subr.bf16.mxu0 0
        %1847 = vmatpush1.bf16.msra.mxu0 0
        %1848 = vmatprep.subr.bf16.mxu0 0
        %1849 = vmatpush1.bf16.msra.mxu0 0
        %1850 = vmatprep.subr.bf16.mxu0 0
        %1851 = vmatpush1.bf16.msra.mxu0 0
        %1852 = vmatprep.subr.bf16.mxu0 0
        %1853 = vmatpush1.bf16.msra.mxu0 0
        %1854 = vmatprep.subr.bf16.mxu0 0
        %1855 = vmatpush1.bf16.msra.mxu0 0
        %1856 = vmatprep.subr.bf16.mxu0 0
        %1857 = vmatpush1.bf16.msra.mxu0 0
        %1858 = vmatprep.subr.bf16.mxu0 0
        %1859 = vmatpush1.bf16.msra.mxu0 0
        %1860 = vmatprep.subr.bf16.mxu0 0
        %1861 = vmatpush1.bf16.msra.mxu0 0
        %1862 = vmatprep.subr.bf16.mxu0 0
        %1863 = vmatpush1.bf16.msra.mxu0 0
        %1864 = vmatprep.subr.bf16.mxu0 0
        %1865 = vmatpush1.bf16.msra.mxu0 0
        %1866 = vmatprep.subr.bf16.mxu0 0
        %1867 = vmatpush1.bf16.msra.mxu0 0
        %1868 = vmatprep.subr.bf16.mxu0 0
        %1869 = vmatpush1.bf16.msra.mxu0 0
        %1870 = vmatprep.mubr.bf16.mxu0 0
        %1871 = vmatmul.mubr.bf16.gmra.mrb[0].mxu0 %v1332
        %v1872 = vpop.f32.mrb[0].mxu0
        %v1873 = vadd.f32 0.0, %v1872
        %v1874 = vpop.f32.mrb[0].mxu0
        %v1875 = vadd.f32 0.0, %v1874
        %v1876 = vpop.f32.mrb[0].mxu0
        %v1877 = vpop.f32.mrb[0].mxu0
        %1878 = vdwg.mxu0
        %1879 = vmatprep.subr.bf16.mxu0 %v1103
        %1880 = vmatpush1.bf16.msra.mxu0 %v1102
        %1881 = vmatprep.subr.bf16.mxu0 %v1109
        %1882 = vmatpush1.bf16.msra.mxu0 %v1108
        %1883 = vmatprep.subr.bf16.mxu0 0
        %1884 = vmatpush1.bf16.msra.mxu0 0
        %1885 = vmatprep.subr.bf16.mxu0 0
        %1886 = vmatpush1.bf16.msra.mxu0 0
        %1887 = vmatprep.subr.bf16.mxu0 0
        %1888 = vmatpush1.bf16.msra.mxu0 0
        %1889 = vmatprep.subr.bf16.mxu0 0
        %1890 = vmatpush1.bf16.msra.mxu0 0
        %1891 = vmatprep.subr.bf16.mxu0 0
        %1892 = vmatpush1.bf16.msra.mxu0 0
        %1893 = vmatprep.subr.bf16.mxu0 0
        %1894 = vmatpush1.bf16.msra.mxu0 0
        %1895 = vmatprep.subr.bf16.mxu0 0
        %1896 = vmatpush1.bf16.msra.mxu0 0
        %1897 = vmatprep.subr.bf16.mxu0 0
        %1898 = vmatpush1.bf16.msra.mxu0 0
        %1899 = vmatprep.subr.bf16.mxu0 0
        %1900 = vmatpush1.bf16.msra.mxu0 0
        %1901 = vmatprep.subr.bf16.mxu0 0
        %1902 = vmatpush1.bf16.msra.mxu0 0
        %1903 = vmatprep.subr.bf16.mxu0 0
        %1904 = vmatpush1.bf16.msra.mxu0 0
        %1905 = vmatprep.subr.bf16.mxu0 0
        %1906 = vmatpush1.bf16.msra.mxu0 0
        %1907 = vmatprep.subr.bf16.mxu0 0
        %1908 = vmatpush1.bf16.msra.mxu0 0
        %1909 = vmatprep.subr.bf16.mxu0 0
        %1910 = vmatpush1.bf16.msra.mxu0 0
        %1911 = vmatprep.mubr.bf16.mxu0 0
        %1912 = vmatmul.mubr.bf16.gmra.mrb[0].mxu0 %v1332
        %v1913 = vpop.f32.mrb[0].mxu0
        %v1914 = vadd.f32 0.0, %v1913
        %v1915 = vpop.f32.mrb[0].mxu0
        %v1916 = vadd.f32 0.0, %v1915
        %v1917 = vpop.f32.mrb[0].mxu0
        %v1918 = vpop.f32.mrb[0].mxu0
        %1919 = vdwg.mxu0
        %1920 = vmatprep.subr.bf16.mxu0 %v1105
        %1921 = vmatpush1.bf16.msra.mxu0 %v1104
        %1922 = vmatprep.subr.bf16.mxu0 %v1111
        %1923 = vmatpush1.bf16.msra.mxu0 %v1110
        %1924 = vmatprep.subr.bf16.mxu0 0
        %1925 = vmatpush1.bf16.msra.mxu0 0
        %1926 = vmatprep.subr.bf16.mxu0 0
        %1927 = vmatpush1.bf16.msra.mxu0 0
        %1928 = vmatprep.subr.bf16.mxu0 0
        %1929 = vmatpush1.bf16.msra.mxu0 0
        %1930 = vmatprep.subr.bf16.mxu0 0
        %1931 = vmatpush1.bf16.msra.mxu0 0
        %1932 = vmatprep.subr.bf16.mxu0 0
        %1933 = vmatpush1.bf16.msra.mxu0 0
        %1934 = vmatprep.subr.bf16.mxu0 0
        %1935 = vmatpush1.bf16.msra.mxu0 0
        %1936 = vmatprep.subr.bf16.mxu0 0
        %1937 = vmatpush1.bf16.msra.mxu0 0
        %1938 = vmatprep.subr.bf16.mxu0 0
        %1939 = vmatpush1.bf16.msra.mxu0 0
        %1940 = vmatprep.subr.bf16.mxu0 0
        %1941 = vmatpush1.bf16.msra.mxu0 0
        %1942 = vmatprep.subr.bf16.mxu0 0
        %1943 = vmatpush1.bf16.msra.mxu0 0
        %1944 = vmatprep.subr.bf16.mxu0 0
        %1945 = vmatpush1.bf16.msra.mxu0 0
        %1946 = vmatprep.subr.bf16.mxu0 0
        %1947 = vmatpush1.bf16.msra.mxu0 0
        %1948 = vmatprep.subr.bf16.mxu0 0
        %1949 = vmatpush1.bf16.msra.mxu0 0
        %1950 = vmatprep.subr.bf16.mxu0 0
        %1951 = vmatpush1.bf16.msra.mxu0 0
        %1952 = vmatprep.mubr.bf16.mxu0 0
        %1953 = vmatmul.mubr.bf16.gmra.mrb[0].mxu0 %v1332
        %v1954 = vpop.f32.mrb[0].mxu0
        %v1955 = vadd.f32 0.0, %v1954
        %v1956 = vpop.f32.mrb[0].mxu0
        %v1957 = vadd.f32 0.0, %v1956
        %v1958 = vpop.f32.mrb[0].mxu0
        %v1959 = vpop.f32.mrb[0].mxu0
        %1960 = vdwg.mxu0
        %v1961 = vadd.f32 %v1832, %v1873
        %v1962 = vadd.f32 %v1833, %v1875
        %v1963 = vadd.f32 %v1834, %v1914
        %v1964 = vadd.f32 %v1835, %v1916
        %v1965 = vadd.f32 %v1836, %v1955
        %v1966 = vadd.f32 %v1837, %v1957
        %v1967 = vld [vmem:[%s438 + $0x8] sm:$0x3f]
        %v1968 = vpack.c.bf16 %v1967, %v1967
        %v1970 = vsel %vm529, %v1968, 0
        %1972 = vmatprep.subr.bf16.mxu0 %v1308
        %1973 = vmatpush1.bf16.msra.mxu0 %v1307
        %1974 = vmatprep.subr.bf16.mxu0 %v1314
        %1975 = vmatpush1.bf16.msra.mxu0 %v1313
        %1976 = vmatprep.subr.bf16.mxu0 0
        %1977 = vmatpush1.bf16.msra.mxu0 0
        %1978 = vmatprep.subr.bf16.mxu0 0
        %1979 = vmatpush1.bf16.msra.mxu0 0
        %1980 = vmatprep.subr.bf16.mxu0 0
        %1981 = vmatpush1.bf16.msra.mxu0 0
        %1982 = vmatprep.subr.bf16.mxu0 0
        %1983 = vmatpush1.bf16.msra.mxu0 0
        %1984 = vmatprep.subr.bf16.mxu0 0
        %1985 = vmatpush1.bf16.msra.mxu0 0
        %1986 = vmatprep.subr.bf16.mxu0 0
        %1987 = vmatpush1.bf16.msra.mxu0 0
        %1988 = vmatprep.subr.bf16.mxu0 0
        %1989 = vmatpush1.bf16.msra.mxu0 0
        %1990 = vmatprep.subr.bf16.mxu0 0
        %1991 = vmatpush1.bf16.msra.mxu0 0
        %1992 = vmatprep.subr.bf16.mxu0 0
        %1993 = vmatpush1.bf16.msra.mxu0 0
        %1994 = vmatprep.subr.bf16.mxu0 0
        %1995 = vmatpush1.bf16.msra.mxu0 0
        %1996 = vmatprep.subr.bf16.mxu0 0
        %1997 = vmatpush1.bf16.msra.mxu0 0
        %1998 = vmatprep.subr.bf16.mxu0 0
        %1999 = vmatpush1.bf16.msra.mxu0 0
        %2000 = vmatprep.subr.bf16.mxu0 0
        %2001 = vmatpush1.bf16.msra.mxu0 0
        %2002 = vmatprep.subr.bf16.mxu0 0
        %2003 = vmatpush1.bf16.msra.mxu0 0
        %2004 = vmatprep.mubr.bf16.mxu0 0
        %2005 = vmatmul.mubr.bf16.gmra.mrb[0].mxu0 %v1970
        %v2006 = vpop.f32.mrb[0].mxu0
        %v2007 = vadd.f32 0.0, %v2006
        %v2008 = vpop.f32.mrb[0].mxu0
        %v2009 = vadd.f32 0.0, %v2008
        %v2010 = vpop.f32.mrb[0].mxu0
        %v2011 = vpop.f32.mrb[0].mxu0
        %2012 = vdwg.mxu0
        %2013 = vmatprep.subr.bf16.mxu0 %v1310
        %2014 = vmatpush1.bf16.msra.mxu0 %v1309
        %2015 = vmatprep.subr.bf16.mxu0 %v1316
        %2016 = vmatpush1.bf16.msra.mxu0 %v1315
        %2017 = vmatprep.subr.bf16.mxu0 0
        %2018 = vmatpush1.bf16.msra.mxu0 0
        %2019 = vmatprep.subr.bf16.mxu0 0
        %2020 = vmatpush1.bf16.msra.mxu0 0
        %2021 = vmatprep.subr.bf16.mxu0 0
        %2022 = vmatpush1.bf16.msra.mxu0 0
        %2023 = vmatprep.subr.bf16.mxu0 0
        %2024 = vmatpush1.bf16.msra.mxu0 0
        %2025 = vmatprep.subr.bf16.mxu0 0
        %2026 = vmatpush1.bf16.msra.mxu0 0
        %2027 = vmatprep.subr.bf16.mxu0 0
        %2028 = vmatpush1.bf16.msra.mxu0 0
        %2029 = vmatprep.subr.bf16.mxu0 0
        %2030 = vmatpush1.bf16.msra.mxu0 0
        %2031 = vmatprep.subr.bf16.mxu0 0
        %2032 = vmatpush1.bf16.msra.mxu0 0
        %2033 = vmatprep.subr.bf16.mxu0 0
        %2034 = vmatpush1.bf16.msra.mxu0 0
        %2035 = vmatprep.subr.bf16.mxu0 0
        %2036 = vmatpush1.bf16.msra.mxu0 0
        %2037 = vmatprep.subr.bf16.mxu0 0
        %2038 = vmatpush1.bf16.msra.mxu0 0
        %2039 = vmatprep.subr.bf16.mxu0 0
        %2040 = vmatpush1.bf16.msra.mxu0 0
        %2041 = vmatprep.subr.bf16.mxu0 0
        %2042 = vmatpush1.bf16.msra.mxu0 0
        %2043 = vmatprep.subr.bf16.mxu0 0
        %2044 = vmatpush1.bf16.msra.mxu0 0
        %2045 = vmatprep.mubr.bf16.mxu0 0
        %2046 = vmatmul.mubr.bf16.gmra.mrb[0].mxu0 %v1970
        %v2047 = vpop.f32.mrb[0].mxu0
        %v2048 = vadd.f32 0.0, %v2047
        %v2049 = vpop.f32.mrb[0].mxu0
        %v2050 = vadd.f32 0.0, %v2049
        %v2051 = vpop.f32.mrb[0].mxu0
        %v2052 = vpop.f32.mrb[0].mxu0
        %2053 = vdwg.mxu0
        %2054 = vmatprep.subr.bf16.mxu0 %v1312
        %2055 = vmatpush1.bf16.msra.mxu0 %v1311
        %2056 = vmatprep.subr.bf16.mxu0 %v1318
        %2057 = vmatpush1.bf16.msra.mxu0 %v1317
        %2058 = vmatprep.subr.bf16.mxu0 0
        %2059 = vmatpush1.bf16.msra.mxu0 0
        %2060 = vmatprep.subr.bf16.mxu0 0
        %2061 = vmatpush1.bf16.msra.mxu0 0
        %2062 = vmatprep.subr.bf16.mxu0 0
        %2063 = vmatpush1.bf16.msra.mxu0 0
        %2064 = vmatprep.subr.bf16.mxu0 0
        %2065 = vmatpush1.bf16.msra.mxu0 0
        %2066 = vmatprep.subr.bf16.mxu0 0
        %2067 = vmatpush1.bf16.msra.mxu0 0
        %2068 = vmatprep.subr.bf16.mxu0 0
        %2069 = vmatpush1.bf16.msra.mxu0 0
        %2070 = vmatprep.subr.bf16.mxu0 0
        %2071 = vmatpush1.bf16.msra.mxu0 0
        %2072 = vmatprep.subr.bf16.mxu0 0
        %2073 = vmatpush1.bf16.msra.mxu0 0
        %2074 = vmatprep.subr.bf16.mxu0 0
        %2075 = vmatpush1.bf16.msra.mxu0 0
        %2076 = vmatprep.subr.bf16.mxu0 0
        %2077 = vmatpush1.bf16.msra.mxu0 0
        %2078 = vmatprep.subr.bf16.mxu0 0
        %2079 = vmatpush1.bf16.msra.mxu0 0
        %2080 = vmatprep.subr.bf16.mxu0 0
        %2081 = vmatpush1.bf16.msra.mxu0 0
        %2082 = vmatprep.subr.bf16.mxu0 0
        %2083 = vmatpush1.bf16.msra.mxu0 0
        %2084 = vmatprep.subr.bf16.mxu0 0
        %2085 = vmatpush1.bf16.msra.mxu0 0
        %2086 = vmatprep.mubr.bf16.mxu0 0
        %2087 = vmatmul.mubr.bf16.gmra.mrb[0].mxu0 %v1970
        %v2088 = vpop.f32.mrb[0].mxu0
        %v2089 = vadd.f32 0.0, %v2088
        %v2090 = vpop.f32.mrb[0].mxu0
        %v2091 = vadd.f32 0.0, %v2090
        %v2092 = vpop.f32.mrb[0].mxu0
        %v2093 = vpop.f32.mrb[0].mxu0
        %2094 = vdwg.mxu0
        %v2095 = vadd.f32 %v1961, %v2007
        %v2096 = vadd.f32 %v1962, %v2009
        %v2097 = vadd.f32 %v1963, %v2048
        %v2098 = vadd.f32 %v1964, %v2050
        %v2099 = vadd.f32 %v1965, %v2089
        %v2100 = vadd.f32 %v1966, %v2091
        %v2101 = vmax.f32 %v1457, %v2095
        %v2102 = vmax.f32 %v1458, %v2096
        %v2103 = vmax.f32 %v1459, %v2097
        %v2104 = vmax.f32 %v1460, %v2098
        %v2105 = vmax.f32 %v1461, %v2099
        %v2106 = vmax.f32 %v1462, %v2100
        %v2107 = vld [vmem:[#allocation7] sm:$0x3f]
        %v2109 = vlaneseq
        %v2110 = vshrl.u32 %v2109, 7
        %v2111 = vsub.s32 0, %v2110
        %v2112 = vrot.slane %v2107, %v2111
        %v2113 = vlaneseq
        %v2114 = vshrl.u32 %v2113, 7
        %v2115 = vsub.s32 1, %v2114
        %v2116 = vrot.slane %v2107, %v2115
        %v2117 = vlaneseq
        %v2118 = vshrl.u32 %v2117, 7
        %v2119 = vsub.s32 2, %v2118
        %v2120 = vrot.slane %v2107, %v2119
        %v2121 = vlaneseq
        %v2122 = vshrl.u32 %v2121, 7
        %v2123 = vsub.s32 3, %v2122
        %v2124 = vrot.slane %v2107, %v2123
        %v2125 = vlaneseq
        %v2126 = vshrl.u32 %v2125, 7
        %v2127 = vsub.s32 4, %v2126
        %v2128 = vrot.slane %v2107, %v2127
        %v2129 = vlaneseq
        %v2130 = vshrl.u32 %v2129, 7
        %v2131 = vsub.s32 5, %v2130
        %v2132 = vrot.slane %v2107, %v2131
        %v2139 = vadd.f32 %v2101, %v2112
        %v2140 = vadd.f32 %v2102, %v2116
        %v2141 = vadd.f32 %v2103, %v2120
        %v2142 = vadd.f32 %v2104, %v2124
        %v2143 = vadd.f32 %v2105, %v2128
        %v2144 = vadd.f32 %v2106, %v2132
        %v2145 = vmax.f32 %v2139, 0.0
        %v2146 = vmax.f32 %v2140, 0.0
        %v2147 = vmax.f32 %v2141, 0.0
        %v2148 = vmax.f32 %v2142, 0.0
        %v2149 = vmax.f32 %v2143, 0.0
        %v2150 = vmax.f32 %v2144, 0.0
        %v2151 = vmax.f32 %v2145, %v2148
        %v2152 = vmax.f32 %v2146, %v2149
        %v2153 = vmax.f32 %v2147, %v2150
        %v2154 = vpack.c.bf16 %v2151, %v2151
        %v2155 = vpack.c.bf16 %v2152, %v2152
        %v2156 = vpack.c.bf16 %v2153, %v2153
        %v2160 = vunpack.c.l.b16 %v2154
        %v2161 = vunpack.c.l.b16 %v2155
        %v2162 = vunpack.c.l.b16 %v2156
        %v2163 = vpack.c.b16 %v2161, %v2160
        %v2164 = vpack.c.b16 %v2162, %v2162
        %2167 = vst [vmem:[#allocation2] sm:$0x77] %v2163
        %2168 = vst [vmem:[#allocation2 + $0x8] sm:$0x7] %v2164
        %v2169 = vld [vmem:[%s438 + $0xe] sm:$0x3f]
        %v2170 = vpack.c.bf16 %v2169, %v2169
        %v2171 = vld [vmem:[#allocation4] sm:$0xff]
        %v2172 = vld [vmem:[#allocation4 + $0x8] sm:$0xff]
        %v2173 = vld [vmem:[#allocation4 + $0x10] sm:$0xff]
        %v2174 = vld [vmem:[#allocation4 + $0x18] sm:$0xff]
        %v2175 = vld [vmem:[#allocation4 + $0x20] sm:$0xff]
        %v2176 = vld [vmem:[#allocation4 + $0x28] sm:$0xff]
        %v2177 = vld [vmem:[#allocation4 + $0x30] sm:$0xff]
        %v2178 = vld [vmem:[#allocation4 + $0x38] sm:$0xff]
        %v2179 = vld [vmem:[#allocation4 + $0x40] sm:$0xff]
        %v2180 = vld [vmem:[#allocation4 + $0x48] sm:$0xff]
        %v2181 = vld [vmem:[#allocation4 + $0x50] sm:$0xff]
        %v2182 = vld [vmem:[#allocation4 + $0x58] sm:$0xff]
        %v2183 = vld [vmem:[%s438 + $0x15] sm:$0x3f]
        %v2184 = vpack.c.bf16 %v2183, %v2183
        %v2185 = vld [vmem:[%s456] sm:$0xff]
        %v2186 = vld [vmem:[%s456 + $0x8] sm:$0xff]
        %v2187 = vld [vmem:[%s456 + $0x10] sm:$0xff]
        %v2188 = vld [vmem:[%s456 + $0x18] sm:$0xff]
        %v2189 = vld [vmem:[%s456 + $0x20] sm:$0xff]
        %v2190 = vld [vmem:[%s456 + $0x28] sm:$0xff]
        %v2191 = vld [vmem:[%s456 + $0x30] sm:$0xff]
        %v2192 = vld [vmem:[%s456 + $0x38] sm:$0xff]
        %v2193 = vld [vmem:[%s456 + $0x40] sm:$0xff]
        %v2194 = vld [vmem:[%s456 + $0x48] sm:$0xff]
        %v2195 = vld [vmem:[%s456 + $0x50] sm:$0xff]
        %v2196 = vld [vmem:[%s456 + $0x58] sm:$0xff]
        %v2209 = vunpack.c.l.b16 %v2185
        %v2210 = vunpack.c.h.b16 %v2185
        %v2211 = vunpack.c.l.b16 %v2186
        %v2212 = vunpack.c.h.b16 %v2186
        %v2213 = vunpack.c.l.b16 %v2187
        %v2214 = vunpack.c.h.b16 %v2187
        %v2215 = vunpack.c.l.b16 %v2188
        %v2216 = vunpack.c.h.b16 %v2188
        %v2217 = vunpack.c.l.b16 %v2189
        %v2218 = vunpack.c.h.b16 %v2189
        %v2219 = vunpack.c.l.b16 %v2190
        %v2220 = vunpack.c.h.b16 %v2190
        %v2221 = vunpack.c.l.b16 %v2191
        %v2222 = vunpack.c.h.b16 %v2191
        %v2223 = vunpack.c.l.b16 %v2192
        %v2224 = vunpack.c.h.b16 %v2192
        %v2225 = vunpack.c.l.b16 %v2193
        %v2226 = vunpack.c.h.b16 %v2193
        %v2227 = vunpack.c.l.b16 %v2194
        %v2228 = vunpack.c.h.b16 %v2194
        %v2229 = vunpack.c.l.b16 %v2195
        %v2230 = vunpack.c.h.b16 %v2195
        %v2231 = vunpack.c.l.b16 %v2196
        %v2232 = vunpack.c.h.b16 %v2196
        %v2233 = vpack.c.b16 %v2215, %v2209
        %v2234 = vpack.c.b16 %v2216, %v2210
        %v2235 = vpack.c.b16 %v2217, %v2211
        %v2236 = vpack.c.b16 %v2218, %v2212
        %v2237 = vpack.c.b16 %v2219, %v2213
        %v2238 = vpack.c.b16 %v2220, %v2214
        %v2239 = vpack.c.b16 %v2227, %v2221
        %v2240 = vpack.c.b16 %v2228, %v2222
        %v2241 = vpack.c.b16 %v2229, %v2223
        %v2242 = vpack.c.b16 %v2230, %v2224
        %v2243 = vpack.c.b16 %v2231, %v2225
        %v2244 = vpack.c.b16 %v2232, %v2226
        %v2258 = vsel %vm529, %v2184, 0
        %2260 = vmatprep.subr.bf16.mxu0 %v2234
        %2261 = vmatpush1.bf16.msra.mxu0 %v2233
        %2262 = vmatprep.subr.bf16.mxu0 %v2240
        %2263 = vmatpush1.bf16.msra.mxu0 %v2239
        %2264 = vmatprep.subr.bf16.mxu0 0
        %2265 = vmatpush1.bf16.msra.mxu0 0
        %2266 = vmatprep.subr.bf16.mxu0 0
        %2267 = vmatpush1.bf16.msra.mxu0 0
        %2268 = vmatprep.subr.bf16.mxu0 0
        %2269 = vmatpush1.bf16.msra.mxu0 0
        %2270 = vmatprep.subr.bf16.mxu0 0
        %2271 = vmatpush1.bf16.msra.mxu0 0
        %2272 = vmatprep.subr.bf16.mxu0 0
        %2273 = vmatpush1.bf16.msra.mxu0 0
        %2274 = vmatprep.subr.bf16.mxu0 0
        %2275 = vmatpush1.bf16.msra.mxu0 0
        %2276 = vmatprep.subr.bf16.mxu0 0
        %2277 = vmatpush1.bf16.msra.mxu0 0
        %2278 = vmatprep.subr.bf16.mxu0 0
        %2279 = vmatpush1.bf16.msra.mxu0 0
        %2280 = vmatprep.subr.bf16.mxu0 0
        %2281 = vmatpush1.bf16.msra.mxu0 0
        %2282 = vmatprep.subr.bf16.mxu0 0
        %2283 = vmatpush1.bf16.msra.mxu0 0
        %2284 = vmatprep.subr.bf16.mxu0 0
        %2285 = vmatpush1.bf16.msra.mxu0 0
        %2286 = vmatprep.subr.bf16.mxu0 0
        %2287 = vmatpush1.bf16.msra.mxu0 0
        %2288 = vmatprep.subr.bf16.mxu0 0
        %2289 = vmatpush1.bf16.msra.mxu0 0
        %2290 = vmatprep.subr.bf16.mxu0 0
        %2291 = vmatpush1.bf16.msra.mxu0 0
        %2292 = vmatprep.mubr.bf16.mxu0 0
        %2293 = vmatmul.mubr.bf16.gmra.mrb[0].mxu0 %v2258
        %v2294 = vpop.f32.mrb[0].mxu0
        %v2295 = vadd.f32 0.0, %v2294
        %v2296 = vpop.f32.mrb[0].mxu0
        %v2297 = vadd.f32 0.0, %v2296
        %v2298 = vpop.f32.mrb[0].mxu0
        %v2299 = vpop.f32.mrb[0].mxu0
        %2300 = vdwg.mxu0
        %2301 = vmatprep.subr.bf16.mxu0 %v2236
        %2302 = vmatpush1.bf16.msra.mxu0 %v2235
        %2303 = vmatprep.subr.bf16.mxu0 %v2242
        %2304 = vmatpush1.bf16.msra.mxu0 %v2241
        %2305 = vmatprep.subr.bf16.mxu0 0
        %2306 = vmatpush1.bf16.msra.mxu0 0
        %2307 = vmatprep.subr.bf16.mxu0 0
        %2308 = vmatpush1.bf16.msra.mxu0 0
        %2309 = vmatprep.subr.bf16.mxu0 0
        %2310 = vmatpush1.bf16.msra.mxu0 0
        %2311 = vmatprep.subr.bf16.mxu0 0
        %2312 = vmatpush1.bf16.msra.mxu0 0
        %2313 = vmatprep.subr.bf16.mxu0 0
        %2314 = vmatpush1.bf16.msra.mxu0 0
        %2315 = vmatprep.subr.bf16.mxu0 0
        %2316 = vmatpush1.bf16.msra.mxu0 0
        %2317 = vmatprep.subr.bf16.mxu0 0
        %2318 = vmatpush1.bf16.msra.mxu0 0
        %2319 = vmatprep.subr.bf16.mxu0 0
        %2320 = vmatpush1.bf16.msra.mxu0 0
        %2321 = vmatprep.subr.bf16.mxu0 0
        %2322 = vmatpush1.bf16.msra.mxu0 0
        %2323 = vmatprep.subr.bf16.mxu0 0
        %2324 = vmatpush1.bf16.msra.mxu0 0
        %2325 = vmatprep.subr.bf16.mxu0 0
        %2326 = vmatpush1.bf16.msra.mxu0 0
        %2327 = vmatprep.subr.bf16.mxu0 0
        %2328 = vmatpush1.bf16.msra.mxu0 0
        %2329 = vmatprep.subr.bf16.mxu0 0
        %2330 = vmatpush1.bf16.msra.mxu0 0
        %2331 = vmatprep.subr.bf16.mxu0 0
        %2332 = vmatpush1.bf16.msra.mxu0 0
        %2333 = vmatprep.mubr.bf16.mxu0 0
        %2334 = vmatmul.mubr.bf16.gmra.mrb[0].mxu0 %v2258
        %v2335 = vpop.f32.mrb[0].mxu0
        %v2336 = vadd.f32 0.0, %v2335
        %v2337 = vpop.f32.mrb[0].mxu0
        %v2338 = vadd.f32 0.0, %v2337
        %v2339 = vpop.f32.mrb[0].mxu0
        %v2340 = vpop.f32.mrb[0].mxu0
        %2341 = vdwg.mxu0
        %2342 = vmatprep.subr.bf16.mxu0 %v2238
        %2343 = vmatpush1.bf16.msra.mxu0 %v2237
        %2344 = vmatprep.subr.bf16.mxu0 %v2244
        %2345 = vmatpush1.bf16.msra.mxu0 %v2243
        %2346 = vmatprep.subr.bf16.mxu0 0
        %2347 = vmatpush1.bf16.msra.mxu0 0
        %2348 = vmatprep.subr.bf16.mxu0 0
        %2349 = vmatpush1.bf16.msra.mxu0 0
        %2350 = vmatprep.subr.bf16.mxu0 0
        %2351 = vmatpush1.bf16.msra.mxu0 0
        %2352 = vmatprep.subr.bf16.mxu0 0
        %2353 = vmatpush1.bf16.msra.mxu0 0
        %2354 = vmatprep.subr.bf16.mxu0 0
        %2355 = vmatpush1.bf16.msra.mxu0 0
        %2356 = vmatprep.subr.bf16.mxu0 0
        %2357 = vmatpush1.bf16.msra.mxu0 0
        %2358 = vmatprep.subr.bf16.mxu0 0
        %2359 = vmatpush1.bf16.msra.mxu0 0
        %2360 = vmatprep.subr.bf16.mxu0 0
        %2361 = vmatpush1.bf16.msra.mxu0 0
        %2362 = vmatprep.subr.bf16.mxu0 0
        %2363 = vmatpush1.bf16.msra.mxu0 0
        %2364 = vmatprep.subr.bf16.mxu0 0
        %2365 = vmatpush1.bf16.msra.mxu0 0
        %2366 = vmatprep.subr.bf16.mxu0 0
        %2367 = vmatpush1.bf16.msra.mxu0 0
        %2368 = vmatprep.subr.bf16.mxu0 0
        %2369 = vmatpush1.bf16.msra.mxu0 0
        %2370 = vmatprep.subr.bf16.mxu0 0
        %2371 = vmatpush1.bf16.msra.mxu0 0
        %2372 = vmatprep.subr.bf16.mxu0 0
        %2373 = vmatpush1.bf16.msra.mxu0 0
        %2374 = vmatprep.mubr.bf16.mxu0 0
        %2375 = vmatmul.mubr.bf16.gmra.mrb[0].mxu0 %v2258
        %v2376 = vpop.f32.mrb[0].mxu0
        %v2377 = vadd.f32 0.0, %v2376
        %v2378 = vpop.f32.mrb[0].mxu0
        %v2379 = vadd.f32 0.0, %v2378
        %v2380 = vpop.f32.mrb[0].mxu0
        %v2381 = vpop.f32.mrb[0].mxu0
        %2382 = vdwg.mxu0
        %v2395 = vunpack.c.l.b16 %v2171
        %v2396 = vunpack.c.h.b16 %v2171
        %v2397 = vunpack.c.l.b16 %v2172
        %v2398 = vunpack.c.h.b16 %v2172
        %v2399 = vunpack.c.l.b16 %v2173
        %v2400 = vunpack.c.h.b16 %v2173
        %v2401 = vunpack.c.l.b16 %v2174
        %v2402 = vunpack.c.h.b16 %v2174
        %v2403 = vunpack.c.l.b16 %v2175
        %v2404 = vunpack.c.h.b16 %v2175
        %v2405 = vunpack.c.l.b16 %v2176
        %v2406 = vunpack.c.h.b16 %v2176
        %v2407 = vunpack.c.l.b16 %v2177
        %v2408 = vunpack.c.h.b16 %v2177
        %v2409 = vunpack.c.l.b16 %v2178
        %v2410 = vunpack.c.h.b16 %v2178
        %v2411 = vunpack.c.l.b16 %v2179
        %v2412 = vunpack.c.h.b16 %v2179
        %v2413 = vunpack.c.l.b16 %v2180
        %v2414 = vunpack.c.h.b16 %v2180
        %v2415 = vunpack.c.l.b16 %v2181
        %v2416 = vunpack.c.h.b16 %v2181
        %v2417 = vunpack.c.l.b16 %v2182
        %v2418 = vunpack.c.h.b16 %v2182
        %v2419 = vpack.c.b16 %v2401, %v2395
        %v2420 = vpack.c.b16 %v2402, %v2396
        %v2421 = vpack.c.b16 %v2403, %v2397
        %v2422 = vpack.c.b16 %v2404, %v2398
        %v2423 = vpack.c.b16 %v2405, %v2399
        %v2424 = vpack.c.b16 %v2406, %v2400
        %v2425 = vpack.c.b16 %v2413, %v2407
        %v2426 = vpack.c.b16 %v2414, %v2408
        %v2427 = vpack.c.b16 %v2415, %v2409
        %v2428 = vpack.c.b16 %v2416, %v2410
        %v2429 = vpack.c.b16 %v2417, %v2411
        %v2430 = vpack.c.b16 %v2418, %v2412
        %v2444 = vsel %vm529, %v2170, 0
        %2446 = vmatprep.subr.bf16.mxu0 %v2420
        %2447 = vmatpush1.bf16.msra.mxu0 %v2419
        %2448 = vmatprep.subr.bf16.mxu0 %v2426
        %2449 = vmatpush1.bf16.msra.mxu0 %v2425
        %2450 = vmatprep.subr.bf16.mxu0 0
        %2451 = vmatpush1.bf16.msra.mxu0 0
        %2452 = vmatprep.subr.bf16.mxu0 0
        %2453 = vmatpush1.bf16.msra.mxu0 0
        %2454 = vmatprep.subr.bf16.mxu0 0
        %2455 = vmatpush1.bf16.msra.mxu0 0
        %2456 = vmatprep.subr.bf16.mxu0 0
        %2457 = vmatpush1.bf16.msra.mxu0 0
        %2458 = vmatprep.subr.bf16.mxu0 0
        %2459 = vmatpush1.bf16.msra.mxu0 0
        %2460 = vmatprep.subr.bf16.mxu0 0
        %2461 = vmatpush1.bf16.msra.mxu0 0
        %2462 = vmatprep.subr.bf16.mxu0 0
        %2463 = vmatpush1.bf16.msra.mxu0 0
        %2464 = vmatprep.subr.bf16.mxu0 0
        %2465 = vmatpush1.bf16.msra.mxu0 0
        %2466 = vmatprep.subr.bf16.mxu0 0
        %2467 = vmatpush1.bf16.msra.mxu0 0
        %2468 = vmatprep.subr.bf16.mxu0 0
        %2469 = vmatpush1.bf16.msra.mxu0 0
        %2470 = vmatprep.subr.bf16.mxu0 0
        %2471 = vmatpush1.bf16.msra.mxu0 0
        %2472 = vmatprep.subr.bf16.mxu0 0
        %2473 = vmatpush1.bf16.msra.mxu0 0
        %2474 = vmatprep.subr.bf16.mxu0 0
        %2475 = vmatpush1.bf16.msra.mxu0 0
        %2476 = vmatprep.subr.bf16.mxu0 0
        %2477 = vmatpush1.bf16.msra.mxu0 0
        %2478 = vmatprep.mubr.bf16.mxu0 0
        %2479 = vmatmul.mubr.bf16.gmra.mrb[0].mxu0 %v2444
        %v2480 = vpop.f32.mrb[0].mxu0
        %v2481 = vadd.f32 %v2295, %v2480
        %v2482 = vpop.f32.mrb[0].mxu0
        %v2483 = vadd.f32 %v2297, %v2482
        %v2484 = vpop.f32.mrb[0].mxu0
        %v2485 = vpop.f32.mrb[0].mxu0
        %2486 = vdwg.mxu0
        %2487 = vmatprep.subr.bf16.mxu0 %v2422
        %2488 = vmatpush1.bf16.msra.mxu0 %v2421
        %2489 = vmatprep.subr.bf16.mxu0 %v2428
        %2490 = vmatpush1.bf16.msra.mxu0 %v2427
        %2491 = vmatprep.subr.bf16.mxu0 0
        %2492 = vmatpush1.bf16.msra.mxu0 0
        %2493 = vmatprep.subr.bf16.mxu0 0
        %2494 = vmatpush1.bf16.msra.mxu0 0
        %2495 = vmatprep.subr.bf16.mxu0 0
        %2496 = vmatpush1.bf16.msra.mxu0 0
        %2497 = vmatprep.subr.bf16.mxu0 0
        %2498 = vmatpush1.bf16.msra.mxu0 0
        %2499 = vmatprep.subr.bf16.mxu0 0
        %2500 = vmatpush1.bf16.msra.mxu0 0
        %2501 = vmatprep.subr.bf16.mxu0 0
        %2502 = vmatpush1.bf16.msra.mxu0 0
        %2503 = vmatprep.subr.bf16.mxu0 0
        %2504 = vmatpush1.bf16.msra.mxu0 0
        %2505 = vmatprep.subr.bf16.mxu0 0
        %2506 = vmatpush1.bf16.msra.mxu0 0
        %2507 = vmatprep.subr.bf16.mxu0 0
        %2508 = vmatpush1.bf16.msra.mxu0 0
        %2509 = vmatprep.subr.bf16.mxu0 0
        %2510 = vmatpush1.bf16.msra.mxu0 0
        %2511 = vmatprep.subr.bf16.mxu0 0
        %2512 = vmatpush1.bf16.msra.mxu0 0
        %2513 = vmatprep.subr.bf16.mxu0 0
        %2514 = vmatpush1.bf16.msra.mxu0 0
        %2515 = vmatprep.subr.bf16.mxu0 0
        %2516 = vmatpush1.bf16.msra.mxu0 0
        %2517 = vmatprep.subr.bf16.mxu0 0
        %2518 = vmatpush1.bf16.msra.mxu0 0
        %2519 = vmatprep.mubr.bf16.mxu0 0
        %2520 = vmatmul.mubr.bf16.gmra.mrb[0].mxu0 %v2444
        %v2521 = vpop.f32.mrb[0].mxu0
        %v2522 = vadd.f32 %v2336, %v2521
        %v2523 = vpop.f32.mrb[0].mxu0
        %v2524 = vadd.f32 %v2338, %v2523
        %v2525 = vpop.f32.mrb[0].mxu0
        %v2526 = vpop.f32.mrb[0].mxu0
        %2527 = vdwg.mxu0
        %2528 = vmatprep.subr.bf16.mxu0 %v2424
        %2529 = vmatpush1.bf16.msra.mxu0 %v2423
        %2530 = vmatprep.subr.bf16.mxu0 %v2430
        %2531 = vmatpush1.bf16.msra.mxu0 %v2429
        %2532 = vmatprep.subr.bf16.mxu0 0
        %2533 = vmatpush1.bf16.msra.mxu0 0
        %2534 = vmatprep.subr.bf16.mxu0 0
        %2535 = vmatpush1.bf16.msra.mxu0 0
        %2536 = vmatprep.subr.bf16.mxu0 0
        %2537 = vmatpush1.bf16.msra.mxu0 0
        %2538 = vmatprep.subr.bf16.mxu0 0
        %2539 = vmatpush1.bf16.msra.mxu0 0
        %2540 = vmatprep.subr.bf16.mxu0 0
        %2541 = vmatpush1.bf16.msra.mxu0 0
        %2542 = vmatprep.subr.bf16.mxu0 0
        %2543 = vmatpush1.bf16.msra.mxu0 0
        %2544 = vmatprep.subr.bf16.mxu0 0
        %2545 = vmatpush1.bf16.msra.mxu0 0
        %2546 = vmatprep.subr.bf16.mxu0 0
        %2547 = vmatpush1.bf16.msra.mxu0 0
        %2548 = vmatprep.subr.bf16.mxu0 0
        %2549 = vmatpush1.bf16.msra.mxu0 0
        %2550 = vmatprep.subr.bf16.mxu0 0
        %2551 = vmatpush1.bf16.msra.mxu0 0
        %2552 = vmatprep.subr.bf16.mxu0 0
        %2553 = vmatpush1.bf16.msra.mxu0 0
        %2554 = vmatprep.subr.bf16.mxu0 0
        %2555 = vmatpush1.bf16.msra.mxu0 0
        %2556 = vmatprep.subr.bf16.mxu0 0
        %2557 = vmatpush1.bf16.msra.mxu0 0
        %2558 = vmatprep.subr.bf16.mxu0 0
        %2559 = vmatpush1.bf16.msra.mxu0 0
        %2560 = vmatprep.mubr.bf16.mxu0 0
        %2561 = vmatmul.mubr.bf16.gmra.mrb[0].mxu0 %v2444
        %v2562 = vpop.f32.mrb[0].mxu0
        %v2563 = vadd.f32 %v2377, %v2562
        %v2564 = vpop.f32.mrb[0].mxu0
        %v2565 = vadd.f32 %v2379, %v2564
        %v2566 = vpop.f32.mrb[0].mxu0
        %v2567 = vpop.f32.mrb[0].mxu0
        %2568 = vdwg.mxu0
        %v2569 = vld [vmem:[%s438 + $0x1] sm:$0x3f]
        %v2570 = vpack.c.bf16 %v2569, %v2569
        %v2571 = vld [vmem:[%s844] sm:$0xff]
        %v2572 = vld [vmem:[%s844 + $0x8] sm:$0xff]
        %v2573 = vld [vmem:[%s844 + $0x10] sm:$0xff]
        %v2574 = vld [vmem:[%s844 + $0x18] sm:$0xff]
        %v2575 = vld [vmem:[%s844 + $0x20] sm:$0xff]
        %v2576 = vld [vmem:[%s844 + $0x28] sm:$0xff]
        %v2577 = vld [vmem:[%s844 + $0x30] sm:$0xff]
        %v2578 = vld [vmem:[%s844 + $0x38] sm:$0xff]
        %v2579 = vld [vmem:[%s844 + $0x40] sm:$0xff]
        %v2580 = vld [vmem:[%s844 + $0x48] sm:$0xff]
        %v2581 = vld [vmem:[%s844 + $0x50] sm:$0xff]
        %v2582 = vld [vmem:[%s844 + $0x58] sm:$0xff]
        %v2595 = vunpack.c.l.b16 %v2571
        %v2596 = vunpack.c.h.b16 %v2571
        %v2597 = vunpack.c.l.b16 %v2572
        %v2598 = vunpack.c.h.b16 %v2572
        %v2599 = vunpack.c.l.b16 %v2573
        %v2600 = vunpack.c.h.b16 %v2573
        %v2601 = vunpack.c.l.b16 %v2574
        %v2602 = vunpack.c.h.b16 %v2574
        %v2603 = vunpack.c.l.b16 %v2575
        %v2604 = vunpack.c.h.b16 %v2575
        %v2605 = vunpack.c.l.b16 %v2576
        %v2606 = vunpack.c.h.b16 %v2576
        %v2607 = vunpack.c.l.b16 %v2577
        %v2608 = vunpack.c.h.b16 %v2577
        %v2609 = vunpack.c.l.b16 %v2578
        %v2610 = vunpack.c.h.b16 %v2578
        %v2611 = vunpack.c.l.b16 %v2579
        %v2612 = vunpack.c.h.b16 %v2579
        %v2613 = vunpack.c.l.b16 %v2580
        %v2614 = vunpack.c.h.b16 %v2580
        %v2615 = vunpack.c.l.b16 %v2581
        %v2616 = vunpack.c.h.b16 %v2581
        %v2617 = vunpack.c.l.b16 %v2582
        %v2618 = vunpack.c.h.b16 %v2582
        %v2619 = vpack.c.b16 %v2601, %v2595
        %v2620 = vpack.c.b16 %v2602, %v2596
        %v2621 = vpack.c.b16 %v2603, %v2597
        %v2622 = vpack.c.b16 %v2604, %v2598
        %v2623 = vpack.c.b16 %v2605, %v2599
        %v2624 = vpack.c.b16 %v2606, %v2600
        %v2625 = vpack.c.b16 %v2613, %v2607
        %v2626 = vpack.c.b16 %v2614, %v2608
        %v2627 = vpack.c.b16 %v2615, %v2609
        %v2628 = vpack.c.b16 %v2616, %v2610
        %v2629 = vpack.c.b16 %v2617, %v2611
        %v2630 = vpack.c.b16 %v2618, %v2612
        %v2644 = vsel %vm529, %v2570, 0
        %2646 = vmatprep.subr.bf16.mxu0 %v2620
        %2647 = vmatpush1.bf16.msra.mxu0 %v2619
        %2648 = vmatprep.subr.bf16.mxu0 %v2626
        %2649 = vmatpush1.bf16.msra.mxu0 %v2625
        %2650 = vmatprep.subr.bf16.mxu0 0
        %2651 = vmatpush1.bf16.msra.mxu0 0
        %2652 = vmatprep.subr.bf16.mxu0 0
        %2653 = vmatpush1.bf16.msra.mxu0 0
        %2654 = vmatprep.subr.bf16.mxu0 0
        %2655 = vmatpush1.bf16.msra.mxu0 0
        %2656 = vmatprep.subr.bf16.mxu0 0
        %2657 = vmatpush1.bf16.msra.mxu0 0
        %2658 = vmatprep.subr.bf16.mxu0 0
        %2659 = vmatpush1.bf16.msra.mxu0 0
        %2660 = vmatprep.subr.bf16.mxu0 0
        %2661 = vmatpush1.bf16.msra.mxu0 0
        %2662 = vmatprep.subr.bf16.mxu0 0
        %2663 = vmatpush1.bf16.msra.mxu0 0
        %2664 = vmatprep.subr.bf16.mxu0 0
        %2665 = vmatpush1.bf16.msra.mxu0 0
        %2666 = vmatprep.subr.bf16.mxu0 0
        %2667 = vmatpush1.bf16.msra.mxu0 0
        %2668 = vmatprep.subr.bf16.mxu0 0
        %2669 = vmatpush1.bf16.msra.mxu0 0
        %2670 = vmatprep.subr.bf16.mxu0 0
        %2671 = vmatpush1.bf16.msra.mxu0 0
        %2672 = vmatprep.subr.bf16.mxu0 0
        %2673 = vmatpush1.bf16.msra.mxu0 0
        %2674 = vmatprep.subr.bf16.mxu0 0
        %2675 = vmatpush1.bf16.msra.mxu0 0
        %2676 = vmatprep.subr.bf16.mxu0 0
        %2677 = vmatpush1.bf16.msra.mxu0 0
        %2678 = vmatprep.mubr.bf16.mxu0 0
        %2679 = vmatmul.mubr.bf16.gmra.mrb[0].mxu0 %v2644
        %v2680 = vpop.f32.mrb[0].mxu0
        %v2681 = vadd.f32 0.0, %v2680
        %v2682 = vpop.f32.mrb[0].mxu0
        %v2683 = vadd.f32 0.0, %v2682
        %v2684 = vpop.f32.mrb[0].mxu0
        %v2685 = vpop.f32.mrb[0].mxu0
        %2686 = vdwg.mxu0
        %2687 = vmatprep.subr.bf16.mxu0 %v2622
        %2688 = vmatpush1.bf16.msra.mxu0 %v2621
        %2689 = vmatprep.subr.bf16.mxu0 %v2628
        %2690 = vmatpush1.bf16.msra.mxu0 %v2627
        %2691 = vmatprep.subr.bf16.mxu0 0
        %2692 = vmatpush1.bf16.msra.mxu0 0
        %2693 = vmatprep.subr.bf16.mxu0 0
        %2694 = vmatpush1.bf16.msra.mxu0 0
        %2695 = vmatprep.subr.bf16.mxu0 0
        %2696 = vmatpush1.bf16.msra.mxu0 0
        %2697 = vmatprep.subr.bf16.mxu0 0
        %2698 = vmatpush1.bf16.msra.mxu0 0
        %2699 = vmatprep.subr.bf16.mxu0 0
        %2700 = vmatpush1.bf16.msra.mxu0 0
        %2701 = vmatprep.subr.bf16.mxu0 0
        %2702 = vmatpush1.bf16.msra.mxu0 0
        %2703 = vmatprep.subr.bf16.mxu0 0
        %2704 = vmatpush1.bf16.msra.mxu0 0
        %2705 = vmatprep.subr.bf16.mxu0 0
        %2706 = vmatpush1.bf16.msra.mxu0 0
        %2707 = vmatprep.subr.bf16.mxu0 0
        %2708 = vmatpush1.bf16.msra.mxu0 0
        %2709 = vmatprep.subr.bf16.mxu0 0
        %2710 = vmatpush1.bf16.msra.mxu0 0
        %2711 = vmatprep.subr.bf16.mxu0 0
        %2712 = vmatpush1.bf16.msra.mxu0 0
        %2713 = vmatprep.subr.bf16.mxu0 0
        %2714 = vmatpush1.bf16.msra.mxu0 0
        %2715 = vmatprep.subr.bf16.mxu0 0
        %2716 = vmatpush1.bf16.msra.mxu0 0
        %2717 = vmatprep.subr.bf16.mxu0 0
        %2718 = vmatpush1.bf16.msra.mxu0 0
        %2719 = vmatprep.mubr.bf16.mxu0 0
        %2720 = vmatmul.mubr.bf16.gmra.mrb[0].mxu0 %v2644
        %v2721 = vpop.f32.mrb[0].mxu0
        %v2722 = vadd.f32 0.0, %v2721
        %v2723 = vpop.f32.mrb[0].mxu0
        %v2724 = vadd.f32 0.0, %v2723
        %v2725 = vpop.f32.mrb[0].mxu0
        %v2726 = vpop.f32.mrb[0].mxu0
        %2727 = vdwg.mxu0
        %2728 = vmatprep.subr.bf16.mxu0 %v2624
        %2729 = vmatpush1.bf16.msra.mxu0 %v2623
        %2730 = vmatprep.subr.bf16.mxu0 %v2630
        %2731 = vmatpush1.bf16.msra.mxu0 %v2629
        %2732 = vmatprep.subr.bf16.mxu0 0
        %2733 = vmatpush1.bf16.msra.mxu0 0
        %2734 = vmatprep.subr.bf16.mxu0 0
        %2735 = vmatpush1.bf16.msra.mxu0 0
        %2736 = vmatprep.subr.bf16.mxu0 0
        %2737 = vmatpush1.bf16.msra.mxu0 0
        %2738 = vmatprep.subr.bf16.mxu0 0
        %2739 = vmatpush1.bf16.msra.mxu0 0
        %2740 = vmatprep.subr.bf16.mxu0 0
        %2741 = vmatpush1.bf16.msra.mxu0 0
        %2742 = vmatprep.subr.bf16.mxu0 0
        %2743 = vmatpush1.bf16.msra.mxu0 0
        %2744 = vmatprep.subr.bf16.mxu0 0
        %2745 = vmatpush1.bf16.msra.mxu0 0
        %2746 = vmatprep.subr.bf16.mxu0 0
        %2747 = vmatpush1.bf16.msra.mxu0 0
        %2748 = vmatprep.subr.bf16.mxu0 0
        %2749 = vmatpush1.bf16.msra.mxu0 0
        %2750 = vmatprep.subr.bf16.mxu0 0
        %2751 = vmatpush1.bf16.msra.mxu0 0
        %2752 = vmatprep.subr.bf16.mxu0 0
        %2753 = vmatpush1.bf16.msra.mxu0 0
        %2754 = vmatprep.subr.bf16.mxu0 0
        %2755 = vmatpush1.bf16.msra.mxu0 0
        %2756 = vmatprep.subr.bf16.mxu0 0
        %2757 = vmatpush1.bf16.msra.mxu0 0
        %2758 = vmatprep.subr.bf16.mxu0 0
        %2759 = vmatpush1.bf16.msra.mxu0 0
        %2760 = vmatprep.mubr.bf16.mxu0 0
        %2761 = vmatmul.mubr.bf16.gmra.mrb[0].mxu0 %v2644
        %v2762 = vpop.f32.mrb[0].mxu0
        %v2763 = vadd.f32 0.0, %v2762
        %v2764 = vpop.f32.mrb[0].mxu0
        %v2765 = vadd.f32 0.0, %v2764
        %v2766 = vpop.f32.mrb[0].mxu0
        %v2767 = vpop.f32.mrb[0].mxu0
        %2768 = vdwg.mxu0
        %v2769 = vadd.f32 %v2481, %v2681
        %v2770 = vadd.f32 %v2483, %v2683
        %v2771 = vadd.f32 %v2522, %v2722
        %v2772 = vadd.f32 %v2524, %v2724
        %v2773 = vadd.f32 %v2563, %v2763
        %v2774 = vadd.f32 %v2565, %v2765
        %v2775 = vld [vmem:[%s438 + $0x8] sm:$0x3f]
        %v2776 = vpack.c.bf16 %v2775, %v2775
        %v2777 = vld [vmem:[%s1051] sm:$0xff]
        %v2778 = vld [vmem:[%s1051 + $0x8] sm:$0xff]
        %v2779 = vld [vmem:[%s1051 + $0x10] sm:$0xff]
        %v2780 = vld [vmem:[%s1051 + $0x18] sm:$0xff]
        %v2781 = vld [vmem:[%s1051 + $0x20] sm:$0xff]
        %v2782 = vld [vmem:[%s1051 + $0x28] sm:$0xff]
        %v2783 = vld [vmem:[%s1051 + $0x30] sm:$0xff]
        %v2784 = vld [vmem:[%s1051 + $0x38] sm:$0xff]
        %v2785 = vld [vmem:[%s1051 + $0x40] sm:$0xff]
        %v2786 = vld [vmem:[%s1051 + $0x48] sm:$0xff]
        %v2787 = vld [vmem:[%s1051 + $0x50] sm:$0xff]
        %v2788 = vld [vmem:[%s1051 + $0x58] sm:$0xff]
        %v2801 = vunpack.c.l.b16 %v2777
        %v2802 = vunpack.c.h.b16 %v2777
        %v2803 = vunpack.c.l.b16 %v2778
        %v2804 = vunpack.c.h.b16 %v2778
        %v2805 = vunpack.c.l.b16 %v2779
        %v2806 = vunpack.c.h.b16 %v2779
        %v2807 = vunpack.c.l.b16 %v2780
        %v2808 = vunpack.c.h.b16 %v2780
        %v2809 = vunpack.c.l.b16 %v2781
        %v2810 = vunpack.c.h.b16 %v2781
        %v2811 = vunpack.c.l.b16 %v2782
        %v2812 = vunpack.c.h.b16 %v2782
        %v2813 = vunpack.c.l.b16 %v2783
        %v2814 = vunpack.c.h.b16 %v2783
        %v2815 = vunpack.c.l.b16 %v2784
        %v2816 = vunpack.c.h.b16 %v2784
        %v2817 = vunpack.c.l.b16 %v2785
        %v2818 = vunpack.c.h.b16 %v2785
        %v2819 = vunpack.c.l.b16 %v2786
        %v2820 = vunpack.c.h.b16 %v2786
        %v2821 = vunpack.c.l.b16 %v2787
        %v2822 = vunpack.c.h.b16 %v2787
        %v2823 = vunpack.c.l.b16 %v2788
        %v2824 = vunpack.c.h.b16 %v2788
        %v2825 = vpack.c.b16 %v2807, %v2801
        %v2826 = vpack.c.b16 %v2808, %v2802
        %v2827 = vpack.c.b16 %v2809, %v2803
        %v2828 = vpack.c.b16 %v2810, %v2804
        %v2829 = vpack.c.b16 %v2811, %v2805
        %v2830 = vpack.c.b16 %v2812, %v2806
        %v2831 = vpack.c.b16 %v2819, %v2813
        %v2832 = vpack.c.b16 %v2820, %v2814
        %v2833 = vpack.c.b16 %v2821, %v2815
        %v2834 = vpack.c.b16 %v2822, %v2816
        %v2835 = vpack.c.b16 %v2823, %v2817
        %v2836 = vpack.c.b16 %v2824, %v2818
        %v2850 = vsel %vm529, %v2776, 0
        %2852 = vmatprep.subr.bf16.mxu0 %v2826
        %2853 = vmatpush1.bf16.msra.mxu0 %v2825
        %2854 = vmatprep.subr.bf16.mxu0 %v2832
        %2855 = vmatpush1.bf16.msra.mxu0 %v2831
        %2856 = vmatprep.subr.bf16.mxu0 0
        %2857 = vmatpush1.bf16.msra.mxu0 0
        %2858 = vmatprep.subr.bf16.mxu0 0
        %2859 = vmatpush1.bf16.msra.mxu0 0
        %2860 = vmatprep.subr.bf16.mxu0 0
        %2861 = vmatpush1.bf16.msra.mxu0 0
        %2862 = vmatprep.subr.bf16.mxu0 0
        %2863 = vmatpush1.bf16.msra.mxu0 0
        %2864 = vmatprep.subr.bf16.mxu0 0
        %2865 = vmatpush1.bf16.msra.mxu0 0
        %2866 = vmatprep.subr.bf16.mxu0 0
        %2867 = vmatpush1.bf16.msra.mxu0 0
        %2868 = vmatprep.subr.bf16.mxu0 0
        %2869 = vmatpush1.bf16.msra.mxu0 0
        %2870 = vmatprep.subr.bf16.mxu0 0
        %2871 = vmatpush1.bf16.msra.mxu0 0
        %2872 = vmatprep.subr.bf16.mxu0 0
        %2873 = vmatpush1.bf16.msra.mxu0 0
        %2874 = vmatprep.subr.bf16.mxu0 0
        %2875 = vmatpush1.bf16.msra.mxu0 0
        %2876 = vmatprep.subr.bf16.mxu0 0
        %2877 = vmatpush1.bf16.msra.mxu0 0
        %2878 = vmatprep.subr.bf16.mxu0 0
        %2879 = vmatpush1.bf16.msra.mxu0 0
        %2880 = vmatprep.subr.bf16.mxu0 0
        %2881 = vmatpush1.bf16.msra.mxu0 0
        %2882 = vmatprep.subr.bf16.mxu0 0
        %2883 = vmatpush1.bf16.msra.mxu0 0
        %2884 = vmatprep.mubr.bf16.mxu0 0
        %2885 = vmatmul.mubr.bf16.gmra.mrb[0].mxu0 %v2850
        %v2886 = vpop.f32.mrb[0].mxu0
        %v2887 = vadd.f32 0.0, %v2886
        %v2888 = vpop.f32.mrb[0].mxu0
        %v2889 = vadd.f32 0.0, %v2888
        %v2890 = vpop.f32.mrb[0].mxu0
        %v2891 = vpop.f32.mrb[0].mxu0
        %2892 = vdwg.mxu0
        %2893 = vmatprep.subr.bf16.mxu0 %v2828
        %2894 = vmatpush1.bf16.msra.mxu0 %v2827
        %2895 = vmatprep.subr.bf16.mxu0 %v2834
        %2896 = vmatpush1.bf16.msra.mxu0 %v2833
        %2897 = vmatprep.subr.bf16.mxu0 0
        %2898 = vmatpush1.bf16.msra.mxu0 0
        %2899 = vmatprep.subr.bf16.mxu0 0
        %2900 = vmatpush1.bf16.msra.mxu0 0
        %2901 = vmatprep.subr.bf16.mxu0 0
        %2902 = vmatpush1.bf16.msra.mxu0 0
        %2903 = vmatprep.subr.bf16.mxu0 0
        %2904 = vmatpush1.bf16.msra.mxu0 0
        %2905 = vmatprep.subr.bf16.mxu0 0
        %2906 = vmatpush1.bf16.msra.mxu0 0
        %2907 = vmatprep.subr.bf16.mxu0 0
        %2908 = vmatpush1.bf16.msra.mxu0 0
        %2909 = vmatprep.subr.bf16.mxu0 0
        %2910 = vmatpush1.bf16.msra.mxu0 0
        %2911 = vmatprep.subr.bf16.mxu0 0
        %2912 = vmatpush1.bf16.msra.mxu0 0
        %2913 = vmatprep.subr.bf16.mxu0 0
        %2914 = vmatpush1.bf16.msra.mxu0 0
        %2915 = vmatprep.subr.bf16.mxu0 0
        %2916 = vmatpush1.bf16.msra.mxu0 0
        %2917 = vmatprep.subr.bf16.mxu0 0
        %2918 = vmatpush1.bf16.msra.mxu0 0
        %2919 = vmatprep.subr.bf16.mxu0 0
        %2920 = vmatpush1.bf16.msra.mxu0 0
        %2921 = vmatprep.subr.bf16.mxu0 0
        %2922 = vmatpush1.bf16.msra.mxu0 0
        %2923 = vmatprep.subr.bf16.mxu0 0
        %2924 = vmatpush1.bf16.msra.mxu0 0
        %2925 = vmatprep.mubr.bf16.mxu0 0
        %2926 = vmatmul.mubr.bf16.gmra.mrb[0].mxu0 %v2850
        %v2927 = vpop.f32.mrb[0].mxu0
        %v2928 = vadd.f32 0.0, %v2927
        %v2929 = vpop.f32.mrb[0].mxu0
        %v2930 = vadd.f32 0.0, %v2929
        %v2931 = vpop.f32.mrb[0].mxu0
        %v2932 = vpop.f32.mrb[0].mxu0
        %2933 = vdwg.mxu0
        %2934 = vmatprep.subr.bf16.mxu0 %v2830
        %2935 = vmatpush1.bf16.msra.mxu0 %v2829
        %2936 = vmatprep.subr.bf16.mxu0 %v2836
        %2937 = vmatpush1.bf16.msra.mxu0 %v2835
        %2938 = vmatprep.subr.bf16.mxu0 0
        %2939 = vmatpush1.bf16.msra.mxu0 0
        %2940 = vmatprep.subr.bf16.mxu0 0
        %2941 = vmatpush1.bf16.msra.mxu0 0
        %2942 = vmatprep.subr.bf16.mxu0 0
        %2943 = vmatpush1.bf16.msra.mxu0 0
        %2944 = vmatprep.subr.bf16.mxu0 0
        %2945 = vmatpush1.bf16.msra.mxu0 0
        %2946 = vmatprep.subr.bf16.mxu0 0
        %2947 = vmatpush1.bf16.msra.mxu0 0
        %2948 = vmatprep.subr.bf16.mxu0 0
        %2949 = vmatpush1.bf16.msra.mxu0 0
        %2950 = vmatprep.subr.bf16.mxu0 0
        %2951 = vmatpush1.bf16.msra.mxu0 0
        %2952 = vmatprep.subr.bf16.mxu0 0
        %2953 = vmatpush1.bf16.msra.mxu0 0
        %2954 = vmatprep.subr.bf16.mxu0 0
        %2955 = vmatpush1.bf16.msra.mxu0 0
        %2956 = vmatprep.subr.bf16.mxu0 0
        %2957 = vmatpush1.bf16.msra.mxu0 0
        %2958 = vmatprep.subr.bf16.mxu0 0
        %2959 = vmatpush1.bf16.msra.mxu0 0
        %2960 = vmatprep.subr.bf16.mxu0 0
        %2961 = vmatpush1.bf16.msra.mxu0 0
        %2962 = vmatprep.subr.bf16.mxu0 0
        %2963 = vmatpush1.bf16.msra.mxu0 0
        %2964 = vmatprep.subr.bf16.mxu0 0
        %2965 = vmatpush1.bf16.msra.mxu0 0
        %2966 = vmatprep.mubr.bf16.mxu0 0
        %2967 = vmatmul.mubr.bf16.gmra.mrb[0].mxu0 %v2850
        %v2968 = vpop.f32.mrb[0].mxu0
        %v2969 = vadd.f32 0.0, %v2968
        %v2970 = vpop.f32.mrb[0].mxu0
        %v2971 = vadd.f32 0.0, %v2970
        %v2972 = vpop.f32.mrb[0].mxu0
        %v2973 = vpop.f32.mrb[0].mxu0
        %2974 = vdwg.mxu0
        %v2975 = vadd.f32 %v2769, %v2887
        %v2976 = vadd.f32 %v2770, %v2889
        %v2977 = vadd.f32 %v2771, %v2928
        %v2978 = vadd.f32 %v2772, %v2930
        %v2979 = vadd.f32 %v2773, %v2969
        %v2980 = vadd.f32 %v2774, %v2971
        %v2981 = vld [vmem:[%s438 + $0xf] sm:$0x3f]
        %v2982 = vpack.c.bf16 %v2981, %v2981
        %v2983 = vld [vmem:[%s1258] sm:$0xff]
        %v2984 = vld [vmem:[%s1258 + $0x8] sm:$0xff]
        %v2985 = vld [vmem:[%s1258 + $0x10] sm:$0xff]
        %v2986 = vld [vmem:[%s1258 + $0x18] sm:$0xff]
        %v2987 = vld [vmem:[%s1258 + $0x20] sm:$0xff]
        %v2988 = vld [vmem:[%s1258 + $0x28] sm:$0xff]
        %v2989 = vld [vmem:[%s1258 + $0x30] sm:$0xff]
        %v2990 = vld [vmem:[%s1258 + $0x38] sm:$0xff]
        %v2991 = vld [vmem:[%s1258 + $0x40] sm:$0xff]
        %v2992 = vld [vmem:[%s1258 + $0x48] sm:$0xff]
        %v2993 = vld [vmem:[%s1258 + $0x50] sm:$0xff]
        %v2994 = vld [vmem:[%s1258 + $0x58] sm:$0xff]
        %v3007 = vunpack.c.l.b16 %v2983
        %v3008 = vunpack.c.h.b16 %v2983
        %v3009 = vunpack.c.l.b16 %v2984
        %v3010 = vunpack.c.h.b16 %v2984
        %v3011 = vunpack.c.l.b16 %v2985
        %v3012 = vunpack.c.h.b16 %v2985
        %v3013 = vunpack.c.l.b16 %v2986
        %v3014 = vunpack.c.h.b16 %v2986
        %v3015 = vunpack.c.l.b16 %v2987
        %v3016 = vunpack.c.h.b16 %v2987
        %v3017 = vunpack.c.l.b16 %v2988
        %v3018 = vunpack.c.h.b16 %v2988
        %v3019 = vunpack.c.l.b16 %v2989
        %v3020 = vunpack.c.h.b16 %v2989
        %v3021 = vunpack.c.l.b16 %v2990
        %v3022 = vunpack.c.h.b16 %v2990
        %v3023 = vunpack.c.l.b16 %v2991
        %v3024 = vunpack.c.h.b16 %v2991
        %v3025 = vunpack.c.l.b16 %v2992
        %v3026 = vunpack.c.h.b16 %v2992
        %v3027 = vunpack.c.l.b16 %v2993
        %v3028 = vunpack.c.h.b16 %v2993
        %v3029 = vunpack.c.l.b16 %v2994
        %v3030 = vunpack.c.h.b16 %v2994
        %v3031 = vpack.c.b16 %v3013, %v3007
        %v3032 = vpack.c.b16 %v3014, %v3008
        %v3033 = vpack.c.b16 %v3015, %v3009
        %v3034 = vpack.c.b16 %v3016, %v3010
        %v3035 = vpack.c.b16 %v3017, %v3011
        %v3036 = vpack.c.b16 %v3018, %v3012
        %v3037 = vpack.c.b16 %v3025, %v3019
        %v3038 = vpack.c.b16 %v3026, %v3020
        %v3039 = vpack.c.b16 %v3027, %v3021
        %v3040 = vpack.c.b16 %v3028, %v3022
        %v3041 = vpack.c.b16 %v3029, %v3023
        %v3042 = vpack.c.b16 %v3030, %v3024
        %v3056 = vsel %vm529, %v2982, 0
        %3058 = vmatprep.subr.bf16.mxu0 %v3032
        %3059 = vmatpush1.bf16.msra.mxu0 %v3031
        %3060 = vmatprep.subr.bf16.mxu0 %v3038
        %3061 = vmatpush1.bf16.msra.mxu0 %v3037
        %3062 = vmatprep.subr.bf16.mxu0 0
        %3063 = vmatpush1.bf16.msra.mxu0 0
        %3064 = vmatprep.subr.bf16.mxu0 0
        %3065 = vmatpush1.bf16.msra.mxu0 0
        %3066 = vmatprep.subr.bf16.mxu0 0
        %3067 = vmatpush1.bf16.msra.mxu0 0
        %3068 = vmatprep.subr.bf16.mxu0 0
        %3069 = vmatpush1.bf16.msra.mxu0 0
        %3070 = vmatprep.subr.bf16.mxu0 0
        %3071 = vmatpush1.bf16.msra.mxu0 0
        %3072 = vmatprep.subr.bf16.mxu0 0
        %3073 = vmatpush1.bf16.msra.mxu0 0
        %3074 = vmatprep.subr.bf16.mxu0 0
        %3075 = vmatpush1.bf16.msra.mxu0 0
        %3076 = vmatprep.subr.bf16.mxu0 0
        %3077 = vmatpush1.bf16.msra.mxu0 0
        %3078 = vmatprep.subr.bf16.mxu0 0
        %3079 = vmatpush1.bf16.msra.mxu0 0
        %3080 = vmatprep.subr.bf16.mxu0 0
        %3081 = vmatpush1.bf16.msra.mxu0 0
        %3082 = vmatprep.subr.bf16.mxu0 0
        %3083 = vmatpush1.bf16.msra.mxu0 0
        %3084 = vmatprep.subr.bf16.mxu0 0
        %3085 = vmatpush1.bf16.msra.mxu0 0
        %3086 = vmatprep.subr.bf16.mxu0 0
        %3087 = vmatpush1.bf16.msra.mxu0 0
        %3088 = vmatprep.subr.bf16.mxu0 0
        %3089 = vmatpush1.bf16.msra.mxu0 0
        %3090 = vmatprep.mubr.bf16.mxu0 0
        %3091 = vmatmul.mubr.bf16.gmra.mrb[0].mxu0 %v3056
        %v3092 = vpop.f32.mrb[0].mxu0
        %v3093 = vadd.f32 0.0, %v3092
        %v3094 = vpop.f32.mrb[0].mxu0
        %v3095 = vadd.f32 0.0, %v3094
        %v3096 = vpop.f32.mrb[0].mxu0
        %v3097 = vpop.f32.mrb[0].mxu0
        %3098 = vdwg.mxu0
        %3099 = vmatprep.subr.bf16.mxu0 %v3034
        %3100 = vmatpush1.bf16.msra.mxu0 %v3033
        %3101 = vmatprep.subr.bf16.mxu0 %v3040
        %3102 = vmatpush1.bf16.msra.mxu0 %v3039
        %3103 = vmatprep.subr.bf16.mxu0 0
        %3104 = vmatpush1.bf16.msra.mxu0 0
        %3105 = vmatprep.subr.bf16.mxu0 0
        %3106 = vmatpush1.bf16.msra.mxu0 0
        %3107 = vmatprep.subr.bf16.mxu0 0
        %3108 = vmatpush1.bf16.msra.mxu0 0
        %3109 = vmatprep.subr.bf16.mxu0 0
        %3110 = vmatpush1.bf16.msra.mxu0 0
        %3111 = vmatprep.subr.bf16.mxu0 0
        %3112 = vmatpush1.bf16.msra.mxu0 0
        %3113 = vmatprep.subr.bf16.mxu0 0
        %3114 = vmatpush1.bf16.msra.mxu0 0
        %3115 = vmatprep.subr.bf16.mxu0 0
        %3116 = vmatpush1.bf16.msra.mxu0 0
        %3117 = vmatprep.subr.bf16.mxu0 0
        %3118 = vmatpush1.bf16.msra.mxu0 0
        %3119 = vmatprep.subr.bf16.mxu0 0
        %3120 = vmatpush1.bf16.msra.mxu0 0
        %3121 = vmatprep.subr.bf16.mxu0 0
        %3122 = vmatpush1.bf16.msra.mxu0 0
        %3123 = vmatprep.subr.bf16.mxu0 0
        %3124 = vmatpush1.bf16.msra.mxu0 0
        %3125 = vmatprep.subr.bf16.mxu0 0
        %3126 = vmatpush1.bf16.msra.mxu0 0
        %3127 = vmatprep.subr.bf16.mxu0 0
        %3128 = vmatpush1.bf16.msra.mxu0 0
        %3129 = vmatprep.subr.bf16.mxu0 0
        %3130 = vmatpush1.bf16.msra.mxu0 0
        %3131 = vmatprep.mubr.bf16.mxu0 0
        %3132 = vmatmul.mubr.bf16.gmra.mrb[0].mxu0 %v3056
        %v3133 = vpop.f32.mrb[0].mxu0
        %v3134 = vadd.f32 0.0, %v3133
        %v3135 = vpop.f32.mrb[0].mxu0
        %v3136 = vadd.f32 0.0, %v3135
        %v3137 = vpop.f32.mrb[0].mxu0
        %v3138 = vpop.f32.mrb[0].mxu0
        %3139 = vdwg.mxu0
        %3140 = vmatprep.subr.bf16.mxu0 %v3036
        %3141 = vmatpush1.bf16.msra.mxu0 %v3035
        %3142 = vmatprep.subr.bf16.mxu0 %v3042
        %3143 = vmatpush1.bf16.msra.mxu0 %v3041
        %3144 = vmatprep.subr.bf16.mxu0 0
        %3145 = vmatpush1.bf16.msra.mxu0 0
        %3146 = vmatprep.subr.bf16.mxu0 0
        %3147 = vmatpush1.bf16.msra.mxu0 0
        %3148 = vmatprep.subr.bf16.mxu0 0
        %3149 = vmatpush1.bf16.msra.mxu0 0
        %3150 = vmatprep.subr.bf16.mxu0 0
        %3151 = vmatpush1.bf16.msra.mxu0 0
        %3152 = vmatprep.subr.bf16.mxu0 0
        %3153 = vmatpush1.bf16.msra.mxu0 0
        %3154 = vmatprep.subr.bf16.mxu0 0
        %3155 = vmatpush1.bf16.msra.mxu0 0
        %3156 = vmatprep.subr.bf16.mxu0 0
        %3157 = vmatpush1.bf16.msra.mxu0 0
        %3158 = vmatprep.subr.bf16.mxu0 0
        %3159 = vmatpush1.bf16.msra.mxu0 0
        %3160 = vmatprep.subr.bf16.mxu0 0
        %3161 = vmatpush1.bf16.msra.mxu0 0
        %3162 = vmatprep.subr.bf16.mxu0 0
        %3163 = vmatpush1.bf16.msra.mxu0 0
        %3164 = vmatprep.subr.bf16.mxu0 0
        %3165 = vmatpush1.bf16.msra.mxu0 0
        %3166 = vmatprep.subr.bf16.mxu0 0
        %3167 = vmatpush1.bf16.msra.mxu0 0
        %3168 = vmatprep.subr.bf16.mxu0 0
        %3169 = vmatpush1.bf16.msra.mxu0 0
        %3170 = vmatprep.subr.bf16.mxu0 0
        %3171 = vmatpush1.bf16.msra.mxu0 0
        %3172 = vmatprep.mubr.bf16.mxu0 0
        %3173 = vmatmul.mubr.bf16.gmra.mrb[0].mxu0 %v3056
        %v3174 = vpop.f32.mrb[0].mxu0
        %v3175 = vadd.f32 0.0, %v3174
        %v3176 = vpop.f32.mrb[0].mxu0
        %v3177 = vadd.f32 0.0, %v3176
        %v3178 = vpop.f32.mrb[0].mxu0
        %v3179 = vpop.f32.mrb[0].mxu0
        %3180 = vdwg.mxu0
        %v3181 = vadd.f32 %v2975, %v3093
        %v3182 = vadd.f32 %v2976, %v3095
        %v3183 = vadd.f32 %v2977, %v3134
        %v3184 = vadd.f32 %v2978, %v3136
        %v3185 = vadd.f32 %v2979, %v3175
        %v3186 = vadd.f32 %v2980, %v3177
        %3187 = vmatprep.subr.bf16.mxu0 %v2234
        %3188 = vmatpush1.bf16.msra.mxu0 %v2233
        %3189 = vmatprep.subr.bf16.mxu0 %v2240
        %3190 = vmatpush1.bf16.msra.mxu0 %v2239
        %3191 = vmatprep.subr.bf16.mxu0 0
        %3192 = vmatpush1.bf16.msra.mxu0 0
        %3193 = vmatprep.subr.bf16.mxu0 0
        %3194 = vmatpush1.bf16.msra.mxu0 0
        %3195 = vmatprep.subr.bf16.mxu0 0
        %3196 = vmatpush1.bf16.msra.mxu0 0
        %3197 = vmatprep.subr.bf16.mxu0 0
        %3198 = vmatpush1.bf16.msra.mxu0 0
        %3199 = vmatprep.subr.bf16.mxu0 0
        %3200 = vmatpush1.bf16.msra.mxu0 0
        %3201 = vmatprep.subr.bf16.mxu0 0
        %3202 = vmatpush1.bf16.msra.mxu0 0
        %3203 = vmatprep.subr.bf16.mxu0 0
        %3204 = vmatpush1.bf16.msra.mxu0 0
        %3205 = vmatprep.subr.bf16.mxu0 0
        %3206 = vmatpush1.bf16.msra.mxu0 0
        %3207 = vmatprep.subr.bf16.mxu0 0
        %3208 = vmatpush1.bf16.msra.mxu0 0
        %3209 = vmatprep.subr.bf16.mxu0 0
        %3210 = vmatpush1.bf16.msra.mxu0 0
        %3211 = vmatprep.subr.bf16.mxu0 0
        %3212 = vmatpush1.bf16.msra.mxu0 0
        %3213 = vmatprep.subr.bf16.mxu0 0
        %3214 = vmatpush1.bf16.msra.mxu0 0
        %3215 = vmatprep.subr.bf16.mxu0 0
        %3216 = vmatpush1.bf16.msra.mxu0 0
        %3217 = vmatprep.subr.bf16.mxu0 0
        %3218 = vmatpush1.bf16.msra.mxu0 0
        %3219 = vmatprep.mubr.bf16.mxu0 0
        %3220 = vmatmul.mubr.bf16.gmra.mrb[0].mxu0 %v2644
        %v3221 = vpop.f32.mrb[0].mxu0
        %v3222 = vadd.f32 0.0, %v3221
        %v3223 = vpop.f32.mrb[0].mxu0
        %v3224 = vadd.f32 0.0, %v3223
        %v3225 = vpop.f32.mrb[0].mxu0
        %v3226 = vpop.f32.mrb[0].mxu0
        %3227 = vdwg.mxu0
        %3228 = vmatprep.subr.bf16.mxu0 %v2236
        %3229 = vmatpush1.bf16.msra.mxu0 %v2235
        %3230 = vmatprep.subr.bf16.mxu0 %v2242
        %3231 = vmatpush1.bf16.msra.mxu0 %v2241
        %3232 = vmatprep.subr.bf16.mxu0 0
        %3233 = vmatpush1.bf16.msra.mxu0 0
        %3234 = vmatprep.subr.bf16.mxu0 0
        %3235 = vmatpush1.bf16.msra.mxu0 0
        %3236 = vmatprep.subr.bf16.mxu0 0
        %3237 = vmatpush1.bf16.msra.mxu0 0
        %3238 = vmatprep.subr.bf16.mxu0 0
        %3239 = vmatpush1.bf16.msra.mxu0 0
        %3240 = vmatprep.subr.bf16.mxu0 0
        %3241 = vmatpush1.bf16.msra.mxu0 0
        %3242 = vmatprep.subr.bf16.mxu0 0
        %3243 = vmatpush1.bf16.msra.mxu0 0
        %3244 = vmatprep.subr.bf16.mxu0 0
        %3245 = vmatpush1.bf16.msra.mxu0 0
        %3246 = vmatprep.subr.bf16.mxu0 0
        %3247 = vmatpush1.bf16.msra.mxu0 0
        %3248 = vmatprep.subr.bf16.mxu0 0
        %3249 = vmatpush1.bf16.msra.mxu0 0
        %3250 = vmatprep.subr.bf16.mxu0 0
        %3251 = vmatpush1.bf16.msra.mxu0 0
        %3252 = vmatprep.subr.bf16.mxu0 0
        %3253 = vmatpush1.bf16.msra.mxu0 0
        %3254 = vmatprep.subr.bf16.mxu0 0
        %3255 = vmatpush1.bf16.msra.mxu0 0
        %3256 = vmatprep.subr.bf16.mxu0 0
        %3257 = vmatpush1.bf16.msra.mxu0 0
        %3258 = vmatprep.subr.bf16.mxu0 0
        %3259 = vmatpush1.bf16.msra.mxu0 0
        %3260 = vmatprep.mubr.bf16.mxu0 0
        %3261 = vmatmul.mubr.bf16.gmra.mrb[0].mxu0 %v2644
        %v3262 = vpop.f32.mrb[0].mxu0
        %v3263 = vadd.f32 0.0, %v3262
        %v3264 = vpop.f32.mrb[0].mxu0
        %v3265 = vadd.f32 0.0, %v3264
        %v3266 = vpop.f32.mrb[0].mxu0
        %v3267 = vpop.f32.mrb[0].mxu0
        %3268 = vdwg.mxu0
        %3269 = vmatprep.subr.bf16.mxu0 %v2238
        %3270 = vmatpush1.bf16.msra.mxu0 %v2237
        %3271 = vmatprep.subr.bf16.mxu0 %v2244
        %3272 = vmatpush1.bf16.msra.mxu0 %v2243
        %3273 = vmatprep.subr.bf16.mxu0 0
        %3274 = vmatpush1.bf16.msra.mxu0 0
        %3275 = vmatprep.subr.bf16.mxu0 0
        %3276 = vmatpush1.bf16.msra.mxu0 0
        %3277 = vmatprep.subr.bf16.mxu0 0
        %3278 = vmatpush1.bf16.msra.mxu0 0
        %3279 = vmatprep.subr.bf16.mxu0 0
        %3280 = vmatpush1.bf16.msra.mxu0 0
        %3281 = vmatprep.subr.bf16.mxu0 0
        %3282 = vmatpush1.bf16.msra.mxu0 0
        %3283 = vmatprep.subr.bf16.mxu0 0
        %3284 = vmatpush1.bf16.msra.mxu0 0
        %3285 = vmatprep.subr.bf16.mxu0 0
        %3286 = vmatpush1.bf16.msra.mxu0 0
        %3287 = vmatprep.subr.bf16.mxu0 0
        %3288 = vmatpush1.bf16.msra.mxu0 0
        %3289 = vmatprep.subr.bf16.mxu0 0
        %3290 = vmatpush1.bf16.msra.mxu0 0
        %3291 = vmatprep.subr.bf16.mxu0 0
        %3292 = vmatpush1.bf16.msra.mxu0 0
        %3293 = vmatprep.subr.bf16.mxu0 0
        %3294 = vmatpush1.bf16.msra.mxu0 0
        %3295 = vmatprep.subr.bf16.mxu0 0
        %3296 = vmatpush1.bf16.msra.mxu0 0
        %3297 = vmatprep.subr.bf16.mxu0 0
        %3298 = vmatpush1.bf16.msra.mxu0 0
        %3299 = vmatprep.subr.bf16.mxu0 0
        %3300 = vmatpush1.bf16.msra.mxu0 0
        %3301 = vmatprep.mubr.bf16.mxu0 0
        %3302 = vmatmul.mubr.bf16.gmra.mrb[0].mxu0 %v2644
        %v3303 = vpop.f32.mrb[0].mxu0
        %v3304 = vadd.f32 0.0, %v3303
        %v3305 = vpop.f32.mrb[0].mxu0
        %v3306 = vadd.f32 0.0, %v3305
        %v3307 = vpop.f32.mrb[0].mxu0
        %v3308 = vpop.f32.mrb[0].mxu0
        %3309 = vdwg.mxu0
        %3310 = vmatprep.subr.bf16.mxu0 %v2420
        %3311 = vmatpush1.bf16.msra.mxu0 %v2419
        %3312 = vmatprep.subr.bf16.mxu0 %v2426
        %3313 = vmatpush1.bf16.msra.mxu0 %v2425
        %3314 = vmatprep.subr.bf16.mxu0 0
        %3315 = vmatpush1.bf16.msra.mxu0 0
        %3316 = vmatprep.subr.bf16.mxu0 0
        %3317 = vmatpush1.bf16.msra.mxu0 0
        %3318 = vmatprep.subr.bf16.mxu0 0
        %3319 = vmatpush1.bf16.msra.mxu0 0
        %3320 = vmatprep.subr.bf16.mxu0 0
        %3321 = vmatpush1.bf16.msra.mxu0 0
        %3322 = vmatprep.subr.bf16.mxu0 0
        %3323 = vmatpush1.bf16.msra.mxu0 0
        %3324 = vmatprep.subr.bf16.mxu0 0
        %3325 = vmatpush1.bf16.msra.mxu0 0
        %3326 = vmatprep.subr.bf16.mxu0 0
        %3327 = vmatpush1.bf16.msra.mxu0 0
        %3328 = vmatprep.subr.bf16.mxu0 0
        %3329 = vmatpush1.bf16.msra.mxu0 0
        %3330 = vmatprep.subr.bf16.mxu0 0
        %3331 = vmatpush1.bf16.msra.mxu0 0
        %3332 = vmatprep.subr.bf16.mxu0 0
        %3333 = vmatpush1.bf16.msra.mxu0 0
        %3334 = vmatprep.subr.bf16.mxu0 0
        %3335 = vmatpush1.bf16.msra.mxu0 0
        %3336 = vmatprep.subr.bf16.mxu0 0
        %3337 = vmatpush1.bf16.msra.mxu0 0
        %3338 = vmatprep.subr.bf16.mxu0 0
        %3339 = vmatpush1.bf16.msra.mxu0 0
        %3340 = vmatprep.subr.bf16.mxu0 0
        %3341 = vmatpush1.bf16.msra.mxu0 0
        %3342 = vmatprep.mubr.bf16.mxu0 0
        %3343 = vmatmul.mubr.bf16.gmra.mrb[0].mxu0 %v2258
        %v3344 = vpop.f32.mrb[0].mxu0
        %v3345 = vadd.f32 %v3222, %v3344
        %v3346 = vpop.f32.mrb[0].mxu0
        %v3347 = vadd.f32 %v3224, %v3346
        %v3348 = vpop.f32.mrb[0].mxu0
        %v3349 = vpop.f32.mrb[0].mxu0
        %3350 = vdwg.mxu0
        %3351 = vmatprep.subr.bf16.mxu0 %v2422
        %3352 = vmatpush1.bf16.msra.mxu0 %v2421
        %3353 = vmatprep.subr.bf16.mxu0 %v2428
        %3354 = vmatpush1.bf16.msra.mxu0 %v2427
        %3355 = vmatprep.subr.bf16.mxu0 0
        %3356 = vmatpush1.bf16.msra.mxu0 0
        %3357 = vmatprep.subr.bf16.mxu0 0
        %3358 = vmatpush1.bf16.msra.mxu0 0
        %3359 = vmatprep.subr.bf16.mxu0 0
        %3360 = vmatpush1.bf16.msra.mxu0 0
        %3361 = vmatprep.subr.bf16.mxu0 0
        %3362 = vmatpush1.bf16.msra.mxu0 0
        %3363 = vmatprep.subr.bf16.mxu0 0
        %3364 = vmatpush1.bf16.msra.mxu0 0
        %3365 = vmatprep.subr.bf16.mxu0 0
        %3366 = vmatpush1.bf16.msra.mxu0 0
        %3367 = vmatprep.subr.bf16.mxu0 0
        %3368 = vmatpush1.bf16.msra.mxu0 0
        %3369 = vmatprep.subr.bf16.mxu0 0
        %3370 = vmatpush1.bf16.msra.mxu0 0
        %3371 = vmatprep.subr.bf16.mxu0 0
        %3372 = vmatpush1.bf16.msra.mxu0 0
        %3373 = vmatprep.subr.bf16.mxu0 0
        %3374 = vmatpush1.bf16.msra.mxu0 0
        %3375 = vmatprep.subr.bf16.mxu0 0
        %3376 = vmatpush1.bf16.msra.mxu0 0
        %3377 = vmatprep.subr.bf16.mxu0 0
        %3378 = vmatpush1.bf16.msra.mxu0 0
        %3379 = vmatprep.subr.bf16.mxu0 0
        %3380 = vmatpush1.bf16.msra.mxu0 0
        %3381 = vmatprep.subr.bf16.mxu0 0
        %3382 = vmatpush1.bf16.msra.mxu0 0
        %3383 = vmatprep.mubr.bf16.mxu0 0
        %3384 = vmatmul.mubr.bf16.gmra.mrb[0].mxu0 %v2258
        %v3385 = vpop.f32.mrb[0].mxu0
        %v3386 = vadd.f32 %v3263, %v3385
        %v3387 = vpop.f32.mrb[0].mxu0
        %v3388 = vadd.f32 %v3265, %v3387
        %v3389 = vpop.f32.mrb[0].mxu0
        %v3390 = vpop.f32.mrb[0].mxu0
        %3391 = vdwg.mxu0
        %3392 = vmatprep.subr.bf16.mxu0 %v2424
        %3393 = vmatpush1.bf16.msra.mxu0 %v2423
        %3394 = vmatprep.subr.bf16.mxu0 %v2430
        %3395 = vmatpush1.bf16.msra.mxu0 %v2429
        %3396 = vmatprep.subr.bf16.mxu0 0
        %3397 = vmatpush1.bf16.msra.mxu0 0
        %3398 = vmatprep.subr.bf16.mxu0 0
        %3399 = vmatpush1.bf16.msra.mxu0 0
        %3400 = vmatprep.subr.bf16.mxu0 0
        %3401 = vmatpush1.bf16.msra.mxu0 0
        %3402 = vmatprep.subr.bf16.mxu0 0
        %3403 = vmatpush1.bf16.msra.mxu0 0
        %3404 = vmatprep.subr.bf16.mxu0 0
        %3405 = vmatpush1.bf16.msra.mxu0 0
        %3406 = vmatprep.subr.bf16.mxu0 0
        %3407 = vmatpush1.bf16.msra.mxu0 0
        %3408 = vmatprep.subr.bf16.mxu0 0
        %3409 = vmatpush1.bf16.msra.mxu0 0
        %3410 = vmatprep.subr.bf16.mxu0 0
        %3411 = vmatpush1.bf16.msra.mxu0 0
        %3412 = vmatprep.subr.bf16.mxu0 0
        %3413 = vmatpush1.bf16.msra.mxu0 0
        %3414 = vmatprep.subr.bf16.mxu0 0
        %3415 = vmatpush1.bf16.msra.mxu0 0
        %3416 = vmatprep.subr.bf16.mxu0 0
        %3417 = vmatpush1.bf16.msra.mxu0 0
        %3418 = vmatprep.subr.bf16.mxu0 0
        %3419 = vmatpush1.bf16.msra.mxu0 0
        %3420 = vmatprep.subr.bf16.mxu0 0
        %3421 = vmatpush1.bf16.msra.mxu0 0
        %3422 = vmatprep.subr.bf16.mxu0 0
        %3423 = vmatpush1.bf16.msra.mxu0 0
        %3424 = vmatprep.mubr.bf16.mxu0 0
        %3425 = vmatmul.mubr.bf16.gmra.mrb[0].mxu0 %v2258
        %v3426 = vpop.f32.mrb[0].mxu0
        %v3427 = vadd.f32 %v3304, %v3426
        %v3428 = vpop.f32.mrb[0].mxu0
        %v3429 = vadd.f32 %v3306, %v3428
        %v3430 = vpop.f32.mrb[0].mxu0
        %v3431 = vpop.f32.mrb[0].mxu0
        %3432 = vdwg.mxu0
        %3433 = vmatprep.subr.bf16.mxu0 %v2620
        %3434 = vmatpush1.bf16.msra.mxu0 %v2619
        %3435 = vmatprep.subr.bf16.mxu0 %v2626
        %3436 = vmatpush1.bf16.msra.mxu0 %v2625
        %3437 = vmatprep.subr.bf16.mxu0 0
        %3438 = vmatpush1.bf16.msra.mxu0 0
        %3439 = vmatprep.subr.bf16.mxu0 0
        %3440 = vmatpush1.bf16.msra.mxu0 0
        %3441 = vmatprep.subr.bf16.mxu0 0
        %3442 = vmatpush1.bf16.msra.mxu0 0
        %3443 = vmatprep.subr.bf16.mxu0 0
        %3444 = vmatpush1.bf16.msra.mxu0 0
        %3445 = vmatprep.subr.bf16.mxu0 0
        %3446 = vmatpush1.bf16.msra.mxu0 0
        %3447 = vmatprep.subr.bf16.mxu0 0
        %3448 = vmatpush1.bf16.msra.mxu0 0
        %3449 = vmatprep.subr.bf16.mxu0 0
        %3450 = vmatpush1.bf16.msra.mxu0 0
        %3451 = vmatprep.subr.bf16.mxu0 0
        %3452 = vmatpush1.bf16.msra.mxu0 0
        %3453 = vmatprep.subr.bf16.mxu0 0
        %3454 = vmatpush1.bf16.msra.mxu0 0
        %3455 = vmatprep.subr.bf16.mxu0 0
        %3456 = vmatpush1.bf16.msra.mxu0 0
        %3457 = vmatprep.subr.bf16.mxu0 0
        %3458 = vmatpush1.bf16.msra.mxu0 0
        %3459 = vmatprep.subr.bf16.mxu0 0
        %3460 = vmatpush1.bf16.msra.mxu0 0
        %3461 = vmatprep.subr.bf16.mxu0 0
        %3462 = vmatpush1.bf16.msra.mxu0 0
        %3463 = vmatprep.subr.bf16.mxu0 0
        %3464 = vmatpush1.bf16.msra.mxu0 0
        %3465 = vmatprep.mubr.bf16.mxu0 0
        %3466 = vmatmul.mubr.bf16.gmra.mrb[0].mxu0 %v2850
        %v3467 = vpop.f32.mrb[0].mxu0
        %v3468 = vadd.f32 0.0, %v3467
        %v3469 = vpop.f32.mrb[0].mxu0
        %v3470 = vadd.f32 0.0, %v3469
        %v3471 = vpop.f32.mrb[0].mxu0
        %v3472 = vpop.f32.mrb[0].mxu0
        %3473 = vdwg.mxu0
        %3474 = vmatprep.subr.bf16.mxu0 %v2622
        %3475 = vmatpush1.bf16.msra.mxu0 %v2621
        %3476 = vmatprep.subr.bf16.mxu0 %v2628
        %3477 = vmatpush1.bf16.msra.mxu0 %v2627
        %3478 = vmatprep.subr.bf16.mxu0 0
        %3479 = vmatpush1.bf16.msra.mxu0 0
        %3480 = vmatprep.subr.bf16.mxu0 0
        %3481 = vmatpush1.bf16.msra.mxu0 0
        %3482 = vmatprep.subr.bf16.mxu0 0
        %3483 = vmatpush1.bf16.msra.mxu0 0
        %3484 = vmatprep.subr.bf16.mxu0 0
        %3485 = vmatpush1.bf16.msra.mxu0 0
        %3486 = vmatprep.subr.bf16.mxu0 0
        %3487 = vmatpush1.bf16.msra.mxu0 0
        %3488 = vmatprep.subr.bf16.mxu0 0
        %3489 = vmatpush1.bf16.msra.mxu0 0
        %3490 = vmatprep.subr.bf16.mxu0 0
        %3491 = vmatpush1.bf16.msra.mxu0 0
        %3492 = vmatprep.subr.bf16.mxu0 0
        %3493 = vmatpush1.bf16.msra.mxu0 0
        %3494 = vmatprep.subr.bf16.mxu0 0
        %3495 = vmatpush1.bf16.msra.mxu0 0
        %3496 = vmatprep.subr.bf16.mxu0 0
        %3497 = vmatpush1.bf16.msra.mxu0 0
        %3498 = vmatprep.subr.bf16.mxu0 0
        %3499 = vmatpush1.bf16.msra.mxu0 0
        %3500 = vmatprep.subr.bf16.mxu0 0
        %3501 = vmatpush1.bf16.msra.mxu0 0
        %3502 = vmatprep.subr.bf16.mxu0 0
        %3503 = vmatpush1.bf16.msra.mxu0 0
        %3504 = vmatprep.subr.bf16.mxu0 0
        %3505 = vmatpush1.bf16.msra.mxu0 0
        %3506 = vmatprep.mubr.bf16.mxu0 0
        %3507 = vmatmul.mubr.bf16.gmra.mrb[0].mxu0 %v2850
        %v3508 = vpop.f32.mrb[0].mxu0
        %v3509 = vadd.f32 0.0, %v3508
        %v3510 = vpop.f32.mrb[0].mxu0
        %v3511 = vadd.f32 0.0, %v3510
        %v3512 = vpop.f32.mrb[0].mxu0
        %v3513 = vpop.f32.mrb[0].mxu0
        %3514 = vdwg.mxu0
        %3515 = vmatprep.subr.bf16.mxu0 %v2624
        %3516 = vmatpush1.bf16.msra.mxu0 %v2623
        %3517 = vmatprep.subr.bf16.mxu0 %v2630
        %3518 = vmatpush1.bf16.msra.mxu0 %v2629
        %3519 = vmatprep.subr.bf16.mxu0 0
        %3520 = vmatpush1.bf16.msra.mxu0 0
        %3521 = vmatprep.subr.bf16.mxu0 0
        %3522 = vmatpush1.bf16.msra.mxu0 0
        %3523 = vmatprep.subr.bf16.mxu0 0
        %3524 = vmatpush1.bf16.msra.mxu0 0
        %3525 = vmatprep.subr.bf16.mxu0 0
        %3526 = vmatpush1.bf16.msra.mxu0 0
        %3527 = vmatprep.subr.bf16.mxu0 0
        %3528 = vmatpush1.bf16.msra.mxu0 0
        %3529 = vmatprep.subr.bf16.mxu0 0
        %3530 = vmatpush1.bf16.msra.mxu0 0
        %3531 = vmatprep.subr.bf16.mxu0 0
        %3532 = vmatpush1.bf16.msra.mxu0 0
        %3533 = vmatprep.subr.bf16.mxu0 0
        %3534 = vmatpush1.bf16.msra.mxu0 0
        %3535 = vmatprep.subr.bf16.mxu0 0
        %3536 = vmatpush1.bf16.msra.mxu0 0
        %3537 = vmatprep.subr.bf16.mxu0 0
        %3538 = vmatpush1.bf16.msra.mxu0 0
        %3539 = vmatprep.subr.bf16.mxu0 0
        %3540 = vmatpush1.bf16.msra.mxu0 0
        %3541 = vmatprep.subr.bf16.mxu0 0
        %3542 = vmatpush1.bf16.msra.mxu0 0
        %3543 = vmatprep.subr.bf16.mxu0 0
        %3544 = vmatpush1.bf16.msra.mxu0 0
        %3545 = vmatprep.subr.bf16.mxu0 0
        %3546 = vmatpush1.bf16.msra.mxu0 0
        %3547 = vmatprep.mubr.bf16.mxu0 0
        %3548 = vmatmul.mubr.bf16.gmra.mrb[0].mxu0 %v2850
        %v3549 = vpop.f32.mrb[0].mxu0
        %v3550 = vadd.f32 0.0, %v3549
        %v3551 = vpop.f32.mrb[0].mxu0
        %v3552 = vadd.f32 0.0, %v3551
        %v3553 = vpop.f32.mrb[0].mxu0
        %v3554 = vpop.f32.mrb[0].mxu0
        %3555 = vdwg.mxu0
        %v3556 = vadd.f32 %v3345, %v3468
        %v3557 = vadd.f32 %v3347, %v3470
        %v3558 = vadd.f32 %v3386, %v3509
        %v3559 = vadd.f32 %v3388, %v3511
        %v3560 = vadd.f32 %v3427, %v3550
        %v3561 = vadd.f32 %v3429, %v3552
        %3562 = vmatprep.subr.bf16.mxu0 %v2826
        %3563 = vmatpush1.bf16.msra.mxu0 %v2825
        %3564 = vmatprep.subr.bf16.mxu0 %v2832
        %3565 = vmatpush1.bf16.msra.mxu0 %v2831
        %3566 = vmatprep.subr.bf16.mxu0 0
        %3567 = vmatpush1.bf16.msra.mxu0 0
        %3568 = vmatprep.subr.bf16.mxu0 0
        %3569 = vmatpush1.bf16.msra.mxu0 0
        %3570 = vmatprep.subr.bf16.mxu0 0
        %3571 = vmatpush1.bf16.msra.mxu0 0
        %3572 = vmatprep.subr.bf16.mxu0 0
        %3573 = vmatpush1.bf16.msra.mxu0 0
        %3574 = vmatprep.subr.bf16.mxu0 0
        %3575 = vmatpush1.bf16.msra.mxu0 0
        %3576 = vmatprep.subr.bf16.mxu0 0
        %3577 = vmatpush1.bf16.msra.mxu0 0
        %3578 = vmatprep.subr.bf16.mxu0 0
        %3579 = vmatpush1.bf16.msra.mxu0 0
        %3580 = vmatprep.subr.bf16.mxu0 0
        %3581 = vmatpush1.bf16.msra.mxu0 0
        %3582 = vmatprep.subr.bf16.mxu0 0
        %3583 = vmatpush1.bf16.msra.mxu0 0
        %3584 = vmatprep.subr.bf16.mxu0 0
        %3585 = vmatpush1.bf16.msra.mxu0 0
        %3586 = vmatprep.subr.bf16.mxu0 0
        %3587 = vmatpush1.bf16.msra.mxu0 0
        %3588 = vmatprep.subr.bf16.mxu0 0
        %3589 = vmatpush1.bf16.msra.mxu0 0
        %3590 = vmatprep.subr.bf16.mxu0 0
        %3591 = vmatpush1.bf16.msra.mxu0 0
        %3592 = vmatprep.subr.bf16.mxu0 0
        %3593 = vmatpush1.bf16.msra.mxu0 0
        %3594 = vmatprep.mubr.bf16.mxu0 0
        %3595 = vmatmul.mubr.bf16.gmra.mrb[0].mxu0 %v3056
        %v3596 = vpop.f32.mrb[0].mxu0
        %v3597 = vadd.f32 0.0, %v3596
        %v3598 = vpop.f32.mrb[0].mxu0
        %v3599 = vadd.f32 0.0, %v3598
        %v3600 = vpop.f32.mrb[0].mxu0
        %v3601 = vpop.f32.mrb[0].mxu0
        %3602 = vdwg.mxu0
        %3603 = vmatprep.subr.bf16.mxu0 %v2828
        %3604 = vmatpush1.bf16.msra.mxu0 %v2827
        %3605 = vmatprep.subr.bf16.mxu0 %v2834
        %3606 = vmatpush1.bf16.msra.mxu0 %v2833
        %3607 = vmatprep.subr.bf16.mxu0 0
        %3608 = vmatpush1.bf16.msra.mxu0 0
        %3609 = vmatprep.subr.bf16.mxu0 0
        %3610 = vmatpush1.bf16.msra.mxu0 0
        %3611 = vmatprep.subr.bf16.mxu0 0
        %3612 = vmatpush1.bf16.msra.mxu0 0
        %3613 = vmatprep.subr.bf16.mxu0 0
        %3614 = vmatpush1.bf16.msra.mxu0 0
        %3615 = vmatprep.subr.bf16.mxu0 0
        %3616 = vmatpush1.bf16.msra.mxu0 0
        %3617 = vmatprep.subr.bf16.mxu0 0
        %3618 = vmatpush1.bf16.msra.mxu0 0
        %3619 = vmatprep.subr.bf16.mxu0 0
        %3620 = vmatpush1.bf16.msra.mxu0 0
        %3621 = vmatprep.subr.bf16.mxu0 0
        %3622 = vmatpush1.bf16.msra.mxu0 0
        %3623 = vmatprep.subr.bf16.mxu0 0
        %3624 = vmatpush1.bf16.msra.mxu0 0
        %3625 = vmatprep.subr.bf16.mxu0 0
        %3626 = vmatpush1.bf16.msra.mxu0 0
        %3627 = vmatprep.subr.bf16.mxu0 0
        %3628 = vmatpush1.bf16.msra.mxu0 0
        %3629 = vmatprep.subr.bf16.mxu0 0
        %3630 = vmatpush1.bf16.msra.mxu0 0
        %3631 = vmatprep.subr.bf16.mxu0 0
        %3632 = vmatpush1.bf16.msra.mxu0 0
        %3633 = vmatprep.subr.bf16.mxu0 0
        %3634 = vmatpush1.bf16.msra.mxu0 0
        %3635 = vmatprep.mubr.bf16.mxu0 0
        %3636 = vmatmul.mubr.bf16.gmra.mrb[0].mxu0 %v3056
        %v3637 = vpop.f32.mrb[0].mxu0
        %v3638 = vadd.f32 0.0, %v3637
        %v3639 = vpop.f32.mrb[0].mxu0
        %v3640 = vadd.f32 0.0, %v3639
        %v3641 = vpop.f32.mrb[0].mxu0
        %v3642 = vpop.f32.mrb[0].mxu0
        %3643 = vdwg.mxu0
        %3644 = vmatprep.subr.bf16.mxu0 %v2830
        %3645 = vmatpush1.bf16.msra.mxu0 %v2829
        %3646 = vmatprep.subr.bf16.mxu0 %v2836
        %3647 = vmatpush1.bf16.msra.mxu0 %v2835
        %3648 = vmatprep.subr.bf16.mxu0 0
        %3649 = vmatpush1.bf16.msra.mxu0 0
        %3650 = vmatprep.subr.bf16.mxu0 0
        %3651 = vmatpush1.bf16.msra.mxu0 0
        %3652 = vmatprep.subr.bf16.mxu0 0
        %3653 = vmatpush1.bf16.msra.mxu0 0
        %3654 = vmatprep.subr.bf16.mxu0 0
        %3655 = vmatpush1.bf16.msra.mxu0 0
        %3656 = vmatprep.subr.bf16.mxu0 0
        %3657 = vmatpush1.bf16.msra.mxu0 0
        %3658 = vmatprep.subr.bf16.mxu0 0
        %3659 = vmatpush1.bf16.msra.mxu0 0
        %3660 = vmatprep.subr.bf16.mxu0 0
        %3661 = vmatpush1.bf16.msra.mxu0 0
        %3662 = vmatprep.subr.bf16.mxu0 0
        %3663 = vmatpush1.bf16.msra.mxu0 0
        %3664 = vmatprep.subr.bf16.mxu0 0
        %3665 = vmatpush1.bf16.msra.mxu0 0
        %3666 = vmatprep.subr.bf16.mxu0 0
        %3667 = vmatpush1.bf16.msra.mxu0 0
        %3668 = vmatprep.subr.bf16.mxu0 0
        %3669 = vmatpush1.bf16.msra.mxu0 0
        %3670 = vmatprep.subr.bf16.mxu0 0
        %3671 = vmatpush1.bf16.msra.mxu0 0
        %3672 = vmatprep.subr.bf16.mxu0 0
        %3673 = vmatpush1.bf16.msra.mxu0 0
        %3674 = vmatprep.subr.bf16.mxu0 0
        %3675 = vmatpush1.bf16.msra.mxu0 0
        %3676 = vmatprep.mubr.bf16.mxu0 0
        %3677 = vmatmul.mubr.bf16.gmra.mrb[0].mxu0 %v3056
        %v3678 = vpop.f32.mrb[0].mxu0
        %v3679 = vadd.f32 0.0, %v3678
        %v3680 = vpop.f32.mrb[0].mxu0
        %v3681 = vadd.f32 0.0, %v3680
        %v3682 = vpop.f32.mrb[0].mxu0
        %v3683 = vpop.f32.mrb[0].mxu0
        %3684 = vdwg.mxu0
        %v3685 = vadd.f32 %v3556, %v3597
        %v3686 = vadd.f32 %v3557, %v3599
        %v3687 = vadd.f32 %v3558, %v3638
        %v3688 = vadd.f32 %v3559, %v3640
        %v3689 = vadd.f32 %v3560, %v3679
        %v3690 = vadd.f32 %v3561, %v3681
        %v3691 = vld [vmem:[%s438 + $0x16] sm:$0x3f]
        %v3692 = vpack.c.bf16 %v3691, %v3691
        %v3694 = vsel %vm529, %v3692, 0
        %3696 = vmatprep.subr.bf16.mxu0 %v3032
        %3697 = vmatpush1.bf16.msra.mxu0 %v3031
        %3698 = vmatprep.subr.bf16.mxu0 %v3038
        %3699 = vmatpush1.bf16.msra.mxu0 %v3037
        %3700 = vmatprep.subr.bf16.mxu0 0
        %3701 = vmatpush1.bf16.msra.mxu0 0
        %3702 = vmatprep.subr.bf16.mxu0 0
        %3703 = vmatpush1.bf16.msra.mxu0 0
        %3704 = vmatprep.subr.bf16.mxu0 0
        %3705 = vmatpush1.bf16.msra.mxu0 0
        %3706 = vmatprep.subr.bf16.mxu0 0
        %3707 = vmatpush1.bf16.msra.mxu0 0
        %3708 = vmatprep.subr.bf16.mxu0 0
        %3709 = vmatpush1.bf16.msra.mxu0 0
        %3710 = vmatprep.subr.bf16.mxu0 0
        %3711 = vmatpush1.bf16.msra.mxu0 0
        %3712 = vmatprep.subr.bf16.mxu0 0
        %3713 = vmatpush1.bf16.msra.mxu0 0
        %3714 = vmatprep.subr.bf16.mxu0 0
        %3715 = vmatpush1.bf16.msra.mxu0 0
        %3716 = vmatprep.subr.bf16.mxu0 0
        %3717 = vmatpush1.bf16.msra.mxu0 0
        %3718 = vmatprep.subr.bf16.mxu0 0
        %3719 = vmatpush1.bf16.msra.mxu0 0
        %3720 = vmatprep.subr.bf16.mxu0 0
        %3721 = vmatpush1.bf16.msra.mxu0 0
        %3722 = vmatprep.subr.bf16.mxu0 0
        %3723 = vmatpush1.bf16.msra.mxu0 0
        %3724 = vmatprep.subr.bf16.mxu0 0
        %3725 = vmatpush1.bf16.msra.mxu0 0
        %3726 = vmatprep.subr.bf16.mxu0 0
        %3727 = vmatpush1.bf16.msra.mxu0 0
        %3728 = vmatprep.mubr.bf16.mxu0 0
        %3729 = vmatmul.mubr.bf16.gmra.mrb[0].mxu0 %v3694
        %v3730 = vpop.f32.mrb[0].mxu0
        %v3731 = vadd.f32 0.0, %v3730
        %v3732 = vpop.f32.mrb[0].mxu0
        %v3733 = vadd.f32 0.0, %v3732
        %v3734 = vpop.f32.mrb[0].mxu0
        %v3735 = vpop.f32.mrb[0].mxu0
        %3736 = vdwg.mxu0
        %3737 = vmatprep.subr.bf16.mxu0 %v3034
        %3738 = vmatpush1.bf16.msra.mxu0 %v3033
        %3739 = vmatprep.subr.bf16.mxu0 %v3040
        %3740 = vmatpush1.bf16.msra.mxu0 %v3039
        %3741 = vmatprep.subr.bf16.mxu0 0
        %3742 = vmatpush1.bf16.msra.mxu0 0
        %3743 = vmatprep.subr.bf16.mxu0 0
        %3744 = vmatpush1.bf16.msra.mxu0 0
        %3745 = vmatprep.subr.bf16.mxu0 0
        %3746 = vmatpush1.bf16.msra.mxu0 0
        %3747 = vmatprep.subr.bf16.mxu0 0
        %3748 = vmatpush1.bf16.msra.mxu0 0
        %3749 = vmatprep.subr.bf16.mxu0 0
        %3750 = vmatpush1.bf16.msra.mxu0 0
        %3751 = vmatprep.subr.bf16.mxu0 0
        %3752 = vmatpush1.bf16.msra.mxu0 0
        %3753 = vmatprep.subr.bf16.mxu0 0
        %3754 = vmatpush1.bf16.msra.mxu0 0
        %3755 = vmatprep.subr.bf16.mxu0 0
        %3756 = vmatpush1.bf16.msra.mxu0 0
        %3757 = vmatprep.subr.bf16.mxu0 0
        %3758 = vmatpush1.bf16.msra.mxu0 0
        %3759 = vmatprep.subr.bf16.mxu0 0
        %3760 = vmatpush1.bf16.msra.mxu0 0
        %3761 = vmatprep.subr.bf16.mxu0 0
        %3762 = vmatpush1.bf16.msra.mxu0 0
        %3763 = vmatprep.subr.bf16.mxu0 0
        %3764 = vmatpush1.bf16.msra.mxu0 0
        %3765 = vmatprep.subr.bf16.mxu0 0
        %3766 = vmatpush1.bf16.msra.mxu0 0
        %3767 = vmatprep.subr.bf16.mxu0 0
        %3768 = vmatpush1.bf16.msra.mxu0 0
        %3769 = vmatprep.mubr.bf16.mxu0 0
        %3770 = vmatmul.mubr.bf16.gmra.mrb[0].mxu0 %v3694
        %v3771 = vpop.f32.mrb[0].mxu0
        %v3772 = vadd.f32 0.0, %v3771
        %v3773 = vpop.f32.mrb[0].mxu0
        %v3774 = vadd.f32 0.0, %v3773
        %v3775 = vpop.f32.mrb[0].mxu0
        %v3776 = vpop.f32.mrb[0].mxu0
        %3777 = vdwg.mxu0
        %3778 = vmatprep.subr.bf16.mxu0 %v3036
        %3779 = vmatpush1.bf16.msra.mxu0 %v3035
        %3780 = vmatprep.subr.bf16.mxu0 %v3042
        %3781 = vmatpush1.bf16.msra.mxu0 %v3041
        %3782 = vmatprep.subr.bf16.mxu0 0
        %3783 = vmatpush1.bf16.msra.mxu0 0
        %3784 = vmatprep.subr.bf16.mxu0 0
        %3785 = vmatpush1.bf16.msra.mxu0 0
        %3786 = vmatprep.subr.bf16.mxu0 0
        %3787 = vmatpush1.bf16.msra.mxu0 0
        %3788 = vmatprep.subr.bf16.mxu0 0
        %3789 = vmatpush1.bf16.msra.mxu0 0
        %3790 = vmatprep.subr.bf16.mxu0 0
        %3791 = vmatpush1.bf16.msra.mxu0 0
        %3792 = vmatprep.subr.bf16.mxu0 0
        %3793 = vmatpush1.bf16.msra.mxu0 0
        %3794 = vmatprep.subr.bf16.mxu0 0
        %3795 = vmatpush1.bf16.msra.mxu0 0
        %3796 = vmatprep.subr.bf16.mxu0 0
        %3797 = vmatpush1.bf16.msra.mxu0 0
        %3798 = vmatprep.subr.bf16.mxu0 0
        %3799 = vmatpush1.bf16.msra.mxu0 0
        %3800 = vmatprep.subr.bf16.mxu0 0
        %3801 = vmatpush1.bf16.msra.mxu0 0
        %3802 = vmatprep.subr.bf16.mxu0 0
        %3803 = vmatpush1.bf16.msra.mxu0 0
        %3804 = vmatprep.subr.bf16.mxu0 0
        %3805 = vmatpush1.bf16.msra.mxu0 0
        %3806 = vmatprep.subr.bf16.mxu0 0
        %3807 = vmatpush1.bf16.msra.mxu0 0
        %3808 = vmatprep.subr.bf16.mxu0 0
        %3809 = vmatpush1.bf16.msra.mxu0 0
        %3810 = vmatprep.mubr.bf16.mxu0 0
        %3811 = vmatmul.mubr.bf16.gmra.mrb[0].mxu0 %v3694
        %v3812 = vpop.f32.mrb[0].mxu0
        %v3813 = vadd.f32 0.0, %v3812
        %v3814 = vpop.f32.mrb[0].mxu0
        %v3815 = vadd.f32 0.0, %v3814
        %v3816 = vpop.f32.mrb[0].mxu0
        %v3817 = vpop.f32.mrb[0].mxu0
        %3818 = vdwg.mxu0
        %v3819 = vadd.f32 %v3685, %v3731
        %v3820 = vadd.f32 %v3686, %v3733
        %v3821 = vadd.f32 %v3687, %v3772
        %v3822 = vadd.f32 %v3688, %v3774
        %v3823 = vadd.f32 %v3689, %v3813
        %v3824 = vadd.f32 %v3690, %v3815
        %v3825 = vmax.f32 %v3181, %v3819
        %v3826 = vmax.f32 %v3182, %v3820
        %v3827 = vmax.f32 %v3183, %v3821
        %v3828 = vmax.f32 %v3184, %v3822
        %v3829 = vmax.f32 %v3185, %v3823
        %v3830 = vmax.f32 %v3186, %v3824
        %v3831 = vld [vmem:[#allocation7] sm:$0x3f]
        %v3833 = vlaneseq
        %v3834 = vshrl.u32 %v3833, 7
        %v3835 = vsub.s32 0, %v3834
        %v3836 = vrot.slane %v3831, %v3835
        %v3837 = vlaneseq
        %v3838 = vshrl.u32 %v3837, 7
        %v3839 = vsub.s32 1, %v3838
        %v3840 = vrot.slane %v3831, %v3839
        %v3841 = vlaneseq
        %v3842 = vshrl.u32 %v3841, 7
        %v3843 = vsub.s32 2, %v3842
        %v3844 = vrot.slane %v3831, %v3843
        %v3845 = vlaneseq
        %v3846 = vshrl.u32 %v3845, 7
        %v3847 = vsub.s32 3, %v3846
        %v3848 = vrot.slane %v3831, %v3847
        %v3849 = vlaneseq
        %v3850 = vshrl.u32 %v3849, 7
        %v3851 = vsub.s32 4, %v3850
        %v3852 = vrot.slane %v3831, %v3851
        %v3853 = vlaneseq
        %v3854 = vshrl.u32 %v3853, 7
        %v3855 = vsub.s32 5, %v3854
        %v3856 = vrot.slane %v3831, %v3855
        %v3863 = vadd.f32 %v3825, %v3836
        %v3864 = vadd.f32 %v3826, %v3840
        %v3865 = vadd.f32 %v3827, %v3844
        %v3866 = vadd.f32 %v3828, %v3848
        %v3867 = vadd.f32 %v3829, %v3852
        %v3868 = vadd.f32 %v3830, %v3856
        %v3869 = vmax.f32 %v3863, 0.0
        %v3870 = vmax.f32 %v3864, 0.0
        %v3871 = vmax.f32 %v3865, 0.0
        %v3872 = vmax.f32 %v3866, 0.0
        %v3873 = vmax.f32 %v3867, 0.0
        %v3874 = vmax.f32 %v3868, 0.0
        %v3875 = vmax.f32 %v3869, %v3872
        %v3876 = vmax.f32 %v3870, %v3873
        %v3877 = vmax.f32 %v3871, %v3874
        %v3878 = vpack.c.bf16 %v3875, %v3875
        %v3879 = vpack.c.bf16 %v3876, %v3876
        %v3880 = vpack.c.bf16 %v3877, %v3877
        %v3884 = vunpack.c.l.b16 %v3878
        %v3885 = vunpack.c.l.b16 %v3879
        %v3886 = vunpack.c.l.b16 %v3880
        %v3887 = vpack.c.b16 %v3885, %v3884
        %v3888 = vpack.c.b16 %v3886, %v3886
        %s3891 = scalar_lea.vmem [#allocation2], 12
        %3892 = vst [vmem:[%s3891] sm:$0x77] %v3887
        %3893 = vst [vmem:[%s3891 + $0x8] sm:$0x7] %v3888
        %v3894 = vld [vmem:[#allocation2] sm:$0x33]
        %v3895 = vld [vmem:[#allocation2 + $0x8] sm:$0x3]
        %v3896 = vld [vmem:[#allocation9] sm:$0xff]
        %v3897 = vld [vmem:[#allocation9 + $0x8] sm:$0xff]
        %v3898 = vld [vmem:[#allocation9 + $0x10] sm:$0xff]
        %v3899 = vld [vmem:[#allocation9 + $0x18] sm:$0xff]
        %v3900 = vld [vmem:[#allocation9 + $0x20] sm:$0xff]
        %v3901 = vld [vmem:[#allocation9 + $0x28] sm:$0xff]
        %v3902 = vld [vmem:[#allocation9 + $0x30] sm:$0xff]
        %v3903 = vld [vmem:[#allocation9 + $0x38] sm:$0xff]
        %v3904 = vld [vmem:[#allocation9 + $0x40] sm:$0xff]
        %v3905 = vld [vmem:[#allocation9 + $0x48] sm:$0xff]
        %v3906 = vld [vmem:[#allocation9 + $0x50] sm:$0xff]
        %v3907 = vld [vmem:[#allocation9 + $0x58] sm:$0xff]
        %v3908 = vld [vmem:[#allocation9 + $0x60] sm:$0xff]
        %v3909 = vld [vmem:[#allocation9 + $0x68] sm:$0xff]
        %v3910 = vld [vmem:[#allocation9 + $0x70] sm:$0xff]
        %v3911 = vld [vmem:[#allocation9 + $0x78] sm:$0xff]
        %v3912 = vld [vmem:[#allocation9 + $0x80] sm:$0xff]
        %v3913 = vld [vmem:[#allocation9 + $0x88] sm:$0xff]
        %v3914 = vld [vmem:[#allocation9 + $0x90] sm:$0xff]
        %v3915 = vld [vmem:[#allocation9 + $0x98] sm:$0xff]
        %v3916 = vld [vmem:[#allocation9 + $0xa0] sm:$0xff]
        %v3917 = vld [vmem:[#allocation9 + $0xa8] sm:$0xff]
        %v3918 = vld [vmem:[#allocation9 + $0xb0] sm:$0xff]
        %v3919 = vld [vmem:[#allocation9 + $0xb8] sm:$0xff]
        %v3920 = vld [vmem:[#allocation9 + $0xc0] sm:$0xff]
        %v3921 = vld [vmem:[#allocation9 + $0xc8] sm:$0xff]
        %v3922 = vld [vmem:[#allocation9 + $0xd0] sm:$0xff]
        %v3923 = vld [vmem:[#allocation9 + $0xd8] sm:$0xff]
        %v3924 = vld [vmem:[#allocation9 + $0xe0] sm:$0xff]
        %v3925 = vld [vmem:[#allocation9 + $0xe8] sm:$0xff]
        %v3926 = vld [vmem:[#allocation9 + $0xf0] sm:$0xff]
        %v3927 = vld [vmem:[#allocation9 + $0xf8] sm:$0xff]
        %v3928 = vld [vmem:[#allocation9 + $0x100] sm:$0xff]
        %v3929 = vld [vmem:[#allocation9 + $0x108] sm:$0xff]
        %v3930 = vld [vmem:[#allocation9 + $0x110] sm:$0xff]
        %v3931 = vld [vmem:[#allocation9 + $0x118] sm:$0xff]
        %v3932 = vld [vmem:[#allocation9 + $0x120] sm:$0xff]
        %v3933 = vld [vmem:[#allocation9 + $0x128] sm:$0xff]
        %v3934 = vld [vmem:[#allocation9 + $0x130] sm:$0xff]
        %v3935 = vld [vmem:[#allocation9 + $0x138] sm:$0xff]
        %v3936 = vld [vmem:[#allocation9 + $0x140] sm:$0xff]
        %v3937 = vld [vmem:[#allocation9 + $0x148] sm:$0xff]
        %v3938 = vld [vmem:[#allocation9 + $0x150] sm:$0xff]
        %v3939 = vld [vmem:[#allocation9 + $0x158] sm:$0xff]
        %v3940 = vld [vmem:[#allocation9 + $0x160] sm:$0xff]
        %v3941 = vld [vmem:[#allocation9 + $0x168] sm:$0xff]
        %v3942 = vld [vmem:[#allocation9 + $0x170] sm:$0xff]
        %v3943 = vld [vmem:[#allocation9 + $0x178] sm:$0xff]
        %v3944 = vld [vmem:[#allocation9 + $0x180] sm:$0xff]
        %v3945 = vld [vmem:[#allocation9 + $0x188] sm:$0xff]
        %v3946 = vld [vmem:[#allocation9 + $0x190] sm:$0xff]
        %v3947 = vld [vmem:[#allocation9 + $0x198] sm:$0xff]
        %v3948 = vld [vmem:[#allocation9 + $0x1a0] sm:$0xff]
        %v3949 = vld [vmem:[#allocation9 + $0x1a8] sm:$0xff]
        %v3950 = vld [vmem:[#allocation9 + $0x1b0] sm:$0xff]
        %v3951 = vld [vmem:[#allocation9 + $0x1b8] sm:$0xff]
        %v3952 = vld [vmem:[#allocation9 + $0x1c0] sm:$0xff]
        %v3953 = vld [vmem:[#allocation9 + $0x1c8] sm:$0xff]
        %v3954 = vld [vmem:[#allocation9 + $0x1d0] sm:$0xff]
        %v3955 = vld [vmem:[#allocation9 + $0x1d8] sm:$0xff]
        %v3956 = vld [vmem:[#allocation9 + $0x1e0] sm:$0xff]
        %v3957 = vld [vmem:[#allocation9 + $0x1e8] sm:$0xff]
        %v3958 = vld [vmem:[#allocation9 + $0x1f0] sm:$0xff]
        %v3959 = vld [vmem:[#allocation9 + $0x1f8] sm:$0xff]
        %v3960 = vld [vmem:[#allocation9 + $0x200] sm:$0xff]
        %v3961 = vld [vmem:[#allocation9 + $0x208] sm:$0xff]
        %v3962 = vld [vmem:[#allocation9 + $0x210] sm:$0xff]
        %v3963 = vld [vmem:[#allocation9 + $0x218] sm:$0xff]
        %v3964 = vld [vmem:[#allocation9 + $0x220] sm:$0xff]
        %v3965 = vld [vmem:[#allocation9 + $0x228] sm:$0xff]
        %v3966 = vld [vmem:[#allocation9 + $0x230] sm:$0xff]
        %v3967 = vld [vmem:[#allocation9 + $0x238] sm:$0xff]
        %v3968 = vld [vmem:[#allocation9 + $0x240] sm:$0xff]
        %v3969 = vld [vmem:[#allocation9 + $0x248] sm:$0xff]
        %v3970 = vld [vmem:[#allocation9 + $0x250] sm:$0xff]
        %v3971 = vld [vmem:[#allocation9 + $0x258] sm:$0xff]
        %v3972 = vld [vmem:[#allocation9 + $0x260] sm:$0xff]
        %v3973 = vld [vmem:[#allocation9 + $0x268] sm:$0xff]
        %v3974 = vld [vmem:[#allocation9 + $0x270] sm:$0xff]
        %v3975 = vld [vmem:[#allocation9 + $0x278] sm:$0xff]
        %v3976 = vld [vmem:[#allocation9 + $0x280] sm:$0xff]
        %v3977 = vld [vmem:[#allocation9 + $0x288] sm:$0xff]
        %v3978 = vld [vmem:[#allocation9 + $0x290] sm:$0xff]
        %v3979 = vld [vmem:[#allocation9 + $0x298] sm:$0xff]
        %v3980 = vld [vmem:[#allocation9 + $0x2a0] sm:$0xff]
        %v3981 = vld [vmem:[#allocation9 + $0x2a8] sm:$0xff]
        %v3982 = vld [vmem:[#allocation9 + $0x2b0] sm:$0xff]
        %v3983 = vld [vmem:[#allocation9 + $0x2b8] sm:$0xff]
        %v3984 = vld [vmem:[#allocation9 + $0x2c0] sm:$0xff]
        %v3985 = vld [vmem:[#allocation9 + $0x2c8] sm:$0xff]
        %v3986 = vld [vmem:[#allocation9 + $0x2d0] sm:$0xff]
        %v3987 = vld [vmem:[#allocation9 + $0x2d8] sm:$0xff]
        %v3988 = vld [vmem:[#allocation9 + $0x2e0] sm:$0xff]
        %v3989 = vld [vmem:[#allocation9 + $0x2e8] sm:$0xff]
        %v3990 = vld [vmem:[#allocation9 + $0x2f0] sm:$0xff]
        %v3991 = vld [vmem:[#allocation9 + $0x2f8] sm:$0xff]
        %v3992 = vld [vmem:[%s3891] sm:$0x33]
        %v3993 = vld [vmem:[%s3891 + $0x8] sm:$0x3]
        %s3994 = scalar_lea.vmem [#allocation9], 768
        %v3995 = vld [vmem:[%s3994] sm:$0xff]
        %v3996 = vld [vmem:[%s3994 + $0x8] sm:$0xff]
        %v3997 = vld [vmem:[%s3994 + $0x10] sm:$0xff]
        %v3998 = vld [vmem:[%s3994 + $0x18] sm:$0xff]
        %v3999 = vld [vmem:[%s3994 + $0x20] sm:$0xff]
        %v4000 = vld [vmem:[%s3994 + $0x28] sm:$0xff]
        %v4001 = vld [vmem:[%s3994 + $0x30] sm:$0xff]
        %v4002 = vld [vmem:[%s3994 + $0x38] sm:$0xff]
        %v4003 = vld [vmem:[%s3994 + $0x40] sm:$0xff]
        %v4004 = vld [vmem:[%s3994 + $0x48] sm:$0xff]
        %v4005 = vld [vmem:[%s3994 + $0x50] sm:$0xff]
        %v4006 = vld [vmem:[%s3994 + $0x58] sm:$0xff]
        %v4007 = vld [vmem:[%s3994 + $0x60] sm:$0xff]
        %v4008 = vld [vmem:[%s3994 + $0x68] sm:$0xff]
        %v4009 = vld [vmem:[%s3994 + $0x70] sm:$0xff]
        %v4010 = vld [vmem:[%s3994 + $0x78] sm:$0xff]
        %v4011 = vld [vmem:[%s3994 + $0x80] sm:$0xff]
        %v4012 = vld [vmem:[%s3994 + $0x88] sm:$0xff]
        %v4013 = vld [vmem:[%s3994 + $0x90] sm:$0xff]
        %v4014 = vld [vmem:[%s3994 + $0x98] sm:$0xff]
        %v4015 = vld [vmem:[%s3994 + $0xa0] sm:$0xff]
        %v4016 = vld [vmem:[%s3994 + $0xa8] sm:$0xff]
        %v4017 = vld [vmem:[%s3994 + $0xb0] sm:$0xff]
        %v4018 = vld [vmem:[%s3994 + $0xb8] sm:$0xff]
        %v4019 = vld [vmem:[%s3994 + $0xc0] sm:$0xff]
        %v4020 = vld [vmem:[%s3994 + $0xc8] sm:$0xff]
        %v4021 = vld [vmem:[%s3994 + $0xd0] sm:$0xff]
        %v4022 = vld [vmem:[%s3994 + $0xd8] sm:$0xff]
        %v4023 = vld [vmem:[%s3994 + $0xe0] sm:$0xff]
        %v4024 = vld [vmem:[%s3994 + $0xe8] sm:$0xff]
        %v4025 = vld [vmem:[%s3994 + $0xf0] sm:$0xff]
        %v4026 = vld [vmem:[%s3994 + $0xf8] sm:$0xff]
        %v4027 = vld [vmem:[%s3994 + $0x100] sm:$0xff]
        %v4028 = vld [vmem:[%s3994 + $0x108] sm:$0xff]
        %v4029 = vld [vmem:[%s3994 + $0x110] sm:$0xff]
        %v4030 = vld [vmem:[%s3994 + $0x118] sm:$0xff]
        %v4031 = vld [vmem:[%s3994 + $0x120] sm:$0xff]
        %v4032 = vld [vmem:[%s3994 + $0x128] sm:$0xff]
        %v4033 = vld [vmem:[%s3994 + $0x130] sm:$0xff]
        %v4034 = vld [vmem:[%s3994 + $0x138] sm:$0xff]
        %v4035 = vld [vmem:[%s3994 + $0x140] sm:$0xff]
        %v4036 = vld [vmem:[%s3994 + $0x148] sm:$0xff]
        %v4037 = vld [vmem:[%s3994 + $0x150] sm:$0xff]
        %v4038 = vld [vmem:[%s3994 + $0x158] sm:$0xff]
        %v4039 = vld [vmem:[%s3994 + $0x160] sm:$0xff]
        %v4040 = vld [vmem:[%s3994 + $0x168] sm:$0xff]
        %v4041 = vld [vmem:[%s3994 + $0x170] sm:$0xff]
        %v4042 = vld [vmem:[%s3994 + $0x178] sm:$0xff]
        %v4043 = vld [vmem:[%s3994 + $0x180] sm:$0xff]
        %v4044 = vld [vmem:[%s3994 + $0x188] sm:$0xff]
        %v4045 = vld [vmem:[%s3994 + $0x190] sm:$0xff]
        %v4046 = vld [vmem:[%s3994 + $0x198] sm:$0xff]
        %v4047 = vld [vmem:[%s3994 + $0x1a0] sm:$0xff]
        %v4048 = vld [vmem:[%s3994 + $0x1a8] sm:$0xff]
        %v4049 = vld [vmem:[%s3994 + $0x1b0] sm:$0xff]
        %v4050 = vld [vmem:[%s3994 + $0x1b8] sm:$0xff]
        %v4051 = vld [vmem:[%s3994 + $0x1c0] sm:$0xff]
        %v4052 = vld [vmem:[%s3994 + $0x1c8] sm:$0xff]
        %v4053 = vld [vmem:[%s3994 + $0x1d0] sm:$0xff]
        %v4054 = vld [vmem:[%s3994 + $0x1d8] sm:$0xff]
        %v4055 = vld [vmem:[%s3994 + $0x1e0] sm:$0xff]
        %v4056 = vld [vmem:[%s3994 + $0x1e8] sm:$0xff]
        %v4057 = vld [vmem:[%s3994 + $0x1f0] sm:$0xff]
        %v4058 = vld [vmem:[%s3994 + $0x1f8] sm:$0xff]
        %v4059 = vld [vmem:[%s3994 + $0x200] sm:$0xff]
        %v4060 = vld [vmem:[%s3994 + $0x208] sm:$0xff]
        %v4061 = vld [vmem:[%s3994 + $0x210] sm:$0xff]
        %v4062 = vld [vmem:[%s3994 + $0x218] sm:$0xff]
        %v4063 = vld [vmem:[%s3994 + $0x220] sm:$0xff]
        %v4064 = vld [vmem:[%s3994 + $0x228] sm:$0xff]
        %v4065 = vld [vmem:[%s3994 + $0x230] sm:$0xff]
        %v4066 = vld [vmem:[%s3994 + $0x238] sm:$0xff]
        %v4067 = vld [vmem:[%s3994 + $0x240] sm:$0xff]
        %v4068 = vld [vmem:[%s3994 + $0x248] sm:$0xff]
        %v4069 = vld [vmem:[%s3994 + $0x250] sm:$0xff]
        %v4070 = vld [vmem:[%s3994 + $0x258] sm:$0xff]
        %v4071 = vld [vmem:[%s3994 + $0x260] sm:$0xff]
        %v4072 = vld [vmem:[%s3994 + $0x268] sm:$0xff]
        %v4073 = vld [vmem:[%s3994 + $0x270] sm:$0xff]
        %v4074 = vld [vmem:[%s3994 + $0x278] sm:$0xff]
        %v4075 = vld [vmem:[%s3994 + $0x280] sm:$0xff]
        %v4076 = vld [vmem:[%s3994 + $0x288] sm:$0xff]
        %v4077 = vld [vmem:[%s3994 + $0x290] sm:$0xff]
        %v4078 = vld [vmem:[%s3994 + $0x298] sm:$0xff]
        %v4079 = vld [vmem:[%s3994 + $0x2a0] sm:$0xff]
        %v4080 = vld [vmem:[%s3994 + $0x2a8] sm:$0xff]
        %v4081 = vld [vmem:[%s3994 + $0x2b0] sm:$0xff]
        %v4082 = vld [vmem:[%s3994 + $0x2b8] sm:$0xff]
        %v4083 = vld [vmem:[%s3994 + $0x2c0] sm:$0xff]
        %v4084 = vld [vmem:[%s3994 + $0x2c8] sm:$0xff]
        %v4085 = vld [vmem:[%s3994 + $0x2d0] sm:$0xff]
        %v4086 = vld [vmem:[%s3994 + $0x2d8] sm:$0xff]
        %v4087 = vld [vmem:[%s3994 + $0x2e0] sm:$0xff]
        %v4088 = vld [vmem:[%s3994 + $0x2e8] sm:$0xff]
        %v4089 = vld [vmem:[%s3994 + $0x2f0] sm:$0xff]
        %v4090 = vld [vmem:[%s3994 + $0x2f8] sm:$0xff]
        %v4093 = vunpack.c.l.b16 %v3992
        %v4094 = vunpack.c.h.b16 %v3992
        %v4095 = vunpack.c.l.b16 %v3993
        %v4096 = vpack.c.b16 %v4093, %v4093
        %v4097 = vpack.c.b16 %v4094, %v4094
        %v4098 = vpack.c.b16 %v4095, %v4095
        %v4198 = vunpack.c.l.b16 %v3995
        %v4199 = vunpack.c.h.b16 %v3995
        %v4200 = vunpack.c.l.b16 %v3996
        %v4201 = vunpack.c.h.b16 %v3996
        %v4202 = vunpack.c.l.b16 %v3997
        %v4203 = vunpack.c.h.b16 %v3997
        %v4204 = vunpack.c.l.b16 %v3998
        %v4205 = vunpack.c.h.b16 %v3998
        %v4206 = vunpack.c.l.b16 %v3999
        %v4207 = vunpack.c.h.b16 %v3999
        %v4208 = vunpack.c.l.b16 %v4000
        %v4209 = vunpack.c.h.b16 %v4000
        %v4210 = vunpack.c.l.b16 %v4001
        %v4211 = vunpack.c.h.b16 %v4001
        %v4212 = vunpack.c.l.b16 %v4002
        %v4213 = vunpack.c.h.b16 %v4002
        %v4214 = vunpack.c.l.b16 %v4003
        %v4215 = vunpack.c.h.b16 %v4003
        %v4216 = vunpack.c.l.b16 %v4004
        %v4217 = vunpack.c.h.b16 %v4004
        %v4218 = vunpack.c.l.b16 %v4005
        %v4219 = vunpack.c.h.b16 %v4005
        %v4220 = vunpack.c.l.b16 %v4006
        %v4221 = vunpack.c.h.b16 %v4006
        %v4222 = vunpack.c.l.b16 %v4007
        %v4223 = vunpack.c.h.b16 %v4007
        %v4224 = vunpack.c.l.b16 %v4008
        %v4225 = vunpack.c.h.b16 %v4008
        %v4226 = vunpack.c.l.b16 %v4009
        %v4227 = vunpack.c.h.b16 %v4009
        %v4228 = vunpack.c.l.b16 %v4010
        %v4229 = vunpack.c.h.b16 %v4010
        %v4230 = vunpack.c.l.b16 %v4011
        %v4231 = vunpack.c.h.b16 %v4011
        %v4232 = vunpack.c.l.b16 %v4012
        %v4233 = vunpack.c.h.b16 %v4012
        %v4234 = vunpack.c.l.b16 %v4013
        %v4235 = vunpack.c.h.b16 %v4013
        %v4236 = vunpack.c.l.b16 %v4014
        %v4237 = vunpack.c.h.b16 %v4014
        %v4238 = vunpack.c.l.b16 %v4015
        %v4239 = vunpack.c.h.b16 %v4015
        %v4240 = vunpack.c.l.b16 %v4016
        %v4241 = vunpack.c.h.b16 %v4016
        %v4242 = vunpack.c.l.b16 %v4017
        %v4243 = vunpack.c.h.b16 %v4017
        %v4244 = vunpack.c.l.b16 %v4018
        %v4245 = vunpack.c.h.b16 %v4018
        %v4246 = vunpack.c.l.b16 %v4019
        %v4247 = vunpack.c.h.b16 %v4019
        %v4248 = vunpack.c.l.b16 %v4020
        %v4249 = vunpack.c.h.b16 %v4020
        %v4250 = vunpack.c.l.b16 %v4021
        %v4251 = vunpack.c.h.b16 %v4021
        %v4252 = vunpack.c.l.b16 %v4022
        %v4253 = vunpack.c.h.b16 %v4022
        %v4254 = vunpack.c.l.b16 %v4023
        %v4255 = vunpack.c.h.b16 %v4023
        %v4256 = vunpack.c.l.b16 %v4024
        %v4257 = vunpack.c.h.b16 %v4024
        %v4258 = vunpack.c.l.b16 %v4025
        %v4259 = vunpack.c.h.b16 %v4025
        %v4260 = vunpack.c.l.b16 %v4026
        %v4261 = vunpack.c.h.b16 %v4026
        %v4262 = vunpack.c.l.b16 %v4027
        %v4263 = vunpack.c.h.b16 %v4027
        %v4264 = vunpack.c.l.b16 %v4028
        %v4265 = vunpack.c.h.b16 %v4028
        %v4266 = vunpack.c.l.b16 %v4029
        %v4267 = vunpack.c.h.b16 %v4029
        %v4268 = vunpack.c.l.b16 %v4030
        %v4269 = vunpack.c.h.b16 %v4030
        %v4270 = vunpack.c.l.b16 %v4031
        %v4271 = vunpack.c.h.b16 %v4031
        %v4272 = vunpack.c.l.b16 %v4032
        %v4273 = vunpack.c.h.b16 %v4032
        %v4274 = vunpack.c.l.b16 %v4033
        %v4275 = vunpack.c.h.b16 %v4033
        %v4276 = vunpack.c.l.b16 %v4034
        %v4277 = vunpack.c.h.b16 %v4034
        %v4278 = vunpack.c.l.b16 %v4035
        %v4279 = vunpack.c.h.b16 %v4035
        %v4280 = vunpack.c.l.b16 %v4036
        %v4281 = vunpack.c.h.b16 %v4036
        %v4282 = vunpack.c.l.b16 %v4037
        %v4283 = vunpack.c.h.b16 %v4037
        %v4284 = vunpack.c.l.b16 %v4038
        %v4285 = vunpack.c.h.b16 %v4038
        %v4286 = vunpack.c.l.b16 %v4039
        %v4287 = vunpack.c.h.b16 %v4039
        %v4288 = vunpack.c.l.b16 %v4040
        %v4289 = vunpack.c.h.b16 %v4040
        %v4290 = vunpack.c.l.b16 %v4041
        %v4291 = vunpack.c.h.b16 %v4041
        %v4292 = vunpack.c.l.b16 %v4042
        %v4293 = vunpack.c.h.b16 %v4042
        %v4294 = vunpack.c.l.b16 %v4043
        %v4295 = vunpack.c.h.b16 %v4043
        %v4296 = vunpack.c.l.b16 %v4044
        %v4297 = vunpack.c.h.b16 %v4044
        %v4298 = vunpack.c.l.b16 %v4045
        %v4299 = vunpack.c.h.b16 %v4045
        %v4300 = vunpack.c.l.b16 %v4046
        %v4301 = vunpack.c.h.b16 %v4046
        %v4302 = vunpack.c.l.b16 %v4047
        %v4303 = vunpack.c.h.b16 %v4047
        %v4304 = vunpack.c.l.b16 %v4048
        %v4305 = vunpack.c.h.b16 %v4048
        %v4306 = vunpack.c.l.b16 %v4049
        %v4307 = vunpack.c.h.b16 %v4049
        %v4308 = vunpack.c.l.b16 %v4050
        %v4309 = vunpack.c.h.b16 %v4050
        %v4310 = vunpack.c.l.b16 %v4051
        %v4311 = vunpack.c.h.b16 %v4051
        %v4312 = vunpack.c.l.b16 %v4052
        %v4313 = vunpack.c.h.b16 %v4052
        %v4314 = vunpack.c.l.b16 %v4053
        %v4315 = vunpack.c.h.b16 %v4053
        %v4316 = vunpack.c.l.b16 %v4054
        %v4317 = vunpack.c.h.b16 %v4054
        %v4318 = vunpack.c.l.b16 %v4055
        %v4319 = vunpack.c.h.b16 %v4055
        %v4320 = vunpack.c.l.b16 %v4056
        %v4321 = vunpack.c.h.b16 %v4056
        %v4322 = vunpack.c.l.b16 %v4057
        %v4323 = vunpack.c.h.b16 %v4057
        %v4324 = vunpack.c.l.b16 %v4058
        %v4325 = vunpack.c.h.b16 %v4058
        %v4326 = vunpack.c.l.b16 %v4059
        %v4327 = vunpack.c.h.b16 %v4059
        %v4328 = vunpack.c.l.b16 %v4060
        %v4329 = vunpack.c.h.b16 %v4060
        %v4330 = vunpack.c.l.b16 %v4061
        %v4331 = vunpack.c.h.b16 %v4061
        %v4332 = vunpack.c.l.b16 %v4062
        %v4333 = vunpack.c.h.b16 %v4062
        %v4334 = vunpack.c.l.b16 %v4063
        %v4335 = vunpack.c.h.b16 %v4063
        %v4336 = vunpack.c.l.b16 %v4064
        %v4337 = vunpack.c.h.b16 %v4064
        %v4338 = vunpack.c.l.b16 %v4065
        %v4339 = vunpack.c.h.b16 %v4065
        %v4340 = vunpack.c.l.b16 %v4066
        %v4341 = vunpack.c.h.b16 %v4066
        %v4342 = vunpack.c.l.b16 %v4067
        %v4343 = vunpack.c.h.b16 %v4067
        %v4344 = vunpack.c.l.b16 %v4068
        %v4345 = vunpack.c.h.b16 %v4068
        %v4346 = vunpack.c.l.b16 %v4069
        %v4347 = vunpack.c.h.b16 %v4069
        %v4348 = vunpack.c.l.b16 %v4070
        %v4349 = vunpack.c.h.b16 %v4070
        %v4350 = vunpack.c.l.b16 %v4071
        %v4351 = vunpack.c.h.b16 %v4071
        %v4352 = vunpack.c.l.b16 %v4072
        %v4353 = vunpack.c.h.b16 %v4072
        %v4354 = vunpack.c.l.b16 %v4073
        %v4355 = vunpack.c.h.b16 %v4073
        %v4356 = vunpack.c.l.b16 %v4074
        %v4357 = vunpack.c.h.b16 %v4074
        %v4358 = vunpack.c.l.b16 %v4075
        %v4359 = vunpack.c.h.b16 %v4075
        %v4360 = vunpack.c.l.b16 %v4076
        %v4361 = vunpack.c.h.b16 %v4076
        %v4362 = vunpack.c.l.b16 %v4077
        %v4363 = vunpack.c.h.b16 %v4077
        %v4364 = vunpack.c.l.b16 %v4078
        %v4365 = vunpack.c.h.b16 %v4078
        %v4366 = vunpack.c.l.b16 %v4079
        %v4367 = vunpack.c.h.b16 %v4079
        %v4368 = vunpack.c.l.b16 %v4080
        %v4369 = vunpack.c.h.b16 %v4080
        %v4370 = vunpack.c.l.b16 %v4081
        %v4371 = vunpack.c.h.b16 %v4081
        %v4372 = vunpack.c.l.b16 %v4082
        %v4373 = vunpack.c.h.b16 %v4082
        %v4374 = vunpack.c.l.b16 %v4083
        %v4375 = vunpack.c.h.b16 %v4083
        %v4376 = vunpack.c.l.b16 %v4084
        %v4377 = vunpack.c.h.b16 %v4084
        %v4378 = vunpack.c.l.b16 %v4085
        %v4379 = vunpack.c.h.b16 %v4085
        %v4380 = vunpack.c.l.b16 %v4086
        %v4381 = vunpack.c.h.b16 %v4086
        %v4382 = vunpack.c.l.b16 %v4087
        %v4383 = vunpack.c.h.b16 %v4087
        %v4384 = vunpack.c.l.b16 %v4088
        %v4385 = vunpack.c.h.b16 %v4088
        %v4386 = vunpack.c.l.b16 %v4089
        %v4387 = vunpack.c.h.b16 %v4089
        %v4388 = vunpack.c.l.b16 %v4090
        %v4389 = vunpack.c.h.b16 %v4090
        %v4390 = vpack.c.b16 %v4202, %v4198
        %v4391 = vpack.c.b16 %v4203, %v4199
        %v4392 = vpack.c.b16 %v4204, %v4200
        %v4393 = vpack.c.b16 %v4205, %v4201
        %v4394 = vpack.c.b16 %v4210, %v4206
        %v4395 = vpack.c.b16 %v4211, %v4207
        %v4396 = vpack.c.b16 %v4212, %v4208
        %v4397 = vpack.c.b16 %v4213, %v4209
        %v4398 = vpack.c.b16 %v4218, %v4214
        %v4399 = vpack.c.b16 %v4219, %v4215
        %v4400 = vpack.c.b16 %v4220, %v4216
        %v4401 = vpack.c.b16 %v4221, %v4217
        %v4402 = vpack.c.b16 %v4226, %v4222
        %v4403 = vpack.c.b16 %v4227, %v4223
        %v4404 = vpack.c.b16 %v4228, %v4224
        %v4405 = vpack.c.b16 %v4229, %v4225
        %v4406 = vpack.c.b16 %v4234, %v4230
        %v4407 = vpack.c.b16 %v4235, %v4231
        %v4408 = vpack.c.b16 %v4236, %v4232
        %v4409 = vpack.c.b16 %v4237, %v4233
        %v4410 = vpack.c.b16 %v4242, %v4238
        %v4411 = vpack.c.b16 %v4243, %v4239
        %v4412 = vpack.c.b16 %v4244, %v4240
        %v4413 = vpack.c.b16 %v4245, %v4241
        %v4414 = vpack.c.b16 %v4250, %v4246
        %v4415 = vpack.c.b16 %v4251, %v4247
        %v4416 = vpack.c.b16 %v4252, %v4248
        %v4417 = vpack.c.b16 %v4253, %v4249
        %v4418 = vpack.c.b16 %v4258, %v4254
        %v4419 = vpack.c.b16 %v4259, %v4255
        %v4420 = vpack.c.b16 %v4260, %v4256
        %v4421 = vpack.c.b16 %v4261, %v4257
        %v4422 = vpack.c.b16 %v4266, %v4262
        %v4423 = vpack.c.b16 %v4267, %v4263
        %v4424 = vpack.c.b16 %v4268, %v4264
        %v4425 = vpack.c.b16 %v4269, %v4265
        %v4426 = vpack.c.b16 %v4274, %v4270
        %v4427 = vpack.c.b16 %v4275, %v4271
        %v4428 = vpack.c.b16 %v4276, %v4272
        %v4429 = vpack.c.b16 %v4277, %v4273
        %v4430 = vpack.c.b16 %v4282, %v4278
        %v4431 = vpack.c.b16 %v4283, %v4279
        %v4432 = vpack.c.b16 %v4284, %v4280
        %v4433 = vpack.c.b16 %v4285, %v4281
        %v4434 = vpack.c.b16 %v4290, %v4286
        %v4435 = vpack.c.b16 %v4291, %v4287
        %v4436 = vpack.c.b16 %v4292, %v4288
        %v4437 = vpack.c.b16 %v4293, %v4289
        %v4438 = vpack.c.b16 %v4298, %v4294
        %v4439 = vpack.c.b16 %v4299, %v4295
        %v4440 = vpack.c.b16 %v4300, %v4296
        %v4441 = vpack.c.b16 %v4301, %v4297
        %v4442 = vpack.c.b16 %v4306, %v4302
        %v4443 = vpack.c.b16 %v4307, %v4303
        %v4444 = vpack.c.b16 %v4308, %v4304
        %v4445 = vpack.c.b16 %v4309, %v4305
        %v4446 = vpack.c.b16 %v4314, %v4310
        %v4447 = vpack.c.b16 %v4315, %v4311
        %v4448 = vpack.c.b16 %v4316, %v4312
        %v4449 = vpack.c.b16 %v4317, %v4313
        %v4450 = vpack.c.b16 %v4322, %v4318
        %v4451 = vpack.c.b16 %v4323, %v4319
        %v4452 = vpack.c.b16 %v4324, %v4320
        %v4453 = vpack.c.b16 %v4325, %v4321
        %v4454 = vpack.c.b16 %v4330, %v4326
        %v4455 = vpack.c.b16 %v4331, %v4327
        %v4456 = vpack.c.b16 %v4332, %v4328
        %v4457 = vpack.c.b16 %v4333, %v4329
        %v4458 = vpack.c.b16 %v4338, %v4334
        %v4459 = vpack.c.b16 %v4339, %v4335
        %v4460 = vpack.c.b16 %v4340, %v4336
        %v4461 = vpack.c.b16 %v4341, %v4337
        %v4462 = vpack.c.b16 %v4346, %v4342
        %v4463 = vpack.c.b16 %v4347, %v4343
        %v4464 = vpack.c.b16 %v4348, %v4344
        %v4465 = vpack.c.b16 %v4349, %v4345
        %v4466 = vpack.c.b16 %v4354, %v4350
        %v4467 = vpack.c.b16 %v4355, %v4351
        %v4468 = vpack.c.b16 %v4356, %v4352
        %v4469 = vpack.c.b16 %v4357, %v4353
        %v4470 = vpack.c.b16 %v4362, %v4358
        %v4471 = vpack.c.b16 %v4363, %v4359
        %v4472 = vpack.c.b16 %v4364, %v4360
        %v4473 = vpack.c.b16 %v4365, %v4361
        %v4474 = vpack.c.b16 %v4370, %v4366
        %v4475 = vpack.c.b16 %v4371, %v4367
        %v4476 = vpack.c.b16 %v4372, %v4368
        %v4477 = vpack.c.b16 %v4373, %v4369
        %v4478 = vpack.c.b16 %v4378, %v4374
        %v4479 = vpack.c.b16 %v4379, %v4375
        %v4480 = vpack.c.b16 %v4380, %v4376
        %v4481 = vpack.c.b16 %v4381, %v4377
        %v4482 = vpack.c.b16 %v4386, %v4382
        %v4483 = vpack.c.b16 %v4387, %v4383
        %v4484 = vpack.c.b16 %v4388, %v4384
        %v4485 = vpack.c.b16 %v4389, %v4385
        %4582 = vmatprep.subr.bf16.mxu0 %v4391
        %4583 = vmatpush1.bf16.msra.mxu0 %v4390
        %4584 = vmatprep.subr.bf16.mxu0 %v4395
        %4585 = vmatpush1.bf16.msra.mxu0 %v4394
        %4586 = vmatprep.subr.bf16.mxu0 %v4399
        %4587 = vmatpush1.bf16.msra.mxu0 %v4398
        %4588 = vmatprep.subr.bf16.mxu0 %v4403
        %4589 = vmatpush1.bf16.msra.mxu0 %v4402
        %4590 = vmatprep.subr.bf16.mxu0 %v4407
        %4591 = vmatpush1.bf16.msra.mxu0 %v4406
        %4592 = vmatprep.subr.bf16.mxu0 %v4411
        %4593 = vmatpush1.bf16.msra.mxu0 %v4410
        %4594 = vmatprep.subr.bf16.mxu0 %v4415
        %4595 = vmatpush1.bf16.msra.mxu0 %v4414
        %4596 = vmatprep.subr.bf16.mxu0 %v4419
        %4597 = vmatpush1.bf16.msra.mxu0 %v4418
        %4598 = vmatprep.subr.bf16.mxu0 %v4423
        %4599 = vmatpush1.bf16.msra.mxu0 %v4422
        %4600 = vmatprep.subr.bf16.mxu0 %v4427
        %4601 = vmatpush1.bf16.msra.mxu0 %v4426
        %4602 = vmatprep.subr.bf16.mxu0 %v4431
        %4603 = vmatpush1.bf16.msra.mxu0 %v4430
        %4604 = vmatprep.subr.bf16.mxu0 %v4435
        %4605 = vmatpush1.bf16.msra.mxu0 %v4434
        %4606 = vmatprep.subr.bf16.mxu0 %v4439
        %4607 = vmatpush1.bf16.msra.mxu0 %v4438
        %4608 = vmatprep.subr.bf16.mxu0 %v4443
        %4609 = vmatpush1.bf16.msra.mxu0 %v4442
        %4610 = vmatprep.subr.bf16.mxu0 %v4447
        %4611 = vmatpush1.bf16.msra.mxu0 %v4446
        %4612 = vmatprep.subr.bf16.mxu0 %v4451
        %4613 = vmatpush1.bf16.msra.mxu0 %v4450
        %4614 = vmatprep.mubr.bf16.mxu0 %v4097
        %4615 = vmatmul.mubr.bf16.gmra.mrb[0].mxu0 %v4096
        %v4616 = vpop.f32.mrb[0].mxu0
        %v4617 = vadd.f32 0.0, %v4616
        %v4618 = vpop.f32.mrb[0].mxu0
        %v4619 = vadd.f32 0.0, %v4618
        %v4620 = vpop.f32.mrb[0].mxu0
        %v4621 = vpop.f32.mrb[0].mxu0
        %4622 = vdwg.mxu0
        %4623 = vmatprep.subr.bf16.mxu0 %v4455
        %4624 = vmatpush1.bf16.msra.mxu0 %v4454
        %4625 = vmatprep.subr.bf16.mxu0 %v4459
        %4626 = vmatpush1.bf16.msra.mxu0 %v4458
        %4627 = vmatprep.subr.bf16.mxu0 %v4463
        %4628 = vmatpush1.bf16.msra.mxu0 %v4462
        %4629 = vmatprep.subr.bf16.mxu0 %v4467
        %4630 = vmatpush1.bf16.msra.mxu0 %v4466
        %4631 = vmatprep.subr.bf16.mxu0 %v4471
        %4632 = vmatpush1.bf16.msra.mxu0 %v4470
        %4633 = vmatprep.subr.bf16.mxu0 %v4475
        %4634 = vmatpush1.bf16.msra.mxu0 %v4474
        %4635 = vmatprep.subr.bf16.mxu0 %v4479
        %4636 = vmatpush1.bf16.msra.mxu0 %v4478
        %4637 = vmatprep.subr.bf16.mxu0 %v4483
        %4638 = vmatpush1.bf16.msra.mxu0 %v4482
        %4639 = vmatprep.subr.bf16.mxu0 0
        %4640 = vmatpush1.bf16.msra.mxu0 0
        %4641 = vmatprep.subr.bf16.mxu0 0
        %4642 = vmatpush1.bf16.msra.mxu0 0
        %4643 = vmatprep.subr.bf16.mxu0 0
        %4644 = vmatpush1.bf16.msra.mxu0 0
        %4645 = vmatprep.subr.bf16.mxu0 0
        %4646 = vmatpush1.bf16.msra.mxu0 0
        %4647 = vmatprep.subr.bf16.mxu0 0
        %4648 = vmatpush1.bf16.msra.mxu0 0
        %4649 = vmatprep.subr.bf16.mxu0 0
        %4650 = vmatpush1.bf16.msra.mxu0 0
        %4651 = vmatprep.subr.bf16.mxu0 0
        %4652 = vmatpush1.bf16.msra.mxu0 0
        %4653 = vmatprep.subr.bf16.mxu0 0
        %4654 = vmatpush1.bf16.msra.mxu0 0
        %4655 = vmatprep.mubr.bf16.mxu0 0
        %4656 = vmatmul.mubr.bf16.gmra.mrb[0].mxu0 %v4098
        %v4657 = vpop.f32.mrb[0].mxu0
        %v4658 = vadd.f32 %v4617, %v4657
        %v4659 = vpop.f32.mrb[0].mxu0
        %v4660 = vadd.f32 %v4619, %v4659
        %v4661 = vpop.f32.mrb[0].mxu0
        %v4662 = vpop.f32.mrb[0].mxu0
        %4663 = vdwg.mxu0
        %4664 = vmatprep.subr.bf16.mxu0 %v4393
        %4665 = vmatpush1.bf16.msra.mxu0 %v4392
        %4666 = vmatprep.subr.bf16.mxu0 %v4397
        %4667 = vmatpush1.bf16.msra.mxu0 %v4396
        %4668 = vmatprep.subr.bf16.mxu0 %v4401
        %4669 = vmatpush1.bf16.msra.mxu0 %v4400
        %4670 = vmatprep.subr.bf16.mxu0 %v4405
        %4671 = vmatpush1.bf16.msra.mxu0 %v4404
        %4672 = vmatprep.subr.bf16.mxu0 %v4409
        %4673 = vmatpush1.bf16.msra.mxu0 %v4408
        %4674 = vmatprep.subr.bf16.mxu0 %v4413
        %4675 = vmatpush1.bf16.msra.mxu0 %v4412
        %4676 = vmatprep.subr.bf16.mxu0 %v4417
        %4677 = vmatpush1.bf16.msra.mxu0 %v4416
        %4678 = vmatprep.subr.bf16.mxu0 %v4421
        %4679 = vmatpush1.bf16.msra.mxu0 %v4420
        %4680 = vmatprep.subr.bf16.mxu0 %v4425
        %4681 = vmatpush1.bf16.msra.mxu0 %v4424
        %4682 = vmatprep.subr.bf16.mxu0 %v4429
        %4683 = vmatpush1.bf16.msra.mxu0 %v4428
        %4684 = vmatprep.subr.bf16.mxu0 %v4433
        %4685 = vmatpush1.bf16.msra.mxu0 %v4432
        %4686 = vmatprep.subr.bf16.mxu0 %v4437
        %4687 = vmatpush1.bf16.msra.mxu0 %v4436
        %4688 = vmatprep.subr.bf16.mxu0 %v4441
        %4689 = vmatpush1.bf16.msra.mxu0 %v4440
        %4690 = vmatprep.subr.bf16.mxu0 %v4445
        %4691 = vmatpush1.bf16.msra.mxu0 %v4444
        %4692 = vmatprep.subr.bf16.mxu0 %v4449
        %4693 = vmatpush1.bf16.msra.mxu0 %v4448
        %4694 = vmatprep.subr.bf16.mxu0 %v4453
        %4695 = vmatpush1.bf16.msra.mxu0 %v4452
        %4696 = vmatprep.mubr.bf16.mxu0 %v4097
        %4697 = vmatmul.mubr.bf16.gmra.mrb[0].mxu0 %v4096
        %v4698 = vpop.f32.mrb[0].mxu0
        %v4699 = vadd.f32 0.0, %v4698
        %v4700 = vpop.f32.mrb[0].mxu0
        %v4701 = vadd.f32 0.0, %v4700
        %v4702 = vpop.f32.mrb[0].mxu0
        %v4703 = vpop.f32.mrb[0].mxu0
        %4704 = vdwg.mxu0
        %4705 = vmatprep.subr.bf16.mxu0 %v4457
        %4706 = vmatpush1.bf16.msra.mxu0 %v4456
        %4707 = vmatprep.subr.bf16.mxu0 %v4461
        %4708 = vmatpush1.bf16.msra.mxu0 %v4460
        %4709 = vmatprep.subr.bf16.mxu0 %v4465
        %4710 = vmatpush1.bf16.msra.mxu0 %v4464
        %4711 = vmatprep.subr.bf16.mxu0 %v4469
        %4712 = vmatpush1.bf16.msra.mxu0 %v4468
        %4713 = vmatprep.subr.bf16.mxu0 %v4473
        %4714 = vmatpush1.bf16.msra.mxu0 %v4472
        %4715 = vmatprep.subr.bf16.mxu0 %v4477
        %4716 = vmatpush1.bf16.msra.mxu0 %v4476
        %4717 = vmatprep.subr.bf16.mxu0 %v4481
        %4718 = vmatpush1.bf16.msra.mxu0 %v4480
        %4719 = vmatprep.subr.bf16.mxu0 %v4485
        %4720 = vmatpush1.bf16.msra.mxu0 %v4484
        %4721 = vmatprep.subr.bf16.mxu0 0
        %4722 = vmatpush1.bf16.msra.mxu0 0
        %4723 = vmatprep.subr.bf16.mxu0 0
        %4724 = vmatpush1.bf16.msra.mxu0 0
        %4725 = vmatprep.subr.bf16.mxu0 0
        %4726 = vmatpush1.bf16.msra.mxu0 0
        %4727 = vmatprep.subr.bf16.mxu0 0
        %4728 = vmatpush1.bf16.msra.mxu0 0
        %4729 = vmatprep.subr.bf16.mxu0 0
        %4730 = vmatpush1.bf16.msra.mxu0 0
        %4731 = vmatprep.subr.bf16.mxu0 0
        %4732 = vmatpush1.bf16.msra.mxu0 0
        %4733 = vmatprep.subr.bf16.mxu0 0
        %4734 = vmatpush1.bf16.msra.mxu0 0
        %4735 = vmatprep.subr.bf16.mxu0 0
        %4736 = vmatpush1.bf16.msra.mxu0 0
        %4737 = vmatprep.mubr.bf16.mxu0 0
        %4738 = vmatmul.mubr.bf16.gmra.mrb[0].mxu0 %v4098
        %v4739 = vpop.f32.mrb[0].mxu0
        %v4740 = vadd.f32 %v4699, %v4739
        %v4741 = vpop.f32.mrb[0].mxu0
        %v4742 = vadd.f32 %v4701, %v4741
        %v4743 = vpop.f32.mrb[0].mxu0
        %v4744 = vpop.f32.mrb[0].mxu0
        %4745 = vdwg.mxu0
        %v4748 = vunpack.c.l.b16 %v3894
        %v4749 = vunpack.c.h.b16 %v3894
        %v4750 = vunpack.c.l.b16 %v3895
        %v4751 = vpack.c.b16 %v4748, %v4748
        %v4752 = vpack.c.b16 %v4749, %v4749
        %v4753 = vpack.c.b16 %v4750, %v4750
        %v4853 = vunpack.c.l.b16 %v3896
        %v4854 = vunpack.c.h.b16 %v3896
        %v4855 = vunpack.c.l.b16 %v3897
        %v4856 = vunpack.c.h.b16 %v3897
        %v4857 = vunpack.c.l.b16 %v3898
        %v4858 = vunpack.c.h.b16 %v3898
        %v4859 = vunpack.c.l.b16 %v3899
        %v4860 = vunpack.c.h.b16 %v3899
        %v4861 = vunpack.c.l.b16 %v3900
        %v4862 = vunpack.c.h.b16 %v3900
        %v4863 = vunpack.c.l.b16 %v3901
        %v4864 = vunpack.c.h.b16 %v3901
        %v4865 = vunpack.c.l.b16 %v3902
        %v4866 = vunpack.c.h.b16 %v3902
        %v4867 = vunpack.c.l.b16 %v3903
        %v4868 = vunpack.c.h.b16 %v3903
        %v4869 = vunpack.c.l.b16 %v3904
        %v4870 = vunpack.c.h.b16 %v3904
        %v4871 = vunpack.c.l.b16 %v3905
        %v4872 = vunpack.c.h.b16 %v3905
        %v4873 = vunpack.c.l.b16 %v3906
        %v4874 = vunpack.c.h.b16 %v3906
        %v4875 = vunpack.c.l.b16 %v3907
        %v4876 = vunpack.c.h.b16 %v3907
        %v4877 = vunpack.c.l.b16 %v3908
        %v4878 = vunpack.c.h.b16 %v3908
        %v4879 = vunpack.c.l.b16 %v3909
        %v4880 = vunpack.c.h.b16 %v3909
        %v4881 = vunpack.c.l.b16 %v3910
        %v4882 = vunpack.c.h.b16 %v3910
        %v4883 = vunpack.c.l.b16 %v3911
        %v4884 = vunpack.c.h.b16 %v3911
        %v4885 = vunpack.c.l.b16 %v3912
        %v4886 = vunpack.c.h.b16 %v3912
        %v4887 = vunpack.c.l.b16 %v3913
        %v4888 = vunpack.c.h.b16 %v3913
        %v4889 = vunpack.c.l.b16 %v3914
        %v4890 = vunpack.c.h.b16 %v3914
        %v4891 = vunpack.c.l.b16 %v3915
        %v4892 = vunpack.c.h.b16 %v3915
        %v4893 = vunpack.c.l.b16 %v3916
        %v4894 = vunpack.c.h.b16 %v3916
        %v4895 = vunpack.c.l.b16 %v3917
        %v4896 = vunpack.c.h.b16 %v3917
        %v4897 = vunpack.c.l.b16 %v3918
        %v4898 = vunpack.c.h.b16 %v3918
        %v4899 = vunpack.c.l.b16 %v3919
        %v4900 = vunpack.c.h.b16 %v3919
        %v4901 = vunpack.c.l.b16 %v3920
        %v4902 = vunpack.c.h.b16 %v3920
        %v4903 = vunpack.c.l.b16 %v3921
        %v4904 = vunpack.c.h.b16 %v3921
        %v4905 = vunpack.c.l.b16 %v3922
        %v4906 = vunpack.c.h.b16 %v3922
        %v4907 = vunpack.c.l.b16 %v3923
        %v4908 = vunpack.c.h.b16 %v3923
        %v4909 = vunpack.c.l.b16 %v3924
        %v4910 = vunpack.c.h.b16 %v3924
        %v4911 = vunpack.c.l.b16 %v3925
        %v4912 = vunpack.c.h.b16 %v3925
        %v4913 = vunpack.c.l.b16 %v3926
        %v4914 = vunpack.c.h.b16 %v3926
        %v4915 = vunpack.c.l.b16 %v3927
        %v4916 = vunpack.c.h.b16 %v3927
        %v4917 = vunpack.c.l.b16 %v3928
        %v4918 = vunpack.c.h.b16 %v3928
        %v4919 = vunpack.c.l.b16 %v3929
        %v4920 = vunpack.c.h.b16 %v3929
        %v4921 = vunpack.c.l.b16 %v3930
        %v4922 = vunpack.c.h.b16 %v3930
        %v4923 = vunpack.c.l.b16 %v3931
        %v4924 = vunpack.c.h.b16 %v3931
        %v4925 = vunpack.c.l.b16 %v3932
        %v4926 = vunpack.c.h.b16 %v3932
        %v4927 = vunpack.c.l.b16 %v3933
        %v4928 = vunpack.c.h.b16 %v3933
        %v4929 = vunpack.c.l.b16 %v3934
        %v4930 = vunpack.c.h.b16 %v3934
        %v4931 = vunpack.c.l.b16 %v3935
        %v4932 = vunpack.c.h.b16 %v3935
        %v4933 = vunpack.c.l.b16 %v3936
        %v4934 = vunpack.c.h.b16 %v3936
        %v4935 = vunpack.c.l.b16 %v3937
        %v4936 = vunpack.c.h.b16 %v3937
        %v4937 = vunpack.c.l.b16 %v3938
        %v4938 = vunpack.c.h.b16 %v3938
        %v4939 = vunpack.c.l.b16 %v3939
        %v4940 = vunpack.c.h.b16 %v3939
        %v4941 = vunpack.c.l.b16 %v3940
        %v4942 = vunpack.c.h.b16 %v3940
        %v4943 = vunpack.c.l.b16 %v3941
        %v4944 = vunpack.c.h.b16 %v3941
        %v4945 = vunpack.c.l.b16 %v3942
        %v4946 = vunpack.c.h.b16 %v3942
        %v4947 = vunpack.c.l.b16 %v3943
        %v4948 = vunpack.c.h.b16 %v3943
        %v4949 = vunpack.c.l.b16 %v3944
        %v4950 = vunpack.c.h.b16 %v3944
        %v4951 = vunpack.c.l.b16 %v3945
        %v4952 = vunpack.c.h.b16 %v3945
        %v4953 = vunpack.c.l.b16 %v3946
        %v4954 = vunpack.c.h.b16 %v3946
        %v4955 = vunpack.c.l.b16 %v3947
        %v4956 = vunpack.c.h.b16 %v3947
        %v4957 = vunpack.c.l.b16 %v3948
        %v4958 = vunpack.c.h.b16 %v3948
        %v4959 = vunpack.c.l.b16 %v3949
        %v4960 = vunpack.c.h.b16 %v3949
        %v4961 = vunpack.c.l.b16 %v3950
        %v4962 = vunpack.c.h.b16 %v3950
        %v4963 = vunpack.c.l.b16 %v3951
        %v4964 = vunpack.c.h.b16 %v3951
        %v4965 = vunpack.c.l.b16 %v3952
        %v4966 = vunpack.c.h.b16 %v3952
        %v4967 = vunpack.c.l.b16 %v3953
        %v4968 = vunpack.c.h.b16 %v3953
        %v4969 = vunpack.c.l.b16 %v3954
        %v4970 = vunpack.c.h.b16 %v3954
        %v4971 = vunpack.c.l.b16 %v3955
        %v4972 = vunpack.c.h.b16 %v3955
        %v4973 = vunpack.c.l.b16 %v3956
        %v4974 = vunpack.c.h.b16 %v3956
        %v4975 = vunpack.c.l.b16 %v3957
        %v4976 = vunpack.c.h.b16 %v3957
        %v4977 = vunpack.c.l.b16 %v3958
        %v4978 = vunpack.c.h.b16 %v3958
        %v4979 = vunpack.c.l.b16 %v3959
        %v4980 = vunpack.c.h.b16 %v3959
        %v4981 = vunpack.c.l.b16 %v3960
        %v4982 = vunpack.c.h.b16 %v3960
        %v4983 = vunpack.c.l.b16 %v3961
        %v4984 = vunpack.c.h.b16 %v3961
        %v4985 = vunpack.c.l.b16 %v3962
        %v4986 = vunpack.c.h.b16 %v3962
        %v4987 = vunpack.c.l.b16 %v3963
        %v4988 = vunpack.c.h.b16 %v3963
        %v4989 = vunpack.c.l.b16 %v3964
        %v4990 = vunpack.c.h.b16 %v3964
        %v4991 = vunpack.c.l.b16 %v3965
        %v4992 = vunpack.c.h.b16 %v3965
        %v4993 = vunpack.c.l.b16 %v3966
        %v4994 = vunpack.c.h.b16 %v3966
        %v4995 = vunpack.c.l.b16 %v3967
        %v4996 = vunpack.c.h.b16 %v3967
        %v4997 = vunpack.c.l.b16 %v3968
        %v4998 = vunpack.c.h.b16 %v3968
        %v4999 = vunpack.c.l.b16 %v3969
        %v5000 = vunpack.c.h.b16 %v3969
        %v5001 = vunpack.c.l.b16 %v3970
        %v5002 = vunpack.c.h.b16 %v3970
        %v5003 = vunpack.c.l.b16 %v3971
        %v5004 = vunpack.c.h.b16 %v3971
        %v5005 = vunpack.c.l.b16 %v3972
        %v5006 = vunpack.c.h.b16 %v3972
        %v5007 = vunpack.c.l.b16 %v3973
        %v5008 = vunpack.c.h.b16 %v3973
        %v5009 = vunpack.c.l.b16 %v3974
        %v5010 = vunpack.c.h.b16 %v3974
        %v5011 = vunpack.c.l.b16 %v3975
        %v5012 = vunpack.c.h.b16 %v3975
        %v5013 = vunpack.c.l.b16 %v3976
        %v5014 = vunpack.c.h.b16 %v3976
        %v5015 = vunpack.c.l.b16 %v3977
        %v5016 = vunpack.c.h.b16 %v3977
        %v5017 = vunpack.c.l.b16 %v3978
        %v5018 = vunpack.c.h.b16 %v3978
        %v5019 = vunpack.c.l.b16 %v3979
        %v5020 = vunpack.c.h.b16 %v3979
        %v5021 = vunpack.c.l.b16 %v3980
        %v5022 = vunpack.c.h.b16 %v3980
        %v5023 = vunpack.c.l.b16 %v3981
        %v5024 = vunpack.c.h.b16 %v3981
        %v5025 = vunpack.c.l.b16 %v3982
        %v5026 = vunpack.c.h.b16 %v3982
        %v5027 = vunpack.c.l.b16 %v3983
        %v5028 = vunpack.c.h.b16 %v3983
        %v5029 = vunpack.c.l.b16 %v3984
        %v5030 = vunpack.c.h.b16 %v3984
        %v5031 = vunpack.c.l.b16 %v3985
        %v5032 = vunpack.c.h.b16 %v3985
        %v5033 = vunpack.c.l.b16 %v3986
        %v5034 = vunpack.c.h.b16 %v3986
        %v5035 = vunpack.c.l.b16 %v3987
        %v5036 = vunpack.c.h.b16 %v3987
        %v5037 = vunpack.c.l.b16 %v3988
        %v5038 = vunpack.c.h.b16 %v3988
        %v5039 = vunpack.c.l.b16 %v3989
        %v5040 = vunpack.c.h.b16 %v3989
        %v5041 = vunpack.c.l.b16 %v3990
        %v5042 = vunpack.c.h.b16 %v3990
        %v5043 = vunpack.c.l.b16 %v3991
        %v5044 = vunpack.c.h.b16 %v3991
        %v5045 = vpack.c.b16 %v4857, %v4853
        %v5046 = vpack.c.b16 %v4858, %v4854
        %v5047 = vpack.c.b16 %v4859, %v4855
        %v5048 = vpack.c.b16 %v4860, %v4856
        %v5049 = vpack.c.b16 %v4865, %v4861
        %v5050 = vpack.c.b16 %v4866, %v4862
        %v5051 = vpack.c.b16 %v4867, %v4863
        %v5052 = vpack.c.b16 %v4868, %v4864
        %v5053 = vpack.c.b16 %v4873, %v4869
        %v5054 = vpack.c.b16 %v4874, %v4870
        %v5055 = vpack.c.b16 %v4875, %v4871
        %v5056 = vpack.c.b16 %v4876, %v4872
        %v5057 = vpack.c.b16 %v4881, %v4877
        %v5058 = vpack.c.b16 %v4882, %v4878
        %v5059 = vpack.c.b16 %v4883, %v4879
        %v5060 = vpack.c.b16 %v4884, %v4880
        %v5061 = vpack.c.b16 %v4889, %v4885
        %v5062 = vpack.c.b16 %v4890, %v4886
        %v5063 = vpack.c.b16 %v4891, %v4887
        %v5064 = vpack.c.b16 %v4892, %v4888
        %v5065 = vpack.c.b16 %v4897, %v4893
        %v5066 = vpack.c.b16 %v4898, %v4894
        %v5067 = vpack.c.b16 %v4899, %v4895
        %v5068 = vpack.c.b16 %v4900, %v4896
        %v5069 = vpack.c.b16 %v4905, %v4901
        %v5070 = vpack.c.b16 %v4906, %v4902
        %v5071 = vpack.c.b16 %v4907, %v4903
        %v5072 = vpack.c.b16 %v4908, %v4904
        %v5073 = vpack.c.b16 %v4913, %v4909
        %v5074 = vpack.c.b16 %v4914, %v4910
        %v5075 = vpack.c.b16 %v4915, %v4911
        %v5076 = vpack.c.b16 %v4916, %v4912
        %v5077 = vpack.c.b16 %v4921, %v4917
        %v5078 = vpack.c.b16 %v4922, %v4918
        %v5079 = vpack.c.b16 %v4923, %v4919
        %v5080 = vpack.c.b16 %v4924, %v4920
        %v5081 = vpack.c.b16 %v4929, %v4925
        %v5082 = vpack.c.b16 %v4930, %v4926
        %v5083 = vpack.c.b16 %v4931, %v4927
        %v5084 = vpack.c.b16 %v4932, %v4928
        %v5085 = vpack.c.b16 %v4937, %v4933
        %v5086 = vpack.c.b16 %v4938, %v4934
        %v5087 = vpack.c.b16 %v4939, %v4935
        %v5088 = vpack.c.b16 %v4940, %v4936
        %v5089 = vpack.c.b16 %v4945, %v4941
        %v5090 = vpack.c.b16 %v4946, %v4942
        %v5091 = vpack.c.b16 %v4947, %v4943
        %v5092 = vpack.c.b16 %v4948, %v4944
        %v5093 = vpack.c.b16 %v4953, %v4949
        %v5094 = vpack.c.b16 %v4954, %v4950
        %v5095 = vpack.c.b16 %v4955, %v4951
        %v5096 = vpack.c.b16 %v4956, %v4952
        %v5097 = vpack.c.b16 %v4961, %v4957
        %v5098 = vpack.c.b16 %v4962, %v4958
        %v5099 = vpack.c.b16 %v4963, %v4959
        %v5100 = vpack.c.b16 %v4964, %v4960
        %v5101 = vpack.c.b16 %v4969, %v4965
        %v5102 = vpack.c.b16 %v4970, %v4966
        %v5103 = vpack.c.b16 %v4971, %v4967
        %v5104 = vpack.c.b16 %v4972, %v4968
        %v5105 = vpack.c.b16 %v4977, %v4973
        %v5106 = vpack.c.b16 %v4978, %v4974
        %v5107 = vpack.c.b16 %v4979, %v4975
        %v5108 = vpack.c.b16 %v4980, %v4976
        %v5109 = vpack.c.b16 %v4985, %v4981
        %v5110 = vpack.c.b16 %v4986, %v4982
        %v5111 = vpack.c.b16 %v4987, %v4983
        %v5112 = vpack.c.b16 %v4988, %v4984
        %v5113 = vpack.c.b16 %v4993, %v4989
        %v5114 = vpack.c.b16 %v4994, %v4990
        %v5115 = vpack.c.b16 %v4995, %v4991
        %v5116 = vpack.c.b16 %v4996, %v4992
        %v5117 = vpack.c.b16 %v5001, %v4997
        %v5118 = vpack.c.b16 %v5002, %v4998
        %v5119 = vpack.c.b16 %v5003, %v4999
        %v5120 = vpack.c.b16 %v5004, %v5000
        %v5121 = vpack.c.b16 %v5009, %v5005
        %v5122 = vpack.c.b16 %v5010, %v5006
        %v5123 = vpack.c.b16 %v5011, %v5007
        %v5124 = vpack.c.b16 %v5012, %v5008
        %v5125 = vpack.c.b16 %v5017, %v5013
        %v5126 = vpack.c.b16 %v5018, %v5014
        %v5127 = vpack.c.b16 %v5019, %v5015
        %v5128 = vpack.c.b16 %v5020, %v5016
        %v5129 = vpack.c.b16 %v5025, %v5021
        %v5130 = vpack.c.b16 %v5026, %v5022
        %v5131 = vpack.c.b16 %v5027, %v5023
        %v5132 = vpack.c.b16 %v5028, %v5024
        %v5133 = vpack.c.b16 %v5033, %v5029
        %v5134 = vpack.c.b16 %v5034, %v5030
        %v5135 = vpack.c.b16 %v5035, %v5031
        %v5136 = vpack.c.b16 %v5036, %v5032
        %v5137 = vpack.c.b16 %v5041, %v5037
        %v5138 = vpack.c.b16 %v5042, %v5038
        %v5139 = vpack.c.b16 %v5043, %v5039
        %v5140 = vpack.c.b16 %v5044, %v5040
        %5237 = vmatprep.subr.bf16.mxu0 %v5046
        %5238 = vmatpush1.bf16.msra.mxu0 %v5045
        %5239 = vmatprep.subr.bf16.mxu0 %v5050
        %5240 = vmatpush1.bf16.msra.mxu0 %v5049
        %5241 = vmatprep.subr.bf16.mxu0 %v5054
        %5242 = vmatpush1.bf16.msra.mxu0 %v5053
        %5243 = vmatprep.subr.bf16.mxu0 %v5058
        %5244 = vmatpush1.bf16.msra.mxu0 %v5057
        %5245 = vmatprep.subr.bf16.mxu0 %v5062
        %5246 = vmatpush1.bf16.msra.mxu0 %v5061
        %5247 = vmatprep.subr.bf16.mxu0 %v5066
        %5248 = vmatpush1.bf16.msra.mxu0 %v5065
        %5249 = vmatprep.subr.bf16.mxu0 %v5070
        %5250 = vmatpush1.bf16.msra.mxu0 %v5069
        %5251 = vmatprep.subr.bf16.mxu0 %v5074
        %5252 = vmatpush1.bf16.msra.mxu0 %v5073
        %5253 = vmatprep.subr.bf16.mxu0 %v5078
        %5254 = vmatpush1.bf16.msra.mxu0 %v5077
        %5255 = vmatprep.subr.bf16.mxu0 %v5082
        %5256 = vmatpush1.bf16.msra.mxu0 %v5081
        %5257 = vmatprep.subr.bf16.mxu0 %v5086
        %5258 = vmatpush1.bf16.msra.mxu0 %v5085
        %5259 = vmatprep.subr.bf16.mxu0 %v5090
        %5260 = vmatpush1.bf16.msra.mxu0 %v5089
        %5261 = vmatprep.subr.bf16.mxu0 %v5094
        %5262 = vmatpush1.bf16.msra.mxu0 %v5093
        %5263 = vmatprep.subr.bf16.mxu0 %v5098
        %5264 = vmatpush1.bf16.msra.mxu0 %v5097
        %5265 = vmatprep.subr.bf16.mxu0 %v5102
        %5266 = vmatpush1.bf16.msra.mxu0 %v5101
        %5267 = vmatprep.subr.bf16.mxu0 %v5106
        %5268 = vmatpush1.bf16.msra.mxu0 %v5105
        %5269 = vmatprep.mubr.bf16.mxu0 %v4752
        %5270 = vmatmul.mubr.bf16.gmra.mrb[0].mxu0 %v4751
        %v5271 = vpop.f32.mrb[0].mxu0
        %v5272 = vadd.f32 %v4658, %v5271
        %v5273 = vpop.f32.mrb[0].mxu0
        %v5274 = vadd.f32 %v4660, %v5273
        %v5275 = vpop.f32.mrb[0].mxu0
        %v5276 = vpop.f32.mrb[0].mxu0
        %5277 = vdwg.mxu0
        %5278 = vmatprep.subr.bf16.mxu0 %v5110
        %5279 = vmatpush1.bf16.msra.mxu0 %v5109
        %5280 = vmatprep.subr.bf16.mxu0 %v5114
        %5281 = vmatpush1.bf16.msra.mxu0 %v5113
        %5282 = vmatprep.subr.bf16.mxu0 %v5118
        %5283 = vmatpush1.bf16.msra.mxu0 %v5117
        %5284 = vmatprep.subr.bf16.mxu0 %v5122
        %5285 = vmatpush1.bf16.msra.mxu0 %v5121
        %5286 = vmatprep.subr.bf16.mxu0 %v5126
        %5287 = vmatpush1.bf16.msra.mxu0 %v5125
        %5288 = vmatprep.subr.bf16.mxu0 %v5130
        %5289 = vmatpush1.bf16.msra.mxu0 %v5129
        %5290 = vmatprep.subr.bf16.mxu0 %v5134
        %5291 = vmatpush1.bf16.msra.mxu0 %v5133
        %5292 = vmatprep.subr.bf16.mxu0 %v5138
        %5293 = vmatpush1.bf16.msra.mxu0 %v5137
        %5294 = vmatprep.subr.bf16.mxu0 0
        %5295 = vmatpush1.bf16.msra.mxu0 0
        %5296 = vmatprep.subr.bf16.mxu0 0
        %5297 = vmatpush1.bf16.msra.mxu0 0
        %5298 = vmatprep.subr.bf16.mxu0 0
        %5299 = vmatpush1.bf16.msra.mxu0 0
        %5300 = vmatprep.subr.bf16.mxu0 0
        %5301 = vmatpush1.bf16.msra.mxu0 0
        %5302 = vmatprep.subr.bf16.mxu0 0
        %5303 = vmatpush1.bf16.msra.mxu0 0
        %5304 = vmatprep.subr.bf16.mxu0 0
        %5305 = vmatpush1.bf16.msra.mxu0 0
        %5306 = vmatprep.subr.bf16.mxu0 0
        %5307 = vmatpush1.bf16.msra.mxu0 0
        %5308 = vmatprep.subr.bf16.mxu0 0
        %5309 = vmatpush1.bf16.msra.mxu0 0
        %5310 = vmatprep.mubr.bf16.mxu0 0
        %5311 = vmatmul.mubr.bf16.gmra.mrb[0].mxu0 %v4753
        %v5312 = vpop.f32.mrb[0].mxu0
        %v5313 = vadd.f32 %v5272, %v5312
        %v5314 = vpop.f32.mrb[0].mxu0
        %v5315 = vadd.f32 %v5274, %v5314
        %v5316 = vpop.f32.mrb[0].mxu0
        %v5317 = vpop.f32.mrb[0].mxu0
        %5318 = vdwg.mxu0
        %5319 = vmatprep.subr.bf16.mxu0 %v5048
        %5320 = vmatpush1.bf16.msra.mxu0 %v5047
        %5321 = vmatprep.subr.bf16.mxu0 %v5052
        %5322 = vmatpush1.bf16.msra.mxu0 %v5051
        %5323 = vmatprep.subr.bf16.mxu0 %v5056
        %5324 = vmatpush1.bf16.msra.mxu0 %v5055
        %5325 = vmatprep.subr.bf16.mxu0 %v5060
        %5326 = vmatpush1.bf16.msra.mxu0 %v5059
        %5327 = vmatprep.subr.bf16.mxu0 %v5064
        %5328 = vmatpush1.bf16.msra.mxu0 %v5063
        %5329 = vmatprep.subr.bf16.mxu0 %v5068
        %5330 = vmatpush1.bf16.msra.mxu0 %v5067
        %5331 = vmatprep.subr.bf16.mxu0 %v5072
        %5332 = vmatpush1.bf16.msra.mxu0 %v5071
        %5333 = vmatprep.subr.bf16.mxu0 %v5076
        %5334 = vmatpush1.bf16.msra.mxu0 %v5075
        %5335 = vmatprep.subr.bf16.mxu0 %v5080
        %5336 = vmatpush1.bf16.msra.mxu0 %v5079
        %5337 = vmatprep.subr.bf16.mxu0 %v5084
        %5338 = vmatpush1.bf16.msra.mxu0 %v5083
        %5339 = vmatprep.subr.bf16.mxu0 %v5088
        %5340 = vmatpush1.bf16.msra.mxu0 %v5087
        %5341 = vmatprep.subr.bf16.mxu0 %v5092
        %5342 = vmatpush1.bf16.msra.mxu0 %v5091
        %5343 = vmatprep.subr.bf16.mxu0 %v5096
        %5344 = vmatpush1.bf16.msra.mxu0 %v5095
        %5345 = vmatprep.subr.bf16.mxu0 %v5100
        %5346 = vmatpush1.bf16.msra.mxu0 %v5099
        %5347 = vmatprep.subr.bf16.mxu0 %v5104
        %5348 = vmatpush1.bf16.msra.mxu0 %v5103
        %5349 = vmatprep.subr.bf16.mxu0 %v5108
        %5350 = vmatpush1.bf16.msra.mxu0 %v5107
        %5351 = vmatprep.mubr.bf16.mxu0 %v4752
        %5352 = vmatmul.mubr.bf16.gmra.mrb[0].mxu0 %v4751
        %v5353 = vpop.f32.mrb[0].mxu0
        %v5354 = vadd.f32 %v4740, %v5353
        %v5355 = vpop.f32.mrb[0].mxu0
        %v5356 = vadd.f32 %v4742, %v5355
        %v5357 = vpop.f32.mrb[0].mxu0
        %v5358 = vpop.f32.mrb[0].mxu0
        %5359 = vdwg.mxu0
        %5360 = vmatprep.subr.bf16.mxu0 %v5112
        %5361 = vmatpush1.bf16.msra.mxu0 %v5111
        %5362 = vmatprep.subr.bf16.mxu0 %v5116
        %5363 = vmatpush1.bf16.msra.mxu0 %v5115
        %5364 = vmatprep.subr.bf16.mxu0 %v5120
        %5365 = vmatpush1.bf16.msra.mxu0 %v5119
        %5366 = vmatprep.subr.bf16.mxu0 %v5124
        %5367 = vmatpush1.bf16.msra.mxu0 %v5123
        %5368 = vmatprep.subr.bf16.mxu0 %v5128
        %5369 = vmatpush1.bf16.msra.mxu0 %v5127
        %5370 = vmatprep.subr.bf16.mxu0 %v5132
        %5371 = vmatpush1.bf16.msra.mxu0 %v5131
        %5372 = vmatprep.subr.bf16.mxu0 %v5136
        %5373 = vmatpush1.bf16.msra.mxu0 %v5135
        %5374 = vmatprep.subr.bf16.mxu0 %v5140
        %5375 = vmatpush1.bf16.msra.mxu0 %v5139
        %5376 = vmatprep.subr.bf16.mxu0 0
        %5377 = vmatpush1.bf16.msra.mxu0 0
        %5378 = vmatprep.subr.bf16.mxu0 0
        %5379 = vmatpush1.bf16.msra.mxu0 0
        %5380 = vmatprep.subr.bf16.mxu0 0
        %5381 = vmatpush1.bf16.msra.mxu0 0
        %5382 = vmatprep.subr.bf16.mxu0 0
        %5383 = vmatpush1.bf16.msra.mxu0 0
        %5384 = vmatprep.subr.bf16.mxu0 0
        %5385 = vmatpush1.bf16.msra.mxu0 0
        %5386 = vmatprep.subr.bf16.mxu0 0
        %5387 = vmatpush1.bf16.msra.mxu0 0
        %5388 = vmatprep.subr.bf16.mxu0 0
        %5389 = vmatpush1.bf16.msra.mxu0 0
        %5390 = vmatprep.subr.bf16.mxu0 0
        %5391 = vmatpush1.bf16.msra.mxu0 0
        %5392 = vmatprep.mubr.bf16.mxu0 0
        %5393 = vmatmul.mubr.bf16.gmra.mrb[0].mxu0 %v4753
        %v5394 = vpop.f32.mrb[0].mxu0
        %v5395 = vadd.f32 %v5354, %v5394
        %v5396 = vpop.f32.mrb[0].mxu0
        %v5397 = vadd.f32 %v5356, %v5396
        %v5398 = vpop.f32.mrb[0].mxu0
        %v5399 = vpop.f32.mrb[0].mxu0
        %5400 = vdwg.mxu0
        %v5401 = vld [vmem:[#allocation2] sm:$0x77]
        %v5402 = vld [vmem:[#allocation2 + $0x8] sm:$0x7]
        %s5403 = scalar_lea.vmem [#allocation9], 1536
        %v5404 = vld [vmem:[%s5403] sm:$0xff]
        %v5405 = vld [vmem:[%s5403 + $0x8] sm:$0xff]
        %v5406 = vld [vmem:[%s5403 + $0x10] sm:$0xff]
        %v5407 = vld [vmem:[%s5403 + $0x18] sm:$0xff]
        %v5408 = vld [vmem:[%s5403 + $0x20] sm:$0xff]
        %v5409 = vld [vmem:[%s5403 + $0x28] sm:$0xff]
        %v5410 = vld [vmem:[%s5403 + $0x30] sm:$0xff]
        %v5411 = vld [vmem:[%s5403 + $0x38] sm:$0xff]
        %v5412 = vld [vmem:[%s5403 + $0x40] sm:$0xff]
        %v5413 = vld [vmem:[%s5403 + $0x48] sm:$0xff]
        %v5414 = vld [vmem:[%s5403 + $0x50] sm:$0xff]
        %v5415 = vld [vmem:[%s5403 + $0x58] sm:$0xff]
        %v5416 = vld [vmem:[%s5403 + $0x60] sm:$0xff]
        %v5417 = vld [vmem:[%s5403 + $0x68] sm:$0xff]
        %v5418 = vld [vmem:[%s5403 + $0x70] sm:$0xff]
        %v5419 = vld [vmem:[%s5403 + $0x78] sm:$0xff]
        %v5420 = vld [vmem:[%s5403 + $0x80] sm:$0xff]
        %v5421 = vld [vmem:[%s5403 + $0x88] sm:$0xff]
        %v5422 = vld [vmem:[%s5403 + $0x90] sm:$0xff]
        %v5423 = vld [vmem:[%s5403 + $0x98] sm:$0xff]
        %v5424 = vld [vmem:[%s5403 + $0xa0] sm:$0xff]
        %v5425 = vld [vmem:[%s5403 + $0xa8] sm:$0xff]
        %v5426 = vld [vmem:[%s5403 + $0xb0] sm:$0xff]
        %v5427 = vld [vmem:[%s5403 + $0xb8] sm:$0xff]
        %v5428 = vld [vmem:[%s5403 + $0xc0] sm:$0xff]
        %v5429 = vld [vmem:[%s5403 + $0xc8] sm:$0xff]
        %v5430 = vld [vmem:[%s5403 + $0xd0] sm:$0xff]
        %v5431 = vld [vmem:[%s5403 + $0xd8] sm:$0xff]
        %v5432 = vld [vmem:[%s5403 + $0xe0] sm:$0xff]
        %v5433 = vld [vmem:[%s5403 + $0xe8] sm:$0xff]
        %v5434 = vld [vmem:[%s5403 + $0xf0] sm:$0xff]
        %v5435 = vld [vmem:[%s5403 + $0xf8] sm:$0xff]
        %v5436 = vld [vmem:[%s5403 + $0x100] sm:$0xff]
        %v5437 = vld [vmem:[%s5403 + $0x108] sm:$0xff]
        %v5438 = vld [vmem:[%s5403 + $0x110] sm:$0xff]
        %v5439 = vld [vmem:[%s5403 + $0x118] sm:$0xff]
        %v5440 = vld [vmem:[%s5403 + $0x120] sm:$0xff]
        %v5441 = vld [vmem:[%s5403 + $0x128] sm:$0xff]
        %v5442 = vld [vmem:[%s5403 + $0x130] sm:$0xff]
        %v5443 = vld [vmem:[%s5403 + $0x138] sm:$0xff]
        %v5444 = vld [vmem:[%s5403 + $0x140] sm:$0xff]
        %v5445 = vld [vmem:[%s5403 + $0x148] sm:$0xff]
        %v5446 = vld [vmem:[%s5403 + $0x150] sm:$0xff]
        %v5447 = vld [vmem:[%s5403 + $0x158] sm:$0xff]
        %v5448 = vld [vmem:[%s5403 + $0x160] sm:$0xff]
        %v5449 = vld [vmem:[%s5403 + $0x168] sm:$0xff]
        %v5450 = vld [vmem:[%s5403 + $0x170] sm:$0xff]
        %v5451 = vld [vmem:[%s5403 + $0x178] sm:$0xff]
        %v5452 = vld [vmem:[%s5403 + $0x180] sm:$0xff]
        %v5453 = vld [vmem:[%s5403 + $0x188] sm:$0xff]
        %v5454 = vld [vmem:[%s5403 + $0x190] sm:$0xff]
        %v5455 = vld [vmem:[%s5403 + $0x198] sm:$0xff]
        %v5456 = vld [vmem:[%s5403 + $0x1a0] sm:$0xff]
        %v5457 = vld [vmem:[%s5403 + $0x1a8] sm:$0xff]
        %v5458 = vld [vmem:[%s5403 + $0x1b0] sm:$0xff]
        %v5459 = vld [vmem:[%s5403 + $0x1b8] sm:$0xff]
        %v5460 = vld [vmem:[%s5403 + $0x1c0] sm:$0xff]
        %v5461 = vld [vmem:[%s5403 + $0x1c8] sm:$0xff]
        %v5462 = vld [vmem:[%s5403 + $0x1d0] sm:$0xff]
        %v5463 = vld [vmem:[%s5403 + $0x1d8] sm:$0xff]
        %v5464 = vld [vmem:[%s5403 + $0x1e0] sm:$0xff]
        %v5465 = vld [vmem:[%s5403 + $0x1e8] sm:$0xff]
        %v5466 = vld [vmem:[%s5403 + $0x1f0] sm:$0xff]
        %v5467 = vld [vmem:[%s5403 + $0x1f8] sm:$0xff]
        %v5468 = vld [vmem:[%s5403 + $0x200] sm:$0xff]
        %v5469 = vld [vmem:[%s5403 + $0x208] sm:$0xff]
        %v5470 = vld [vmem:[%s5403 + $0x210] sm:$0xff]
        %v5471 = vld [vmem:[%s5403 + $0x218] sm:$0xff]
        %v5472 = vld [vmem:[%s5403 + $0x220] sm:$0xff]
        %v5473 = vld [vmem:[%s5403 + $0x228] sm:$0xff]
        %v5474 = vld [vmem:[%s5403 + $0x230] sm:$0xff]
        %v5475 = vld [vmem:[%s5403 + $0x238] sm:$0xff]
        %v5476 = vld [vmem:[%s5403 + $0x240] sm:$0xff]
        %v5477 = vld [vmem:[%s5403 + $0x248] sm:$0xff]
        %v5478 = vld [vmem:[%s5403 + $0x250] sm:$0xff]
        %v5479 = vld [vmem:[%s5403 + $0x258] sm:$0xff]
        %v5480 = vld [vmem:[%s5403 + $0x260] sm:$0xff]
        %v5481 = vld [vmem:[%s5403 + $0x268] sm:$0xff]
        %v5482 = vld [vmem:[%s5403 + $0x270] sm:$0xff]
        %v5483 = vld [vmem:[%s5403 + $0x278] sm:$0xff]
        %v5484 = vld [vmem:[%s5403 + $0x280] sm:$0xff]
        %v5485 = vld [vmem:[%s5403 + $0x288] sm:$0xff]
        %v5486 = vld [vmem:[%s5403 + $0x290] sm:$0xff]
        %v5487 = vld [vmem:[%s5403 + $0x298] sm:$0xff]
        %v5488 = vld [vmem:[%s5403 + $0x2a0] sm:$0xff]
        %v5489 = vld [vmem:[%s5403 + $0x2a8] sm:$0xff]
        %v5490 = vld [vmem:[%s5403 + $0x2b0] sm:$0xff]
        %v5491 = vld [vmem:[%s5403 + $0x2b8] sm:$0xff]
        %v5492 = vld [vmem:[%s5403 + $0x2c0] sm:$0xff]
        %v5493 = vld [vmem:[%s5403 + $0x2c8] sm:$0xff]
        %v5494 = vld [vmem:[%s5403 + $0x2d0] sm:$0xff]
        %v5495 = vld [vmem:[%s5403 + $0x2d8] sm:$0xff]
        %v5496 = vld [vmem:[%s5403 + $0x2e0] sm:$0xff]
        %v5497 = vld [vmem:[%s5403 + $0x2e8] sm:$0xff]
        %v5498 = vld [vmem:[%s5403 + $0x2f0] sm:$0xff]
        %v5499 = vld [vmem:[%s5403 + $0x2f8] sm:$0xff]
        %v5502 = vunpack.c.l.b16 %v5401
        %v5503 = vunpack.c.h.b16 %v5401
        %v5504 = vunpack.c.l.b16 %v5402
        %v5505 = vpack.c.b16 %v5502, %v5502
        %v5506 = vpack.c.b16 %v5503, %v5503
        %v5507 = vpack.c.b16 %v5504, %v5504
        %v5509 = vshrl.u32 %v5505, 16
        %v5511 = vshll.u32 %v5505, 16
        %v5513 = vrot.slane %v5511, 1
        %v5514 = vor.u32 %v5509, %v5513
        %v5516 = vshrl.u32 %v5506, 16
        %v5518 = vshll.u32 %v5506, 16
        %v5520 = vrot.slane %v5518, 1
        %v5521 = vor.u32 %v5516, %v5520
        %v5523 = vshrl.u32 %v5507, 16
        %v5525 = vshll.u32 %v5507, 16
        %v5527 = vrot.slane %v5525, 1
        %v5528 = vor.u32 %v5523, %v5527
        %v5628 = vunpack.c.l.b16 %v5404
        %v5629 = vunpack.c.h.b16 %v5404
        %v5630 = vunpack.c.l.b16 %v5405
        %v5631 = vunpack.c.h.b16 %v5405
        %v5632 = vunpack.c.l.b16 %v5406
        %v5633 = vunpack.c.h.b16 %v5406
        %v5634 = vunpack.c.l.b16 %v5407
        %v5635 = vunpack.c.h.b16 %v5407
        %v5636 = vunpack.c.l.b16 %v5408
        %v5637 = vunpack.c.h.b16 %v5408
        %v5638 = vunpack.c.l.b16 %v5409
        %v5639 = vunpack.c.h.b16 %v5409
        %v5640 = vunpack.c.l.b16 %v5410
        %v5641 = vunpack.c.h.b16 %v5410
        %v5642 = vunpack.c.l.b16 %v5411
        %v5643 = vunpack.c.h.b16 %v5411
        %v5644 = vunpack.c.l.b16 %v5412
        %v5645 = vunpack.c.h.b16 %v5412
        %v5646 = vunpack.c.l.b16 %v5413
        %v5647 = vunpack.c.h.b16 %v5413
        %v5648 = vunpack.c.l.b16 %v5414
        %v5649 = vunpack.c.h.b16 %v5414
        %v5650 = vunpack.c.l.b16 %v5415
        %v5651 = vunpack.c.h.b16 %v5415
        %v5652 = vunpack.c.l.b16 %v5416
        %v5653 = vunpack.c.h.b16 %v5416
        %v5654 = vunpack.c.l.b16 %v5417
        %v5655 = vunpack.c.h.b16 %v5417
        %v5656 = vunpack.c.l.b16 %v5418
        %v5657 = vunpack.c.h.b16 %v5418
        %v5658 = vunpack.c.l.b16 %v5419
        %v5659 = vunpack.c.h.b16 %v5419
        %v5660 = vunpack.c.l.b16 %v5420
        %v5661 = vunpack.c.h.b16 %v5420
        %v5662 = vunpack.c.l.b16 %v5421
        %v5663 = vunpack.c.h.b16 %v5421
        %v5664 = vunpack.c.l.b16 %v5422
        %v5665 = vunpack.c.h.b16 %v5422
        %v5666 = vunpack.c.l.b16 %v5423
        %v5667 = vunpack.c.h.b16 %v5423
        %v5668 = vunpack.c.l.b16 %v5424
        %v5669 = vunpack.c.h.b16 %v5424
        %v5670 = vunpack.c.l.b16 %v5425
        %v5671 = vunpack.c.h.b16 %v5425
        %v5672 = vunpack.c.l.b16 %v5426
        %v5673 = vunpack.c.h.b16 %v5426
        %v5674 = vunpack.c.l.b16 %v5427
        %v5675 = vunpack.c.h.b16 %v5427
        %v5676 = vunpack.c.l.b16 %v5428
        %v5677 = vunpack.c.h.b16 %v5428
        %v5678 = vunpack.c.l.b16 %v5429
        %v5679 = vunpack.c.h.b16 %v5429
        %v5680 = vunpack.c.l.b16 %v5430
        %v5681 = vunpack.c.h.b16 %v5430
        %v5682 = vunpack.c.l.b16 %v5431
        %v5683 = vunpack.c.h.b16 %v5431
        %v5684 = vunpack.c.l.b16 %v5432
        %v5685 = vunpack.c.h.b16 %v5432
        %v5686 = vunpack.c.l.b16 %v5433
        %v5687 = vunpack.c.h.b16 %v5433
        %v5688 = vunpack.c.l.b16 %v5434
        %v5689 = vunpack.c.h.b16 %v5434
        %v5690 = vunpack.c.l.b16 %v5435
        %v5691 = vunpack.c.h.b16 %v5435
        %v5692 = vunpack.c.l.b16 %v5436
        %v5693 = vunpack.c.h.b16 %v5436
        %v5694 = vunpack.c.l.b16 %v5437
        %v5695 = vunpack.c.h.b16 %v5437
        %v5696 = vunpack.c.l.b16 %v5438
        %v5697 = vunpack.c.h.b16 %v5438
        %v5698 = vunpack.c.l.b16 %v5439
        %v5699 = vunpack.c.h.b16 %v5439
        %v5700 = vunpack.c.l.b16 %v5440
        %v5701 = vunpack.c.h.b16 %v5440
        %v5702 = vunpack.c.l.b16 %v5441
        %v5703 = vunpack.c.h.b16 %v5441
        %v5704 = vunpack.c.l.b16 %v5442
        %v5705 = vunpack.c.h.b16 %v5442
        %v5706 = vunpack.c.l.b16 %v5443
        %v5707 = vunpack.c.h.b16 %v5443
        %v5708 = vunpack.c.l.b16 %v5444
        %v5709 = vunpack.c.h.b16 %v5444
        %v5710 = vunpack.c.l.b16 %v5445
        %v5711 = vunpack.c.h.b16 %v5445
        %v5712 = vunpack.c.l.b16 %v5446
        %v5713 = vunpack.c.h.b16 %v5446
        %v5714 = vunpack.c.l.b16 %v5447
        %v5715 = vunpack.c.h.b16 %v5447
        %v5716 = vunpack.c.l.b16 %v5448
        %v5717 = vunpack.c.h.b16 %v5448
        %v5718 = vunpack.c.l.b16 %v5449
        %v5719 = vunpack.c.h.b16 %v5449
        %v5720 = vunpack.c.l.b16 %v5450
        %v5721 = vunpack.c.h.b16 %v5450
        %v5722 = vunpack.c.l.b16 %v5451
        %v5723 = vunpack.c.h.b16 %v5451
        %v5724 = vunpack.c.l.b16 %v5452
        %v5725 = vunpack.c.h.b16 %v5452
        %v5726 = vunpack.c.l.b16 %v5453
        %v5727 = vunpack.c.h.b16 %v5453
        %v5728 = vunpack.c.l.b16 %v5454
        %v5729 = vunpack.c.h.b16 %v5454
        %v5730 = vunpack.c.l.b16 %v5455
        %v5731 = vunpack.c.h.b16 %v5455
        %v5732 = vunpack.c.l.b16 %v5456
        %v5733 = vunpack.c.h.b16 %v5456
        %v5734 = vunpack.c.l.b16 %v5457
        %v5735 = vunpack.c.h.b16 %v5457
        %v5736 = vunpack.c.l.b16 %v5458
        %v5737 = vunpack.c.h.b16 %v5458
        %v5738 = vunpack.c.l.b16 %v5459
        %v5739 = vunpack.c.h.b16 %v5459
        %v5740 = vunpack.c.l.b16 %v5460
        %v5741 = vunpack.c.h.b16 %v5460
        %v5742 = vunpack.c.l.b16 %v5461
        %v5743 = vunpack.c.h.b16 %v5461
        %v5744 = vunpack.c.l.b16 %v5462
        %v5745 = vunpack.c.h.b16 %v5462
        %v5746 = vunpack.c.l.b16 %v5463
        %v5747 = vunpack.c.h.b16 %v5463
        %v5748 = vunpack.c.l.b16 %v5464
        %v5749 = vunpack.c.h.b16 %v5464
        %v5750 = vunpack.c.l.b16 %v5465
        %v5751 = vunpack.c.h.b16 %v5465
        %v5752 = vunpack.c.l.b16 %v5466
        %v5753 = vunpack.c.h.b16 %v5466
        %v5754 = vunpack.c.l.b16 %v5467
        %v5755 = vunpack.c.h.b16 %v5467
        %v5756 = vunpack.c.l.b16 %v5468
        %v5757 = vunpack.c.h.b16 %v5468
        %v5758 = vunpack.c.l.b16 %v5469
        %v5759 = vunpack.c.h.b16 %v5469
        %v5760 = vunpack.c.l.b16 %v5470
        %v5761 = vunpack.c.h.b16 %v5470
        %v5762 = vunpack.c.l.b16 %v5471
        %v5763 = vunpack.c.h.b16 %v5471
        %v5764 = vunpack.c.l.b16 %v5472
        %v5765 = vunpack.c.h.b16 %v5472
        %v5766 = vunpack.c.l.b16 %v5473
        %v5767 = vunpack.c.h.b16 %v5473
        %v5768 = vunpack.c.l.b16 %v5474
        %v5769 = vunpack.c.h.b16 %v5474
        %v5770 = vunpack.c.l.b16 %v5475
        %v5771 = vunpack.c.h.b16 %v5475
        %v5772 = vunpack.c.l.b16 %v5476
        %v5773 = vunpack.c.h.b16 %v5476
        %v5774 = vunpack.c.l.b16 %v5477
        %v5775 = vunpack.c.h.b16 %v5477
        %v5776 = vunpack.c.l.b16 %v5478
        %v5777 = vunpack.c.h.b16 %v5478
        %v5778 = vunpack.c.l.b16 %v5479
        %v5779 = vunpack.c.h.b16 %v5479
        %v5780 = vunpack.c.l.b16 %v5480
        %v5781 = vunpack.c.h.b16 %v5480
        %v5782 = vunpack.c.l.b16 %v5481
        %v5783 = vunpack.c.h.b16 %v5481
        %v5784 = vunpack.c.l.b16 %v5482
        %v5785 = vunpack.c.h.b16 %v5482
        %v5786 = vunpack.c.l.b16 %v5483
        %v5787 = vunpack.c.h.b16 %v5483
        %v5788 = vunpack.c.l.b16 %v5484
        %v5789 = vunpack.c.h.b16 %v5484
        %v5790 = vunpack.c.l.b16 %v5485
        %v5791 = vunpack.c.h.b16 %v5485
        %v5792 = vunpack.c.l.b16 %v5486
        %v5793 = vunpack.c.h.b16 %v5486
        %v5794 = vunpack.c.l.b16 %v5487
        %v5795 = vunpack.c.h.b16 %v5487
        %v5796 = vunpack.c.l.b16 %v5488
        %v5797 = vunpack.c.h.b16 %v5488
        %v5798 = vunpack.c.l.b16 %v5489
        %v5799 = vunpack.c.h.b16 %v5489
        %v5800 = vunpack.c.l.b16 %v5490
        %v5801 = vunpack.c.h.b16 %v5490
        %v5802 = vunpack.c.l.b16 %v5491
        %v5803 = vunpack.c.h.b16 %v5491
        %v5804 = vunpack.c.l.b16 %v5492
        %v5805 = vunpack.c.h.b16 %v5492
        %v5806 = vunpack.c.l.b16 %v5493
        %v5807 = vunpack.c.h.b16 %v5493
        %v5808 = vunpack.c.l.b16 %v5494
        %v5809 = vunpack.c.h.b16 %v5494
        %v5810 = vunpack.c.l.b16 %v5495
        %v5811 = vunpack.c.h.b16 %v5495
        %v5812 = vunpack.c.l.b16 %v5496
        %v5813 = vunpack.c.h.b16 %v5496
        %v5814 = vunpack.c.l.b16 %v5497
        %v5815 = vunpack.c.h.b16 %v5497
        %v5816 = vunpack.c.l.b16 %v5498
        %v5817 = vunpack.c.h.b16 %v5498
        %v5818 = vunpack.c.l.b16 %v5499
        %v5819 = vunpack.c.h.b16 %v5499
        %v5820 = vpack.c.b16 %v5632, %v5628
        %v5821 = vpack.c.b16 %v5633, %v5629
        %v5822 = vpack.c.b16 %v5634, %v5630
        %v5823 = vpack.c.b16 %v5635, %v5631
        %v5824 = vpack.c.b16 %v5640, %v5636
        %v5825 = vpack.c.b16 %v5641, %v5637
        %v5826 = vpack.c.b16 %v5642, %v5638
        %v5827 = vpack.c.b16 %v5643, %v5639
        %v5828 = vpack.c.b16 %v5648, %v5644
        %v5829 = vpack.c.b16 %v5649, %v5645
        %v5830 = vpack.c.b16 %v5650, %v5646
        %v5831 = vpack.c.b16 %v5651, %v5647
        %v5832 = vpack.c.b16 %v5656, %v5652
        %v5833 = vpack.c.b16 %v5657, %v5653
        %v5834 = vpack.c.b16 %v5658, %v5654
        %v5835 = vpack.c.b16 %v5659, %v5655
        %v5836 = vpack.c.b16 %v5664, %v5660
        %v5837 = vpack.c.b16 %v5665, %v5661
        %v5838 = vpack.c.b16 %v5666, %v5662
        %v5839 = vpack.c.b16 %v5667, %v5663
        %v5840 = vpack.c.b16 %v5672, %v5668
        %v5841 = vpack.c.b16 %v5673, %v5669
        %v5842 = vpack.c.b16 %v5674, %v5670
        %v5843 = vpack.c.b16 %v5675, %v5671
        %v5844 = vpack.c.b16 %v5680, %v5676
        %v5845 = vpack.c.b16 %v5681, %v5677
        %v5846 = vpack.c.b16 %v5682, %v5678
        %v5847 = vpack.c.b16 %v5683, %v5679
        %v5848 = vpack.c.b16 %v5688, %v5684
        %v5849 = vpack.c.b16 %v5689, %v5685
        %v5850 = vpack.c.b16 %v5690, %v5686
        %v5851 = vpack.c.b16 %v5691, %v5687
        %v5852 = vpack.c.b16 %v5696, %v5692
        %v5853 = vpack.c.b16 %v5697, %v5693
        %v5854 = vpack.c.b16 %v5698, %v5694
        %v5855 = vpack.c.b16 %v5699, %v5695
        %v5856 = vpack.c.b16 %v5704, %v5700
        %v5857 = vpack.c.b16 %v5705, %v5701
        %v5858 = vpack.c.b16 %v5706, %v5702
        %v5859 = vpack.c.b16 %v5707, %v5703
        %v5860 = vpack.c.b16 %v5712, %v5708
        %v5861 = vpack.c.b16 %v5713, %v5709
        %v5862 = vpack.c.b16 %v5714, %v5710
        %v5863 = vpack.c.b16 %v5715, %v5711
        %v5864 = vpack.c.b16 %v5720, %v5716
        %v5865 = vpack.c.b16 %v5721, %v5717
        %v5866 = vpack.c.b16 %v5722, %v5718
        %v5867 = vpack.c.b16 %v5723, %v5719
        %v5868 = vpack.c.b16 %v5728, %v5724
        %v5869 = vpack.c.b16 %v5729, %v5725
        %v5870 = vpack.c.b16 %v5730, %v5726
        %v5871 = vpack.c.b16 %v5731, %v5727
        %v5872 = vpack.c.b16 %v5736, %v5732
        %v5873 = vpack.c.b16 %v5737, %v5733
        %v5874 = vpack.c.b16 %v5738, %v5734
        %v5875 = vpack.c.b16 %v5739, %v5735
        %v5876 = vpack.c.b16 %v5744, %v5740
        %v5877 = vpack.c.b16 %v5745, %v5741
        %v5878 = vpack.c.b16 %v5746, %v5742
        %v5879 = vpack.c.b16 %v5747, %v5743
        %v5880 = vpack.c.b16 %v5752, %v5748
        %v5881 = vpack.c.b16 %v5753, %v5749
        %v5882 = vpack.c.b16 %v5754, %v5750
        %v5883 = vpack.c.b16 %v5755, %v5751
        %v5884 = vpack.c.b16 %v5760, %v5756
        %v5885 = vpack.c.b16 %v5761, %v5757
        %v5886 = vpack.c.b16 %v5762, %v5758
        %v5887 = vpack.c.b16 %v5763, %v5759
        %v5888 = vpack.c.b16 %v5768, %v5764
        %v5889 = vpack.c.b16 %v5769, %v5765
        %v5890 = vpack.c.b16 %v5770, %v5766
        %v5891 = vpack.c.b16 %v5771, %v5767
        %v5892 = vpack.c.b16 %v5776, %v5772
        %v5893 = vpack.c.b16 %v5777, %v5773
        %v5894 = vpack.c.b16 %v5778, %v5774
        %v5895 = vpack.c.b16 %v5779, %v5775
        %v5896 = vpack.c.b16 %v5784, %v5780
        %v5897 = vpack.c.b16 %v5785, %v5781
        %v5898 = vpack.c.b16 %v5786, %v5782
        %v5899 = vpack.c.b16 %v5787, %v5783
        %v5900 = vpack.c.b16 %v5792, %v5788
        %v5901 = vpack.c.b16 %v5793, %v5789
        %v5902 = vpack.c.b16 %v5794, %v5790
        %v5903 = vpack.c.b16 %v5795, %v5791
        %v5904 = vpack.c.b16 %v5800, %v5796
        %v5905 = vpack.c.b16 %v5801, %v5797
        %v5906 = vpack.c.b16 %v5802, %v5798
        %v5907 = vpack.c.b16 %v5803, %v5799
        %v5908 = vpack.c.b16 %v5808, %v5804
        %v5909 = vpack.c.b16 %v5809, %v5805
        %v5910 = vpack.c.b16 %v5810, %v5806
        %v5911 = vpack.c.b16 %v5811, %v5807
        %v5912 = vpack.c.b16 %v5816, %v5812
        %v5913 = vpack.c.b16 %v5817, %v5813
        %v5914 = vpack.c.b16 %v5818, %v5814
        %v5915 = vpack.c.b16 %v5819, %v5815
        %6012 = vmatprep.subr.bf16.mxu0 %v5821
        %6013 = vmatpush1.bf16.msra.mxu0 %v5820
        %6014 = vmatprep.subr.bf16.mxu0 %v5825
        %6015 = vmatpush1.bf16.msra.mxu0 %v5824
        %6016 = vmatprep.subr.bf16.mxu0 %v5829
        %6017 = vmatpush1.bf16.msra.mxu0 %v5828
        %6018 = vmatprep.subr.bf16.mxu0 %v5833
        %6019 = vmatpush1.bf16.msra.mxu0 %v5832
        %6020 = vmatprep.subr.bf16.mxu0 %v5837
        %6021 = vmatpush1.bf16.msra.mxu0 %v5836
        %6022 = vmatprep.subr.bf16.mxu0 %v5841
        %6023 = vmatpush1.bf16.msra.mxu0 %v5840
        %6024 = vmatprep.subr.bf16.mxu0 %v5845
        %6025 = vmatpush1.bf16.msra.mxu0 %v5844
        %6026 = vmatprep.subr.bf16.mxu0 %v5849
        %6027 = vmatpush1.bf16.msra.mxu0 %v5848
        %6028 = vmatprep.subr.bf16.mxu0 %v5853
        %6029 = vmatpush1.bf16.msra.mxu0 %v5852
        %6030 = vmatprep.subr.bf16.mxu0 %v5857
        %6031 = vmatpush1.bf16.msra.mxu0 %v5856
        %6032 = vmatprep.subr.bf16.mxu0 %v5861
        %6033 = vmatpush1.bf16.msra.mxu0 %v5860
        %6034 = vmatprep.subr.bf16.mxu0 %v5865
        %6035 = vmatpush1.bf16.msra.mxu0 %v5864
        %6036 = vmatprep.subr.bf16.mxu0 %v5869
        %6037 = vmatpush1.bf16.msra.mxu0 %v5868
        %6038 = vmatprep.subr.bf16.mxu0 %v5873
        %6039 = vmatpush1.bf16.msra.mxu0 %v5872
        %6040 = vmatprep.subr.bf16.mxu0 %v5877
        %6041 = vmatpush1.bf16.msra.mxu0 %v5876
        %6042 = vmatprep.subr.bf16.mxu0 %v5881
        %6043 = vmatpush1.bf16.msra.mxu0 %v5880
        %6044 = vmatprep.mubr.bf16.mxu0 %v5521
        %6045 = vmatmul.mubr.bf16.gmra.mrb[0].mxu0 %v5514
        %v6046 = vpop.f32.mrb[0].mxu0
        %v6047 = vadd.f32 0.0, %v6046
        %v6048 = vpop.f32.mrb[0].mxu0
        %v6049 = vadd.f32 0.0, %v6048
        %v6050 = vpop.f32.mrb[0].mxu0
        %v6051 = vpop.f32.mrb[0].mxu0
        %6052 = vdwg.mxu0
        %6053 = vmatprep.subr.bf16.mxu0 %v5885
        %6054 = vmatpush1.bf16.msra.mxu0 %v5884
        %6055 = vmatprep.subr.bf16.mxu0 %v5889
        %6056 = vmatpush1.bf16.msra.mxu0 %v5888
        %6057 = vmatprep.subr.bf16.mxu0 %v5893
        %6058 = vmatpush1.bf16.msra.mxu0 %v5892
        %6059 = vmatprep.subr.bf16.mxu0 %v5897
        %6060 = vmatpush1.bf16.msra.mxu0 %v5896
        %6061 = vmatprep.subr.bf16.mxu0 %v5901
        %6062 = vmatpush1.bf16.msra.mxu0 %v5900
        %6063 = vmatprep.subr.bf16.mxu0 %v5905
        %6064 = vmatpush1.bf16.msra.mxu0 %v5904
        %6065 = vmatprep.subr.bf16.mxu0 %v5909
        %6066 = vmatpush1.bf16.msra.mxu0 %v5908
        %6067 = vmatprep.subr.bf16.mxu0 %v5913
        %6068 = vmatpush1.bf16.msra.mxu0 %v5912
        %6069 = vmatprep.subr.bf16.mxu0 0
        %6070 = vmatpush1.bf16.msra.mxu0 0
        %6071 = vmatprep.subr.bf16.mxu0 0
        %6072 = vmatpush1.bf16.msra.mxu0 0
        %6073 = vmatprep.subr.bf16.mxu0 0
        %6074 = vmatpush1.bf16.msra.mxu0 0
        %6075 = vmatprep.subr.bf16.mxu0 0
        %6076 = vmatpush1.bf16.msra.mxu0 0
        %6077 = vmatprep.subr.bf16.mxu0 0
        %6078 = vmatpush1.bf16.msra.mxu0 0
        %6079 = vmatprep.subr.bf16.mxu0 0
        %6080 = vmatpush1.bf16.msra.mxu0 0
        %6081 = vmatprep.subr.bf16.mxu0 0
        %6082 = vmatpush1.bf16.msra.mxu0 0
        %6083 = vmatprep.subr.bf16.mxu0 0
        %6084 = vmatpush1.bf16.msra.mxu0 0
        %6085 = vmatprep.mubr.bf16.mxu0 0
        %6086 = vmatmul.mubr.bf16.gmra.mrb[0].mxu0 %v5528
        %v6087 = vpop.f32.mrb[0].mxu0
        %v6088 = vadd.f32 %v6047, %v6087
        %v6089 = vpop.f32.mrb[0].mxu0
        %v6090 = vadd.f32 %v6049, %v6089
        %v6091 = vpop.f32.mrb[0].mxu0
        %v6092 = vpop.f32.mrb[0].mxu0
        %6093 = vdwg.mxu0
        %6094 = vmatprep.subr.bf16.mxu0 %v5823
        %6095 = vmatpush1.bf16.msra.mxu0 %v5822
        %6096 = vmatprep.subr.bf16.mxu0 %v5827
        %6097 = vmatpush1.bf16.msra.mxu0 %v5826
        %6098 = vmatprep.subr.bf16.mxu0 %v5831
        %6099 = vmatpush1.bf16.msra.mxu0 %v5830
        %6100 = vmatprep.subr.bf16.mxu0 %v5835
        %6101 = vmatpush1.bf16.msra.mxu0 %v5834
        %6102 = vmatprep.subr.bf16.mxu0 %v5839
        %6103 = vmatpush1.bf16.msra.mxu0 %v5838
        %6104 = vmatprep.subr.bf16.mxu0 %v5843
        %6105 = vmatpush1.bf16.msra.mxu0 %v5842
        %6106 = vmatprep.subr.bf16.mxu0 %v5847
        %6107 = vmatpush1.bf16.msra.mxu0 %v5846
        %6108 = vmatprep.subr.bf16.mxu0 %v5851
        %6109 = vmatpush1.bf16.msra.mxu0 %v5850
        %6110 = vmatprep.subr.bf16.mxu0 %v5855
        %6111 = vmatpush1.bf16.msra.mxu0 %v5854
        %6112 = vmatprep.subr.bf16.mxu0 %v5859
        %6113 = vmatpush1.bf16.msra.mxu0 %v5858
        %6114 = vmatprep.subr.bf16.mxu0 %v5863
        %6115 = vmatpush1.bf16.msra.mxu0 %v5862
        %6116 = vmatprep.subr.bf16.mxu0 %v5867
        %6117 = vmatpush1.bf16.msra.mxu0 %v5866
        %6118 = vmatprep.subr.bf16.mxu0 %v5871
        %6119 = vmatpush1.bf16.msra.mxu0 %v5870
        %6120 = vmatprep.subr.bf16.mxu0 %v5875
        %6121 = vmatpush1.bf16.msra.mxu0 %v5874
        %6122 = vmatprep.subr.bf16.mxu0 %v5879
        %6123 = vmatpush1.bf16.msra.mxu0 %v5878
        %6124 = vmatprep.subr.bf16.mxu0 %v5883
        %6125 = vmatpush1.bf16.msra.mxu0 %v5882
        %6126 = vmatprep.mubr.bf16.mxu0 %v5521
        %6127 = vmatmul.mubr.bf16.gmra.mrb[0].mxu0 %v5514
        %v6128 = vpop.f32.mrb[0].mxu0
        %v6129 = vadd.f32 0.0, %v6128
        %v6130 = vpop.f32.mrb[0].mxu0
        %v6131 = vadd.f32 0.0, %v6130
        %v6132 = vpop.f32.mrb[0].mxu0
        %v6133 = vpop.f32.mrb[0].mxu0
        %6134 = vdwg.mxu0
        %6135 = vmatprep.subr.bf16.mxu0 %v5887
        %6136 = vmatpush1.bf16.msra.mxu0 %v5886
        %6137 = vmatprep.subr.bf16.mxu0 %v5891
        %6138 = vmatpush1.bf16.msra.mxu0 %v5890
        %6139 = vmatprep.subr.bf16.mxu0 %v5895
        %6140 = vmatpush1.bf16.msra.mxu0 %v5894
        %6141 = vmatprep.subr.bf16.mxu0 %v5899
        %6142 = vmatpush1.bf16.msra.mxu0 %v5898
        %6143 = vmatprep.subr.bf16.mxu0 %v5903
        %6144 = vmatpush1.bf16.msra.mxu0 %v5902
        %6145 = vmatprep.subr.bf16.mxu0 %v5907
        %6146 = vmatpush1.bf16.msra.mxu0 %v5906
        %6147 = vmatprep.subr.bf16.mxu0 %v5911
        %6148 = vmatpush1.bf16.msra.mxu0 %v5910
        %6149 = vmatprep.subr.bf16.mxu0 %v5915
        %6150 = vmatpush1.bf16.msra.mxu0 %v5914
        %6151 = vmatprep.subr.bf16.mxu0 0
        %6152 = vmatpush1.bf16.msra.mxu0 0
        %6153 = vmatprep.subr.bf16.mxu0 0
        %6154 = vmatpush1.bf16.msra.mxu0 0
        %6155 = vmatprep.subr.bf16.mxu0 0
        %6156 = vmatpush1.bf16.msra.mxu0 0
        %6157 = vmatprep.subr.bf16.mxu0 0
        %6158 = vmatpush1.bf16.msra.mxu0 0
        %6159 = vmatprep.subr.bf16.mxu0 0
        %6160 = vmatpush1.bf16.msra.mxu0 0
        %6161 = vmatprep.subr.bf16.mxu0 0
        %6162 = vmatpush1.bf16.msra.mxu0 0
        %6163 = vmatprep.subr.bf16.mxu0 0
        %6164 = vmatpush1.bf16.msra.mxu0 0
        %6165 = vmatprep.subr.bf16.mxu0 0
        %6166 = vmatpush1.bf16.msra.mxu0 0
        %6167 = vmatprep.mubr.bf16.mxu0 0
        %6168 = vmatmul.mubr.bf16.gmra.mrb[0].mxu0 %v5528
        %v6169 = vpop.f32.mrb[0].mxu0
        %v6170 = vadd.f32 %v6129, %v6169
        %v6171 = vpop.f32.mrb[0].mxu0
        %v6172 = vadd.f32 %v6131, %v6171
        %v6173 = vpop.f32.mrb[0].mxu0
        %v6174 = vpop.f32.mrb[0].mxu0
        %6175 = vdwg.mxu0
        %v6176 = vadd.f32 %v5313, %v6088
        %v6177 = vadd.f32 %v5315, %v6090
        %v6178 = vadd.f32 %v5395, %v6170
        %v6179 = vadd.f32 %v5397, %v6172
        %v6180 = vld [vmem:[%s3891] sm:$0x77]
        %v6181 = vld [vmem:[%s3891 + $0x8] sm:$0x7]
        %s6182 = scalar_lea.vmem [#allocation9], 2304
        %v6183 = vld [vmem:[%s6182] sm:$0xff]
        %v6184 = vld [vmem:[%s6182 + $0x8] sm:$0xff]
        %v6185 = vld [vmem:[%s6182 + $0x10] sm:$0xff]
        %v6186 = vld [vmem:[%s6182 + $0x18] sm:$0xff]
        %v6187 = vld [vmem:[%s6182 + $0x20] sm:$0xff]
        %v6188 = vld [vmem:[%s6182 + $0x28] sm:$0xff]
        %v6189 = vld [vmem:[%s6182 + $0x30] sm:$0xff]
        %v6190 = vld [vmem:[%s6182 + $0x38] sm:$0xff]
        %v6191 = vld [vmem:[%s6182 + $0x40] sm:$0xff]
        %v6192 = vld [vmem:[%s6182 + $0x48] sm:$0xff]
        %v6193 = vld [vmem:[%s6182 + $0x50] sm:$0xff]
        %v6194 = vld [vmem:[%s6182 + $0x58] sm:$0xff]
        %v6195 = vld [vmem:[%s6182 + $0x60] sm:$0xff]
        %v6196 = vld [vmem:[%s6182 + $0x68] sm:$0xff]
        %v6197 = vld [vmem:[%s6182 + $0x70] sm:$0xff]
        %v6198 = vld [vmem:[%s6182 + $0x78] sm:$0xff]
        %v6199 = vld [vmem:[%s6182 + $0x80] sm:$0xff]
        %v6200 = vld [vmem:[%s6182 + $0x88] sm:$0xff]
        %v6201 = vld [vmem:[%s6182 + $0x90] sm:$0xff]
        %v6202 = vld [vmem:[%s6182 + $0x98] sm:$0xff]
        %v6203 = vld [vmem:[%s6182 + $0xa0] sm:$0xff]
        %v6204 = vld [vmem:[%s6182 + $0xa8] sm:$0xff]
        %v6205 = vld [vmem:[%s6182 + $0xb0] sm:$0xff]
        %v6206 = vld [vmem:[%s6182 + $0xb8] sm:$0xff]
        %v6207 = vld [vmem:[%s6182 + $0xc0] sm:$0xff]
        %v6208 = vld [vmem:[%s6182 + $0xc8] sm:$0xff]
        %v6209 = vld [vmem:[%s6182 + $0xd0] sm:$0xff]
        %v6210 = vld [vmem:[%s6182 + $0xd8] sm:$0xff]
        %v6211 = vld [vmem:[%s6182 + $0xe0] sm:$0xff]
        %v6212 = vld [vmem:[%s6182 + $0xe8] sm:$0xff]
        %v6213 = vld [vmem:[%s6182 + $0xf0] sm:$0xff]
        %v6214 = vld [vmem:[%s6182 + $0xf8] sm:$0xff]
        %v6215 = vld [vmem:[%s6182 + $0x100] sm:$0xff]
        %v6216 = vld [vmem:[%s6182 + $0x108] sm:$0xff]
        %v6217 = vld [vmem:[%s6182 + $0x110] sm:$0xff]
        %v6218 = vld [vmem:[%s6182 + $0x118] sm:$0xff]
        %v6219 = vld [vmem:[%s6182 + $0x120] sm:$0xff]
        %v6220 = vld [vmem:[%s6182 + $0x128] sm:$0xff]
        %v6221 = vld [vmem:[%s6182 + $0x130] sm:$0xff]
        %v6222 = vld [vmem:[%s6182 + $0x138] sm:$0xff]
        %v6223 = vld [vmem:[%s6182 + $0x140] sm:$0xff]
        %v6224 = vld [vmem:[%s6182 + $0x148] sm:$0xff]
        %v6225 = vld [vmem:[%s6182 + $0x150] sm:$0xff]
        %v6226 = vld [vmem:[%s6182 + $0x158] sm:$0xff]
        %v6227 = vld [vmem:[%s6182 + $0x160] sm:$0xff]
        %v6228 = vld [vmem:[%s6182 + $0x168] sm:$0xff]
        %v6229 = vld [vmem:[%s6182 + $0x170] sm:$0xff]
        %v6230 = vld [vmem:[%s6182 + $0x178] sm:$0xff]
        %v6231 = vld [vmem:[%s6182 + $0x180] sm:$0xff]
        %v6232 = vld [vmem:[%s6182 + $0x188] sm:$0xff]
        %v6233 = vld [vmem:[%s6182 + $0x190] sm:$0xff]
        %v6234 = vld [vmem:[%s6182 + $0x198] sm:$0xff]
        %v6235 = vld [vmem:[%s6182 + $0x1a0] sm:$0xff]
        %v6236 = vld [vmem:[%s6182 + $0x1a8] sm:$0xff]
        %v6237 = vld [vmem:[%s6182 + $0x1b0] sm:$0xff]
        %v6238 = vld [vmem:[%s6182 + $0x1b8] sm:$0xff]
        %v6239 = vld [vmem:[%s6182 + $0x1c0] sm:$0xff]
        %v6240 = vld [vmem:[%s6182 + $0x1c8] sm:$0xff]
        %v6241 = vld [vmem:[%s6182 + $0x1d0] sm:$0xff]
        %v6242 = vld [vmem:[%s6182 + $0x1d8] sm:$0xff]
        %v6243 = vld [vmem:[%s6182 + $0x1e0] sm:$0xff]
        %v6244 = vld [vmem:[%s6182 + $0x1e8] sm:$0xff]
        %v6245 = vld [vmem:[%s6182 + $0x1f0] sm:$0xff]
        %v6246 = vld [vmem:[%s6182 + $0x1f8] sm:$0xff]
        %v6247 = vld [vmem:[%s6182 + $0x200] sm:$0xff]
        %v6248 = vld [vmem:[%s6182 + $0x208] sm:$0xff]
        %v6249 = vld [vmem:[%s6182 + $0x210] sm:$0xff]
        %v6250 = vld [vmem:[%s6182 + $0x218] sm:$0xff]
        %v6251 = vld [vmem:[%s6182 + $0x220] sm:$0xff]
        %v6252 = vld [vmem:[%s6182 + $0x228] sm:$0xff]
        %v6253 = vld [vmem:[%s6182 + $0x230] sm:$0xff]
        %v6254 = vld [vmem:[%s6182 + $0x238] sm:$0xff]
        %v6255 = vld [vmem:[%s6182 + $0x240] sm:$0xff]
        %v6256 = vld [vmem:[%s6182 + $0x248] sm:$0xff]
        %v6257 = vld [vmem:[%s6182 + $0x250] sm:$0xff]
        %v6258 = vld [vmem:[%s6182 + $0x258] sm:$0xff]
        %v6259 = vld [vmem:[%s6182 + $0x260] sm:$0xff]
        %v6260 = vld [vmem:[%s6182 + $0x268] sm:$0xff]
        %v6261 = vld [vmem:[%s6182 + $0x270] sm:$0xff]
        %v6262 = vld [vmem:[%s6182 + $0x278] sm:$0xff]
        %v6263 = vld [vmem:[%s6182 + $0x280] sm:$0xff]
        %v6264 = vld [vmem:[%s6182 + $0x288] sm:$0xff]
        %v6265 = vld [vmem:[%s6182 + $0x290] sm:$0xff]
        %v6266 = vld [vmem:[%s6182 + $0x298] sm:$0xff]
        %v6267 = vld [vmem:[%s6182 + $0x2a0] sm:$0xff]
        %v6268 = vld [vmem:[%s6182 + $0x2a8] sm:$0xff]
        %v6269 = vld [vmem:[%s6182 + $0x2b0] sm:$0xff]
        %v6270 = vld [vmem:[%s6182 + $0x2b8] sm:$0xff]
        %v6271 = vld [vmem:[%s6182 + $0x2c0] sm:$0xff]
        %v6272 = vld [vmem:[%s6182 + $0x2c8] sm:$0xff]
        %v6273 = vld [vmem:[%s6182 + $0x2d0] sm:$0xff]
        %v6274 = vld [vmem:[%s6182 + $0x2d8] sm:$0xff]
        %v6275 = vld [vmem:[%s6182 + $0x2e0] sm:$0xff]
        %v6276 = vld [vmem:[%s6182 + $0x2e8] sm:$0xff]
        %v6277 = vld [vmem:[%s6182 + $0x2f0] sm:$0xff]
        %v6278 = vld [vmem:[%s6182 + $0x2f8] sm:$0xff]
        %v6281 = vunpack.c.l.b16 %v6180
        %v6282 = vunpack.c.h.b16 %v6180
        %v6283 = vunpack.c.l.b16 %v6181
        %v6284 = vpack.c.b16 %v6281, %v6281
        %v6285 = vpack.c.b16 %v6282, %v6282
        %v6286 = vpack.c.b16 %v6283, %v6283
        %v6288 = vshrl.u32 %v6284, 16
        %v6290 = vshll.u32 %v6284, 16
        %v6292 = vrot.slane %v6290, 1
        %v6293 = vor.u32 %v6288, %v6292
        %v6295 = vshrl.u32 %v6285, 16
        %v6297 = vshll.u32 %v6285, 16
        %v6299 = vrot.slane %v6297, 1
        %v6300 = vor.u32 %v6295, %v6299
        %v6302 = vshrl.u32 %v6286, 16
        %v6304 = vshll.u32 %v6286, 16
        %v6306 = vrot.slane %v6304, 1
        %v6307 = vor.u32 %v6302, %v6306
        %v6407 = vunpack.c.l.b16 %v6183
        %v6408 = vunpack.c.h.b16 %v6183
        %v6409 = vunpack.c.l.b16 %v6184
        %v6410 = vunpack.c.h.b16 %v6184
        %v6411 = vunpack.c.l.b16 %v6185
        %v6412 = vunpack.c.h.b16 %v6185
        %v6413 = vunpack.c.l.b16 %v6186
        %v6414 = vunpack.c.h.b16 %v6186
        %v6415 = vunpack.c.l.b16 %v6187
        %v6416 = vunpack.c.h.b16 %v6187
        %v6417 = vunpack.c.l.b16 %v6188
        %v6418 = vunpack.c.h.b16 %v6188
        %v6419 = vunpack.c.l.b16 %v6189
        %v6420 = vunpack.c.h.b16 %v6189
        %v6421 = vunpack.c.l.b16 %v6190
        %v6422 = vunpack.c.h.b16 %v6190
        %v6423 = vunpack.c.l.b16 %v6191
        %v6424 = vunpack.c.h.b16 %v6191
        %v6425 = vunpack.c.l.b16 %v6192
        %v6426 = vunpack.c.h.b16 %v6192
        %v6427 = vunpack.c.l.b16 %v6193
        %v6428 = vunpack.c.h.b16 %v6193
        %v6429 = vunpack.c.l.b16 %v6194
        %v6430 = vunpack.c.h.b16 %v6194
        %v6431 = vunpack.c.l.b16 %v6195
        %v6432 = vunpack.c.h.b16 %v6195
        %v6433 = vunpack.c.l.b16 %v6196
        %v6434 = vunpack.c.h.b16 %v6196
        %v6435 = vunpack.c.l.b16 %v6197
        %v6436 = vunpack.c.h.b16 %v6197
        %v6437 = vunpack.c.l.b16 %v6198
        %v6438 = vunpack.c.h.b16 %v6198
        %v6439 = vunpack.c.l.b16 %v6199
        %v6440 = vunpack.c.h.b16 %v6199
        %v6441 = vunpack.c.l.b16 %v6200
        %v6442 = vunpack.c.h.b16 %v6200
        %v6443 = vunpack.c.l.b16 %v6201
        %v6444 = vunpack.c.h.b16 %v6201
        %v6445 = vunpack.c.l.b16 %v6202
        %v6446 = vunpack.c.h.b16 %v6202
        %v6447 = vunpack.c.l.b16 %v6203
        %v6448 = vunpack.c.h.b16 %v6203
        %v6449 = vunpack.c.l.b16 %v6204
        %v6450 = vunpack.c.h.b16 %v6204
        %v6451 = vunpack.c.l.b16 %v6205
        %v6452 = vunpack.c.h.b16 %v6205
        %v6453 = vunpack.c.l.b16 %v6206
        %v6454 = vunpack.c.h.b16 %v6206
        %v6455 = vunpack.c.l.b16 %v6207
        %v6456 = vunpack.c.h.b16 %v6207
        %v6457 = vunpack.c.l.b16 %v6208
        %v6458 = vunpack.c.h.b16 %v6208
        %v6459 = vunpack.c.l.b16 %v6209
        %v6460 = vunpack.c.h.b16 %v6209
        %v6461 = vunpack.c.l.b16 %v6210
        %v6462 = vunpack.c.h.b16 %v6210
        %v6463 = vunpack.c.l.b16 %v6211
        %v6464 = vunpack.c.h.b16 %v6211
        %v6465 = vunpack.c.l.b16 %v6212
        %v6466 = vunpack.c.h.b16 %v6212
        %v6467 = vunpack.c.l.b16 %v6213
        %v6468 = vunpack.c.h.b16 %v6213
        %v6469 = vunpack.c.l.b16 %v6214
        %v6470 = vunpack.c.h.b16 %v6214
        %v6471 = vunpack.c.l.b16 %v6215
        %v6472 = vunpack.c.h.b16 %v6215
        %v6473 = vunpack.c.l.b16 %v6216
        %v6474 = vunpack.c.h.b16 %v6216
        %v6475 = vunpack.c.l.b16 %v6217
        %v6476 = vunpack.c.h.b16 %v6217
        %v6477 = vunpack.c.l.b16 %v6218
        %v6478 = vunpack.c.h.b16 %v6218
        %v6479 = vunpack.c.l.b16 %v6219
        %v6480 = vunpack.c.h.b16 %v6219
        %v6481 = vunpack.c.l.b16 %v6220
        %v6482 = vunpack.c.h.b16 %v6220
        %v6483 = vunpack.c.l.b16 %v6221
        %v6484 = vunpack.c.h.b16 %v6221
        %v6485 = vunpack.c.l.b16 %v6222
        %v6486 = vunpack.c.h.b16 %v6222
        %v6487 = vunpack.c.l.b16 %v6223
        %v6488 = vunpack.c.h.b16 %v6223
        %v6489 = vunpack.c.l.b16 %v6224
        %v6490 = vunpack.c.h.b16 %v6224
        %v6491 = vunpack.c.l.b16 %v6225
        %v6492 = vunpack.c.h.b16 %v6225
        %v6493 = vunpack.c.l.b16 %v6226
        %v6494 = vunpack.c.h.b16 %v6226
        %v6495 = vunpack.c.l.b16 %v6227
        %v6496 = vunpack.c.h.b16 %v6227
        %v6497 = vunpack.c.l.b16 %v6228
        %v6498 = vunpack.c.h.b16 %v6228
        %v6499 = vunpack.c.l.b16 %v6229
        %v6500 = vunpack.c.h.b16 %v6229
        %v6501 = vunpack.c.l.b16 %v6230
        %v6502 = vunpack.c.h.b16 %v6230
        %v6503 = vunpack.c.l.b16 %v6231
        %v6504 = vunpack.c.h.b16 %v6231
        %v6505 = vunpack.c.l.b16 %v6232
        %v6506 = vunpack.c.h.b16 %v6232
        %v6507 = vunpack.c.l.b16 %v6233
        %v6508 = vunpack.c.h.b16 %v6233
        %v6509 = vunpack.c.l.b16 %v6234
        %v6510 = vunpack.c.h.b16 %v6234
        %v6511 = vunpack.c.l.b16 %v6235
        %v6512 = vunpack.c.h.b16 %v6235
        %v6513 = vunpack.c.l.b16 %v6236
        %v6514 = vunpack.c.h.b16 %v6236
        %v6515 = vunpack.c.l.b16 %v6237
        %v6516 = vunpack.c.h.b16 %v6237
        %v6517 = vunpack.c.l.b16 %v6238
        %v6518 = vunpack.c.h.b16 %v6238
        %v6519 = vunpack.c.l.b16 %v6239
        %v6520 = vunpack.c.h.b16 %v6239
        %v6521 = vunpack.c.l.b16 %v6240
        %v6522 = vunpack.c.h.b16 %v6240
        %v6523 = vunpack.c.l.b16 %v6241
        %v6524 = vunpack.c.h.b16 %v6241
        %v6525 = vunpack.c.l.b16 %v6242
        %v6526 = vunpack.c.h.b16 %v6242
        %v6527 = vunpack.c.l.b16 %v6243
        %v6528 = vunpack.c.h.b16 %v6243
        %v6529 = vunpack.c.l.b16 %v6244
        %v6530 = vunpack.c.h.b16 %v6244
        %v6531 = vunpack.c.l.b16 %v6245
        %v6532 = vunpack.c.h.b16 %v6245
        %v6533 = vunpack.c.l.b16 %v6246
        %v6534 = vunpack.c.h.b16 %v6246
        %v6535 = vunpack.c.l.b16 %v6247
        %v6536 = vunpack.c.h.b16 %v6247
        %v6537 = vunpack.c.l.b16 %v6248
        %v6538 = vunpack.c.h.b16 %v6248
        %v6539 = vunpack.c.l.b16 %v6249
        %v6540 = vunpack.c.h.b16 %v6249
        %v6541 = vunpack.c.l.b16 %v6250
        %v6542 = vunpack.c.h.b16 %v6250
        %v6543 = vunpack.c.l.b16 %v6251
        %v6544 = vunpack.c.h.b16 %v6251
        %v6545 = vunpack.c.l.b16 %v6252
        %v6546 = vunpack.c.h.b16 %v6252
        %v6547 = vunpack.c.l.b16 %v6253
        %v6548 = vunpack.c.h.b16 %v6253
        %v6549 = vunpack.c.l.b16 %v6254
        %v6550 = vunpack.c.h.b16 %v6254
        %v6551 = vunpack.c.l.b16 %v6255
        %v6552 = vunpack.c.h.b16 %v6255
        %v6553 = vunpack.c.l.b16 %v6256
        %v6554 = vunpack.c.h.b16 %v6256
        %v6555 = vunpack.c.l.b16 %v6257
        %v6556 = vunpack.c.h.b16 %v6257
        %v6557 = vunpack.c.l.b16 %v6258
        %v6558 = vunpack.c.h.b16 %v6258
        %v6559 = vunpack.c.l.b16 %v6259
        %v6560 = vunpack.c.h.b16 %v6259
        %v6561 = vunpack.c.l.b16 %v6260
        %v6562 = vunpack.c.h.b16 %v6260
        %v6563 = vunpack.c.l.b16 %v6261
        %v6564 = vunpack.c.h.b16 %v6261
        %v6565 = vunpack.c.l.b16 %v6262
        %v6566 = vunpack.c.h.b16 %v6262
        %v6567 = vunpack.c.l.b16 %v6263
        %v6568 = vunpack.c.h.b16 %v6263
        %v6569 = vunpack.c.l.b16 %v6264
        %v6570 = vunpack.c.h.b16 %v6264
        %v6571 = vunpack.c.l.b16 %v6265
        %v6572 = vunpack.c.h.b16 %v6265
        %v6573 = vunpack.c.l.b16 %v6266
        %v6574 = vunpack.c.h.b16 %v6266
        %v6575 = vunpack.c.l.b16 %v6267
        %v6576 = vunpack.c.h.b16 %v6267
        %v6577 = vunpack.c.l.b16 %v6268
        %v6578 = vunpack.c.h.b16 %v6268
        %v6579 = vunpack.c.l.b16 %v6269
        %v6580 = vunpack.c.h.b16 %v6269
        %v6581 = vunpack.c.l.b16 %v6270
        %v6582 = vunpack.c.h.b16 %v6270
        %v6583 = vunpack.c.l.b16 %v6271
        %v6584 = vunpack.c.h.b16 %v6271
        %v6585 = vunpack.c.l.b16 %v6272
        %v6586 = vunpack.c.h.b16 %v6272
        %v6587 = vunpack.c.l.b16 %v6273
        %v6588 = vunpack.c.h.b16 %v6273
        %v6589 = vunpack.c.l.b16 %v6274
        %v6590 = vunpack.c.h.b16 %v6274
        %v6591 = vunpack.c.l.b16 %v6275
        %v6592 = vunpack.c.h.b16 %v6275
        %v6593 = vunpack.c.l.b16 %v6276
        %v6594 = vunpack.c.h.b16 %v6276
        %v6595 = vunpack.c.l.b16 %v6277
        %v6596 = vunpack.c.h.b16 %v6277
        %v6597 = vunpack.c.l.b16 %v6278
        %v6598 = vunpack.c.h.b16 %v6278
        %v6599 = vpack.c.b16 %v6411, %v6407
        %v6600 = vpack.c.b16 %v6412, %v6408
        %v6601 = vpack.c.b16 %v6413, %v6409
        %v6602 = vpack.c.b16 %v6414, %v6410
        %v6603 = vpack.c.b16 %v6419, %v6415
        %v6604 = vpack.c.b16 %v6420, %v6416
        %v6605 = vpack.c.b16 %v6421, %v6417
        %v6606 = vpack.c.b16 %v6422, %v6418
        %v6607 = vpack.c.b16 %v6427, %v6423
        %v6608 = vpack.c.b16 %v6428, %v6424
        %v6609 = vpack.c.b16 %v6429, %v6425
        %v6610 = vpack.c.b16 %v6430, %v6426
        %v6611 = vpack.c.b16 %v6435, %v6431
        %v6612 = vpack.c.b16 %v6436, %v6432
        %v6613 = vpack.c.b16 %v6437, %v6433
        %v6614 = vpack.c.b16 %v6438, %v6434
        %v6615 = vpack.c.b16 %v6443, %v6439
        %v6616 = vpack.c.b16 %v6444, %v6440
        %v6617 = vpack.c.b16 %v6445, %v6441
        %v6618 = vpack.c.b16 %v6446, %v6442
        %v6619 = vpack.c.b16 %v6451, %v6447
        %v6620 = vpack.c.b16 %v6452, %v6448
        %v6621 = vpack.c.b16 %v6453, %v6449
        %v6622 = vpack.c.b16 %v6454, %v6450
        %v6623 = vpack.c.b16 %v6459, %v6455
        %v6624 = vpack.c.b16 %v6460, %v6456
        %v6625 = vpack.c.b16 %v6461, %v6457
        %v6626 = vpack.c.b16 %v6462, %v6458
        %v6627 = vpack.c.b16 %v6467, %v6463
        %v6628 = vpack.c.b16 %v6468, %v6464
        %v6629 = vpack.c.b16 %v6469, %v6465
        %v6630 = vpack.c.b16 %v6470, %v6466
        %v6631 = vpack.c.b16 %v6475, %v6471
        %v6632 = vpack.c.b16 %v6476, %v6472
        %v6633 = vpack.c.b16 %v6477, %v6473
        %v6634 = vpack.c.b16 %v6478, %v6474
        %v6635 = vpack.c.b16 %v6483, %v6479
        %v6636 = vpack.c.b16 %v6484, %v6480
        %v6637 = vpack.c.b16 %v6485, %v6481
        %v6638 = vpack.c.b16 %v6486, %v6482
        %v6639 = vpack.c.b16 %v6491, %v6487
        %v6640 = vpack.c.b16 %v6492, %v6488
        %v6641 = vpack.c.b16 %v6493, %v6489
        %v6642 = vpack.c.b16 %v6494, %v6490
        %v6643 = vpack.c.b16 %v6499, %v6495
        %v6644 = vpack.c.b16 %v6500, %v6496
        %v6645 = vpack.c.b16 %v6501, %v6497
        %v6646 = vpack.c.b16 %v6502, %v6498
        %v6647 = vpack.c.b16 %v6507, %v6503
        %v6648 = vpack.c.b16 %v6508, %v6504
        %v6649 = vpack.c.b16 %v6509, %v6505
        %v6650 = vpack.c.b16 %v6510, %v6506
        %v6651 = vpack.c.b16 %v6515, %v6511
        %v6652 = vpack.c.b16 %v6516, %v6512
        %v6653 = vpack.c.b16 %v6517, %v6513
        %v6654 = vpack.c.b16 %v6518, %v6514
        %v6655 = vpack.c.b16 %v6523, %v6519
        %v6656 = vpack.c.b16 %v6524, %v6520
        %v6657 = vpack.c.b16 %v6525, %v6521
        %v6658 = vpack.c.b16 %v6526, %v6522
        %v6659 = vpack.c.b16 %v6531, %v6527
        %v6660 = vpack.c.b16 %v6532, %v6528
        %v6661 = vpack.c.b16 %v6533, %v6529
        %v6662 = vpack.c.b16 %v6534, %v6530
        %v6663 = vpack.c.b16 %v6539, %v6535
        %v6664 = vpack.c.b16 %v6540, %v6536
        %v6665 = vpack.c.b16 %v6541, %v6537
        %v6666 = vpack.c.b16 %v6542, %v6538
        %v6667 = vpack.c.b16 %v6547, %v6543
        %v6668 = vpack.c.b16 %v6548, %v6544
        %v6669 = vpack.c.b16 %v6549, %v6545
        %v6670 = vpack.c.b16 %v6550, %v6546
        %v6671 = vpack.c.b16 %v6555, %v6551
        %v6672 = vpack.c.b16 %v6556, %v6552
        %v6673 = vpack.c.b16 %v6557, %v6553
        %v6674 = vpack.c.b16 %v6558, %v6554
        %v6675 = vpack.c.b16 %v6563, %v6559
        %v6676 = vpack.c.b16 %v6564, %v6560
        %v6677 = vpack.c.b16 %v6565, %v6561
        %v6678 = vpack.c.b16 %v6566, %v6562
        %v6679 = vpack.c.b16 %v6571, %v6567
        %v6680 = vpack.c.b16 %v6572, %v6568
        %v6681 = vpack.c.b16 %v6573, %v6569
        %v6682 = vpack.c.b16 %v6574, %v6570
        %v6683 = vpack.c.b16 %v6579, %v6575
        %v6684 = vpack.c.b16 %v6580, %v6576
        %v6685 = vpack.c.b16 %v6581, %v6577
        %v6686 = vpack.c.b16 %v6582, %v6578
        %v6687 = vpack.c.b16 %v6587, %v6583
        %v6688 = vpack.c.b16 %v6588, %v6584
        %v6689 = vpack.c.b16 %v6589, %v6585
        %v6690 = vpack.c.b16 %v6590, %v6586
        %v6691 = vpack.c.b16 %v6595, %v6591
        %v6692 = vpack.c.b16 %v6596, %v6592
        %v6693 = vpack.c.b16 %v6597, %v6593
        %v6694 = vpack.c.b16 %v6598, %v6594
        %6791 = vmatprep.subr.bf16.mxu0 %v6600
        %6792 = vmatpush1.bf16.msra.mxu0 %v6599
        %6793 = vmatprep.subr.bf16.mxu0 %v6604
        %6794 = vmatpush1.bf16.msra.mxu0 %v6603
        %6795 = vmatprep.subr.bf16.mxu0 %v6608
        %6796 = vmatpush1.bf16.msra.mxu0 %v6607
        %6797 = vmatprep.subr.bf16.mxu0 %v6612
        %6798 = vmatpush1.bf16.msra.mxu0 %v6611
        %6799 = vmatprep.subr.bf16.mxu0 %v6616
        %6800 = vmatpush1.bf16.msra.mxu0 %v6615
        %6801 = vmatprep.subr.bf16.mxu0 %v6620
        %6802 = vmatpush1.bf16.msra.mxu0 %v6619
        %6803 = vmatprep.subr.bf16.mxu0 %v6624
        %6804 = vmatpush1.bf16.msra.mxu0 %v6623
        %6805 = vmatprep.subr.bf16.mxu0 %v6628
        %6806 = vmatpush1.bf16.msra.mxu0 %v6627
        %6807 = vmatprep.subr.bf16.mxu0 %v6632
        %6808 = vmatpush1.bf16.msra.mxu0 %v6631
        %6809 = vmatprep.subr.bf16.mxu0 %v6636
        %6810 = vmatpush1.bf16.msra.mxu0 %v6635
        %6811 = vmatprep.subr.bf16.mxu0 %v6640
        %6812 = vmatpush1.bf16.msra.mxu0 %v6639
        %6813 = vmatprep.subr.bf16.mxu0 %v6644
        %6814 = vmatpush1.bf16.msra.mxu0 %v6643
        %6815 = vmatprep.subr.bf16.mxu0 %v6648
        %6816 = vmatpush1.bf16.msra.mxu0 %v6647
        %6817 = vmatprep.subr.bf16.mxu0 %v6652
        %6818 = vmatpush1.bf16.msra.mxu0 %v6651
        %6819 = vmatprep.subr.bf16.mxu0 %v6656
        %6820 = vmatpush1.bf16.msra.mxu0 %v6655
        %6821 = vmatprep.subr.bf16.mxu0 %v6660
        %6822 = vmatpush1.bf16.msra.mxu0 %v6659
        %6823 = vmatprep.mubr.bf16.mxu0 %v6300
        %6824 = vmatmul.mubr.bf16.gmra.mrb[0].mxu0 %v6293
        %v6825 = vpop.f32.mrb[0].mxu0
        %v6826 = vadd.f32 0.0, %v6825
        %v6827 = vpop.f32.mrb[0].mxu0
        %v6828 = vadd.f32 0.0, %v6827
        %v6829 = vpop.f32.mrb[0].mxu0
        %v6830 = vpop.f32.mrb[0].mxu0
        %6831 = vdwg.mxu0
        %6832 = vmatprep.subr.bf16.mxu0 %v6664
        %6833 = vmatpush1.bf16.msra.mxu0 %v6663
        %6834 = vmatprep.subr.bf16.mxu0 %v6668
        %6835 = vmatpush1.bf16.msra.mxu0 %v6667
        %6836 = vmatprep.subr.bf16.mxu0 %v6672
        %6837 = vmatpush1.bf16.msra.mxu0 %v6671
        %6838 = vmatprep.subr.bf16.mxu0 %v6676
        %6839 = vmatpush1.bf16.msra.mxu0 %v6675
        %6840 = vmatprep.subr.bf16.mxu0 %v6680
        %6841 = vmatpush1.bf16.msra.mxu0 %v6679
        %6842 = vmatprep.subr.bf16.mxu0 %v6684
        %6843 = vmatpush1.bf16.msra.mxu0 %v6683
        %6844 = vmatprep.subr.bf16.mxu0 %v6688
        %6845 = vmatpush1.bf16.msra.mxu0 %v6687
        %6846 = vmatprep.subr.bf16.mxu0 %v6692
        %6847 = vmatpush1.bf16.msra.mxu0 %v6691
        %6848 = vmatprep.subr.bf16.mxu0 0
        %6849 = vmatpush1.bf16.msra.mxu0 0
        %6850 = vmatprep.subr.bf16.mxu0 0
        %6851 = vmatpush1.bf16.msra.mxu0 0
        %6852 = vmatprep.subr.bf16.mxu0 0
        %6853 = vmatpush1.bf16.msra.mxu0 0
        %6854 = vmatprep.subr.bf16.mxu0 0
        %6855 = vmatpush1.bf16.msra.mxu0 0
        %6856 = vmatprep.subr.bf16.mxu0 0
        %6857 = vmatpush1.bf16.msra.mxu0 0
        %6858 = vmatprep.subr.bf16.mxu0 0
        %6859 = vmatpush1.bf16.msra.mxu0 0
        %6860 = vmatprep.subr.bf16.mxu0 0
        %6861 = vmatpush1.bf16.msra.mxu0 0
        %6862 = vmatprep.subr.bf16.mxu0 0
        %6863 = vmatpush1.bf16.msra.mxu0 0
        %6864 = vmatprep.mubr.bf16.mxu0 0
        %6865 = vmatmul.mubr.bf16.gmra.mrb[0].mxu0 %v6307
        %v6866 = vpop.f32.mrb[0].mxu0
        %v6867 = vadd.f32 %v6826, %v6866
        %v6868 = vpop.f32.mrb[0].mxu0
        %v6869 = vadd.f32 %v6828, %v6868
        %v6870 = vpop.f32.mrb[0].mxu0
        %v6871 = vpop.f32.mrb[0].mxu0
        %6872 = vdwg.mxu0
        %6873 = vmatprep.subr.bf16.mxu0 %v6602
        %6874 = vmatpush1.bf16.msra.mxu0 %v6601
        %6875 = vmatprep.subr.bf16.mxu0 %v6606
        %6876 = vmatpush1.bf16.msra.mxu0 %v6605
        %6877 = vmatprep.subr.bf16.mxu0 %v6610
        %6878 = vmatpush1.bf16.msra.mxu0 %v6609
        %6879 = vmatprep.subr.bf16.mxu0 %v6614
        %6880 = vmatpush1.bf16.msra.mxu0 %v6613
        %6881 = vmatprep.subr.bf16.mxu0 %v6618
        %6882 = vmatpush1.bf16.msra.mxu0 %v6617
        %6883 = vmatprep.subr.bf16.mxu0 %v6622
        %6884 = vmatpush1.bf16.msra.mxu0 %v6621
        %6885 = vmatprep.subr.bf16.mxu0 %v6626
        %6886 = vmatpush1.bf16.msra.mxu0 %v6625
        %6887 = vmatprep.subr.bf16.mxu0 %v6630
        %6888 = vmatpush1.bf16.msra.mxu0 %v6629
        %6889 = vmatprep.subr.bf16.mxu0 %v6634
        %6890 = vmatpush1.bf16.msra.mxu0 %v6633
        %6891 = vmatprep.subr.bf16.mxu0 %v6638
        %6892 = vmatpush1.bf16.msra.mxu0 %v6637
        %6893 = vmatprep.subr.bf16.mxu0 %v6642
        %6894 = vmatpush1.bf16.msra.mxu0 %v6641
        %6895 = vmatprep.subr.bf16.mxu0 %v6646
        %6896 = vmatpush1.bf16.msra.mxu0 %v6645
        %6897 = vmatprep.subr.bf16.mxu0 %v6650
        %6898 = vmatpush1.bf16.msra.mxu0 %v6649
        %6899 = vmatprep.subr.bf16.mxu0 %v6654
        %6900 = vmatpush1.bf16.msra.mxu0 %v6653
        %6901 = vmatprep.subr.bf16.mxu0 %v6658
        %6902 = vmatpush1.bf16.msra.mxu0 %v6657
        %6903 = vmatprep.subr.bf16.mxu0 %v6662
        %6904 = vmatpush1.bf16.msra.mxu0 %v6661
        %6905 = vmatprep.mubr.bf16.mxu0 %v6300
        %6906 = vmatmul.mubr.bf16.gmra.mrb[0].mxu0 %v6293
        %v6907 = vpop.f32.mrb[0].mxu0
        %v6908 = vadd.f32 0.0, %v6907
        %v6909 = vpop.f32.mrb[0].mxu0
        %v6910 = vadd.f32 0.0, %v6909
        %v6911 = vpop.f32.mrb[0].mxu0
        %v6912 = vpop.f32.mrb[0].mxu0
        %6913 = vdwg.mxu0
        %6914 = vmatprep.subr.bf16.mxu0 %v6666
        %6915 = vmatpush1.bf16.msra.mxu0 %v6665
        %6916 = vmatprep.subr.bf16.mxu0 %v6670
        %6917 = vmatpush1.bf16.msra.mxu0 %v6669
        %6918 = vmatprep.subr.bf16.mxu0 %v6674
        %6919 = vmatpush1.bf16.msra.mxu0 %v6673
        %6920 = vmatprep.subr.bf16.mxu0 %v6678
        %6921 = vmatpush1.bf16.msra.mxu0 %v6677
        %6922 = vmatprep.subr.bf16.mxu0 %v6682
        %6923 = vmatpush1.bf16.msra.mxu0 %v6681
        %6924 = vmatprep.subr.bf16.mxu0 %v6686
        %6925 = vmatpush1.bf16.msra.mxu0 %v6685
        %6926 = vmatprep.subr.bf16.mxu0 %v6690
        %6927 = vmatpush1.bf16.msra.mxu0 %v6689
        %6928 = vmatprep.subr.bf16.mxu0 %v6694
        %6929 = vmatpush1.bf16.msra.mxu0 %v6693
        %6930 = vmatprep.subr.bf16.mxu0 0
        %6931 = vmatpush1.bf16.msra.mxu0 0
        %6932 = vmatprep.subr.bf16.mxu0 0
        %6933 = vmatpush1.bf16.msra.mxu0 0
        %6934 = vmatprep.subr.bf16.mxu0 0
        %6935 = vmatpush1.bf16.msra.mxu0 0
        %6936 = vmatprep.subr.bf16.mxu0 0
        %6937 = vmatpush1.bf16.msra.mxu0 0
        %6938 = vmatprep.subr.bf16.mxu0 0
        %6939 = vmatpush1.bf16.msra.mxu0 0
        %6940 = vmatprep.subr.bf16.mxu0 0
        %6941 = vmatpush1.bf16.msra.mxu0 0
        %6942 = vmatprep.subr.bf16.mxu0 0
        %6943 = vmatpush1.bf16.msra.mxu0 0
        %6944 = vmatprep.subr.bf16.mxu0 0
        %6945 = vmatpush1.bf16.msra.mxu0 0
        %6946 = vmatprep.mubr.bf16.mxu0 0
        %6947 = vmatmul.mubr.bf16.gmra.mrb[0].mxu0 %v6307
        %v6948 = vpop.f32.mrb[0].mxu0
        %v6949 = vadd.f32 %v6908, %v6948
        %v6950 = vpop.f32.mrb[0].mxu0
        %v6951 = vadd.f32 %v6910, %v6950
        %v6952 = vpop.f32.mrb[0].mxu0
        %v6953 = vpop.f32.mrb[0].mxu0
        %6954 = vdwg.mxu0
        %v6955 = vadd.f32 %v6176, %v6867
        %v6956 = vadd.f32 %v6177, %v6869
        %v6957 = vadd.f32 %v6178, %v6949
        %v6958 = vadd.f32 %v6179, %v6951
        %v6959 = vld [vmem:[#allocation2] sm:$0x66]
        %v6960 = vld [vmem:[#allocation2 + $0x8] sm:$0x6]
        %s6961 = scalar_lea.vmem [#allocation9], 3072
        %v6962 = vld [vmem:[%s6961] sm:$0xff]
        %v6963 = vld [vmem:[%s6961 + $0x8] sm:$0xff]
        %v6964 = vld [vmem:[%s6961 + $0x10] sm:$0xff]
        %v6965 = vld [vmem:[%s6961 + $0x18] sm:$0xff]
        %v6966 = vld [vmem:[%s6961 + $0x20] sm:$0xff]
        %v6967 = vld [vmem:[%s6961 + $0x28] sm:$0xff]
        %v6968 = vld [vmem:[%s6961 + $0x30] sm:$0xff]
        %v6969 = vld [vmem:[%s6961 + $0x38] sm:$0xff]
        %v6970 = vld [vmem:[%s6961 + $0x40] sm:$0xff]
        %v6971 = vld [vmem:[%s6961 + $0x48] sm:$0xff]
        %v6972 = vld [vmem:[%s6961 + $0x50] sm:$0xff]
        %v6973 = vld [vmem:[%s6961 + $0x58] sm:$0xff]
        %v6974 = vld [vmem:[%s6961 + $0x60] sm:$0xff]
        %v6975 = vld [vmem:[%s6961 + $0x68] sm:$0xff]
        %v6976 = vld [vmem:[%s6961 + $0x70] sm:$0xff]
        %v6977 = vld [vmem:[%s6961 + $0x78] sm:$0xff]
        %v6978 = vld [vmem:[%s6961 + $0x80] sm:$0xff]
        %v6979 = vld [vmem:[%s6961 + $0x88] sm:$0xff]
        %v6980 = vld [vmem:[%s6961 + $0x90] sm:$0xff]
        %v6981 = vld [vmem:[%s6961 + $0x98] sm:$0xff]
        %v6982 = vld [vmem:[%s6961 + $0xa0] sm:$0xff]
        %v6983 = vld [vmem:[%s6961 + $0xa8] sm:$0xff]
        %v6984 = vld [vmem:[%s6961 + $0xb0] sm:$0xff]
        %v6985 = vld [vmem:[%s6961 + $0xb8] sm:$0xff]
        %v6986 = vld [vmem:[%s6961 + $0xc0] sm:$0xff]
        %v6987 = vld [vmem:[%s6961 + $0xc8] sm:$0xff]
        %v6988 = vld [vmem:[%s6961 + $0xd0] sm:$0xff]
        %v6989 = vld [vmem:[%s6961 + $0xd8] sm:$0xff]
        %v6990 = vld [vmem:[%s6961 + $0xe0] sm:$0xff]
        %v6991 = vld [vmem:[%s6961 + $0xe8] sm:$0xff]
        %v6992 = vld [vmem:[%s6961 + $0xf0] sm:$0xff]
        %v6993 = vld [vmem:[%s6961 + $0xf8] sm:$0xff]
        %v6994 = vld [vmem:[%s6961 + $0x100] sm:$0xff]
        %v6995 = vld [vmem:[%s6961 + $0x108] sm:$0xff]
        %v6996 = vld [vmem:[%s6961 + $0x110] sm:$0xff]
        %v6997 = vld [vmem:[%s6961 + $0x118] sm:$0xff]
        %v6998 = vld [vmem:[%s6961 + $0x120] sm:$0xff]
        %v6999 = vld [vmem:[%s6961 + $0x128] sm:$0xff]
        %v7000 = vld [vmem:[%s6961 + $0x130] sm:$0xff]
        %v7001 = vld [vmem:[%s6961 + $0x138] sm:$0xff]
        %v7002 = vld [vmem:[%s6961 + $0x140] sm:$0xff]
        %v7003 = vld [vmem:[%s6961 + $0x148] sm:$0xff]
        %v7004 = vld [vmem:[%s6961 + $0x150] sm:$0xff]
        %v7005 = vld [vmem:[%s6961 + $0x158] sm:$0xff]
        %v7006 = vld [vmem:[%s6961 + $0x160] sm:$0xff]
        %v7007 = vld [vmem:[%s6961 + $0x168] sm:$0xff]
        %v7008 = vld [vmem:[%s6961 + $0x170] sm:$0xff]
        %v7009 = vld [vmem:[%s6961 + $0x178] sm:$0xff]
        %v7010 = vld [vmem:[%s6961 + $0x180] sm:$0xff]
        %v7011 = vld [vmem:[%s6961 + $0x188] sm:$0xff]
        %v7012 = vld [vmem:[%s6961 + $0x190] sm:$0xff]
        %v7013 = vld [vmem:[%s6961 + $0x198] sm:$0xff]
        %v7014 = vld [vmem:[%s6961 + $0x1a0] sm:$0xff]
        %v7015 = vld [vmem:[%s6961 + $0x1a8] sm:$0xff]
        %v7016 = vld [vmem:[%s6961 + $0x1b0] sm:$0xff]
        %v7017 = vld [vmem:[%s6961 + $0x1b8] sm:$0xff]
        %v7018 = vld [vmem:[%s6961 + $0x1c0] sm:$0xff]
        %v7019 = vld [vmem:[%s6961 + $0x1c8] sm:$0xff]
        %v7020 = vld [vmem:[%s6961 + $0x1d0] sm:$0xff]
        %v7021 = vld [vmem:[%s6961 + $0x1d8] sm:$0xff]
        %v7022 = vld [vmem:[%s6961 + $0x1e0] sm:$0xff]
        %v7023 = vld [vmem:[%s6961 + $0x1e8] sm:$0xff]
        %v7024 = vld [vmem:[%s6961 + $0x1f0] sm:$0xff]
        %v7025 = vld [vmem:[%s6961 + $0x1f8] sm:$0xff]
        %v7026 = vld [vmem:[%s6961 + $0x200] sm:$0xff]
        %v7027 = vld [vmem:[%s6961 + $0x208] sm:$0xff]
        %v7028 = vld [vmem:[%s6961 + $0x210] sm:$0xff]
        %v7029 = vld [vmem:[%s6961 + $0x218] sm:$0xff]
        %v7030 = vld [vmem:[%s6961 + $0x220] sm:$0xff]
        %v7031 = vld [vmem:[%s6961 + $0x228] sm:$0xff]
        %v7032 = vld [vmem:[%s6961 + $0x230] sm:$0xff]
        %v7033 = vld [vmem:[%s6961 + $0x238] sm:$0xff]
        %v7034 = vld [vmem:[%s6961 + $0x240] sm:$0xff]
        %v7035 = vld [vmem:[%s6961 + $0x248] sm:$0xff]
        %v7036 = vld [vmem:[%s6961 + $0x250] sm:$0xff]
        %v7037 = vld [vmem:[%s6961 + $0x258] sm:$0xff]
        %v7038 = vld [vmem:[%s6961 + $0x260] sm:$0xff]
        %v7039 = vld [vmem:[%s6961 + $0x268] sm:$0xff]
        %v7040 = vld [vmem:[%s6961 + $0x270] sm:$0xff]
        %v7041 = vld [vmem:[%s6961 + $0x278] sm:$0xff]
        %v7042 = vld [vmem:[%s6961 + $0x280] sm:$0xff]
        %v7043 = vld [vmem:[%s6961 + $0x288] sm:$0xff]
        %v7044 = vld [vmem:[%s6961 + $0x290] sm:$0xff]
        %v7045 = vld [vmem:[%s6961 + $0x298] sm:$0xff]
        %v7046 = vld [vmem:[%s6961 + $0x2a0] sm:$0xff]
        %v7047 = vld [vmem:[%s6961 + $0x2a8] sm:$0xff]
        %v7048 = vld [vmem:[%s6961 + $0x2b0] sm:$0xff]
        %v7049 = vld [vmem:[%s6961 + $0x2b8] sm:$0xff]
        %v7050 = vld [vmem:[%s6961 + $0x2c0] sm:$0xff]
        %v7051 = vld [vmem:[%s6961 + $0x2c8] sm:$0xff]
        %v7052 = vld [vmem:[%s6961 + $0x2d0] sm:$0xff]
        %v7053 = vld [vmem:[%s6961 + $0x2d8] sm:$0xff]
        %v7054 = vld [vmem:[%s6961 + $0x2e0] sm:$0xff]
        %v7055 = vld [vmem:[%s6961 + $0x2e8] sm:$0xff]
        %v7056 = vld [vmem:[%s6961 + $0x2f0] sm:$0xff]
        %v7057 = vld [vmem:[%s6961 + $0x2f8] sm:$0xff]
        %v7060 = vunpack.c.l.b16 %v6959
        %v7061 = vunpack.c.h.b16 %v6959
        %v7062 = vunpack.c.l.b16 %v6960
        %v7063 = vpack.c.b16 %v7060, %v7060
        %v7064 = vpack.c.b16 %v7061, %v7061
        %v7065 = vpack.c.b16 %v7062, %v7062
        %v7066 = vrot.slane %v7063, 1
        %v7067 = vrot.slane %v7064, 1
        %v7068 = vrot.slane %v7065, 1
        %v7168 = vunpack.c.l.b16 %v6962
        %v7169 = vunpack.c.h.b16 %v6962
        %v7170 = vunpack.c.l.b16 %v6963
        %v7171 = vunpack.c.h.b16 %v6963
        %v7172 = vunpack.c.l.b16 %v6964
        %v7173 = vunpack.c.h.b16 %v6964
        %v7174 = vunpack.c.l.b16 %v6965
        %v7175 = vunpack.c.h.b16 %v6965
        %v7176 = vunpack.c.l.b16 %v6966
        %v7177 = vunpack.c.h.b16 %v6966
        %v7178 = vunpack.c.l.b16 %v6967
        %v7179 = vunpack.c.h.b16 %v6967
        %v7180 = vunpack.c.l.b16 %v6968
        %v7181 = vunpack.c.h.b16 %v6968
        %v7182 = vunpack.c.l.b16 %v6969
        %v7183 = vunpack.c.h.b16 %v6969
        %v7184 = vunpack.c.l.b16 %v6970
        %v7185 = vunpack.c.h.b16 %v6970
        %v7186 = vunpack.c.l.b16 %v6971
        %v7187 = vunpack.c.h.b16 %v6971
        %v7188 = vunpack.c.l.b16 %v6972
        %v7189 = vunpack.c.h.b16 %v6972
        %v7190 = vunpack.c.l.b16 %v6973
        %v7191 = vunpack.c.h.b16 %v6973
        %v7192 = vunpack.c.l.b16 %v6974
        %v7193 = vunpack.c.h.b16 %v6974
        %v7194 = vunpack.c.l.b16 %v6975
        %v7195 = vunpack.c.h.b16 %v6975
        %v7196 = vunpack.c.l.b16 %v6976
        %v7197 = vunpack.c.h.b16 %v6976
        %v7198 = vunpack.c.l.b16 %v6977
        %v7199 = vunpack.c.h.b16 %v6977
        %v7200 = vunpack.c.l.b16 %v6978
        %v7201 = vunpack.c.h.b16 %v6978
        %v7202 = vunpack.c.l.b16 %v6979
        %v7203 = vunpack.c.h.b16 %v6979
        %v7204 = vunpack.c.l.b16 %v6980
        %v7205 = vunpack.c.h.b16 %v6980
        %v7206 = vunpack.c.l.b16 %v6981
        %v7207 = vunpack.c.h.b16 %v6981
        %v7208 = vunpack.c.l.b16 %v6982
        %v7209 = vunpack.c.h.b16 %v6982
        %v7210 = vunpack.c.l.b16 %v6983
        %v7211 = vunpack.c.h.b16 %v6983
        %v7212 = vunpack.c.l.b16 %v6984
        %v7213 = vunpack.c.h.b16 %v6984
        %v7214 = vunpack.c.l.b16 %v6985
        %v7215 = vunpack.c.h.b16 %v6985
        %v7216 = vunpack.c.l.b16 %v6986
        %v7217 = vunpack.c.h.b16 %v6986
        %v7218 = vunpack.c.l.b16 %v6987
        %v7219 = vunpack.c.h.b16 %v6987
        %v7220 = vunpack.c.l.b16 %v6988
        %v7221 = vunpack.c.h.b16 %v6988
        %v7222 = vunpack.c.l.b16 %v6989
        %v7223 = vunpack.c.h.b16 %v6989
        %v7224 = vunpack.c.l.b16 %v6990
        %v7225 = vunpack.c.h.b16 %v6990
        %v7226 = vunpack.c.l.b16 %v6991
        %v7227 = vunpack.c.h.b16 %v6991
        %v7228 = vunpack.c.l.b16 %v6992
        %v7229 = vunpack.c.h.b16 %v6992
        %v7230 = vunpack.c.l.b16 %v6993
        %v7231 = vunpack.c.h.b16 %v6993
        %v7232 = vunpack.c.l.b16 %v6994
        %v7233 = vunpack.c.h.b16 %v6994
        %v7234 = vunpack.c.l.b16 %v6995
        %v7235 = vunpack.c.h.b16 %v6995
        %v7236 = vunpack.c.l.b16 %v6996
        %v7237 = vunpack.c.h.b16 %v6996
        %v7238 = vunpack.c.l.b16 %v6997
        %v7239 = vunpack.c.h.b16 %v6997
        %v7240 = vunpack.c.l.b16 %v6998
        %v7241 = vunpack.c.h.b16 %v6998
        %v7242 = vunpack.c.l.b16 %v6999
        %v7243 = vunpack.c.h.b16 %v6999
        %v7244 = vunpack.c.l.b16 %v7000
        %v7245 = vunpack.c.h.b16 %v7000
        %v7246 = vunpack.c.l.b16 %v7001
        %v7247 = vunpack.c.h.b16 %v7001
        %v7248 = vunpack.c.l.b16 %v7002
        %v7249 = vunpack.c.h.b16 %v7002
        %v7250 = vunpack.c.l.b16 %v7003
        %v7251 = vunpack.c.h.b16 %v7003
        %v7252 = vunpack.c.l.b16 %v7004
        %v7253 = vunpack.c.h.b16 %v7004
        %v7254 = vunpack.c.l.b16 %v7005
        %v7255 = vunpack.c.h.b16 %v7005
        %v7256 = vunpack.c.l.b16 %v7006
        %v7257 = vunpack.c.h.b16 %v7006
        %v7258 = vunpack.c.l.b16 %v7007
        %v7259 = vunpack.c.h.b16 %v7007
        %v7260 = vunpack.c.l.b16 %v7008
        %v7261 = vunpack.c.h.b16 %v7008
        %v7262 = vunpack.c.l.b16 %v7009
        %v7263 = vunpack.c.h.b16 %v7009
        %v7264 = vunpack.c.l.b16 %v7010
        %v7265 = vunpack.c.h.b16 %v7010
        %v7266 = vunpack.c.l.b16 %v7011
        %v7267 = vunpack.c.h.b16 %v7011
        %v7268 = vunpack.c.l.b16 %v7012
        %v7269 = vunpack.c.h.b16 %v7012
        %v7270 = vunpack.c.l.b16 %v7013
        %v7271 = vunpack.c.h.b16 %v7013
        %v7272 = vunpack.c.l.b16 %v7014
        %v7273 = vunpack.c.h.b16 %v7014
        %v7274 = vunpack.c.l.b16 %v7015
        %v7275 = vunpack.c.h.b16 %v7015
        %v7276 = vunpack.c.l.b16 %v7016
        %v7277 = vunpack.c.h.b16 %v7016
        %v7278 = vunpack.c.l.b16 %v7017
        %v7279 = vunpack.c.h.b16 %v7017
        %v7280 = vunpack.c.l.b16 %v7018
        %v7281 = vunpack.c.h.b16 %v7018
        %v7282 = vunpack.c.l.b16 %v7019
        %v7283 = vunpack.c.h.b16 %v7019
        %v7284 = vunpack.c.l.b16 %v7020
        %v7285 = vunpack.c.h.b16 %v7020
        %v7286 = vunpack.c.l.b16 %v7021
        %v7287 = vunpack.c.h.b16 %v7021
        %v7288 = vunpack.c.l.b16 %v7022
        %v7289 = vunpack.c.h.b16 %v7022
        %v7290 = vunpack.c.l.b16 %v7023
        %v7291 = vunpack.c.h.b16 %v7023
        %v7292 = vunpack.c.l.b16 %v7024
        %v7293 = vunpack.c.h.b16 %v7024
        %v7294 = vunpack.c.l.b16 %v7025
        %v7295 = vunpack.c.h.b16 %v7025
        %v7296 = vunpack.c.l.b16 %v7026
        %v7297 = vunpack.c.h.b16 %v7026
        %v7298 = vunpack.c.l.b16 %v7027
        %v7299 = vunpack.c.h.b16 %v7027
        %v7300 = vunpack.c.l.b16 %v7028
        %v7301 = vunpack.c.h.b16 %v7028
        %v7302 = vunpack.c.l.b16 %v7029
        %v7303 = vunpack.c.h.b16 %v7029
        %v7304 = vunpack.c.l.b16 %v7030
        %v7305 = vunpack.c.h.b16 %v7030
        %v7306 = vunpack.c.l.b16 %v7031
        %v7307 = vunpack.c.h.b16 %v7031
        %v7308 = vunpack.c.l.b16 %v7032
        %v7309 = vunpack.c.h.b16 %v7032
        %v7310 = vunpack.c.l.b16 %v7033
        %v7311 = vunpack.c.h.b16 %v7033
        %v7312 = vunpack.c.l.b16 %v7034
        %v7313 = vunpack.c.h.b16 %v7034
        %v7314 = vunpack.c.l.b16 %v7035
        %v7315 = vunpack.c.h.b16 %v7035
        %v7316 = vunpack.c.l.b16 %v7036
        %v7317 = vunpack.c.h.b16 %v7036
        %v7318 = vunpack.c.l.b16 %v7037
        %v7319 = vunpack.c.h.b16 %v7037
        %v7320 = vunpack.c.l.b16 %v7038
        %v7321 = vunpack.c.h.b16 %v7038
        %v7322 = vunpack.c.l.b16 %v7039
        %v7323 = vunpack.c.h.b16 %v7039
        %v7324 = vunpack.c.l.b16 %v7040
        %v7325 = vunpack.c.h.b16 %v7040
        %v7326 = vunpack.c.l.b16 %v7041
        %v7327 = vunpack.c.h.b16 %v7041
        %v7328 = vunpack.c.l.b16 %v7042
        %v7329 = vunpack.c.h.b16 %v7042
        %v7330 = vunpack.c.l.b16 %v7043
        %v7331 = vunpack.c.h.b16 %v7043
        %v7332 = vunpack.c.l.b16 %v7044
        %v7333 = vunpack.c.h.b16 %v7044
        %v7334 = vunpack.c.l.b16 %v7045
        %v7335 = vunpack.c.h.b16 %v7045
        %v7336 = vunpack.c.l.b16 %v7046
        %v7337 = vunpack.c.h.b16 %v7046
        %v7338 = vunpack.c.l.b16 %v7047
        %v7339 = vunpack.c.h.b16 %v7047
        %v7340 = vunpack.c.l.b16 %v7048
        %v7341 = vunpack.c.h.b16 %v7048
        %v7342 = vunpack.c.l.b16 %v7049
        %v7343 = vunpack.c.h.b16 %v7049
        %v7344 = vunpack.c.l.b16 %v7050
        %v7345 = vunpack.c.h.b16 %v7050
        %v7346 = vunpack.c.l.b16 %v7051
        %v7347 = vunpack.c.h.b16 %v7051
        %v7348 = vunpack.c.l.b16 %v7052
        %v7349 = vunpack.c.h.b16 %v7052
        %v7350 = vunpack.c.l.b16 %v7053
        %v7351 = vunpack.c.h.b16 %v7053
        %v7352 = vunpack.c.l.b16 %v7054
        %v7353 = vunpack.c.h.b16 %v7054
        %v7354 = vunpack.c.l.b16 %v7055
        %v7355 = vunpack.c.h.b16 %v7055
        %v7356 = vunpack.c.l.b16 %v7056
        %v7357 = vunpack.c.h.b16 %v7056
        %v7358 = vunpack.c.l.b16 %v7057
        %v7359 = vunpack.c.h.b16 %v7057
        %v7360 = vpack.c.b16 %v7172, %v7168
        %v7361 = vpack.c.b16 %v7173, %v7169
        %v7362 = vpack.c.b16 %v7174, %v7170
        %v7363 = vpack.c.b16 %v7175, %v7171
        %v7364 = vpack.c.b16 %v7180, %v7176
        %v7365 = vpack.c.b16 %v7181, %v7177
        %v7366 = vpack.c.b16 %v7182, %v7178
        %v7367 = vpack.c.b16 %v7183, %v7179
        %v7368 = vpack.c.b16 %v7188, %v7184
        %v7369 = vpack.c.b16 %v7189, %v7185
        %v7370 = vpack.c.b16 %v7190, %v7186
        %v7371 = vpack.c.b16 %v7191, %v7187
        %v7372 = vpack.c.b16 %v7196, %v7192
        %v7373 = vpack.c.b16 %v7197, %v7193
        %v7374 = vpack.c.b16 %v7198, %v7194
        %v7375 = vpack.c.b16 %v7199, %v7195
        %v7376 = vpack.c.b16 %v7204, %v7200
        %v7377 = vpack.c.b16 %v7205, %v7201
        %v7378 = vpack.c.b16 %v7206, %v7202
        %v7379 = vpack.c.b16 %v7207, %v7203
        %v7380 = vpack.c.b16 %v7212, %v7208
        %v7381 = vpack.c.b16 %v7213, %v7209
        %v7382 = vpack.c.b16 %v7214, %v7210
        %v7383 = vpack.c.b16 %v7215, %v7211
        %v7384 = vpack.c.b16 %v7220, %v7216
        %v7385 = vpack.c.b16 %v7221, %v7217
        %v7386 = vpack.c.b16 %v7222, %v7218
        %v7387 = vpack.c.b16 %v7223, %v7219
        %v7388 = vpack.c.b16 %v7228, %v7224
        %v7389 = vpack.c.b16 %v7229, %v7225
        %v7390 = vpack.c.b16 %v7230, %v7226
        %v7391 = vpack.c.b16 %v7231, %v7227
        %v7392 = vpack.c.b16 %v7236, %v7232
        %v7393 = vpack.c.b16 %v7237, %v7233
        %v7394 = vpack.c.b16 %v7238, %v7234
        %v7395 = vpack.c.b16 %v7239, %v7235
        %v7396 = vpack.c.b16 %v7244, %v7240
        %v7397 = vpack.c.b16 %v7245, %v7241
        %v7398 = vpack.c.b16 %v7246, %v7242
        %v7399 = vpack.c.b16 %v7247, %v7243
        %v7400 = vpack.c.b16 %v7252, %v7248
        %v7401 = vpack.c.b16 %v7253, %v7249
        %v7402 = vpack.c.b16 %v7254, %v7250
        %v7403 = vpack.c.b16 %v7255, %v7251
        %v7404 = vpack.c.b16 %v7260, %v7256
        %v7405 = vpack.c.b16 %v7261, %v7257
        %v7406 = vpack.c.b16 %v7262, %v7258
        %v7407 = vpack.c.b16 %v7263, %v7259
        %v7408 = vpack.c.b16 %v7268, %v7264
        %v7409 = vpack.c.b16 %v7269, %v7265
        %v7410 = vpack.c.b16 %v7270, %v7266
        %v7411 = vpack.c.b16 %v7271, %v7267
        %v7412 = vpack.c.b16 %v7276, %v7272
        %v7413 = vpack.c.b16 %v7277, %v7273
        %v7414 = vpack.c.b16 %v7278, %v7274
        %v7415 = vpack.c.b16 %v7279, %v7275
        %v7416 = vpack.c.b16 %v7284, %v7280
        %v7417 = vpack.c.b16 %v7285, %v7281
        %v7418 = vpack.c.b16 %v7286, %v7282
        %v7419 = vpack.c.b16 %v7287, %v7283
        %v7420 = vpack.c.b16 %v7292, %v7288
        %v7421 = vpack.c.b16 %v7293, %v7289
        %v7422 = vpack.c.b16 %v7294, %v7290
        %v7423 = vpack.c.b16 %v7295, %v7291
        %v7424 = vpack.c.b16 %v7300, %v7296
        %v7425 = vpack.c.b16 %v7301, %v7297
        %v7426 = vpack.c.b16 %v7302, %v7298
        %v7427 = vpack.c.b16 %v7303, %v7299
        %v7428 = vpack.c.b16 %v7308, %v7304
        %v7429 = vpack.c.b16 %v7309, %v7305
        %v7430 = vpack.c.b16 %v7310, %v7306
        %v7431 = vpack.c.b16 %v7311, %v7307
        %v7432 = vpack.c.b16 %v7316, %v7312
        %v7433 = vpack.c.b16 %v7317, %v7313
        %v7434 = vpack.c.b16 %v7318, %v7314
        %v7435 = vpack.c.b16 %v7319, %v7315
        %v7436 = vpack.c.b16 %v7324, %v7320
        %v7437 = vpack.c.b16 %v7325, %v7321
        %v7438 = vpack.c.b16 %v7326, %v7322
        %v7439 = vpack.c.b16 %v7327, %v7323
        %v7440 = vpack.c.b16 %v7332, %v7328
        %v7441 = vpack.c.b16 %v7333, %v7329
        %v7442 = vpack.c.b16 %v7334, %v7330
        %v7443 = vpack.c.b16 %v7335, %v7331
        %v7444 = vpack.c.b16 %v7340, %v7336
        %v7445 = vpack.c.b16 %v7341, %v7337
        %v7446 = vpack.c.b16 %v7342, %v7338
        %v7447 = vpack.c.b16 %v7343, %v7339
        %v7448 = vpack.c.b16 %v7348, %v7344
        %v7449 = vpack.c.b16 %v7349, %v7345
        %v7450 = vpack.c.b16 %v7350, %v7346
        %v7451 = vpack.c.b16 %v7351, %v7347
        %v7452 = vpack.c.b16 %v7356, %v7352
        %v7453 = vpack.c.b16 %v7357, %v7353
        %v7454 = vpack.c.b16 %v7358, %v7354
        %v7455 = vpack.c.b16 %v7359, %v7355
        %7552 = vmatprep.subr.bf16.mxu0 %v7361
        %7553 = vmatpush1.bf16.msra.mxu0 %v7360
        %7554 = vmatprep.subr.bf16.mxu0 %v7365
        %7555 = vmatpush1.bf16.msra.mxu0 %v7364
        %7556 = vmatprep.subr.bf16.mxu0 %v7369
        %7557 = vmatpush1.bf16.msra.mxu0 %v7368
        %7558 = vmatprep.subr.bf16.mxu0 %v7373
        %7559 = vmatpush1.bf16.msra.mxu0 %v7372
        %7560 = vmatprep.subr.bf16.mxu0 %v7377
        %7561 = vmatpush1.bf16.msra.mxu0 %v7376
        %7562 = vmatprep.subr.bf16.mxu0 %v7381
        %7563 = vmatpush1.bf16.msra.mxu0 %v7380
        %7564 = vmatprep.subr.bf16.mxu0 %v7385
        %7565 = vmatpush1.bf16.msra.mxu0 %v7384
        %7566 = vmatprep.subr.bf16.mxu0 %v7389
        %7567 = vmatpush1.bf16.msra.mxu0 %v7388
        %7568 = vmatprep.subr.bf16.mxu0 %v7393
        %7569 = vmatpush1.bf16.msra.mxu0 %v7392
        %7570 = vmatprep.subr.bf16.mxu0 %v7397
        %7571 = vmatpush1.bf16.msra.mxu0 %v7396
        %7572 = vmatprep.subr.bf16.mxu0 %v7401
        %7573 = vmatpush1.bf16.msra.mxu0 %v7400
        %7574 = vmatprep.subr.bf16.mxu0 %v7405
        %7575 = vmatpush1.bf16.msra.mxu0 %v7404
        %7576 = vmatprep.subr.bf16.mxu0 %v7409
        %7577 = vmatpush1.bf16.msra.mxu0 %v7408
        %7578 = vmatprep.subr.bf16.mxu0 %v7413
        %7579 = vmatpush1.bf16.msra.mxu0 %v7412
        %7580 = vmatprep.subr.bf16.mxu0 %v7417
        %7581 = vmatpush1.bf16.msra.mxu0 %v7416
        %7582 = vmatprep.subr.bf16.mxu0 %v7421
        %7583 = vmatpush1.bf16.msra.mxu0 %v7420
        %7584 = vmatprep.mubr.bf16.mxu0 %v7067
        %7585 = vmatmul.mubr.bf16.gmra.mrb[0].mxu0 %v7066
        %v7586 = vpop.f32.mrb[0].mxu0
        %v7587 = vadd.f32 0.0, %v7586
        %v7588 = vpop.f32.mrb[0].mxu0
        %v7589 = vadd.f32 0.0, %v7588
        %v7590 = vpop.f32.mrb[0].mxu0
        %v7591 = vpop.f32.mrb[0].mxu0
        %7592 = vdwg.mxu0
        %7593 = vmatprep.subr.bf16.mxu0 %v7425
        %7594 = vmatpush1.bf16.msra.mxu0 %v7424
        %7595 = vmatprep.subr.bf16.mxu0 %v7429
        %7596 = vmatpush1.bf16.msra.mxu0 %v7428
        %7597 = vmatprep.subr.bf16.mxu0 %v7433
        %7598 = vmatpush1.bf16.msra.mxu0 %v7432
        %7599 = vmatprep.subr.bf16.mxu0 %v7437
        %7600 = vmatpush1.bf16.msra.mxu0 %v7436
        %7601 = vmatprep.subr.bf16.mxu0 %v7441
        %7602 = vmatpush1.bf16.msra.mxu0 %v7440
        %7603 = vmatprep.subr.bf16.mxu0 %v7445
        %7604 = vmatpush1.bf16.msra.mxu0 %v7444
        %7605 = vmatprep.subr.bf16.mxu0 %v7449
        %7606 = vmatpush1.bf16.msra.mxu0 %v7448
        %7607 = vmatprep.subr.bf16.mxu0 %v7453
        %7608 = vmatpush1.bf16.msra.mxu0 %v7452
        %7609 = vmatprep.subr.bf16.mxu0 0
        %7610 = vmatpush1.bf16.msra.mxu0 0
        %7611 = vmatprep.subr.bf16.mxu0 0
        %7612 = vmatpush1.bf16.msra.mxu0 0
        %7613 = vmatprep.subr.bf16.mxu0 0
        %7614 = vmatpush1.bf16.msra.mxu0 0
        %7615 = vmatprep.subr.bf16.mxu0 0
        %7616 = vmatpush1.bf16.msra.mxu0 0
        %7617 = vmatprep.subr.bf16.mxu0 0
        %7618 = vmatpush1.bf16.msra.mxu0 0
        %7619 = vmatprep.subr.bf16.mxu0 0
        %7620 = vmatpush1.bf16.msra.mxu0 0
        %7621 = vmatprep.subr.bf16.mxu0 0
        %7622 = vmatpush1.bf16.msra.mxu0 0
        %7623 = vmatprep.subr.bf16.mxu0 0
        %7624 = vmatpush1.bf16.msra.mxu0 0
        %7625 = vmatprep.mubr.bf16.mxu0 0
        %7626 = vmatmul.mubr.bf16.gmra.mrb[0].mxu0 %v7068
        %v7627 = vpop.f32.mrb[0].mxu0
        %v7628 = vadd.f32 %v7587, %v7627
        %v7629 = vpop.f32.mrb[0].mxu0
        %v7630 = vadd.f32 %v7589, %v7629
        %v7631 = vpop.f32.mrb[0].mxu0
        %v7632 = vpop.f32.mrb[0].mxu0
        %7633 = vdwg.mxu0
        %7634 = vmatprep.subr.bf16.mxu0 %v7363
        %7635 = vmatpush1.bf16.msra.mxu0 %v7362
        %7636 = vmatprep.subr.bf16.mxu0 %v7367
        %7637 = vmatpush1.bf16.msra.mxu0 %v7366
        %7638 = vmatprep.subr.bf16.mxu0 %v7371
        %7639 = vmatpush1.bf16.msra.mxu0 %v7370
        %7640 = vmatprep.subr.bf16.mxu0 %v7375
        %7641 = vmatpush1.bf16.msra.mxu0 %v7374
        %7642 = vmatprep.subr.bf16.mxu0 %v7379
        %7643 = vmatpush1.bf16.msra.mxu0 %v7378
        %7644 = vmatprep.subr.bf16.mxu0 %v7383
        %7645 = vmatpush1.bf16.msra.mxu0 %v7382
        %7646 = vmatprep.subr.bf16.mxu0 %v7387
        %7647 = vmatpush1.bf16.msra.mxu0 %v7386
        %7648 = vmatprep.subr.bf16.mxu0 %v7391
        %7649 = vmatpush1.bf16.msra.mxu0 %v7390
        %7650 = vmatprep.subr.bf16.mxu0 %v7395
        %7651 = vmatpush1.bf16.msra.mxu0 %v7394
        %7652 = vmatprep.subr.bf16.mxu0 %v7399
        %7653 = vmatpush1.bf16.msra.mxu0 %v7398
        %7654 = vmatprep.subr.bf16.mxu0 %v7403
        %7655 = vmatpush1.bf16.msra.mxu0 %v7402
        %7656 = vmatprep.subr.bf16.mxu0 %v7407
        %7657 = vmatpush1.bf16.msra.mxu0 %v7406
        %7658 = vmatprep.subr.bf16.mxu0 %v7411
        %7659 = vmatpush1.bf16.msra.mxu0 %v7410
        %7660 = vmatprep.subr.bf16.mxu0 %v7415
        %7661 = vmatpush1.bf16.msra.mxu0 %v7414
        %7662 = vmatprep.subr.bf16.mxu0 %v7419
        %7663 = vmatpush1.bf16.msra.mxu0 %v7418
        %7664 = vmatprep.subr.bf16.mxu0 %v7423
        %7665 = vmatpush1.bf16.msra.mxu0 %v7422
        %7666 = vmatprep.mubr.bf16.mxu0 %v7067
        %7667 = vmatmul.mubr.bf16.gmra.mrb[0].mxu0 %v7066
        %v7668 = vpop.f32.mrb[0].mxu0
        %v7669 = vadd.f32 0.0, %v7668
        %v7670 = vpop.f32.mrb[0].mxu0
        %v7671 = vadd.f32 0.0, %v7670
        %v7672 = vpop.f32.mrb[0].mxu0
        %v7673 = vpop.f32.mrb[0].mxu0
        %7674 = vdwg.mxu0
        %7675 = vmatprep.subr.bf16.mxu0 %v7427
        %7676 = vmatpush1.bf16.msra.mxu0 %v7426
        %7677 = vmatprep.subr.bf16.mxu0 %v7431
        %7678 = vmatpush1.bf16.msra.mxu0 %v7430
        %7679 = vmatprep.subr.bf16.mxu0 %v7435
        %7680 = vmatpush1.bf16.msra.mxu0 %v7434
        %7681 = vmatprep.subr.bf16.mxu0 %v7439
        %7682 = vmatpush1.bf16.msra.mxu0 %v7438
        %7683 = vmatprep.subr.bf16.mxu0 %v7443
        %7684 = vmatpush1.bf16.msra.mxu0 %v7442
        %7685 = vmatprep.subr.bf16.mxu0 %v7447
        %7686 = vmatpush1.bf16.msra.mxu0 %v7446
        %7687 = vmatprep.subr.bf16.mxu0 %v7451
        %7688 = vmatpush1.bf16.msra.mxu0 %v7450
        %7689 = vmatprep.subr.bf16.mxu0 %v7455
        %7690 = vmatpush1.bf16.msra.mxu0 %v7454
        %7691 = vmatprep.subr.bf16.mxu0 0
        %7692 = vmatpush1.bf16.msra.mxu0 0
        %7693 = vmatprep.subr.bf16.mxu0 0
        %7694 = vmatpush1.bf16.msra.mxu0 0
        %7695 = vmatprep.subr.bf16.mxu0 0
        %7696 = vmatpush1.bf16.msra.mxu0 0
        %7697 = vmatprep.subr.bf16.mxu0 0
        %7698 = vmatpush1.bf16.msra.mxu0 0
        %7699 = vmatprep.subr.bf16.mxu0 0
        %7700 = vmatpush1.bf16.msra.mxu0 0
        %7701 = vmatprep.subr.bf16.mxu0 0
        %7702 = vmatpush1.bf16.msra.mxu0 0
        %7703 = vmatprep.subr.bf16.mxu0 0
        %7704 = vmatpush1.bf16.msra.mxu0 0
        %7705 = vmatprep.subr.bf16.mxu0 0
        %7706 = vmatpush1.bf16.msra.mxu0 0
        %7707 = vmatprep.mubr.bf16.mxu0 0
        %7708 = vmatmul.mubr.bf16.gmra.mrb[0].mxu0 %v7068
        %v7709 = vpop.f32.mrb[0].mxu0
        %v7710 = vadd.f32 %v7669, %v7709
        %v7711 = vpop.f32.mrb[0].mxu0
        %v7712 = vadd.f32 %v7671, %v7711
        %v7713 = vpop.f32.mrb[0].mxu0
        %v7714 = vpop.f32.mrb[0].mxu0
        %7715 = vdwg.mxu0
        %v7716 = vadd.f32 %v6955, %v7628
        %v7717 = vadd.f32 %v6956, %v7630
        %v7718 = vadd.f32 %v6957, %v7710
        %v7719 = vadd.f32 %v6958, %v7712
        %7720 = vmatprep.subr.bf16.mxu0 %v4391
        %7721 = vmatpush1.bf16.msra.mxu0 %v4390
        %7722 = vmatprep.subr.bf16.mxu0 %v4395
        %7723 = vmatpush1.bf16.msra.mxu0 %v4394
        %7724 = vmatprep.subr.bf16.mxu0 %v4399
        %7725 = vmatpush1.bf16.msra.mxu0 %v4398
        %7726 = vmatprep.subr.bf16.mxu0 %v4403
        %7727 = vmatpush1.bf16.msra.mxu0 %v4402
        %7728 = vmatprep.subr.bf16.mxu0 %v4407
        %7729 = vmatpush1.bf16.msra.mxu0 %v4406
        %7730 = vmatprep.subr.bf16.mxu0 %v4411
        %7731 = vmatpush1.bf16.msra.mxu0 %v4410
        %7732 = vmatprep.subr.bf16.mxu0 %v4415
        %7733 = vmatpush1.bf16.msra.mxu0 %v4414
        %7734 = vmatprep.subr.bf16.mxu0 %v4419
        %7735 = vmatpush1.bf16.msra.mxu0 %v4418
        %7736 = vmatprep.subr.bf16.mxu0 %v4423
        %7737 = vmatpush1.bf16.msra.mxu0 %v4422
        %7738 = vmatprep.subr.bf16.mxu0 %v4427
        %7739 = vmatpush1.bf16.msra.mxu0 %v4426
        %7740 = vmatprep.subr.bf16.mxu0 %v4431
        %7741 = vmatpush1.bf16.msra.mxu0 %v4430
        %7742 = vmatprep.subr.bf16.mxu0 %v4435
        %7743 = vmatpush1.bf16.msra.mxu0 %v4434
        %7744 = vmatprep.subr.bf16.mxu0 %v4439
        %7745 = vmatpush1.bf16.msra.mxu0 %v4438
        %7746 = vmatprep.subr.bf16.mxu0 %v4443
        %7747 = vmatpush1.bf16.msra.mxu0 %v4442
        %7748 = vmatprep.subr.bf16.mxu0 %v4447
        %7749 = vmatpush1.bf16.msra.mxu0 %v4446
        %7750 = vmatprep.subr.bf16.mxu0 %v4451
        %7751 = vmatpush1.bf16.msra.mxu0 %v4450
        %7752 = vmatprep.mubr.bf16.mxu0 %v5521
        %7753 = vmatmul.mubr.bf16.gmra.mrb[0].mxu0 %v5514
        %v7754 = vpop.f32.mrb[0].mxu0
        %v7755 = vadd.f32 0.0, %v7754
        %v7756 = vpop.f32.mrb[0].mxu0
        %v7757 = vadd.f32 0.0, %v7756
        %v7758 = vpop.f32.mrb[0].mxu0
        %v7759 = vpop.f32.mrb[0].mxu0
        %7760 = vdwg.mxu0
        %7761 = vmatprep.subr.bf16.mxu0 %v4455
        %7762 = vmatpush1.bf16.msra.mxu0 %v4454
        %7763 = vmatprep.subr.bf16.mxu0 %v4459
        %7764 = vmatpush1.bf16.msra.mxu0 %v4458
        %7765 = vmatprep.subr.bf16.mxu0 %v4463
        %7766 = vmatpush1.bf16.msra.mxu0 %v4462
        %7767 = vmatprep.subr.bf16.mxu0 %v4467
        %7768 = vmatpush1.bf16.msra.mxu0 %v4466
        %7769 = vmatprep.subr.bf16.mxu0 %v4471
        %7770 = vmatpush1.bf16.msra.mxu0 %v4470
        %7771 = vmatprep.subr.bf16.mxu0 %v4475
        %7772 = vmatpush1.bf16.msra.mxu0 %v4474
        %7773 = vmatprep.subr.bf16.mxu0 %v4479
        %7774 = vmatpush1.bf16.msra.mxu0 %v4478
        %7775 = vmatprep.subr.bf16.mxu0 %v4483
        %7776 = vmatpush1.bf16.msra.mxu0 %v4482
        %7777 = vmatprep.subr.bf16.mxu0 0
        %7778 = vmatpush1.bf16.msra.mxu0 0
        %7779 = vmatprep.subr.bf16.mxu0 0
        %7780 = vmatpush1.bf16.msra.mxu0 0
        %7781 = vmatprep.subr.bf16.mxu0 0
        %7782 = vmatpush1.bf16.msra.mxu0 0
        %7783 = vmatprep.subr.bf16.mxu0 0
        %7784 = vmatpush1.bf16.msra.mxu0 0
        %7785 = vmatprep.subr.bf16.mxu0 0
        %7786 = vmatpush1.bf16.msra.mxu0 0
        %7787 = vmatprep.subr.bf16.mxu0 0
        %7788 = vmatpush1.bf16.msra.mxu0 0
        %7789 = vmatprep.subr.bf16.mxu0 0
        %7790 = vmatpush1.bf16.msra.mxu0 0
        %7791 = vmatprep.subr.bf16.mxu0 0
        %7792 = vmatpush1.bf16.msra.mxu0 0
        %7793 = vmatprep.mubr.bf16.mxu0 0
        %7794 = vmatmul.mubr.bf16.gmra.mrb[0].mxu0 %v5528
        %v7795 = vpop.f32.mrb[0].mxu0
        %v7796 = vadd.f32 %v7755, %v7795
        %v7797 = vpop.f32.mrb[0].mxu0
        %v7798 = vadd.f32 %v7757, %v7797
        %v7799 = vpop.f32.mrb[0].mxu0
        %v7800 = vpop.f32.mrb[0].mxu0
        %7801 = vdwg.mxu0
        %7802 = vmatprep.subr.bf16.mxu0 %v4393
        %7803 = vmatpush1.bf16.msra.mxu0 %v4392
        %7804 = vmatprep.subr.bf16.mxu0 %v4397
        %7805 = vmatpush1.bf16.msra.mxu0 %v4396
        %7806 = vmatprep.subr.bf16.mxu0 %v4401
        %7807 = vmatpush1.bf16.msra.mxu0 %v4400
        %7808 = vmatprep.subr.bf16.mxu0 %v4405
        %7809 = vmatpush1.bf16.msra.mxu0 %v4404
        %7810 = vmatprep.subr.bf16.mxu0 %v4409
        %7811 = vmatpush1.bf16.msra.mxu0 %v4408
        %7812 = vmatprep.subr.bf16.mxu0 %v4413
        %7813 = vmatpush1.bf16.msra.mxu0 %v4412
        %7814 = vmatprep.subr.bf16.mxu0 %v4417
        %7815 = vmatpush1.bf16.msra.mxu0 %v4416
        %7816 = vmatprep.subr.bf16.mxu0 %v4421
        %7817 = vmatpush1.bf16.msra.mxu0 %v4420
        %7818 = vmatprep.subr.bf16.mxu0 %v4425
        %7819 = vmatpush1.bf16.msra.mxu0 %v4424
        %7820 = vmatprep.subr.bf16.mxu0 %v4429
        %7821 = vmatpush1.bf16.msra.mxu0 %v4428
        %7822 = vmatprep.subr.bf16.mxu0 %v4433
        %7823 = vmatpush1.bf16.msra.mxu0 %v4432
        %7824 = vmatprep.subr.bf16.mxu0 %v4437
        %7825 = vmatpush1.bf16.msra.mxu0 %v4436
        %7826 = vmatprep.subr.bf16.mxu0 %v4441
        %7827 = vmatpush1.bf16.msra.mxu0 %v4440
        %7828 = vmatprep.subr.bf16.mxu0 %v4445
        %7829 = vmatpush1.bf16.msra.mxu0 %v4444
        %7830 = vmatprep.subr.bf16.mxu0 %v4449
        %7831 = vmatpush1.bf16.msra.mxu0 %v4448
        %7832 = vmatprep.subr.bf16.mxu0 %v4453
        %7833 = vmatpush1.bf16.msra.mxu0 %v4452
        %7834 = vmatprep.mubr.bf16.mxu0 %v5521
        %7835 = vmatmul.mubr.bf16.gmra.mrb[0].mxu0 %v5514
        %v7836 = vpop.f32.mrb[0].mxu0
        %v7837 = vadd.f32 0.0, %v7836
        %v7838 = vpop.f32.mrb[0].mxu0
        %v7839 = vadd.f32 0.0, %v7838
        %v7840 = vpop.f32.mrb[0].mxu0
        %v7841 = vpop.f32.mrb[0].mxu0
        %7842 = vdwg.mxu0
        %7843 = vmatprep.subr.bf16.mxu0 %v4457
        %7844 = vmatpush1.bf16.msra.mxu0 %v4456
        %7845 = vmatprep.subr.bf16.mxu0 %v4461
        %7846 = vmatpush1.bf16.msra.mxu0 %v4460
        %7847 = vmatprep.subr.bf16.mxu0 %v4465
        %7848 = vmatpush1.bf16.msra.mxu0 %v4464
        %7849 = vmatprep.subr.bf16.mxu0 %v4469
        %7850 = vmatpush1.bf16.msra.mxu0 %v4468
        %7851 = vmatprep.subr.bf16.mxu0 %v4473
        %7852 = vmatpush1.bf16.msra.mxu0 %v4472
        %7853 = vmatprep.subr.bf16.mxu0 %v4477
        %7854 = vmatpush1.bf16.msra.mxu0 %v4476
        %7855 = vmatprep.subr.bf16.mxu0 %v4481
        %7856 = vmatpush1.bf16.msra.mxu0 %v4480
        %7857 = vmatprep.subr.bf16.mxu0 %v4485
        %7858 = vmatpush1.bf16.msra.mxu0 %v4484
        %7859 = vmatprep.subr.bf16.mxu0 0
        %7860 = vmatpush1.bf16.msra.mxu0 0
        %7861 = vmatprep.subr.bf16.mxu0 0
        %7862 = vmatpush1.bf16.msra.mxu0 0
        %7863 = vmatprep.subr.bf16.mxu0 0
        %7864 = vmatpush1.bf16.msra.mxu0 0
        %7865 = vmatprep.subr.bf16.mxu0 0
        %7866 = vmatpush1.bf16.msra.mxu0 0
        %7867 = vmatprep.subr.bf16.mxu0 0
        %7868 = vmatpush1.bf16.msra.mxu0 0
        %7869 = vmatprep.subr.bf16.mxu0 0
        %7870 = vmatpush1.bf16.msra.mxu0 0
        %7871 = vmatprep.subr.bf16.mxu0 0
        %7872 = vmatpush1.bf16.msra.mxu0 0
        %7873 = vmatprep.subr.bf16.mxu0 0
        %7874 = vmatpush1.bf16.msra.mxu0 0
        %7875 = vmatprep.mubr.bf16.mxu0 0
        %7876 = vmatmul.mubr.bf16.gmra.mrb[0].mxu0 %v5528
        %v7877 = vpop.f32.mrb[0].mxu0
        %v7878 = vadd.f32 %v7837, %v7877
        %v7879 = vpop.f32.mrb[0].mxu0
        %v7880 = vadd.f32 %v7839, %v7879
        %v7881 = vpop.f32.mrb[0].mxu0
        %v7882 = vpop.f32.mrb[0].mxu0
        %7883 = vdwg.mxu0
        %7884 = vmatprep.subr.bf16.mxu0 %v5046
        %7885 = vmatpush1.bf16.msra.mxu0 %v5045
        %7886 = vmatprep.subr.bf16.mxu0 %v5050
        %7887 = vmatpush1.bf16.msra.mxu0 %v5049
        %7888 = vmatprep.subr.bf16.mxu0 %v5054
        %7889 = vmatpush1.bf16.msra.mxu0 %v5053
        %7890 = vmatprep.subr.bf16.mxu0 %v5058
        %7891 = vmatpush1.bf16.msra.mxu0 %v5057
        %7892 = vmatprep.subr.bf16.mxu0 %v5062
        %7893 = vmatpush1.bf16.msra.mxu0 %v5061
        %7894 = vmatprep.subr.bf16.mxu0 %v5066
        %7895 = vmatpush1.bf16.msra.mxu0 %v5065
        %7896 = vmatprep.subr.bf16.mxu0 %v5070
        %7897 = vmatpush1.bf16.msra.mxu0 %v5069
        %7898 = vmatprep.subr.bf16.mxu0 %v5074
        %7899 = vmatpush1.bf16.msra.mxu0 %v5073
        %7900 = vmatprep.subr.bf16.mxu0 %v5078
        %7901 = vmatpush1.bf16.msra.mxu0 %v5077
        %7902 = vmatprep.subr.bf16.mxu0 %v5082
        %7903 = vmatpush1.bf16.msra.mxu0 %v5081
        %7904 = vmatprep.subr.bf16.mxu0 %v5086
        %7905 = vmatpush1.bf16.msra.mxu0 %v5085
        %7906 = vmatprep.subr.bf16.mxu0 %v5090
        %7907 = vmatpush1.bf16.msra.mxu0 %v5089
        %7908 = vmatprep.subr.bf16.mxu0 %v5094
        %7909 = vmatpush1.bf16.msra.mxu0 %v5093
        %7910 = vmatprep.subr.bf16.mxu0 %v5098
        %7911 = vmatpush1.bf16.msra.mxu0 %v5097
        %7912 = vmatprep.subr.bf16.mxu0 %v5102
        %7913 = vmatpush1.bf16.msra.mxu0 %v5101
        %7914 = vmatprep.subr.bf16.mxu0 %v5106
        %7915 = vmatpush1.bf16.msra.mxu0 %v5105
        %7916 = vmatprep.mubr.bf16.mxu0 %v4097
        %7917 = vmatmul.mubr.bf16.gmra.mrb[0].mxu0 %v4096
        %v7918 = vpop.f32.mrb[0].mxu0
        %v7919 = vadd.f32 %v7796, %v7918
        %v7920 = vpop.f32.mrb[0].mxu0
        %v7921 = vadd.f32 %v7798, %v7920
        %v7922 = vpop.f32.mrb[0].mxu0
        %v7923 = vpop.f32.mrb[0].mxu0
        %7924 = vdwg.mxu0
        %7925 = vmatprep.subr.bf16.mxu0 %v5110
        %7926 = vmatpush1.bf16.msra.mxu0 %v5109
        %7927 = vmatprep.subr.bf16.mxu0 %v5114
        %7928 = vmatpush1.bf16.msra.mxu0 %v5113
        %7929 = vmatprep.subr.bf16.mxu0 %v5118
        %7930 = vmatpush1.bf16.msra.mxu0 %v5117
        %7931 = vmatprep.subr.bf16.mxu0 %v5122
        %7932 = vmatpush1.bf16.msra.mxu0 %v5121
        %7933 = vmatprep.subr.bf16.mxu0 %v5126
        %7934 = vmatpush1.bf16.msra.mxu0 %v5125
        %7935 = vmatprep.subr.bf16.mxu0 %v5130
        %7936 = vmatpush1.bf16.msra.mxu0 %v5129
        %7937 = vmatprep.subr.bf16.mxu0 %v5134
        %7938 = vmatpush1.bf16.msra.mxu0 %v5133
        %7939 = vmatprep.subr.bf16.mxu0 %v5138
        %7940 = vmatpush1.bf16.msra.mxu0 %v5137
        %7941 = vmatprep.subr.bf16.mxu0 0
        %7942 = vmatpush1.bf16.msra.mxu0 0
        %7943 = vmatprep.subr.bf16.mxu0 0
        %7944 = vmatpush1.bf16.msra.mxu0 0
        %7945 = vmatprep.subr.bf16.mxu0 0
        %7946 = vmatpush1.bf16.msra.mxu0 0
        %7947 = vmatprep.subr.bf16.mxu0 0
        %7948 = vmatpush1.bf16.msra.mxu0 0
        %7949 = vmatprep.subr.bf16.mxu0 0
        %7950 = vmatpush1.bf16.msra.mxu0 0
        %7951 = vmatprep.subr.bf16.mxu0 0
        %7952 = vmatpush1.bf16.msra.mxu0 0
        %7953 = vmatprep.subr.bf16.mxu0 0
        %7954 = vmatpush1.bf16.msra.mxu0 0
        %7955 = vmatprep.subr.bf16.mxu0 0
        %7956 = vmatpush1.bf16.msra.mxu0 0
        %7957 = vmatprep.mubr.bf16.mxu0 0
        %7958 = vmatmul.mubr.bf16.gmra.mrb[0].mxu0 %v4098
        %v7959 = vpop.f32.mrb[0].mxu0
        %v7960 = vadd.f32 %v7919, %v7959
        %v7961 = vpop.f32.mrb[0].mxu0
        %v7962 = vadd.f32 %v7921, %v7961
        %v7963 = vpop.f32.mrb[0].mxu0
        %v7964 = vpop.f32.mrb[0].mxu0
        %7965 = vdwg.mxu0
        %7966 = vmatprep.subr.bf16.mxu0 %v5048
        %7967 = vmatpush1.bf16.msra.mxu0 %v5047
        %7968 = vmatprep.subr.bf16.mxu0 %v5052
        %7969 = vmatpush1.bf16.msra.mxu0 %v5051
        %7970 = vmatprep.subr.bf16.mxu0 %v5056
        %7971 = vmatpush1.bf16.msra.mxu0 %v5055
        %7972 = vmatprep.subr.bf16.mxu0 %v5060
        %7973 = vmatpush1.bf16.msra.mxu0 %v5059
        %7974 = vmatprep.subr.bf16.mxu0 %v5064
        %7975 = vmatpush1.bf16.msra.mxu0 %v5063
        %7976 = vmatprep.subr.bf16.mxu0 %v5068
        %7977 = vmatpush1.bf16.msra.mxu0 %v5067
        %7978 = vmatprep.subr.bf16.mxu0 %v5072
        %7979 = vmatpush1.bf16.msra.mxu0 %v5071
        %7980 = vmatprep.subr.bf16.mxu0 %v5076
        %7981 = vmatpush1.bf16.msra.mxu0 %v5075
        %7982 = vmatprep.subr.bf16.mxu0 %v5080
        %7983 = vmatpush1.bf16.msra.mxu0 %v5079
        %7984 = vmatprep.subr.bf16.mxu0 %v5084
        %7985 = vmatpush1.bf16.msra.mxu0 %v5083
        %7986 = vmatprep.subr.bf16.mxu0 %v5088
        %7987 = vmatpush1.bf16.msra.mxu0 %v5087
        %7988 = vmatprep.subr.bf16.mxu0 %v5092
        %7989 = vmatpush1.bf16.msra.mxu0 %v5091
        %7990 = vmatprep.subr.bf16.mxu0 %v5096
        %7991 = vmatpush1.bf16.msra.mxu0 %v5095
        %7992 = vmatprep.subr.bf16.mxu0 %v5100
        %7993 = vmatpush1.bf16.msra.mxu0 %v5099
        %7994 = vmatprep.subr.bf16.mxu0 %v5104
        %7995 = vmatpush1.bf16.msra.mxu0 %v5103
        %7996 = vmatprep.subr.bf16.mxu0 %v5108
        %7997 = vmatpush1.bf16.msra.mxu0 %v5107
        %7998 = vmatprep.mubr.bf16.mxu0 %v4097
        %7999 = vmatmul.mubr.bf16.gmra.mrb[0].mxu0 %v4096
        %v8000 = vpop.f32.mrb[0].mxu0
        %v8001 = vadd.f32 %v7878, %v8000
        %v8002 = vpop.f32.mrb[0].mxu0
        %v8003 = vadd.f32 %v7880, %v8002
        %v8004 = vpop.f32.mrb[0].mxu0
        %v8005 = vpop.f32.mrb[0].mxu0
        %8006 = vdwg.mxu0
        %8007 = vmatprep.subr.bf16.mxu0 %v5112
        %8008 = vmatpush1.bf16.msra.mxu0 %v5111
        %8009 = vmatprep.subr.bf16.mxu0 %v5116
        %8010 = vmatpush1.bf16.msra.mxu0 %v5115
        %8011 = vmatprep.subr.bf16.mxu0 %v5120
        %8012 = vmatpush1.bf16.msra.mxu0 %v5119
        %8013 = vmatprep.subr.bf16.mxu0 %v5124
        %8014 = vmatpush1.bf16.msra.mxu0 %v5123
        %8015 = vmatprep.subr.bf16.mxu0 %v5128
        %8016 = vmatpush1.bf16.msra.mxu0 %v5127
        %8017 = vmatprep.subr.bf16.mxu0 %v5132
        %8018 = vmatpush1.bf16.msra.mxu0 %v5131
        %8019 = vmatprep.subr.bf16.mxu0 %v5136
        %8020 = vmatpush1.bf16.msra.mxu0 %v5135
        %8021 = vmatprep.subr.bf16.mxu0 %v5140
        %8022 = vmatpush1.bf16.msra.mxu0 %v5139
        %8023 = vmatprep.subr.bf16.mxu0 0
        %8024 = vmatpush1.bf16.msra.mxu0 0
        %8025 = vmatprep.subr.bf16.mxu0 0
        %8026 = vmatpush1.bf16.msra.mxu0 0
        %8027 = vmatprep.subr.bf16.mxu0 0
        %8028 = vmatpush1.bf16.msra.mxu0 0
        %8029 = vmatprep.subr.bf16.mxu0 0
        %8030 = vmatpush1.bf16.msra.mxu0 0
        %8031 = vmatprep.subr.bf16.mxu0 0
        %8032 = vmatpush1.bf16.msra.mxu0 0
        %8033 = vmatprep.subr.bf16.mxu0 0
        %8034 = vmatpush1.bf16.msra.mxu0 0
        %8035 = vmatprep.subr.bf16.mxu0 0
        %8036 = vmatpush1.bf16.msra.mxu0 0
        %8037 = vmatprep.subr.bf16.mxu0 0
        %8038 = vmatpush1.bf16.msra.mxu0 0
        %8039 = vmatprep.mubr.bf16.mxu0 0
        %8040 = vmatmul.mubr.bf16.gmra.mrb[0].mxu0 %v4098
        %v8041 = vpop.f32.mrb[0].mxu0
        %v8042 = vadd.f32 %v8001, %v8041
        %v8043 = vpop.f32.mrb[0].mxu0
        %v8044 = vadd.f32 %v8003, %v8043
        %v8045 = vpop.f32.mrb[0].mxu0
        %v8046 = vpop.f32.mrb[0].mxu0
        %8047 = vdwg.mxu0
        %8048 = vmatprep.subr.bf16.mxu0 %v5821
        %8049 = vmatpush1.bf16.msra.mxu0 %v5820
        %8050 = vmatprep.subr.bf16.mxu0 %v5825
        %8051 = vmatpush1.bf16.msra.mxu0 %v5824
        %8052 = vmatprep.subr.bf16.mxu0 %v5829
        %8053 = vmatpush1.bf16.msra.mxu0 %v5828
        %8054 = vmatprep.subr.bf16.mxu0 %v5833
        %8055 = vmatpush1.bf16.msra.mxu0 %v5832
        %8056 = vmatprep.subr.bf16.mxu0 %v5837
        %8057 = vmatpush1.bf16.msra.mxu0 %v5836
        %8058 = vmatprep.subr.bf16.mxu0 %v5841
        %8059 = vmatpush1.bf16.msra.mxu0 %v5840
        %8060 = vmatprep.subr.bf16.mxu0 %v5845
        %8061 = vmatpush1.bf16.msra.mxu0 %v5844
        %8062 = vmatprep.subr.bf16.mxu0 %v5849
        %8063 = vmatpush1.bf16.msra.mxu0 %v5848
        %8064 = vmatprep.subr.bf16.mxu0 %v5853
        %8065 = vmatpush1.bf16.msra.mxu0 %v5852
        %8066 = vmatprep.subr.bf16.mxu0 %v5857
        %8067 = vmatpush1.bf16.msra.mxu0 %v5856
        %8068 = vmatprep.subr.bf16.mxu0 %v5861
        %8069 = vmatpush1.bf16.msra.mxu0 %v5860
        %8070 = vmatprep.subr.bf16.mxu0 %v5865
        %8071 = vmatpush1.bf16.msra.mxu0 %v5864
        %8072 = vmatprep.subr.bf16.mxu0 %v5869
        %8073 = vmatpush1.bf16.msra.mxu0 %v5868
        %8074 = vmatprep.subr.bf16.mxu0 %v5873
        %8075 = vmatpush1.bf16.msra.mxu0 %v5872
        %8076 = vmatprep.subr.bf16.mxu0 %v5877
        %8077 = vmatpush1.bf16.msra.mxu0 %v5876
        %8078 = vmatprep.subr.bf16.mxu0 %v5881
        %8079 = vmatpush1.bf16.msra.mxu0 %v5880
        %8080 = vmatprep.mubr.bf16.mxu0 %v6300
        %8081 = vmatmul.mubr.bf16.gmra.mrb[0].mxu0 %v6293
        %v8082 = vpop.f32.mrb[0].mxu0
        %v8083 = vadd.f32 0.0, %v8082
        %v8084 = vpop.f32.mrb[0].mxu0
        %v8085 = vadd.f32 0.0, %v8084
        %v8086 = vpop.f32.mrb[0].mxu0
        %v8087 = vpop.f32.mrb[0].mxu0
        %8088 = vdwg.mxu0
        %8089 = vmatprep.subr.bf16.mxu0 %v5885
        %8090 = vmatpush1.bf16.msra.mxu0 %v5884
        %8091 = vmatprep.subr.bf16.mxu0 %v5889
        %8092 = vmatpush1.bf16.msra.mxu0 %v5888
        %8093 = vmatprep.subr.bf16.mxu0 %v5893
        %8094 = vmatpush1.bf16.msra.mxu0 %v5892
        %8095 = vmatprep.subr.bf16.mxu0 %v5897
        %8096 = vmatpush1.bf16.msra.mxu0 %v5896
        %8097 = vmatprep.subr.bf16.mxu0 %v5901
        %8098 = vmatpush1.bf16.msra.mxu0 %v5900
        %8099 = vmatprep.subr.bf16.mxu0 %v5905
        %8100 = vmatpush1.bf16.msra.mxu0 %v5904
        %8101 = vmatprep.subr.bf16.mxu0 %v5909
        %8102 = vmatpush1.bf16.msra.mxu0 %v5908
        %8103 = vmatprep.subr.bf16.mxu0 %v5913
        %8104 = vmatpush1.bf16.msra.mxu0 %v5912
        %8105 = vmatprep.subr.bf16.mxu0 0
        %8106 = vmatpush1.bf16.msra.mxu0 0
        %8107 = vmatprep.subr.bf16.mxu0 0
        %8108 = vmatpush1.bf16.msra.mxu0 0
        %8109 = vmatprep.subr.bf16.mxu0 0
        %8110 = vmatpush1.bf16.msra.mxu0 0
        %8111 = vmatprep.subr.bf16.mxu0 0
        %8112 = vmatpush1.bf16.msra.mxu0 0
        %8113 = vmatprep.subr.bf16.mxu0 0
        %8114 = vmatpush1.bf16.msra.mxu0 0
        %8115 = vmatprep.subr.bf16.mxu0 0
        %8116 = vmatpush1.bf16.msra.mxu0 0
        %8117 = vmatprep.subr.bf16.mxu0 0
        %8118 = vmatpush1.bf16.msra.mxu0 0
        %8119 = vmatprep.subr.bf16.mxu0 0
        %8120 = vmatpush1.bf16.msra.mxu0 0
        %8121 = vmatprep.mubr.bf16.mxu0 0
        %8122 = vmatmul.mubr.bf16.gmra.mrb[0].mxu0 %v6307
        %v8123 = vpop.f32.mrb[0].mxu0
        %v8124 = vadd.f32 %v8083, %v8123
        %v8125 = vpop.f32.mrb[0].mxu0
        %v8126 = vadd.f32 %v8085, %v8125
        %v8127 = vpop.f32.mrb[0].mxu0
        %v8128 = vpop.f32.mrb[0].mxu0
        %8129 = vdwg.mxu0
        %8130 = vmatprep.subr.bf16.mxu0 %v5823
        %8131 = vmatpush1.bf16.msra.mxu0 %v5822
        %8132 = vmatprep.subr.bf16.mxu0 %v5827
        %8133 = vmatpush1.bf16.msra.mxu0 %v5826
        %8134 = vmatprep.subr.bf16.mxu0 %v5831
        %8135 = vmatpush1.bf16.msra.mxu0 %v5830
        %8136 = vmatprep.subr.bf16.mxu0 %v5835
        %8137 = vmatpush1.bf16.msra.mxu0 %v5834
        %8138 = vmatprep.subr.bf16.mxu0 %v5839
        %8139 = vmatpush1.bf16.msra.mxu0 %v5838
        %8140 = vmatprep.subr.bf16.mxu0 %v5843
        %8141 = vmatpush1.bf16.msra.mxu0 %v5842
        %8142 = vmatprep.subr.bf16.mxu0 %v5847
        %8143 = vmatpush1.bf16.msra.mxu0 %v5846
        %8144 = vmatprep.subr.bf16.mxu0 %v5851
        %8145 = vmatpush1.bf16.msra.mxu0 %v5850
        %8146 = vmatprep.subr.bf16.mxu0 %v5855
        %8147 = vmatpush1.bf16.msra.mxu0 %v5854
        %8148 = vmatprep.subr.bf16.mxu0 %v5859
        %8149 = vmatpush1.bf16.msra.mxu0 %v5858
        %8150 = vmatprep.subr.bf16.mxu0 %v5863
        %8151 = vmatpush1.bf16.msra.mxu0 %v5862
        %8152 = vmatprep.subr.bf16.mxu0 %v5867
        %8153 = vmatpush1.bf16.msra.mxu0 %v5866
        %8154 = vmatprep.subr.bf16.mxu0 %v5871
        %8155 = vmatpush1.bf16.msra.mxu0 %v5870
        %8156 = vmatprep.subr.bf16.mxu0 %v5875
        %8157 = vmatpush1.bf16.msra.mxu0 %v5874
        %8158 = vmatprep.subr.bf16.mxu0 %v5879
        %8159 = vmatpush1.bf16.msra.mxu0 %v5878
        %8160 = vmatprep.subr.bf16.mxu0 %v5883
        %8161 = vmatpush1.bf16.msra.mxu0 %v5882
        %8162 = vmatprep.mubr.bf16.mxu0 %v6300
        %8163 = vmatmul.mubr.bf16.gmra.mrb[0].mxu0 %v6293
        %v8164 = vpop.f32.mrb[0].mxu0
        %v8165 = vadd.f32 0.0, %v8164
        %v8166 = vpop.f32.mrb[0].mxu0
        %v8167 = vadd.f32 0.0, %v8166
        %v8168 = vpop.f32.mrb[0].mxu0
        %v8169 = vpop.f32.mrb[0].mxu0
        %8170 = vdwg.mxu0
        %8171 = vmatprep.subr.bf16.mxu0 %v5887
        %8172 = vmatpush1.bf16.msra.mxu0 %v5886
        %8173 = vmatprep.subr.bf16.mxu0 %v5891
        %8174 = vmatpush1.bf16.msra.mxu0 %v5890
        %8175 = vmatprep.subr.bf16.mxu0 %v5895
        %8176 = vmatpush1.bf16.msra.mxu0 %v5894
        %8177 = vmatprep.subr.bf16.mxu0 %v5899
        %8178 = vmatpush1.bf16.msra.mxu0 %v5898
        %8179 = vmatprep.subr.bf16.mxu0 %v5903
        %8180 = vmatpush1.bf16.msra.mxu0 %v5902
        %8181 = vmatprep.subr.bf16.mxu0 %v5907
        %8182 = vmatpush1.bf16.msra.mxu0 %v5906
        %8183 = vmatprep.subr.bf16.mxu0 %v5911
        %8184 = vmatpush1.bf16.msra.mxu0 %v5910
        %8185 = vmatprep.subr.bf16.mxu0 %v5915
        %8186 = vmatpush1.bf16.msra.mxu0 %v5914
        %8187 = vmatprep.subr.bf16.mxu0 0
        %8188 = vmatpush1.bf16.msra.mxu0 0
        %8189 = vmatprep.subr.bf16.mxu0 0
        %8190 = vmatpush1.bf16.msra.mxu0 0
        %8191 = vmatprep.subr.bf16.mxu0 0
        %8192 = vmatpush1.bf16.msra.mxu0 0
        %8193 = vmatprep.subr.bf16.mxu0 0
        %8194 = vmatpush1.bf16.msra.mxu0 0
        %8195 = vmatprep.subr.bf16.mxu0 0
        %8196 = vmatpush1.bf16.msra.mxu0 0
        %8197 = vmatprep.subr.bf16.mxu0 0
        %8198 = vmatpush1.bf16.msra.mxu0 0
        %8199 = vmatprep.subr.bf16.mxu0 0
        %8200 = vmatpush1.bf16.msra.mxu0 0
        %8201 = vmatprep.subr.bf16.mxu0 0
        %8202 = vmatpush1.bf16.msra.mxu0 0
        %8203 = vmatprep.mubr.bf16.mxu0 0
        %8204 = vmatmul.mubr.bf16.gmra.mrb[0].mxu0 %v6307
        %v8205 = vpop.f32.mrb[0].mxu0
        %v8206 = vadd.f32 %v8165, %v8205
        %v8207 = vpop.f32.mrb[0].mxu0
        %v8208 = vadd.f32 %v8167, %v8207
        %v8209 = vpop.f32.mrb[0].mxu0
        %v8210 = vpop.f32.mrb[0].mxu0
        %8211 = vdwg.mxu0
        %v8212 = vadd.f32 %v7960, %v8124
        %v8213 = vadd.f32 %v7962, %v8126
        %v8214 = vadd.f32 %v8042, %v8206
        %v8215 = vadd.f32 %v8044, %v8208
        %8216 = vmatprep.subr.bf16.mxu0 %v6600
        %8217 = vmatpush1.bf16.msra.mxu0 %v6599
        %8218 = vmatprep.subr.bf16.mxu0 %v6604
        %8219 = vmatpush1.bf16.msra.mxu0 %v6603
        %8220 = vmatprep.subr.bf16.mxu0 %v6608
        %8221 = vmatpush1.bf16.msra.mxu0 %v6607
        %8222 = vmatprep.subr.bf16.mxu0 %v6612
        %8223 = vmatpush1.bf16.msra.mxu0 %v6611
        %8224 = vmatprep.subr.bf16.mxu0 %v6616
        %8225 = vmatpush1.bf16.msra.mxu0 %v6615
        %8226 = vmatprep.subr.bf16.mxu0 %v6620
        %8227 = vmatpush1.bf16.msra.mxu0 %v6619
        %8228 = vmatprep.subr.bf16.mxu0 %v6624
        %8229 = vmatpush1.bf16.msra.mxu0 %v6623
        %8230 = vmatprep.subr.bf16.mxu0 %v6628
        %8231 = vmatpush1.bf16.msra.mxu0 %v6627
        %8232 = vmatprep.subr.bf16.mxu0 %v6632
        %8233 = vmatpush1.bf16.msra.mxu0 %v6631
        %8234 = vmatprep.subr.bf16.mxu0 %v6636
        %8235 = vmatpush1.bf16.msra.mxu0 %v6635
        %8236 = vmatprep.subr.bf16.mxu0 %v6640
        %8237 = vmatpush1.bf16.msra.mxu0 %v6639
        %8238 = vmatprep.subr.bf16.mxu0 %v6644
        %8239 = vmatpush1.bf16.msra.mxu0 %v6643
        %8240 = vmatprep.subr.bf16.mxu0 %v6648
        %8241 = vmatpush1.bf16.msra.mxu0 %v6647
        %8242 = vmatprep.subr.bf16.mxu0 %v6652
        %8243 = vmatpush1.bf16.msra.mxu0 %v6651
        %8244 = vmatprep.subr.bf16.mxu0 %v6656
        %8245 = vmatpush1.bf16.msra.mxu0 %v6655
        %8246 = vmatprep.subr.bf16.mxu0 %v6660
        %8247 = vmatpush1.bf16.msra.mxu0 %v6659
        %8248 = vmatprep.mubr.bf16.mxu0 %v7067
        %8249 = vmatmul.mubr.bf16.gmra.mrb[0].mxu0 %v7066
        %v8250 = vpop.f32.mrb[0].mxu0
        %v8251 = vadd.f32 0.0, %v8250
        %v8252 = vpop.f32.mrb[0].mxu0
        %v8253 = vadd.f32 0.0, %v8252
        %v8254 = vpop.f32.mrb[0].mxu0
        %v8255 = vpop.f32.mrb[0].mxu0
        %8256 = vdwg.mxu0
        %8257 = vmatprep.subr.bf16.mxu0 %v6664
        %8258 = vmatpush1.bf16.msra.mxu0 %v6663
        %8259 = vmatprep.subr.bf16.mxu0 %v6668
        %8260 = vmatpush1.bf16.msra.mxu0 %v6667
        %8261 = vmatprep.subr.bf16.mxu0 %v6672
        %8262 = vmatpush1.bf16.msra.mxu0 %v6671
        %8263 = vmatprep.subr.bf16.mxu0 %v6676
        %8264 = vmatpush1.bf16.msra.mxu0 %v6675
        %8265 = vmatprep.subr.bf16.mxu0 %v6680
        %8266 = vmatpush1.bf16.msra.mxu0 %v6679
        %8267 = vmatprep.subr.bf16.mxu0 %v6684
        %8268 = vmatpush1.bf16.msra.mxu0 %v6683
        %8269 = vmatprep.subr.bf16.mxu0 %v6688
        %8270 = vmatpush1.bf16.msra.mxu0 %v6687
        %8271 = vmatprep.subr.bf16.mxu0 %v6692
        %8272 = vmatpush1.bf16.msra.mxu0 %v6691
        %8273 = vmatprep.subr.bf16.mxu0 0
        %8274 = vmatpush1.bf16.msra.mxu0 0
        %8275 = vmatprep.subr.bf16.mxu0 0
        %8276 = vmatpush1.bf16.msra.mxu0 0
        %8277 = vmatprep.subr.bf16.mxu0 0
        %8278 = vmatpush1.bf16.msra.mxu0 0
        %8279 = vmatprep.subr.bf16.mxu0 0
        %8280 = vmatpush1.bf16.msra.mxu0 0
        %8281 = vmatprep.subr.bf16.mxu0 0
        %8282 = vmatpush1.bf16.msra.mxu0 0
        %8283 = vmatprep.subr.bf16.mxu0 0
        %8284 = vmatpush1.bf16.msra.mxu0 0
        %8285 = vmatprep.subr.bf16.mxu0 0
        %8286 = vmatpush1.bf16.msra.mxu0 0
        %8287 = vmatprep.subr.bf16.mxu0 0
        %8288 = vmatpush1.bf16.msra.mxu0 0
        %8289 = vmatprep.mubr.bf16.mxu0 0
        %8290 = vmatmul.mubr.bf16.gmra.mrb[0].mxu0 %v7068
        %v8291 = vpop.f32.mrb[0].mxu0
        %v8292 = vadd.f32 %v8251, %v8291
        %v8293 = vpop.f32.mrb[0].mxu0
        %v8294 = vadd.f32 %v8253, %v8293
        %v8295 = vpop.f32.mrb[0].mxu0
        %v8296 = vpop.f32.mrb[0].mxu0
        %8297 = vdwg.mxu0
        %8298 = vmatprep.subr.bf16.mxu0 %v6602
        %8299 = vmatpush1.bf16.msra.mxu0 %v6601
        %8300 = vmatprep.subr.bf16.mxu0 %v6606
        %8301 = vmatpush1.bf16.msra.mxu0 %v6605
        %8302 = vmatprep.subr.bf16.mxu0 %v6610
        %8303 = vmatpush1.bf16.msra.mxu0 %v6609
        %8304 = vmatprep.subr.bf16.mxu0 %v6614
        %8305 = vmatpush1.bf16.msra.mxu0 %v6613
        %8306 = vmatprep.subr.bf16.mxu0 %v6618
        %8307 = vmatpush1.bf16.msra.mxu0 %v6617
        %8308 = vmatprep.subr.bf16.mxu0 %v6622
        %8309 = vmatpush1.bf16.msra.mxu0 %v6621
        %8310 = vmatprep.subr.bf16.mxu0 %v6626
        %8311 = vmatpush1.bf16.msra.mxu0 %v6625
        %8312 = vmatprep.subr.bf16.mxu0 %v6630
        %8313 = vmatpush1.bf16.msra.mxu0 %v6629
        %8314 = vmatprep.subr.bf16.mxu0 %v6634
        %8315 = vmatpush1.bf16.msra.mxu0 %v6633
        %8316 = vmatprep.subr.bf16.mxu0 %v6638
        %8317 = vmatpush1.bf16.msra.mxu0 %v6637
        %8318 = vmatprep.subr.bf16.mxu0 %v6642
        %8319 = vmatpush1.bf16.msra.mxu0 %v6641
        %8320 = vmatprep.subr.bf16.mxu0 %v6646
        %8321 = vmatpush1.bf16.msra.mxu0 %v6645
        %8322 = vmatprep.subr.bf16.mxu0 %v6650
        %8323 = vmatpush1.bf16.msra.mxu0 %v6649
        %8324 = vmatprep.subr.bf16.mxu0 %v6654
        %8325 = vmatpush1.bf16.msra.mxu0 %v6653
        %8326 = vmatprep.subr.bf16.mxu0 %v6658
        %8327 = vmatpush1.bf16.msra.mxu0 %v6657
        %8328 = vmatprep.subr.bf16.mxu0 %v6662
        %8329 = vmatpush1.bf16.msra.mxu0 %v6661
        %8330 = vmatprep.mubr.bf16.mxu0 %v7067
        %8331 = vmatmul.mubr.bf16.gmra.mrb[0].mxu0 %v7066
        %v8332 = vpop.f32.mrb[0].mxu0
        %v8333 = vadd.f32 0.0, %v8332
        %v8334 = vpop.f32.mrb[0].mxu0
        %v8335 = vadd.f32 0.0, %v8334
        %v8336 = vpop.f32.mrb[0].mxu0
        %v8337 = vpop.f32.mrb[0].mxu0
        %8338 = vdwg.mxu0
        %8339 = vmatprep.subr.bf16.mxu0 %v6666
        %8340 = vmatpush1.bf16.msra.mxu0 %v6665
        %8341 = vmatprep.subr.bf16.mxu0 %v6670
        %8342 = vmatpush1.bf16.msra.mxu0 %v6669
        %8343 = vmatprep.subr.bf16.mxu0 %v6674
        %8344 = vmatpush1.bf16.msra.mxu0 %v6673
        %8345 = vmatprep.subr.bf16.mxu0 %v6678
        %8346 = vmatpush1.bf16.msra.mxu0 %v6677
        %8347 = vmatprep.subr.bf16.mxu0 %v6682
        %8348 = vmatpush1.bf16.msra.mxu0 %v6681
        %8349 = vmatprep.subr.bf16.mxu0 %v6686
        %8350 = vmatpush1.bf16.msra.mxu0 %v6685
        %8351 = vmatprep.subr.bf16.mxu0 %v6690
        %8352 = vmatpush1.bf16.msra.mxu0 %v6689
        %8353 = vmatprep.subr.bf16.mxu0 %v6694
        %8354 = vmatpush1.bf16.msra.mxu0 %v6693
        %8355 = vmatprep.subr.bf16.mxu0 0
        %8356 = vmatpush1.bf16.msra.mxu0 0
        %8357 = vmatprep.subr.bf16.mxu0 0
        %8358 = vmatpush1.bf16.msra.mxu0 0
        %8359 = vmatprep.subr.bf16.mxu0 0
        %8360 = vmatpush1.bf16.msra.mxu0 0
        %8361 = vmatprep.subr.bf16.mxu0 0
        %8362 = vmatpush1.bf16.msra.mxu0 0
        %8363 = vmatprep.subr.bf16.mxu0 0
        %8364 = vmatpush1.bf16.msra.mxu0 0
        %8365 = vmatprep.subr.bf16.mxu0 0
        %8366 = vmatpush1.bf16.msra.mxu0 0
        %8367 = vmatprep.subr.bf16.mxu0 0
        %8368 = vmatpush1.bf16.msra.mxu0 0
        %8369 = vmatprep.subr.bf16.mxu0 0
        %8370 = vmatpush1.bf16.msra.mxu0 0
        %8371 = vmatprep.mubr.bf16.mxu0 0
        %8372 = vmatmul.mubr.bf16.gmra.mrb[0].mxu0 %v7068
        %v8373 = vpop.f32.mrb[0].mxu0
        %v8374 = vadd.f32 %v8333, %v8373
        %v8375 = vpop.f32.mrb[0].mxu0
        %v8376 = vadd.f32 %v8335, %v8375
        %v8377 = vpop.f32.mrb[0].mxu0
        %v8378 = vpop.f32.mrb[0].mxu0
        %8379 = vdwg.mxu0
        %v8380 = vadd.f32 %v8212, %v8292
        %v8381 = vadd.f32 %v8213, %v8294
        %v8382 = vadd.f32 %v8214, %v8374
        %v8383 = vadd.f32 %v8215, %v8376
        %v8384 = vld [vmem:[%s3891] sm:$0x66]
        %v8385 = vld [vmem:[%s3891 + $0x8] sm:$0x6]
        %v8388 = vunpack.c.l.b16 %v8384
        %v8389 = vunpack.c.h.b16 %v8384
        %v8390 = vunpack.c.l.b16 %v8385
        %v8391 = vpack.c.b16 %v8388, %v8388
        %v8392 = vpack.c.b16 %v8389, %v8389
        %v8393 = vpack.c.b16 %v8390, %v8390
        %v8394 = vrot.slane %v8391, 1
        %v8395 = vrot.slane %v8392, 1
        %v8396 = vrot.slane %v8393, 1
        %8400 = vmatprep.subr.bf16.mxu0 %v7361
        %8401 = vmatpush1.bf16.msra.mxu0 %v7360
        %8402 = vmatprep.subr.bf16.mxu0 %v7365
        %8403 = vmatpush1.bf16.msra.mxu0 %v7364
        %8404 = vmatprep.subr.bf16.mxu0 %v7369
        %8405 = vmatpush1.bf16.msra.mxu0 %v7368
        %8406 = vmatprep.subr.bf16.mxu0 %v7373
        %8407 = vmatpush1.bf16.msra.mxu0 %v7372
        %8408 = vmatprep.subr.bf16.mxu0 %v7377
        %8409 = vmatpush1.bf16.msra.mxu0 %v7376
        %8410 = vmatprep.subr.bf16.mxu0 %v7381
        %8411 = vmatpush1.bf16.msra.mxu0 %v7380
        %8412 = vmatprep.subr.bf16.mxu0 %v7385
        %8413 = vmatpush1.bf16.msra.mxu0 %v7384
        %8414 = vmatprep.subr.bf16.mxu0 %v7389
        %8415 = vmatpush1.bf16.msra.mxu0 %v7388
        %8416 = vmatprep.subr.bf16.mxu0 %v7393
        %8417 = vmatpush1.bf16.msra.mxu0 %v7392
        %8418 = vmatprep.subr.bf16.mxu0 %v7397
        %8419 = vmatpush1.bf16.msra.mxu0 %v7396
        %8420 = vmatprep.subr.bf16.mxu0 %v7401
        %8421 = vmatpush1.bf16.msra.mxu0 %v7400
        %8422 = vmatprep.subr.bf16.mxu0 %v7405
        %8423 = vmatpush1.bf16.msra.mxu0 %v7404
        %8424 = vmatprep.subr.bf16.mxu0 %v7409
        %8425 = vmatpush1.bf16.msra.mxu0 %v7408
        %8426 = vmatprep.subr.bf16.mxu0 %v7413
        %8427 = vmatpush1.bf16.msra.mxu0 %v7412
        %8428 = vmatprep.subr.bf16.mxu0 %v7417
        %8429 = vmatpush1.bf16.msra.mxu0 %v7416
        %8430 = vmatprep.subr.bf16.mxu0 %v7421
        %8431 = vmatpush1.bf16.msra.mxu0 %v7420
        %8432 = vmatprep.mubr.bf16.mxu0 %v8395
        %8433 = vmatmul.mubr.bf16.gmra.mrb[0].mxu0 %v8394
        %v8434 = vpop.f32.mrb[0].mxu0
        %v8435 = vadd.f32 0.0, %v8434
        %v8436 = vpop.f32.mrb[0].mxu0
        %v8437 = vadd.f32 0.0, %v8436
        %v8438 = vpop.f32.mrb[0].mxu0
        %v8439 = vpop.f32.mrb[0].mxu0
        %8440 = vdwg.mxu0
        %8441 = vmatprep.subr.bf16.mxu0 %v7425
        %8442 = vmatpush1.bf16.msra.mxu0 %v7424
        %8443 = vmatprep.subr.bf16.mxu0 %v7429
        %8444 = vmatpush1.bf16.msra.mxu0 %v7428
        %8445 = vmatprep.subr.bf16.mxu0 %v7433
        %8446 = vmatpush1.bf16.msra.mxu0 %v7432
        %8447 = vmatprep.subr.bf16.mxu0 %v7437
        %8448 = vmatpush1.bf16.msra.mxu0 %v7436
        %8449 = vmatprep.subr.bf16.mxu0 %v7441
        %8450 = vmatpush1.bf16.msra.mxu0 %v7440
        %8451 = vmatprep.subr.bf16.mxu0 %v7445
        %8452 = vmatpush1.bf16.msra.mxu0 %v7444
        %8453 = vmatprep.subr.bf16.mxu0 %v7449
        %8454 = vmatpush1.bf16.msra.mxu0 %v7448
        %8455 = vmatprep.subr.bf16.mxu0 %v7453
        %8456 = vmatpush1.bf16.msra.mxu0 %v7452
        %8457 = vmatprep.subr.bf16.mxu0 0
        %8458 = vmatpush1.bf16.msra.mxu0 0
        %8459 = vmatprep.subr.bf16.mxu0 0
        %8460 = vmatpush1.bf16.msra.mxu0 0
        %8461 = vmatprep.subr.bf16.mxu0 0
        %8462 = vmatpush1.bf16.msra.mxu0 0
        %8463 = vmatprep.subr.bf16.mxu0 0
        %8464 = vmatpush1.bf16.msra.mxu0 0
        %8465 = vmatprep.subr.bf16.mxu0 0
        %8466 = vmatpush1.bf16.msra.mxu0 0
        %8467 = vmatprep.subr.bf16.mxu0 0
        %8468 = vmatpush1.bf16.msra.mxu0 0
        %8469 = vmatprep.subr.bf16.mxu0 0
        %8470 = vmatpush1.bf16.msra.mxu0 0
        %8471 = vmatprep.subr.bf16.mxu0 0
        %8472 = vmatpush1.bf16.msra.mxu0 0
        %8473 = vmatprep.mubr.bf16.mxu0 0
        %8474 = vmatmul.mubr.bf16.gmra.mrb[0].mxu0 %v8396
        %v8475 = vpop.f32.mrb[0].mxu0
        %v8476 = vadd.f32 %v8435, %v8475
        %v8477 = vpop.f32.mrb[0].mxu0
        %v8478 = vadd.f32 %v8437, %v8477
        %v8479 = vpop.f32.mrb[0].mxu0
        %v8480 = vpop.f32.mrb[0].mxu0
        %8481 = vdwg.mxu0
        %8482 = vmatprep.subr.bf16.mxu0 %v7363
        %8483 = vmatpush1.bf16.msra.mxu0 %v7362
        %8484 = vmatprep.subr.bf16.mxu0 %v7367
        %8485 = vmatpush1.bf16.msra.mxu0 %v7366
        %8486 = vmatprep.subr.bf16.mxu0 %v7371
        %8487 = vmatpush1.bf16.msra.mxu0 %v7370
        %8488 = vmatprep.subr.bf16.mxu0 %v7375
        %8489 = vmatpush1.bf16.msra.mxu0 %v7374
        %8490 = vmatprep.subr.bf16.mxu0 %v7379
        %8491 = vmatpush1.bf16.msra.mxu0 %v7378
        %8492 = vmatprep.subr.bf16.mxu0 %v7383
        %8493 = vmatpush1.bf16.msra.mxu0 %v7382
        %8494 = vmatprep.subr.bf16.mxu0 %v7387
        %8495 = vmatpush1.bf16.msra.mxu0 %v7386
        %8496 = vmatprep.subr.bf16.mxu0 %v7391
        %8497 = vmatpush1.bf16.msra.mxu0 %v7390
        %8498 = vmatprep.subr.bf16.mxu0 %v7395
        %8499 = vmatpush1.bf16.msra.mxu0 %v7394
        %8500 = vmatprep.subr.bf16.mxu0 %v7399
        %8501 = vmatpush1.bf16.msra.mxu0 %v7398
        %8502 = vmatprep.subr.bf16.mxu0 %v7403
        %8503 = vmatpush1.bf16.msra.mxu0 %v7402
        %8504 = vmatprep.subr.bf16.mxu0 %v7407
        %8505 = vmatpush1.bf16.msra.mxu0 %v7406
        %8506 = vmatprep.subr.bf16.mxu0 %v7411
        %8507 = vmatpush1.bf16.msra.mxu0 %v7410
        %8508 = vmatprep.subr.bf16.mxu0 %v7415
        %8509 = vmatpush1.bf16.msra.mxu0 %v7414
        %8510 = vmatprep.subr.bf16.mxu0 %v7419
        %8511 = vmatpush1.bf16.msra.mxu0 %v7418
        %8512 = vmatprep.subr.bf16.mxu0 %v7423
        %8513 = vmatpush1.bf16.msra.mxu0 %v7422
        %8514 = vmatprep.mubr.bf16.mxu0 %v8395
        %8515 = vmatmul.mubr.bf16.gmra.mrb[0].mxu0 %v8394
        %v8516 = vpop.f32.mrb[0].mxu0
        %v8517 = vadd.f32 0.0, %v8516
        %v8518 = vpop.f32.mrb[0].mxu0
        %v8519 = vadd.f32 0.0, %v8518
        %v8520 = vpop.f32.mrb[0].mxu0
        %v8521 = vpop.f32.mrb[0].mxu0
        %8522 = vdwg.mxu0
        %8523 = vmatprep.subr.bf16.mxu0 %v7427
        %8524 = vmatpush1.bf16.msra.mxu0 %v7426
        %8525 = vmatprep.subr.bf16.mxu0 %v7431
        %8526 = vmatpush1.bf16.msra.mxu0 %v7430
        %8527 = vmatprep.subr.bf16.mxu0 %v7435
        %8528 = vmatpush1.bf16.msra.mxu0 %v7434
        %8529 = vmatprep.subr.bf16.mxu0 %v7439
        %8530 = vmatpush1.bf16.msra.mxu0 %v7438
        %8531 = vmatprep.subr.bf16.mxu0 %v7443
        %8532 = vmatpush1.bf16.msra.mxu0 %v7442
        %8533 = vmatprep.subr.bf16.mxu0 %v7447
        %8534 = vmatpush1.bf16.msra.mxu0 %v7446
        %8535 = vmatprep.subr.bf16.mxu0 %v7451
        %8536 = vmatpush1.bf16.msra.mxu0 %v7450
        %8537 = vmatprep.subr.bf16.mxu0 %v7455
        %8538 = vmatpush1.bf16.msra.mxu0 %v7454
        %8539 = vmatprep.subr.bf16.mxu0 0
        %8540 = vmatpush1.bf16.msra.mxu0 0
        %8541 = vmatprep.subr.bf16.mxu0 0
        %8542 = vmatpush1.bf16.msra.mxu0 0
        %8543 = vmatprep.subr.bf16.mxu0 0
        %8544 = vmatpush1.bf16.msra.mxu0 0
        %8545 = vmatprep.subr.bf16.mxu0 0
        %8546 = vmatpush1.bf16.msra.mxu0 0
        %8547 = vmatprep.subr.bf16.mxu0 0
        %8548 = vmatpush1.bf16.msra.mxu0 0
        %8549 = vmatprep.subr.bf16.mxu0 0
        %8550 = vmatpush1.bf16.msra.mxu0 0
        %8551 = vmatprep.subr.bf16.mxu0 0
        %8552 = vmatpush1.bf16.msra.mxu0 0
        %8553 = vmatprep.subr.bf16.mxu0 0
        %8554 = vmatpush1.bf16.msra.mxu0 0
        %8555 = vmatprep.mubr.bf16.mxu0 0
        %8556 = vmatmul.mubr.bf16.gmra.mrb[0].mxu0 %v8396
        %v8557 = vpop.f32.mrb[0].mxu0
        %v8558 = vadd.f32 %v8517, %v8557
        %v8559 = vpop.f32.mrb[0].mxu0
        %v8560 = vadd.f32 %v8519, %v8559
        %v8561 = vpop.f32.mrb[0].mxu0
        %v8562 = vpop.f32.mrb[0].mxu0
        %8563 = vdwg.mxu0
        %v8564 = vadd.f32 %v8380, %v8476
        %v8565 = vadd.f32 %v8381, %v8478
        %v8566 = vadd.f32 %v8382, %v8558
        %v8567 = vadd.f32 %v8383, %v8560
        %v8568 = vmax.f32 %v7716, %v8564
        %v8569 = vmax.f32 %v7717, %v8565
        %v8570 = vmax.f32 %v7718, %v8566
        %v8571 = vmax.f32 %v7719, %v8567
        %v8572 = vld [vmem:[#allocation10] sm:$0xf]
        %v8574 = vlaneseq
        %v8575 = vshrl.u32 %v8574, 7
        %v8576 = vsub.s32 0, %v8575
        %v8577 = vrot.slane %v8572, %v8576
        %v8578 = vlaneseq
        %v8579 = vshrl.u32 %v8578, 7
        %v8580 = vsub.s32 1, %v8579
        %v8581 = vrot.slane %v8572, %v8580
        %v8582 = vlaneseq
        %v8583 = vshrl.u32 %v8582, 7
        %v8584 = vsub.s32 2, %v8583
        %v8585 = vrot.slane %v8572, %v8584
        %v8586 = vlaneseq
        %v8587 = vshrl.u32 %v8586, 7
        %v8588 = vsub.s32 3, %v8587
        %v8589 = vrot.slane %v8572, %v8588
        %v8594 = vadd.f32 %v8568, %v8577
        %v8595 = vadd.f32 %v8569, %v8581
        %v8596 = vadd.f32 %v8570, %v8585
        %v8597 = vadd.f32 %v8571, %v8589
        %v8598 = vmax.f32 %v8594, 0.0
        %v8599 = vmax.f32 %v8595, 0.0
        %v8600 = vmax.f32 %v8596, 0.0
        %v8601 = vmax.f32 %v8597, 0.0
        %v8602 = vmax.f32 %v8598, %v8600
        %v8603 = vmax.f32 %v8599, %v8601
        %v8604 = vpack.c.bf16 %v8602, %v8602
        %v8605 = vpack.c.bf16 %v8603, %v8603
        %v8608 = vcombine.low %v8604, %v8605
        %v8610 = vunpack.c.l.s4 1983009808
        %v8611 = vunpack.c.0.s8 %v8610
        %v8612 = vlaneseq
        %v8613 = vshrl.u32 %v8612, 7
        %v8614 = vsub.s32 %v8611, %v8613
        %v8615 = vrot.slane %v8608, %v8614
        %8617 = vst [vmem:[#allocation3] sm:$0xf] %v8615
        %v8618 = vld [vmem:[#allocation3] sm:$0x5]
        %v8619 = vld [vmem:[#allocation12] sm:$0xff]
        %v8620 = vld [vmem:[#allocation12 + $0x8] sm:$0xff]
        %v8621 = vld [vmem:[#allocation12 + $0x10] sm:$0xff]
        %v8622 = vld [vmem:[#allocation12 + $0x18] sm:$0xff]
        %v8623 = vld [vmem:[#allocation12 + $0x20] sm:$0xff]
        %v8624 = vld [vmem:[#allocation12 + $0x28] sm:$0xff]
        %v8625 = vld [vmem:[#allocation12 + $0x30] sm:$0xff]
        %v8626 = vld [vmem:[#allocation12 + $0x38] sm:$0xff]
        %v8627 = vld [vmem:[#allocation12 + $0x40] sm:$0xff]
        %v8628 = vld [vmem:[#allocation12 + $0x48] sm:$0xff]
        %v8629 = vld [vmem:[#allocation12 + $0x50] sm:$0xff]
        %v8630 = vld [vmem:[#allocation12 + $0x58] sm:$0xff]
        %v8631 = vld [vmem:[#allocation12 + $0x60] sm:$0xff]
        %v8632 = vld [vmem:[#allocation12 + $0x68] sm:$0xff]
        %v8633 = vld [vmem:[#allocation12 + $0x70] sm:$0xff]
        %v8634 = vld [vmem:[#allocation12 + $0x78] sm:$0xff]
        %v8635 = vld [vmem:[#allocation12 + $0x80] sm:$0xff]
        %v8636 = vld [vmem:[#allocation12 + $0x88] sm:$0xff]
        %v8637 = vld [vmem:[#allocation12 + $0x90] sm:$0xff]
        %v8638 = vld [vmem:[#allocation12 + $0x98] sm:$0xff]
        %v8639 = vld [vmem:[#allocation12 + $0xa0] sm:$0xff]
        %v8640 = vld [vmem:[#allocation12 + $0xa8] sm:$0xff]
        %v8641 = vld [vmem:[#allocation12 + $0xb0] sm:$0xff]
        %v8642 = vld [vmem:[#allocation12 + $0xb8] sm:$0xff]
        %v8643 = vld [vmem:[#allocation12 + $0xc0] sm:$0xff]
        %v8644 = vld [vmem:[#allocation12 + $0xc8] sm:$0xff]
        %v8645 = vld [vmem:[#allocation12 + $0xd0] sm:$0xff]
        %v8646 = vld [vmem:[#allocation12 + $0xd8] sm:$0xff]
        %v8647 = vld [vmem:[#allocation12 + $0xe0] sm:$0xff]
        %v8648 = vld [vmem:[#allocation12 + $0xe8] sm:$0xff]
        %v8649 = vld [vmem:[#allocation12 + $0xf0] sm:$0xff]
        %v8650 = vld [vmem:[#allocation12 + $0xf8] sm:$0xff]
        %v8651 = vld [vmem:[#allocation12 + $0x100] sm:$0xff]
        %v8652 = vld [vmem:[#allocation12 + $0x108] sm:$0xff]
        %v8653 = vld [vmem:[#allocation12 + $0x110] sm:$0xff]
        %v8654 = vld [vmem:[#allocation12 + $0x118] sm:$0xff]
        %v8655 = vld [vmem:[#allocation12 + $0x120] sm:$0xff]
        %v8656 = vld [vmem:[#allocation12 + $0x128] sm:$0xff]
        %v8657 = vld [vmem:[#allocation12 + $0x130] sm:$0xff]
        %v8658 = vld [vmem:[#allocation12 + $0x138] sm:$0xff]
        %v8659 = vld [vmem:[#allocation12 + $0x140] sm:$0xff]
        %v8660 = vld [vmem:[#allocation12 + $0x148] sm:$0xff]
        %v8661 = vld [vmem:[#allocation12 + $0x150] sm:$0xff]
        %v8662 = vld [vmem:[#allocation12 + $0x158] sm:$0xff]
        %v8663 = vld [vmem:[#allocation12 + $0x160] sm:$0xff]
        %v8664 = vld [vmem:[#allocation12 + $0x168] sm:$0xff]
        %v8665 = vld [vmem:[#allocation12 + $0x170] sm:$0xff]
        %v8666 = vld [vmem:[#allocation12 + $0x178] sm:$0xff]
        %v8667 = vld [vmem:[#allocation12 + $0x180] sm:$0xff]
        %v8668 = vld [vmem:[#allocation12 + $0x188] sm:$0xff]
        %v8669 = vld [vmem:[#allocation12 + $0x190] sm:$0xff]
        %v8670 = vld [vmem:[#allocation12 + $0x198] sm:$0xff]
        %v8671 = vld [vmem:[#allocation12 + $0x1a0] sm:$0xff]
        %v8672 = vld [vmem:[#allocation12 + $0x1a8] sm:$0xff]
        %v8673 = vld [vmem:[#allocation12 + $0x1b0] sm:$0xff]
        %v8674 = vld [vmem:[#allocation12 + $0x1b8] sm:$0xff]
        %v8675 = vld [vmem:[#allocation12 + $0x1c0] sm:$0xff]
        %v8676 = vld [vmem:[#allocation12 + $0x1c8] sm:$0xff]
        %v8677 = vld [vmem:[#allocation12 + $0x1d0] sm:$0xff]
        %v8678 = vld [vmem:[#allocation12 + $0x1d8] sm:$0xff]
        %v8679 = vld [vmem:[#allocation12 + $0x1e0] sm:$0xff]
        %v8680 = vld [vmem:[#allocation12 + $0x1e8] sm:$0xff]
        %v8681 = vld [vmem:[#allocation12 + $0x1f0] sm:$0xff]
        %v8682 = vld [vmem:[#allocation12 + $0x1f8] sm:$0xff]
        %v8683 = vld [vmem:[#allocation12 + $0x200] sm:$0xff]
        %v8684 = vld [vmem:[#allocation12 + $0x208] sm:$0xff]
        %v8685 = vld [vmem:[#allocation12 + $0x210] sm:$0xff]
        %v8686 = vld [vmem:[#allocation12 + $0x218] sm:$0xff]
        %v8687 = vld [vmem:[#allocation12 + $0x220] sm:$0xff]
        %v8688 = vld [vmem:[#allocation12 + $0x228] sm:$0xff]
        %v8689 = vld [vmem:[#allocation12 + $0x230] sm:$0xff]
        %v8690 = vld [vmem:[#allocation12 + $0x238] sm:$0xff]
        %v8691 = vld [vmem:[#allocation12 + $0x240] sm:$0xff]
        %v8692 = vld [vmem:[#allocation12 + $0x248] sm:$0xff]
        %v8693 = vld [vmem:[#allocation12 + $0x250] sm:$0xff]
        %v8694 = vld [vmem:[#allocation12 + $0x258] sm:$0xff]
        %v8695 = vld [vmem:[#allocation12 + $0x260] sm:$0xff]
        %v8696 = vld [vmem:[#allocation12 + $0x268] sm:$0xff]
        %v8697 = vld [vmem:[#allocation12 + $0x270] sm:$0xff]
        %v8698 = vld [vmem:[#allocation12 + $0x278] sm:$0xff]
        %v8699 = vld [vmem:[#allocation12 + $0x280] sm:$0xff]
        %v8700 = vld [vmem:[#allocation12 + $0x288] sm:$0xff]
        %v8701 = vld [vmem:[#allocation12 + $0x290] sm:$0xff]
        %v8702 = vld [vmem:[#allocation12 + $0x298] sm:$0xff]
        %v8703 = vld [vmem:[#allocation12 + $0x2a0] sm:$0xff]
        %v8704 = vld [vmem:[#allocation12 + $0x2a8] sm:$0xff]
        %v8705 = vld [vmem:[#allocation12 + $0x2b0] sm:$0xff]
        %v8706 = vld [vmem:[#allocation12 + $0x2b8] sm:$0xff]
        %v8707 = vld [vmem:[#allocation12 + $0x2c0] sm:$0xff]
        %v8708 = vld [vmem:[#allocation12 + $0x2c8] sm:$0xff]
        %v8709 = vld [vmem:[#allocation12 + $0x2d0] sm:$0xff]
        %v8710 = vld [vmem:[#allocation12 + $0x2d8] sm:$0xff]
        %v8711 = vld [vmem:[#allocation12 + $0x2e0] sm:$0xff]
        %v8712 = vld [vmem:[#allocation12 + $0x2e8] sm:$0xff]
        %v8713 = vld [vmem:[#allocation12 + $0x2f0] sm:$0xff]
        %v8714 = vld [vmem:[#allocation12 + $0x2f8] sm:$0xff]
        %v8715 = vld [vmem:[#allocation12 + $0x300] sm:$0xff]
        %v8716 = vld [vmem:[#allocation12 + $0x308] sm:$0xff]
        %v8717 = vld [vmem:[#allocation12 + $0x310] sm:$0xff]
        %v8718 = vld [vmem:[#allocation12 + $0x318] sm:$0xff]
        %v8719 = vld [vmem:[#allocation12 + $0x320] sm:$0xff]
        %v8720 = vld [vmem:[#allocation12 + $0x328] sm:$0xff]
        %v8721 = vld [vmem:[#allocation12 + $0x330] sm:$0xff]
        %v8722 = vld [vmem:[#allocation12 + $0x338] sm:$0xff]
        %v8723 = vld [vmem:[#allocation12 + $0x340] sm:$0xff]
        %v8724 = vld [vmem:[#allocation12 + $0x348] sm:$0xff]
        %v8725 = vld [vmem:[#allocation12 + $0x350] sm:$0xff]
        %v8726 = vld [vmem:[#allocation12 + $0x358] sm:$0xff]
        %v8727 = vld [vmem:[#allocation12 + $0x360] sm:$0xff]
        %v8728 = vld [vmem:[#allocation12 + $0x368] sm:$0xff]
        %v8729 = vld [vmem:[#allocation12 + $0x370] sm:$0xff]
        %v8730 = vld [vmem:[#allocation12 + $0x378] sm:$0xff]
        %v8731 = vld [vmem:[#allocation12 + $0x380] sm:$0xff]
        %v8732 = vld [vmem:[#allocation12 + $0x388] sm:$0xff]
        %v8733 = vld [vmem:[#allocation12 + $0x390] sm:$0xff]
        %v8734 = vld [vmem:[#allocation12 + $0x398] sm:$0xff]
        %v8735 = vld [vmem:[#allocation12 + $0x3a0] sm:$0xff]
        %v8736 = vld [vmem:[#allocation12 + $0x3a8] sm:$0xff]
        %v8737 = vld [vmem:[#allocation12 + $0x3b0] sm:$0xff]
        %v8738 = vld [vmem:[#allocation12 + $0x3b8] sm:$0xff]
        %v8739 = vld [vmem:[#allocation12 + $0x3c0] sm:$0xff]
        %v8740 = vld [vmem:[#allocation12 + $0x3c8] sm:$0xff]
        %v8741 = vld [vmem:[#allocation12 + $0x3d0] sm:$0xff]
        %v8742 = vld [vmem:[#allocation12 + $0x3d8] sm:$0xff]
        %v8743 = vld [vmem:[#allocation12 + $0x3e0] sm:$0xff]
        %v8744 = vld [vmem:[#allocation12 + $0x3e8] sm:$0xff]
        %v8745 = vld [vmem:[#allocation12 + $0x3f0] sm:$0xff]
        %v8746 = vld [vmem:[#allocation12 + $0x3f8] sm:$0xff]
        %v8749 = vunpack.c.l.s4 1983009808
        %v8750 = vunpack.c.0.s8 %v8749
        %v8751 = vlaneseq
        %v8752 = vshrl.u32 %v8751, 7
        %v8753 = vsub.s32 %v8750, %v8752
        %v8754 = vrot.slane %v8618, %v8753
        %v8755 = vcombine.high %v8754, %v8754
        %v8757 = vshrl.u32 %v8754, 16
        %v8760 = vshrl.u32 %v8755, 16
        %v8828 = vunpack.c.l.b16 %v8683
        %v8829 = vunpack.c.h.b16 %v8683
        %v8830 = vunpack.c.l.b16 %v8684
        %v8831 = vunpack.c.h.b16 %v8684
        %v8832 = vunpack.c.l.b16 %v8685
        %v8833 = vunpack.c.h.b16 %v8685
        %v8834 = vunpack.c.l.b16 %v8686
        %v8835 = vunpack.c.h.b16 %v8686
        %v8836 = vunpack.c.l.b16 %v8687
        %v8837 = vunpack.c.h.b16 %v8687
        %v8838 = vunpack.c.l.b16 %v8688
        %v8839 = vunpack.c.h.b16 %v8688
        %v8840 = vunpack.c.l.b16 %v8689
        %v8841 = vunpack.c.h.b16 %v8689
        %v8842 = vunpack.c.l.b16 %v8690
        %v8843 = vunpack.c.h.b16 %v8690
        %v8844 = vunpack.c.l.b16 %v8691
        %v8845 = vunpack.c.h.b16 %v8691
        %v8846 = vunpack.c.l.b16 %v8692
        %v8847 = vunpack.c.h.b16 %v8692
        %v8848 = vunpack.c.l.b16 %v8693
        %v8849 = vunpack.c.h.b16 %v8693
        %v8850 = vunpack.c.l.b16 %v8694
        %v8851 = vunpack.c.h.b16 %v8694
        %v8852 = vunpack.c.l.b16 %v8695
        %v8853 = vunpack.c.h.b16 %v8695
        %v8854 = vunpack.c.l.b16 %v8696
        %v8855 = vunpack.c.h.b16 %v8696
        %v8856 = vunpack.c.l.b16 %v8697
        %v8857 = vunpack.c.h.b16 %v8697
        %v8858 = vunpack.c.l.b16 %v8698
        %v8859 = vunpack.c.h.b16 %v8698
        %v8860 = vunpack.c.l.b16 %v8699
        %v8861 = vunpack.c.h.b16 %v8699
        %v8862 = vunpack.c.l.b16 %v8700
        %v8863 = vunpack.c.h.b16 %v8700
        %v8864 = vunpack.c.l.b16 %v8701
        %v8865 = vunpack.c.h.b16 %v8701
        %v8866 = vunpack.c.l.b16 %v8702
        %v8867 = vunpack.c.h.b16 %v8702
        %v8868 = vunpack.c.l.b16 %v8703
        %v8869 = vunpack.c.h.b16 %v8703
        %v8870 = vunpack.c.l.b16 %v8704
        %v8871 = vunpack.c.h.b16 %v8704
        %v8872 = vunpack.c.l.b16 %v8705
        %v8873 = vunpack.c.h.b16 %v8705
        %v8874 = vunpack.c.l.b16 %v8706
        %v8875 = vunpack.c.h.b16 %v8706
        %v8876 = vunpack.c.l.b16 %v8707
        %v8877 = vunpack.c.h.b16 %v8707
        %v8878 = vunpack.c.l.b16 %v8708
        %v8879 = vunpack.c.h.b16 %v8708
        %v8880 = vunpack.c.l.b16 %v8709
        %v8881 = vunpack.c.h.b16 %v8709
        %v8882 = vunpack.c.l.b16 %v8710
        %v8883 = vunpack.c.h.b16 %v8710
        %v8884 = vunpack.c.l.b16 %v8711
        %v8885 = vunpack.c.h.b16 %v8711
        %v8886 = vunpack.c.l.b16 %v8712
        %v8887 = vunpack.c.h.b16 %v8712
        %v8888 = vunpack.c.l.b16 %v8713
        %v8889 = vunpack.c.h.b16 %v8713
        %v8890 = vunpack.c.l.b16 %v8714
        %v8891 = vunpack.c.h.b16 %v8714
        %v8892 = vunpack.c.l.b16 %v8715
        %v8893 = vunpack.c.h.b16 %v8715
        %v8894 = vunpack.c.l.b16 %v8716
        %v8895 = vunpack.c.h.b16 %v8716
        %v8896 = vunpack.c.l.b16 %v8717
        %v8897 = vunpack.c.h.b16 %v8717
        %v8898 = vunpack.c.l.b16 %v8718
        %v8899 = vunpack.c.h.b16 %v8718
        %v8900 = vunpack.c.l.b16 %v8719
        %v8901 = vunpack.c.h.b16 %v8719
        %v8902 = vunpack.c.l.b16 %v8720
        %v8903 = vunpack.c.h.b16 %v8720
        %v8904 = vunpack.c.l.b16 %v8721
        %v8905 = vunpack.c.h.b16 %v8721
        %v8906 = vunpack.c.l.b16 %v8722
        %v8907 = vunpack.c.h.b16 %v8722
        %v8908 = vunpack.c.l.b16 %v8723
        %v8909 = vunpack.c.h.b16 %v8723
        %v8910 = vunpack.c.l.b16 %v8724
        %v8911 = vunpack.c.h.b16 %v8724
        %v8912 = vunpack.c.l.b16 %v8725
        %v8913 = vunpack.c.h.b16 %v8725
        %v8914 = vunpack.c.l.b16 %v8726
        %v8915 = vunpack.c.h.b16 %v8726
        %v8916 = vunpack.c.l.b16 %v8727
        %v8917 = vunpack.c.h.b16 %v8727
        %v8918 = vunpack.c.l.b16 %v8728
        %v8919 = vunpack.c.h.b16 %v8728
        %v8920 = vunpack.c.l.b16 %v8729
        %v8921 = vunpack.c.h.b16 %v8729
        %v8922 = vunpack.c.l.b16 %v8730
        %v8923 = vunpack.c.h.b16 %v8730
        %v8924 = vunpack.c.l.b16 %v8731
        %v8925 = vunpack.c.h.b16 %v8731
        %v8926 = vunpack.c.l.b16 %v8732
        %v8927 = vunpack.c.h.b16 %v8732
        %v8928 = vunpack.c.l.b16 %v8733
        %v8929 = vunpack.c.h.b16 %v8733
        %v8930 = vunpack.c.l.b16 %v8734
        %v8931 = vunpack.c.h.b16 %v8734
        %v8932 = vunpack.c.l.b16 %v8735
        %v8933 = vunpack.c.h.b16 %v8735
        %v8934 = vunpack.c.l.b16 %v8736
        %v8935 = vunpack.c.h.b16 %v8736
        %v8936 = vunpack.c.l.b16 %v8737
        %v8937 = vunpack.c.h.b16 %v8737
        %v8938 = vunpack.c.l.b16 %v8738
        %v8939 = vunpack.c.h.b16 %v8738
        %v8940 = vunpack.c.l.b16 %v8739
        %v8941 = vunpack.c.h.b16 %v8739
        %v8942 = vunpack.c.l.b16 %v8740
        %v8943 = vunpack.c.h.b16 %v8740
        %v8944 = vunpack.c.l.b16 %v8741
        %v8945 = vunpack.c.h.b16 %v8741
        %v8946 = vunpack.c.l.b16 %v8742
        %v8947 = vunpack.c.h.b16 %v8742
        %v8948 = vunpack.c.l.b16 %v8743
        %v8949 = vunpack.c.h.b16 %v8743
        %v8950 = vunpack.c.l.b16 %v8744
        %v8951 = vunpack.c.h.b16 %v8744
        %v8952 = vunpack.c.l.b16 %v8745
        %v8953 = vunpack.c.h.b16 %v8745
        %v8954 = vunpack.c.l.b16 %v8746
        %v8955 = vunpack.c.h.b16 %v8746
        %v8956 = vpack.c.b16 %v8832, %v8828
        %v8957 = vpack.c.b16 %v8833, %v8829
        %v8958 = vpack.c.b16 %v8834, %v8830
        %v8959 = vpack.c.b16 %v8835, %v8831
        %v8960 = vpack.c.b16 %v8840, %v8836
        %v8961 = vpack.c.b16 %v8841, %v8837
        %v8962 = vpack.c.b16 %v8842, %v8838
        %v8963 = vpack.c.b16 %v8843, %v8839
        %v8964 = vpack.c.b16 %v8848, %v8844
        %v8965 = vpack.c.b16 %v8849, %v8845
        %v8966 = vpack.c.b16 %v8850, %v8846
        %v8967 = vpack.c.b16 %v8851, %v8847
        %v8968 = vpack.c.b16 %v8856, %v8852
        %v8969 = vpack.c.b16 %v8857, %v8853
        %v8970 = vpack.c.b16 %v8858, %v8854
        %v8971 = vpack.c.b16 %v8859, %v8855
        %v8972 = vpack.c.b16 %v8864, %v8860
        %v8973 = vpack.c.b16 %v8865, %v8861
        %v8974 = vpack.c.b16 %v8866, %v8862
        %v8975 = vpack.c.b16 %v8867, %v8863
        %v8976 = vpack.c.b16 %v8872, %v8868
        %v8977 = vpack.c.b16 %v8873, %v8869
        %v8978 = vpack.c.b16 %v8874, %v8870
        %v8979 = vpack.c.b16 %v8875, %v8871
        %v8980 = vpack.c.b16 %v8880, %v8876
        %v8981 = vpack.c.b16 %v8881, %v8877
        %v8982 = vpack.c.b16 %v8882, %v8878
        %v8983 = vpack.c.b16 %v8883, %v8879
        %v8984 = vpack.c.b16 %v8888, %v8884
        %v8985 = vpack.c.b16 %v8889, %v8885
        %v8986 = vpack.c.b16 %v8890, %v8886
        %v8987 = vpack.c.b16 %v8891, %v8887
        %v8988 = vpack.c.b16 %v8896, %v8892
        %v8989 = vpack.c.b16 %v8897, %v8893
        %v8990 = vpack.c.b16 %v8898, %v8894
        %v8991 = vpack.c.b16 %v8899, %v8895
        %v8992 = vpack.c.b16 %v8904, %v8900
        %v8993 = vpack.c.b16 %v8905, %v8901
        %v8994 = vpack.c.b16 %v8906, %v8902
        %v8995 = vpack.c.b16 %v8907, %v8903
        %v8996 = vpack.c.b16 %v8912, %v8908
        %v8997 = vpack.c.b16 %v8913, %v8909
        %v8998 = vpack.c.b16 %v8914, %v8910
        %v8999 = vpack.c.b16 %v8915, %v8911
        %v9000 = vpack.c.b16 %v8920, %v8916
        %v9001 = vpack.c.b16 %v8921, %v8917
        %v9002 = vpack.c.b16 %v8922, %v8918
        %v9003 = vpack.c.b16 %v8923, %v8919
        %v9004 = vpack.c.b16 %v8928, %v8924
        %v9005 = vpack.c.b16 %v8929, %v8925
        %v9006 = vpack.c.b16 %v8930, %v8926
        %v9007 = vpack.c.b16 %v8931, %v8927
        %v9008 = vpack.c.b16 %v8936, %v8932
        %v9009 = vpack.c.b16 %v8937, %v8933
        %v9010 = vpack.c.b16 %v8938, %v8934
        %v9011 = vpack.c.b16 %v8939, %v8935
        %v9012 = vpack.c.b16 %v8944, %v8940
        %v9013 = vpack.c.b16 %v8945, %v8941
        %v9014 = vpack.c.b16 %v8946, %v8942
        %v9015 = vpack.c.b16 %v8947, %v8943
        %v9016 = vpack.c.b16 %v8952, %v8948
        %v9017 = vpack.c.b16 %v8953, %v8949
        %v9018 = vpack.c.b16 %v8954, %v8950
        %v9019 = vpack.c.b16 %v8955, %v8951
        %9084 = vmatprep.subr.bf16.mxu0 %v8957
        %9085 = vmatpush1.bf16.msra.mxu0 %v8956
        %9086 = vmatprep.subr.bf16.mxu0 %v8961
        %9087 = vmatpush1.bf16.msra.mxu0 %v8960
        %9088 = vmatprep.subr.bf16.mxu0 %v8965
        %9089 = vmatpush1.bf16.msra.mxu0 %v8964
        %9090 = vmatprep.subr.bf16.mxu0 %v8969
        %9091 = vmatpush1.bf16.msra.mxu0 %v8968
        %9092 = vmatprep.subr.bf16.mxu0 %v8973
        %9093 = vmatpush1.bf16.msra.mxu0 %v8972
        %9094 = vmatprep.subr.bf16.mxu0 %v8977
        %9095 = vmatpush1.bf16.msra.mxu0 %v8976
        %9096 = vmatprep.subr.bf16.mxu0 %v8981
        %9097 = vmatpush1.bf16.msra.mxu0 %v8980
        %9098 = vmatprep.subr.bf16.mxu0 %v8985
        %9099 = vmatpush1.bf16.msra.mxu0 %v8984
        %9100 = vmatprep.subr.bf16.mxu0 %v8989
        %9101 = vmatpush1.bf16.msra.mxu0 %v8988
        %9102 = vmatprep.subr.bf16.mxu0 %v8993
        %9103 = vmatpush1.bf16.msra.mxu0 %v8992
        %9104 = vmatprep.subr.bf16.mxu0 %v8997
        %9105 = vmatpush1.bf16.msra.mxu0 %v8996
        %9106 = vmatprep.subr.bf16.mxu0 %v9001
        %9107 = vmatpush1.bf16.msra.mxu0 %v9000
        %9108 = vmatprep.subr.bf16.mxu0 %v9005
        %9109 = vmatpush1.bf16.msra.mxu0 %v9004
        %9110 = vmatprep.subr.bf16.mxu0 %v9009
        %9111 = vmatpush1.bf16.msra.mxu0 %v9008
        %9112 = vmatprep.subr.bf16.mxu0 %v9013
        %9113 = vmatpush1.bf16.msra.mxu0 %v9012
        %9114 = vmatprep.subr.bf16.mxu0 %v9017
        %9115 = vmatpush1.bf16.msra.mxu0 %v9016
        %9116 = vmatprep.mubr.bf16.mxu0 %v8760
        %9117 = vmatmul.mubr.bf16.gmra.mrb[0].mxu0 %v8757
        %v9118 = vpop.f32.mrb[0].mxu0
        %v9119 = vadd.f32 0.0, %v9118
        %v9120 = vpop.f32.mrb[0].mxu0
        %v9121 = vadd.f32 0.0, %v9120
        %v9122 = vpop.f32.mrb[0].mxu0
        %v9123 = vpop.f32.mrb[0].mxu0
        %9124 = vdwg.mxu0
        %9125 = vmatprep.subr.bf16.mxu0 %v8959
        %9126 = vmatpush1.bf16.msra.mxu0 %v8958
        %9127 = vmatprep.subr.bf16.mxu0 %v8963
        %9128 = vmatpush1.bf16.msra.mxu0 %v8962
        %9129 = vmatprep.subr.bf16.mxu0 %v8967
        %9130 = vmatpush1.bf16.msra.mxu0 %v8966
        %9131 = vmatprep.subr.bf16.mxu0 %v8971
        %9132 = vmatpush1.bf16.msra.mxu0 %v8970
        %9133 = vmatprep.subr.bf16.mxu0 %v8975
        %9134 = vmatpush1.bf16.msra.mxu0 %v8974
        %9135 = vmatprep.subr.bf16.mxu0 %v8979
        %9136 = vmatpush1.bf16.msra.mxu0 %v8978
        %9137 = vmatprep.subr.bf16.mxu0 %v8983
        %9138 = vmatpush1.bf16.msra.mxu0 %v8982
        %9139 = vmatprep.subr.bf16.mxu0 %v8987
        %9140 = vmatpush1.bf16.msra.mxu0 %v8986
        %9141 = vmatprep.subr.bf16.mxu0 %v8991
        %9142 = vmatpush1.bf16.msra.mxu0 %v8990
        %9143 = vmatprep.subr.bf16.mxu0 %v8995
        %9144 = vmatpush1.bf16.msra.mxu0 %v8994
        %9145 = vmatprep.subr.bf16.mxu0 %v8999
        %9146 = vmatpush1.bf16.msra.mxu0 %v8998
        %9147 = vmatprep.subr.bf16.mxu0 %v9003
        %9148 = vmatpush1.bf16.msra.mxu0 %v9002
        %9149 = vmatprep.subr.bf16.mxu0 %v9007
        %9150 = vmatpush1.bf16.msra.mxu0 %v9006
        %9151 = vmatprep.subr.bf16.mxu0 %v9011
        %9152 = vmatpush1.bf16.msra.mxu0 %v9010
        %9153 = vmatprep.subr.bf16.mxu0 %v9015
        %9154 = vmatpush1.bf16.msra.mxu0 %v9014
        %9155 = vmatprep.subr.bf16.mxu0 %v9019
        %9156 = vmatpush1.bf16.msra.mxu0 %v9018
        %9157 = vmatprep.mubr.bf16.mxu0 %v8760
        %9158 = vmatmul.mubr.bf16.gmra.mrb[0].mxu0 %v8757
        %v9159 = vpop.f32.mrb[0].mxu0
        %v9160 = vadd.f32 0.0, %v9159
        %v9161 = vpop.f32.mrb[0].mxu0
        %v9162 = vadd.f32 0.0, %v9161
        %v9163 = vpop.f32.mrb[0].mxu0
        %v9164 = vpop.f32.mrb[0].mxu0
        %9165 = vdwg.mxu0
        %v9232 = vunpack.c.l.b16 %v8619
        %v9233 = vunpack.c.h.b16 %v8619
        %v9234 = vunpack.c.l.b16 %v8620
        %v9235 = vunpack.c.h.b16 %v8620
        %v9236 = vunpack.c.l.b16 %v8621
        %v9237 = vunpack.c.h.b16 %v8621
        %v9238 = vunpack.c.l.b16 %v8622
        %v9239 = vunpack.c.h.b16 %v8622
        %v9240 = vunpack.c.l.b16 %v8623
        %v9241 = vunpack.c.h.b16 %v8623
        %v9242 = vunpack.c.l.b16 %v8624
        %v9243 = vunpack.c.h.b16 %v8624
        %v9244 = vunpack.c.l.b16 %v8625
        %v9245 = vunpack.c.h.b16 %v8625
        %v9246 = vunpack.c.l.b16 %v8626
        %v9247 = vunpack.c.h.b16 %v8626
        %v9248 = vunpack.c.l.b16 %v8627
        %v9249 = vunpack.c.h.b16 %v8627
        %v9250 = vunpack.c.l.b16 %v8628
        %v9251 = vunpack.c.h.b16 %v8628
        %v9252 = vunpack.c.l.b16 %v8629
        %v9253 = vunpack.c.h.b16 %v8629
        %v9254 = vunpack.c.l.b16 %v8630
        %v9255 = vunpack.c.h.b16 %v8630
        %v9256 = vunpack.c.l.b16 %v8631
        %v9257 = vunpack.c.h.b16 %v8631
        %v9258 = vunpack.c.l.b16 %v8632
        %v9259 = vunpack.c.h.b16 %v8632
        %v9260 = vunpack.c.l.b16 %v8633
        %v9261 = vunpack.c.h.b16 %v8633
        %v9262 = vunpack.c.l.b16 %v8634
        %v9263 = vunpack.c.h.b16 %v8634
        %v9264 = vunpack.c.l.b16 %v8635
        %v9265 = vunpack.c.h.b16 %v8635
        %v9266 = vunpack.c.l.b16 %v8636
        %v9267 = vunpack.c.h.b16 %v8636
        %v9268 = vunpack.c.l.b16 %v8637
        %v9269 = vunpack.c.h.b16 %v8637
        %v9270 = vunpack.c.l.b16 %v8638
        %v9271 = vunpack.c.h.b16 %v8638
        %v9272 = vunpack.c.l.b16 %v8639
        %v9273 = vunpack.c.h.b16 %v8639
        %v9274 = vunpack.c.l.b16 %v8640
        %v9275 = vunpack.c.h.b16 %v8640
        %v9276 = vunpack.c.l.b16 %v8641
        %v9277 = vunpack.c.h.b16 %v8641
        %v9278 = vunpack.c.l.b16 %v8642
        %v9279 = vunpack.c.h.b16 %v8642
        %v9280 = vunpack.c.l.b16 %v8643
        %v9281 = vunpack.c.h.b16 %v8643
        %v9282 = vunpack.c.l.b16 %v8644
        %v9283 = vunpack.c.h.b16 %v8644
        %v9284 = vunpack.c.l.b16 %v8645
        %v9285 = vunpack.c.h.b16 %v8645
        %v9286 = vunpack.c.l.b16 %v8646
        %v9287 = vunpack.c.h.b16 %v8646
        %v9288 = vunpack.c.l.b16 %v8647
        %v9289 = vunpack.c.h.b16 %v8647
        %v9290 = vunpack.c.l.b16 %v8648
        %v9291 = vunpack.c.h.b16 %v8648
        %v9292 = vunpack.c.l.b16 %v8649
        %v9293 = vunpack.c.h.b16 %v8649
        %v9294 = vunpack.c.l.b16 %v8650
        %v9295 = vunpack.c.h.b16 %v8650
        %v9296 = vunpack.c.l.b16 %v8651
        %v9297 = vunpack.c.h.b16 %v8651
        %v9298 = vunpack.c.l.b16 %v8652
        %v9299 = vunpack.c.h.b16 %v8652
        %v9300 = vunpack.c.l.b16 %v8653
        %v9301 = vunpack.c.h.b16 %v8653
        %v9302 = vunpack.c.l.b16 %v8654
        %v9303 = vunpack.c.h.b16 %v8654
        %v9304 = vunpack.c.l.b16 %v8655
        %v9305 = vunpack.c.h.b16 %v8655
        %v9306 = vunpack.c.l.b16 %v8656
        %v9307 = vunpack.c.h.b16 %v8656
        %v9308 = vunpack.c.l.b16 %v8657
        %v9309 = vunpack.c.h.b16 %v8657
        %v9310 = vunpack.c.l.b16 %v8658
        %v9311 = vunpack.c.h.b16 %v8658
        %v9312 = vunpack.c.l.b16 %v8659
        %v9313 = vunpack.c.h.b16 %v8659
        %v9314 = vunpack.c.l.b16 %v8660
        %v9315 = vunpack.c.h.b16 %v8660
        %v9316 = vunpack.c.l.b16 %v8661
        %v9317 = vunpack.c.h.b16 %v8661
        %v9318 = vunpack.c.l.b16 %v8662
        %v9319 = vunpack.c.h.b16 %v8662
        %v9320 = vunpack.c.l.b16 %v8663
        %v9321 = vunpack.c.h.b16 %v8663
        %v9322 = vunpack.c.l.b16 %v8664
        %v9323 = vunpack.c.h.b16 %v8664
        %v9324 = vunpack.c.l.b16 %v8665
        %v9325 = vunpack.c.h.b16 %v8665
        %v9326 = vunpack.c.l.b16 %v8666
        %v9327 = vunpack.c.h.b16 %v8666
        %v9328 = vunpack.c.l.b16 %v8667
        %v9329 = vunpack.c.h.b16 %v8667
        %v9330 = vunpack.c.l.b16 %v8668
        %v9331 = vunpack.c.h.b16 %v8668
        %v9332 = vunpack.c.l.b16 %v8669
        %v9333 = vunpack.c.h.b16 %v8669
        %v9334 = vunpack.c.l.b16 %v8670
        %v9335 = vunpack.c.h.b16 %v8670
        %v9336 = vunpack.c.l.b16 %v8671
        %v9337 = vunpack.c.h.b16 %v8671
        %v9338 = vunpack.c.l.b16 %v8672
        %v9339 = vunpack.c.h.b16 %v8672
        %v9340 = vunpack.c.l.b16 %v8673
        %v9341 = vunpack.c.h.b16 %v8673
        %v9342 = vunpack.c.l.b16 %v8674
        %v9343 = vunpack.c.h.b16 %v8674
        %v9344 = vunpack.c.l.b16 %v8675
        %v9345 = vunpack.c.h.b16 %v8675
        %v9346 = vunpack.c.l.b16 %v8676
        %v9347 = vunpack.c.h.b16 %v8676
        %v9348 = vunpack.c.l.b16 %v8677
        %v9349 = vunpack.c.h.b16 %v8677
        %v9350 = vunpack.c.l.b16 %v8678
        %v9351 = vunpack.c.h.b16 %v8678
        %v9352 = vunpack.c.l.b16 %v8679
        %v9353 = vunpack.c.h.b16 %v8679
        %v9354 = vunpack.c.l.b16 %v8680
        %v9355 = vunpack.c.h.b16 %v8680
        %v9356 = vunpack.c.l.b16 %v8681
        %v9357 = vunpack.c.h.b16 %v8681
        %v9358 = vunpack.c.l.b16 %v8682
        %v9359 = vunpack.c.h.b16 %v8682
        %v9360 = vpack.c.b16 %v9236, %v9232
        %v9361 = vpack.c.b16 %v9237, %v9233
        %v9362 = vpack.c.b16 %v9238, %v9234
        %v9363 = vpack.c.b16 %v9239, %v9235
        %v9364 = vpack.c.b16 %v9244, %v9240
        %v9365 = vpack.c.b16 %v9245, %v9241
        %v9366 = vpack.c.b16 %v9246, %v9242
        %v9367 = vpack.c.b16 %v9247, %v9243
        %v9368 = vpack.c.b16 %v9252, %v9248
        %v9369 = vpack.c.b16 %v9253, %v9249
        %v9370 = vpack.c.b16 %v9254, %v9250
        %v9371 = vpack.c.b16 %v9255, %v9251
        %v9372 = vpack.c.b16 %v9260, %v9256
        %v9373 = vpack.c.b16 %v9261, %v9257
        %v9374 = vpack.c.b16 %v9262, %v9258
        %v9375 = vpack.c.b16 %v9263, %v9259
        %v9376 = vpack.c.b16 %v9268, %v9264
        %v9377 = vpack.c.b16 %v9269, %v9265
        %v9378 = vpack.c.b16 %v9270, %v9266
        %v9379 = vpack.c.b16 %v9271, %v9267
        %v9380 = vpack.c.b16 %v9276, %v9272
        %v9381 = vpack.c.b16 %v9277, %v9273
        %v9382 = vpack.c.b16 %v9278, %v9274
        %v9383 = vpack.c.b16 %v9279, %v9275
        %v9384 = vpack.c.b16 %v9284, %v9280
        %v9385 = vpack.c.b16 %v9285, %v9281
        %v9386 = vpack.c.b16 %v9286, %v9282
        %v9387 = vpack.c.b16 %v9287, %v9283
        %v9388 = vpack.c.b16 %v9292, %v9288
        %v9389 = vpack.c.b16 %v9293, %v9289
        %v9390 = vpack.c.b16 %v9294, %v9290
        %v9391 = vpack.c.b16 %v9295, %v9291
        %v9392 = vpack.c.b16 %v9300, %v9296
        %v9393 = vpack.c.b16 %v9301, %v9297
        %v9394 = vpack.c.b16 %v9302, %v9298
        %v9395 = vpack.c.b16 %v9303, %v9299
        %v9396 = vpack.c.b16 %v9308, %v9304
        %v9397 = vpack.c.b16 %v9309, %v9305
        %v9398 = vpack.c.b16 %v9310, %v9306
        %v9399 = vpack.c.b16 %v9311, %v9307
        %v9400 = vpack.c.b16 %v9316, %v9312
        %v9401 = vpack.c.b16 %v9317, %v9313
        %v9402 = vpack.c.b16 %v9318, %v9314
        %v9403 = vpack.c.b16 %v9319, %v9315
        %v9404 = vpack.c.b16 %v9324, %v9320
        %v9405 = vpack.c.b16 %v9325, %v9321
        %v9406 = vpack.c.b16 %v9326, %v9322
        %v9407 = vpack.c.b16 %v9327, %v9323
        %v9408 = vpack.c.b16 %v9332, %v9328
        %v9409 = vpack.c.b16 %v9333, %v9329
        %v9410 = vpack.c.b16 %v9334, %v9330
        %v9411 = vpack.c.b16 %v9335, %v9331
        %v9412 = vpack.c.b16 %v9340, %v9336
        %v9413 = vpack.c.b16 %v9341, %v9337
        %v9414 = vpack.c.b16 %v9342, %v9338
        %v9415 = vpack.c.b16 %v9343, %v9339
        %v9416 = vpack.c.b16 %v9348, %v9344
        %v9417 = vpack.c.b16 %v9349, %v9345
        %v9418 = vpack.c.b16 %v9350, %v9346
        %v9419 = vpack.c.b16 %v9351, %v9347
        %v9420 = vpack.c.b16 %v9356, %v9352
        %v9421 = vpack.c.b16 %v9357, %v9353
        %v9422 = vpack.c.b16 %v9358, %v9354
        %v9423 = vpack.c.b16 %v9359, %v9355
        %9488 = vmatprep.subr.bf16.mxu0 %v9361
        %9489 = vmatpush1.bf16.msra.mxu0 %v9360
        %9490 = vmatprep.subr.bf16.mxu0 %v9365
        %9491 = vmatpush1.bf16.msra.mxu0 %v9364
        %9492 = vmatprep.subr.bf16.mxu0 %v9369
        %9493 = vmatpush1.bf16.msra.mxu0 %v9368
        %9494 = vmatprep.subr.bf16.mxu0 %v9373
        %9495 = vmatpush1.bf16.msra.mxu0 %v9372
        %9496 = vmatprep.subr.bf16.mxu0 %v9377
        %9497 = vmatpush1.bf16.msra.mxu0 %v9376
        %9498 = vmatprep.subr.bf16.mxu0 %v9381
        %9499 = vmatpush1.bf16.msra.mxu0 %v9380
        %9500 = vmatprep.subr.bf16.mxu0 %v9385
        %9501 = vmatpush1.bf16.msra.mxu0 %v9384
        %9502 = vmatprep.subr.bf16.mxu0 %v9389
        %9503 = vmatpush1.bf16.msra.mxu0 %v9388
        %9504 = vmatprep.subr.bf16.mxu0 %v9393
        %9505 = vmatpush1.bf16.msra.mxu0 %v9392
        %9506 = vmatprep.subr.bf16.mxu0 %v9397
        %9507 = vmatpush1.bf16.msra.mxu0 %v9396
        %9508 = vmatprep.subr.bf16.mxu0 %v9401
        %9509 = vmatpush1.bf16.msra.mxu0 %v9400
        %9510 = vmatprep.subr.bf16.mxu0 %v9405
        %9511 = vmatpush1.bf16.msra.mxu0 %v9404
        %9512 = vmatprep.subr.bf16.mxu0 %v9409
        %9513 = vmatpush1.bf16.msra.mxu0 %v9408
        %9514 = vmatprep.subr.bf16.mxu0 %v9413
        %9515 = vmatpush1.bf16.msra.mxu0 %v9412
        %9516 = vmatprep.subr.bf16.mxu0 %v9417
        %9517 = vmatpush1.bf16.msra.mxu0 %v9416
        %9518 = vmatprep.subr.bf16.mxu0 %v9421
        %9519 = vmatpush1.bf16.msra.mxu0 %v9420
        %9520 = vmatprep.mubr.bf16.mxu0 %v8755
        %9521 = vmatmul.mubr.bf16.gmra.mrb[0].mxu0 %v8754
        %v9522 = vpop.f32.mrb[0].mxu0
        %v9523 = vadd.f32 %v9119, %v9522
        %v9524 = vpop.f32.mrb[0].mxu0
        %v9525 = vadd.f32 %v9121, %v9524
        %v9526 = vpop.f32.mrb[0].mxu0
        %v9527 = vpop.f32.mrb[0].mxu0
        %9528 = vdwg.mxu0
        %9529 = vmatprep.subr.bf16.mxu0 %v9363
        %9530 = vmatpush1.bf16.msra.mxu0 %v9362
        %9531 = vmatprep.subr.bf16.mxu0 %v9367
        %9532 = vmatpush1.bf16.msra.mxu0 %v9366
        %9533 = vmatprep.subr.bf16.mxu0 %v9371
        %9534 = vmatpush1.bf16.msra.mxu0 %v9370
        %9535 = vmatprep.subr.bf16.mxu0 %v9375
        %9536 = vmatpush1.bf16.msra.mxu0 %v9374
        %9537 = vmatprep.subr.bf16.mxu0 %v9379
        %9538 = vmatpush1.bf16.msra.mxu0 %v9378
        %9539 = vmatprep.subr.bf16.mxu0 %v9383
        %9540 = vmatpush1.bf16.msra.mxu0 %v9382
        %9541 = vmatprep.subr.bf16.mxu0 %v9387
        %9542 = vmatpush1.bf16.msra.mxu0 %v9386
        %9543 = vmatprep.subr.bf16.mxu0 %v9391
        %9544 = vmatpush1.bf16.msra.mxu0 %v9390
        %9545 = vmatprep.subr.bf16.mxu0 %v9395
        %9546 = vmatpush1.bf16.msra.mxu0 %v9394
        %9547 = vmatprep.subr.bf16.mxu0 %v9399
        %9548 = vmatpush1.bf16.msra.mxu0 %v9398
        %9549 = vmatprep.subr.bf16.mxu0 %v9403
        %9550 = vmatpush1.bf16.msra.mxu0 %v9402
        %9551 = vmatprep.subr.bf16.mxu0 %v9407
        %9552 = vmatpush1.bf16.msra.mxu0 %v9406
        %9553 = vmatprep.subr.bf16.mxu0 %v9411
        %9554 = vmatpush1.bf16.msra.mxu0 %v9410
        %9555 = vmatprep.subr.bf16.mxu0 %v9415
        %9556 = vmatpush1.bf16.msra.mxu0 %v9414
        %9557 = vmatprep.subr.bf16.mxu0 %v9419
        %9558 = vmatpush1.bf16.msra.mxu0 %v9418
        %9559 = vmatprep.subr.bf16.mxu0 %v9423
        %9560 = vmatpush1.bf16.msra.mxu0 %v9422
        %9561 = vmatprep.mubr.bf16.mxu0 %v8755
        %9562 = vmatmul.mubr.bf16.gmra.mrb[0].mxu0 %v8754
        %v9563 = vpop.f32.mrb[0].mxu0
        %v9564 = vadd.f32 %v9160, %v9563
        %v9565 = vpop.f32.mrb[0].mxu0
        %v9566 = vadd.f32 %v9162, %v9565
        %v9567 = vpop.f32.mrb[0].mxu0
        %v9568 = vpop.f32.mrb[0].mxu0
        %9569 = vdwg.mxu0
        %v9570 = vld [vmem:[#allocation3] sm:$0xa]
        %v9571 = vld [vmem:[#allocation12 + $0x400] sm:$0xff]
        %v9572 = vld [vmem:[#allocation12 + $0x408] sm:$0xff]
        %v9573 = vld [vmem:[#allocation12 + $0x410] sm:$0xff]
        %v9574 = vld [vmem:[#allocation12 + $0x418] sm:$0xff]
        %v9575 = vld [vmem:[#allocation12 + $0x420] sm:$0xff]
        %v9576 = vld [vmem:[#allocation12 + $0x428] sm:$0xff]
        %v9577 = vld [vmem:[#allocation12 + $0x430] sm:$0xff]
        %v9578 = vld [vmem:[#allocation12 + $0x438] sm:$0xff]
        %v9579 = vld [vmem:[#allocation12 + $0x440] sm:$0xff]
        %v9580 = vld [vmem:[#allocation12 + $0x448] sm:$0xff]
        %v9581 = vld [vmem:[#allocation12 + $0x450] sm:$0xff]
        %v9582 = vld [vmem:[#allocation12 + $0x458] sm:$0xff]
        %v9583 = vld [vmem:[#allocation12 + $0x460] sm:$0xff]
        %v9584 = vld [vmem:[#allocation12 + $0x468] sm:$0xff]
        %v9585 = vld [vmem:[#allocation12 + $0x470] sm:$0xff]
        %v9586 = vld [vmem:[#allocation12 + $0x478] sm:$0xff]
        %v9587 = vld [vmem:[#allocation12 + $0x480] sm:$0xff]
        %v9588 = vld [vmem:[#allocation12 + $0x488] sm:$0xff]
        %v9589 = vld [vmem:[#allocation12 + $0x490] sm:$0xff]
        %v9590 = vld [vmem:[#allocation12 + $0x498] sm:$0xff]
        %v9591 = vld [vmem:[#allocation12 + $0x4a0] sm:$0xff]
        %v9592 = vld [vmem:[#allocation12 + $0x4a8] sm:$0xff]
        %v9593 = vld [vmem:[#allocation12 + $0x4b0] sm:$0xff]
        %v9594 = vld [vmem:[#allocation12 + $0x4b8] sm:$0xff]
        %v9595 = vld [vmem:[#allocation12 + $0x4c0] sm:$0xff]
        %v9596 = vld [vmem:[#allocation12 + $0x4c8] sm:$0xff]
        %v9597 = vld [vmem:[#allocation12 + $0x4d0] sm:$0xff]
        %v9598 = vld [vmem:[#allocation12 + $0x4d8] sm:$0xff]
        %v9599 = vld [vmem:[#allocation12 + $0x4e0] sm:$0xff]
        %v9600 = vld [vmem:[#allocation12 + $0x4e8] sm:$0xff]
        %v9601 = vld [vmem:[#allocation12 + $0x4f0] sm:$0xff]
        %v9602 = vld [vmem:[#allocation12 + $0x4f8] sm:$0xff]
        %v9603 = vld [vmem:[#allocation12 + $0x500] sm:$0xff]
        %v9604 = vld [vmem:[#allocation12 + $0x508] sm:$0xff]
        %v9605 = vld [vmem:[#allocation12 + $0x510] sm:$0xff]
        %v9606 = vld [vmem:[#allocation12 + $0x518] sm:$0xff]
        %v9607 = vld [vmem:[#allocation12 + $0x520] sm:$0xff]
        %v9608 = vld [vmem:[#allocation12 + $0x528] sm:$0xff]
        %v9609 = vld [vmem:[#allocation12 + $0x530] sm:$0xff]
        %v9610 = vld [vmem:[#allocation12 + $0x538] sm:$0xff]
        %v9611 = vld [vmem:[#allocation12 + $0x540] sm:$0xff]
        %v9612 = vld [vmem:[#allocation12 + $0x548] sm:$0xff]
        %v9613 = vld [vmem:[#allocation12 + $0x550] sm:$0xff]
        %v9614 = vld [vmem:[#allocation12 + $0x558] sm:$0xff]
        %v9615 = vld [vmem:[#allocation12 + $0x560] sm:$0xff]
        %v9616 = vld [vmem:[#allocation12 + $0x568] sm:$0xff]
        %v9617 = vld [vmem:[#allocation12 + $0x570] sm:$0xff]
        %v9618 = vld [vmem:[#allocation12 + $0x578] sm:$0xff]
        %v9619 = vld [vmem:[#allocation12 + $0x580] sm:$0xff]
        %v9620 = vld [vmem:[#allocation12 + $0x588] sm:$0xff]
        %v9621 = vld [vmem:[#allocation12 + $0x590] sm:$0xff]
        %v9622 = vld [vmem:[#allocation12 + $0x598] sm:$0xff]
        %v9623 = vld [vmem:[#allocation12 + $0x5a0] sm:$0xff]
        %v9624 = vld [vmem:[#allocation12 + $0x5a8] sm:$0xff]
        %v9625 = vld [vmem:[#allocation12 + $0x5b0] sm:$0xff]
        %v9626 = vld [vmem:[#allocation12 + $0x5b8] sm:$0xff]
        %v9627 = vld [vmem:[#allocation12 + $0x5c0] sm:$0xff]
        %v9628 = vld [vmem:[#allocation12 + $0x5c8] sm:$0xff]
        %v9629 = vld [vmem:[#allocation12 + $0x5d0] sm:$0xff]
        %v9630 = vld [vmem:[#allocation12 + $0x5d8] sm:$0xff]
        %v9631 = vld [vmem:[#allocation12 + $0x5e0] sm:$0xff]
        %v9632 = vld [vmem:[#allocation12 + $0x5e8] sm:$0xff]
        %v9633 = vld [vmem:[#allocation12 + $0x5f0] sm:$0xff]
        %v9634 = vld [vmem:[#allocation12 + $0x5f8] sm:$0xff]
        %v9637 = vunpack.c.l.s4 1983009808
        %v9638 = vunpack.c.0.s8 %v9637
        %v9639 = vlaneseq
        %v9640 = vshrl.u32 %v9639, 7
        %v9641 = vsub.s32 %v9638, %v9640
        %v9642 = vrot.slane %v9570, %v9641
        %v9643 = vcombine.high %v9642, %v9642
        %v9644 = vrot.slane %v9642, 1
        %v9645 = vrot.slane %v9643, 1
        %v9712 = vunpack.c.l.b16 %v9571
        %v9713 = vunpack.c.h.b16 %v9571
        %v9714 = vunpack.c.l.b16 %v9572
        %v9715 = vunpack.c.h.b16 %v9572
        %v9716 = vunpack.c.l.b16 %v9573
        %v9717 = vunpack.c.h.b16 %v9573
        %v9718 = vunpack.c.l.b16 %v9574
        %v9719 = vunpack.c.h.b16 %v9574
        %v9720 = vunpack.c.l.b16 %v9575
        %v9721 = vunpack.c.h.b16 %v9575
        %v9722 = vunpack.c.l.b16 %v9576
        %v9723 = vunpack.c.h.b16 %v9576
        %v9724 = vunpack.c.l.b16 %v9577
        %v9725 = vunpack.c.h.b16 %v9577
        %v9726 = vunpack.c.l.b16 %v9578
        %v9727 = vunpack.c.h.b16 %v9578
        %v9728 = vunpack.c.l.b16 %v9579
        %v9729 = vunpack.c.h.b16 %v9579
        %v9730 = vunpack.c.l.b16 %v9580
        %v9731 = vunpack.c.h.b16 %v9580
        %v9732 = vunpack.c.l.b16 %v9581
        %v9733 = vunpack.c.h.b16 %v9581
        %v9734 = vunpack.c.l.b16 %v9582
        %v9735 = vunpack.c.h.b16 %v9582
        %v9736 = vunpack.c.l.b16 %v9583
        %v9737 = vunpack.c.h.b16 %v9583
        %v9738 = vunpack.c.l.b16 %v9584
        %v9739 = vunpack.c.h.b16 %v9584
        %v9740 = vunpack.c.l.b16 %v9585
        %v9741 = vunpack.c.h.b16 %v9585
        %v9742 = vunpack.c.l.b16 %v9586
        %v9743 = vunpack.c.h.b16 %v9586
        %v9744 = vunpack.c.l.b16 %v9587
        %v9745 = vunpack.c.h.b16 %v9587
        %v9746 = vunpack.c.l.b16 %v9588
        %v9747 = vunpack.c.h.b16 %v9588
        %v9748 = vunpack.c.l.b16 %v9589
        %v9749 = vunpack.c.h.b16 %v9589
        %v9750 = vunpack.c.l.b16 %v9590
        %v9751 = vunpack.c.h.b16 %v9590
        %v9752 = vunpack.c.l.b16 %v9591
        %v9753 = vunpack.c.h.b16 %v9591
        %v9754 = vunpack.c.l.b16 %v9592
        %v9755 = vunpack.c.h.b16 %v9592
        %v9756 = vunpack.c.l.b16 %v9593
        %v9757 = vunpack.c.h.b16 %v9593
        %v9758 = vunpack.c.l.b16 %v9594
        %v9759 = vunpack.c.h.b16 %v9594
        %v9760 = vunpack.c.l.b16 %v9595
        %v9761 = vunpack.c.h.b16 %v9595
        %v9762 = vunpack.c.l.b16 %v9596
        %v9763 = vunpack.c.h.b16 %v9596
        %v9764 = vunpack.c.l.b16 %v9597
        %v9765 = vunpack.c.h.b16 %v9597
        %v9766 = vunpack.c.l.b16 %v9598
        %v9767 = vunpack.c.h.b16 %v9598
        %v9768 = vunpack.c.l.b16 %v9599
        %v9769 = vunpack.c.h.b16 %v9599
        %v9770 = vunpack.c.l.b16 %v9600
        %v9771 = vunpack.c.h.b16 %v9600
        %v9772 = vunpack.c.l.b16 %v9601
        %v9773 = vunpack.c.h.b16 %v9601
        %v9774 = vunpack.c.l.b16 %v9602
        %v9775 = vunpack.c.h.b16 %v9602
        %v9776 = vunpack.c.l.b16 %v9603
        %v9777 = vunpack.c.h.b16 %v9603
        %v9778 = vunpack.c.l.b16 %v9604
        %v9779 = vunpack.c.h.b16 %v9604
        %v9780 = vunpack.c.l.b16 %v9605
        %v9781 = vunpack.c.h.b16 %v9605
        %v9782 = vunpack.c.l.b16 %v9606
        %v9783 = vunpack.c.h.b16 %v9606
        %v9784 = vunpack.c.l.b16 %v9607
        %v9785 = vunpack.c.h.b16 %v9607
        %v9786 = vunpack.c.l.b16 %v9608
        %v9787 = vunpack.c.h.b16 %v9608
        %v9788 = vunpack.c.l.b16 %v9609
        %v9789 = vunpack.c.h.b16 %v9609
        %v9790 = vunpack.c.l.b16 %v9610
        %v9791 = vunpack.c.h.b16 %v9610
        %v9792 = vunpack.c.l.b16 %v9611
        %v9793 = vunpack.c.h.b16 %v9611
        %v9794 = vunpack.c.l.b16 %v9612
        %v9795 = vunpack.c.h.b16 %v9612
        %v9796 = vunpack.c.l.b16 %v9613
        %v9797 = vunpack.c.h.b16 %v9613
        %v9798 = vunpack.c.l.b16 %v9614
        %v9799 = vunpack.c.h.b16 %v9614
        %v9800 = vunpack.c.l.b16 %v9615
        %v9801 = vunpack.c.h.b16 %v9615
        %v9802 = vunpack.c.l.b16 %v9616
        %v9803 = vunpack.c.h.b16 %v9616
        %v9804 = vunpack.c.l.b16 %v9617
        %v9805 = vunpack.c.h.b16 %v9617
        %v9806 = vunpack.c.l.b16 %v9618
        %v9807 = vunpack.c.h.b16 %v9618
        %v9808 = vunpack.c.l.b16 %v9619
        %v9809 = vunpack.c.h.b16 %v9619
        %v9810 = vunpack.c.l.b16 %v9620
        %v9811 = vunpack.c.h.b16 %v9620
        %v9812 = vunpack.c.l.b16 %v9621
        %v9813 = vunpack.c.h.b16 %v9621
        %v9814 = vunpack.c.l.b16 %v9622
        %v9815 = vunpack.c.h.b16 %v9622
        %v9816 = vunpack.c.l.b16 %v9623
        %v9817 = vunpack.c.h.b16 %v9623
        %v9818 = vunpack.c.l.b16 %v9624
        %v9819 = vunpack.c.h.b16 %v9624
        %v9820 = vunpack.c.l.b16 %v9625
        %v9821 = vunpack.c.h.b16 %v9625
        %v9822 = vunpack.c.l.b16 %v9626
        %v9823 = vunpack.c.h.b16 %v9626
        %v9824 = vunpack.c.l.b16 %v9627
        %v9825 = vunpack.c.h.b16 %v9627
        %v9826 = vunpack.c.l.b16 %v9628
        %v9827 = vunpack.c.h.b16 %v9628
        %v9828 = vunpack.c.l.b16 %v9629
        %v9829 = vunpack.c.h.b16 %v9629
        %v9830 = vunpack.c.l.b16 %v9630
        %v9831 = vunpack.c.h.b16 %v9630
        %v9832 = vunpack.c.l.b16 %v9631
        %v9833 = vunpack.c.h.b16 %v9631
        %v9834 = vunpack.c.l.b16 %v9632
        %v9835 = vunpack.c.h.b16 %v9632
        %v9836 = vunpack.c.l.b16 %v9633
        %v9837 = vunpack.c.h.b16 %v9633
        %v9838 = vunpack.c.l.b16 %v9634
        %v9839 = vunpack.c.h.b16 %v9634
        %v9840 = vpack.c.b16 %v9716, %v9712
        %v9841 = vpack.c.b16 %v9717, %v9713
        %v9842 = vpack.c.b16 %v9718, %v9714
        %v9843 = vpack.c.b16 %v9719, %v9715
        %v9844 = vpack.c.b16 %v9724, %v9720
        %v9845 = vpack.c.b16 %v9725, %v9721
        %v9846 = vpack.c.b16 %v9726, %v9722
        %v9847 = vpack.c.b16 %v9727, %v9723
        %v9848 = vpack.c.b16 %v9732, %v9728
        %v9849 = vpack.c.b16 %v9733, %v9729
        %v9850 = vpack.c.b16 %v9734, %v9730
        %v9851 = vpack.c.b16 %v9735, %v9731
        %v9852 = vpack.c.b16 %v9740, %v9736
        %v9853 = vpack.c.b16 %v9741, %v9737
        %v9854 = vpack.c.b16 %v9742, %v9738
        %v9855 = vpack.c.b16 %v9743, %v9739
        %v9856 = vpack.c.b16 %v9748, %v9744
        %v9857 = vpack.c.b16 %v9749, %v9745
        %v9858 = vpack.c.b16 %v9750, %v9746
        %v9859 = vpack.c.b16 %v9751, %v9747
        %v9860 = vpack.c.b16 %v9756, %v9752
        %v9861 = vpack.c.b16 %v9757, %v9753
        %v9862 = vpack.c.b16 %v9758, %v9754
        %v9863 = vpack.c.b16 %v9759, %v9755
        %v9864 = vpack.c.b16 %v9764, %v9760
        %v9865 = vpack.c.b16 %v9765, %v9761
        %v9866 = vpack.c.b16 %v9766, %v9762
        %v9867 = vpack.c.b16 %v9767, %v9763
        %v9868 = vpack.c.b16 %v9772, %v9768
        %v9869 = vpack.c.b16 %v9773, %v9769
        %v9870 = vpack.c.b16 %v9774, %v9770
        %v9871 = vpack.c.b16 %v9775, %v9771
        %v9872 = vpack.c.b16 %v9780, %v9776
        %v9873 = vpack.c.b16 %v9781, %v9777
        %v9874 = vpack.c.b16 %v9782, %v9778
        %v9875 = vpack.c.b16 %v9783, %v9779
        %v9876 = vpack.c.b16 %v9788, %v9784
        %v9877 = vpack.c.b16 %v9789, %v9785
        %v9878 = vpack.c.b16 %v9790, %v9786
        %v9879 = vpack.c.b16 %v9791, %v9787
        %v9880 = vpack.c.b16 %v9796, %v9792
        %v9881 = vpack.c.b16 %v9797, %v9793
        %v9882 = vpack.c.b16 %v9798, %v9794
        %v9883 = vpack.c.b16 %v9799, %v9795
        %v9884 = vpack.c.b16 %v9804, %v9800
        %v9885 = vpack.c.b16 %v9805, %v9801
        %v9886 = vpack.c.b16 %v9806, %v9802
        %v9887 = vpack.c.b16 %v9807, %v9803
        %v9888 = vpack.c.b16 %v9812, %v9808
        %v9889 = vpack.c.b16 %v9813, %v9809
        %v9890 = vpack.c.b16 %v9814, %v9810
        %v9891 = vpack.c.b16 %v9815, %v9811
        %v9892 = vpack.c.b16 %v9820, %v9816
        %v9893 = vpack.c.b16 %v9821, %v9817
        %v9894 = vpack.c.b16 %v9822, %v9818
        %v9895 = vpack.c.b16 %v9823, %v9819
        %v9896 = vpack.c.b16 %v9828, %v9824
        %v9897 = vpack.c.b16 %v9829, %v9825
        %v9898 = vpack.c.b16 %v9830, %v9826
        %v9899 = vpack.c.b16 %v9831, %v9827
        %v9900 = vpack.c.b16 %v9836, %v9832
        %v9901 = vpack.c.b16 %v9837, %v9833
        %v9902 = vpack.c.b16 %v9838, %v9834
        %v9903 = vpack.c.b16 %v9839, %v9835
        %9968 = vmatprep.subr.bf16.mxu0 %v9841
        %9969 = vmatpush1.bf16.msra.mxu0 %v9840
        %9970 = vmatprep.subr.bf16.mxu0 %v9845
        %9971 = vmatpush1.bf16.msra.mxu0 %v9844
        %9972 = vmatprep.subr.bf16.mxu0 %v9849
        %9973 = vmatpush1.bf16.msra.mxu0 %v9848
        %9974 = vmatprep.subr.bf16.mxu0 %v9853
        %9975 = vmatpush1.bf16.msra.mxu0 %v9852
        %9976 = vmatprep.subr.bf16.mxu0 %v9857
        %9977 = vmatpush1.bf16.msra.mxu0 %v9856
        %9978 = vmatprep.subr.bf16.mxu0 %v9861
        %9979 = vmatpush1.bf16.msra.mxu0 %v9860
        %9980 = vmatprep.subr.bf16.mxu0 %v9865
        %9981 = vmatpush1.bf16.msra.mxu0 %v9864
        %9982 = vmatprep.subr.bf16.mxu0 %v9869
        %9983 = vmatpush1.bf16.msra.mxu0 %v9868
        %9984 = vmatprep.subr.bf16.mxu0 %v9873
        %9985 = vmatpush1.bf16.msra.mxu0 %v9872
        %9986 = vmatprep.subr.bf16.mxu0 %v9877
        %9987 = vmatpush1.bf16.msra.mxu0 %v9876
        %9988 = vmatprep.subr.bf16.mxu0 %v9881
        %9989 = vmatpush1.bf16.msra.mxu0 %v9880
        %9990 = vmatprep.subr.bf16.mxu0 %v9885
        %9991 = vmatpush1.bf16.msra.mxu0 %v9884
        %9992 = vmatprep.subr.bf16.mxu0 %v9889
        %9993 = vmatpush1.bf16.msra.mxu0 %v9888
        %9994 = vmatprep.subr.bf16.mxu0 %v9893
        %9995 = vmatpush1.bf16.msra.mxu0 %v9892
        %9996 = vmatprep.subr.bf16.mxu0 %v9897
        %9997 = vmatpush1.bf16.msra.mxu0 %v9896
        %9998 = vmatprep.subr.bf16.mxu0 %v9901
        %9999 = vmatpush1.bf16.msra.mxu0 %v9900
        %10000 = vmatprep.mubr.bf16.mxu0 %v9645
        %10001 = vmatmul.mubr.bf16.gmra.mrb[0].mxu0 %v9644
        %v10002 = vpop.f32.mrb[0].mxu0
        %v10003 = vadd.f32 0.0, %v10002
        %v10004 = vpop.f32.mrb[0].mxu0
        %v10005 = vadd.f32 0.0, %v10004
        %v10006 = vpop.f32.mrb[0].mxu0
        %v10007 = vpop.f32.mrb[0].mxu0
        %10008 = vdwg.mxu0
        %10009 = vmatprep.subr.bf16.mxu0 %v9843
        %10010 = vmatpush1.bf16.msra.mxu0 %v9842
        %10011 = vmatprep.subr.bf16.mxu0 %v9847
        %10012 = vmatpush1.bf16.msra.mxu0 %v9846
        %10013 = vmatprep.subr.bf16.mxu0 %v9851
        %10014 = vmatpush1.bf16.msra.mxu0 %v9850
        %10015 = vmatprep.subr.bf16.mxu0 %v9855
        %10016 = vmatpush1.bf16.msra.mxu0 %v9854
        %10017 = vmatprep.subr.bf16.mxu0 %v9859
        %10018 = vmatpush1.bf16.msra.mxu0 %v9858
        %10019 = vmatprep.subr.bf16.mxu0 %v9863
        %10020 = vmatpush1.bf16.msra.mxu0 %v9862
        %10021 = vmatprep.subr.bf16.mxu0 %v9867
        %10022 = vmatpush1.bf16.msra.mxu0 %v9866
        %10023 = vmatprep.subr.bf16.mxu0 %v9871
        %10024 = vmatpush1.bf16.msra.mxu0 %v9870
        %10025 = vmatprep.subr.bf16.mxu0 %v9875
        %10026 = vmatpush1.bf16.msra.mxu0 %v9874
        %10027 = vmatprep.subr.bf16.mxu0 %v9879
        %10028 = vmatpush1.bf16.msra.mxu0 %v9878
        %10029 = vmatprep.subr.bf16.mxu0 %v9883
        %10030 = vmatpush1.bf16.msra.mxu0 %v9882
        %10031 = vmatprep.subr.bf16.mxu0 %v9887
        %10032 = vmatpush1.bf16.msra.mxu0 %v9886
        %10033 = vmatprep.subr.bf16.mxu0 %v9891
        %10034 = vmatpush1.bf16.msra.mxu0 %v9890
        %10035 = vmatprep.subr.bf16.mxu0 %v9895
        %10036 = vmatpush1.bf16.msra.mxu0 %v9894
        %10037 = vmatprep.subr.bf16.mxu0 %v9899
        %10038 = vmatpush1.bf16.msra.mxu0 %v9898
        %10039 = vmatprep.subr.bf16.mxu0 %v9903
        %10040 = vmatpush1.bf16.msra.mxu0 %v9902
        %10041 = vmatprep.mubr.bf16.mxu0 %v9645
        %10042 = vmatmul.mubr.bf16.gmra.mrb[0].mxu0 %v9644
        %v10043 = vpop.f32.mrb[0].mxu0
        %v10044 = vadd.f32 0.0, %v10043
        %v10045 = vpop.f32.mrb[0].mxu0
        %v10046 = vadd.f32 0.0, %v10045
        %v10047 = vpop.f32.mrb[0].mxu0
        %v10048 = vpop.f32.mrb[0].mxu0
        %10049 = vdwg.mxu0
        %v10050 = vadd.f32 %v9523, %v10003
        %v10051 = vadd.f32 %v9525, %v10005
        %v10052 = vadd.f32 %v9564, %v10044
        %v10053 = vadd.f32 %v9566, %v10046
        %v10054 = vld [vmem:[#allocation3] sm:$0xa]
        %v10055 = vld [vmem:[#allocation12 + $0x600] sm:$0xff]
        %v10056 = vld [vmem:[#allocation12 + $0x608] sm:$0xff]
        %v10057 = vld [vmem:[#allocation12 + $0x610] sm:$0xff]
        %v10058 = vld [vmem:[#allocation12 + $0x618] sm:$0xff]
        %v10059 = vld [vmem:[#allocation12 + $0x620] sm:$0xff]
        %v10060 = vld [vmem:[#allocation12 + $0x628] sm:$0xff]
        %v10061 = vld [vmem:[#allocation12 + $0x630] sm:$0xff]
        %v10062 = vld [vmem:[#allocation12 + $0x638] sm:$0xff]
        %v10063 = vld [vmem:[#allocation12 + $0x640] sm:$0xff]
        %v10064 = vld [vmem:[#allocation12 + $0x648] sm:$0xff]
        %v10065 = vld [vmem:[#allocation12 + $0x650] sm:$0xff]
        %v10066 = vld [vmem:[#allocation12 + $0x658] sm:$0xff]
        %v10067 = vld [vmem:[#allocation12 + $0x660] sm:$0xff]
        %v10068 = vld [vmem:[#allocation12 + $0x668] sm:$0xff]
        %v10069 = vld [vmem:[#allocation12 + $0x670] sm:$0xff]
        %v10070 = vld [vmem:[#allocation12 + $0x678] sm:$0xff]
        %v10071 = vld [vmem:[#allocation12 + $0x680] sm:$0xff]
        %v10072 = vld [vmem:[#allocation12 + $0x688] sm:$0xff]
        %v10073 = vld [vmem:[#allocation12 + $0x690] sm:$0xff]
        %v10074 = vld [vmem:[#allocation12 + $0x698] sm:$0xff]
        %v10075 = vld [vmem:[#allocation12 + $0x6a0] sm:$0xff]
        %v10076 = vld [vmem:[#allocation12 + $0x6a8] sm:$0xff]
        %v10077 = vld [vmem:[#allocation12 + $0x6b0] sm:$0xff]
        %v10078 = vld [vmem:[#allocation12 + $0x6b8] sm:$0xff]
        %v10079 = vld [vmem:[#allocation12 + $0x6c0] sm:$0xff]
        %v10080 = vld [vmem:[#allocation12 + $0x6c8] sm:$0xff]
        %v10081 = vld [vmem:[#allocation12 + $0x6d0] sm:$0xff]
        %v10082 = vld [vmem:[#allocation12 + $0x6d8] sm:$0xff]
        %v10083 = vld [vmem:[#allocation12 + $0x6e0] sm:$0xff]
        %v10084 = vld [vmem:[#allocation12 + $0x6e8] sm:$0xff]
        %v10085 = vld [vmem:[#allocation12 + $0x6f0] sm:$0xff]
        %v10086 = vld [vmem:[#allocation12 + $0x6f8] sm:$0xff]
        %v10087 = vld [vmem:[#allocation12 + $0x700] sm:$0xff]
        %v10088 = vld [vmem:[#allocation12 + $0x708] sm:$0xff]
        %v10089 = vld [vmem:[#allocation12 + $0x710] sm:$0xff]
        %v10090 = vld [vmem:[#allocation12 + $0x718] sm:$0xff]
        %v10091 = vld [vmem:[#allocation12 + $0x720] sm:$0xff]
        %v10092 = vld [vmem:[#allocation12 + $0x728] sm:$0xff]
        %v10093 = vld [vmem:[#allocation12 + $0x730] sm:$0xff]
        %v10094 = vld [vmem:[#allocation12 + $0x738] sm:$0xff]
        %v10095 = vld [vmem:[#allocation12 + $0x740] sm:$0xff]
        %v10096 = vld [vmem:[#allocation12 + $0x748] sm:$0xff]
        %v10097 = vld [vmem:[#allocation12 + $0x750] sm:$0xff]
        %v10098 = vld [vmem:[#allocation12 + $0x758] sm:$0xff]
        %v10099 = vld [vmem:[#allocation12 + $0x760] sm:$0xff]
        %v10100 = vld [vmem:[#allocation12 + $0x768] sm:$0xff]
        %v10101 = vld [vmem:[#allocation12 + $0x770] sm:$0xff]
        %v10102 = vld [vmem:[#allocation12 + $0x778] sm:$0xff]
        %v10103 = vld [vmem:[#allocation12 + $0x780] sm:$0xff]
        %v10104 = vld [vmem:[#allocation12 + $0x788] sm:$0xff]
        %v10105 = vld [vmem:[#allocation12 + $0x790] sm:$0xff]
        %v10106 = vld [vmem:[#allocation12 + $0x798] sm:$0xff]
        %v10107 = vld [vmem:[#allocation12 + $0x7a0] sm:$0xff]
        %v10108 = vld [vmem:[#allocation12 + $0x7a8] sm:$0xff]
        %v10109 = vld [vmem:[#allocation12 + $0x7b0] sm:$0xff]
        %v10110 = vld [vmem:[#allocation12 + $0x7b8] sm:$0xff]
        %v10111 = vld [vmem:[#allocation12 + $0x7c0] sm:$0xff]
        %v10112 = vld [vmem:[#allocation12 + $0x7c8] sm:$0xff]
        %v10113 = vld [vmem:[#allocation12 + $0x7d0] sm:$0xff]
        %v10114 = vld [vmem:[#allocation12 + $0x7d8] sm:$0xff]
        %v10115 = vld [vmem:[#allocation12 + $0x7e0] sm:$0xff]
        %v10116 = vld [vmem:[#allocation12 + $0x7e8] sm:$0xff]
        %v10117 = vld [vmem:[#allocation12 + $0x7f0] sm:$0xff]
        %v10118 = vld [vmem:[#allocation12 + $0x7f8] sm:$0xff]
        %v10121 = vunpack.c.l.s4 1983009808
        %v10122 = vunpack.c.0.s8 %v10121
        %v10123 = vlaneseq
        %v10124 = vshrl.u32 %v10123, 7
        %v10125 = vsub.s32 %v10122, %v10124
        %v10126 = vrot.slane %v10054, %v10125
        %v10127 = vcombine.high %v10126, %v10126
        %v10129 = vshrl.u32 %v10126, 16
        %v10131 = vrot.slane %v10129, 1
        %v10133 = vshrl.u32 %v10127, 16
        %v10135 = vrot.slane %v10133, 1
        %v10202 = vunpack.c.l.b16 %v10055
        %v10203 = vunpack.c.h.b16 %v10055
        %v10204 = vunpack.c.l.b16 %v10056
        %v10205 = vunpack.c.h.b16 %v10056
        %v10206 = vunpack.c.l.b16 %v10057
        %v10207 = vunpack.c.h.b16 %v10057
        %v10208 = vunpack.c.l.b16 %v10058
        %v10209 = vunpack.c.h.b16 %v10058
        %v10210 = vunpack.c.l.b16 %v10059
        %v10211 = vunpack.c.h.b16 %v10059
        %v10212 = vunpack.c.l.b16 %v10060
        %v10213 = vunpack.c.h.b16 %v10060
        %v10214 = vunpack.c.l.b16 %v10061
        %v10215 = vunpack.c.h.b16 %v10061
        %v10216 = vunpack.c.l.b16 %v10062
        %v10217 = vunpack.c.h.b16 %v10062
        %v10218 = vunpack.c.l.b16 %v10063
        %v10219 = vunpack.c.h.b16 %v10063
        %v10220 = vunpack.c.l.b16 %v10064
        %v10221 = vunpack.c.h.b16 %v10064
        %v10222 = vunpack.c.l.b16 %v10065
        %v10223 = vunpack.c.h.b16 %v10065
        %v10224 = vunpack.c.l.b16 %v10066
        %v10225 = vunpack.c.h.b16 %v10066
        %v10226 = vunpack.c.l.b16 %v10067
        %v10227 = vunpack.c.h.b16 %v10067
        %v10228 = vunpack.c.l.b16 %v10068
        %v10229 = vunpack.c.h.b16 %v10068
        %v10230 = vunpack.c.l.b16 %v10069
        %v10231 = vunpack.c.h.b16 %v10069
        %v10232 = vunpack.c.l.b16 %v10070
        %v10233 = vunpack.c.h.b16 %v10070
        %v10234 = vunpack.c.l.b16 %v10071
        %v10235 = vunpack.c.h.b16 %v10071
        %v10236 = vunpack.c.l.b16 %v10072
        %v10237 = vunpack.c.h.b16 %v10072
        %v10238 = vunpack.c.l.b16 %v10073
        %v10239 = vunpack.c.h.b16 %v10073
        %v10240 = vunpack.c.l.b16 %v10074
        %v10241 = vunpack.c.h.b16 %v10074
        %v10242 = vunpack.c.l.b16 %v10075
        %v10243 = vunpack.c.h.b16 %v10075
        %v10244 = vunpack.c.l.b16 %v10076
        %v10245 = vunpack.c.h.b16 %v10076
        %v10246 = vunpack.c.l.b16 %v10077
        %v10247 = vunpack.c.h.b16 %v10077
        %v10248 = vunpack.c.l.b16 %v10078
        %v10249 = vunpack.c.h.b16 %v10078
        %v10250 = vunpack.c.l.b16 %v10079
        %v10251 = vunpack.c.h.b16 %v10079
        %v10252 = vunpack.c.l.b16 %v10080
        %v10253 = vunpack.c.h.b16 %v10080
        %v10254 = vunpack.c.l.b16 %v10081
        %v10255 = vunpack.c.h.b16 %v10081
        %v10256 = vunpack.c.l.b16 %v10082
        %v10257 = vunpack.c.h.b16 %v10082
        %v10258 = vunpack.c.l.b16 %v10083
        %v10259 = vunpack.c.h.b16 %v10083
        %v10260 = vunpack.c.l.b16 %v10084
        %v10261 = vunpack.c.h.b16 %v10084
        %v10262 = vunpack.c.l.b16 %v10085
        %v10263 = vunpack.c.h.b16 %v10085
        %v10264 = vunpack.c.l.b16 %v10086
        %v10265 = vunpack.c.h.b16 %v10086
        %v10266 = vunpack.c.l.b16 %v10087
        %v10267 = vunpack.c.h.b16 %v10087
        %v10268 = vunpack.c.l.b16 %v10088
        %v10269 = vunpack.c.h.b16 %v10088
        %v10270 = vunpack.c.l.b16 %v10089
        %v10271 = vunpack.c.h.b16 %v10089
        %v10272 = vunpack.c.l.b16 %v10090
        %v10273 = vunpack.c.h.b16 %v10090
        %v10274 = vunpack.c.l.b16 %v10091
        %v10275 = vunpack.c.h.b16 %v10091
        %v10276 = vunpack.c.l.b16 %v10092
        %v10277 = vunpack.c.h.b16 %v10092
        %v10278 = vunpack.c.l.b16 %v10093
        %v10279 = vunpack.c.h.b16 %v10093
        %v10280 = vunpack.c.l.b16 %v10094
        %v10281 = vunpack.c.h.b16 %v10094
        %v10282 = vunpack.c.l.b16 %v10095
        %v10283 = vunpack.c.h.b16 %v10095
        %v10284 = vunpack.c.l.b16 %v10096
        %v10285 = vunpack.c.h.b16 %v10096
        %v10286 = vunpack.c.l.b16 %v10097
        %v10287 = vunpack.c.h.b16 %v10097
        %v10288 = vunpack.c.l.b16 %v10098
        %v10289 = vunpack.c.h.b16 %v10098
        %v10290 = vunpack.c.l.b16 %v10099
        %v10291 = vunpack.c.h.b16 %v10099
        %v10292 = vunpack.c.l.b16 %v10100
        %v10293 = vunpack.c.h.b16 %v10100
        %v10294 = vunpack.c.l.b16 %v10101
        %v10295 = vunpack.c.h.b16 %v10101
        %v10296 = vunpack.c.l.b16 %v10102
        %v10297 = vunpack.c.h.b16 %v10102
        %v10298 = vunpack.c.l.b16 %v10103
        %v10299 = vunpack.c.h.b16 %v10103
        %v10300 = vunpack.c.l.b16 %v10104
        %v10301 = vunpack.c.h.b16 %v10104
        %v10302 = vunpack.c.l.b16 %v10105
        %v10303 = vunpack.c.h.b16 %v10105
        %v10304 = vunpack.c.l.b16 %v10106
        %v10305 = vunpack.c.h.b16 %v10106
        %v10306 = vunpack.c.l.b16 %v10107
        %v10307 = vunpack.c.h.b16 %v10107
        %v10308 = vunpack.c.l.b16 %v10108
        %v10309 = vunpack.c.h.b16 %v10108
        %v10310 = vunpack.c.l.b16 %v10109
        %v10311 = vunpack.c.h.b16 %v10109
        %v10312 = vunpack.c.l.b16 %v10110
        %v10313 = vunpack.c.h.b16 %v10110
        %v10314 = vunpack.c.l.b16 %v10111
        %v10315 = vunpack.c.h.b16 %v10111
        %v10316 = vunpack.c.l.b16 %v10112
        %v10317 = vunpack.c.h.b16 %v10112
        %v10318 = vunpack.c.l.b16 %v10113
        %v10319 = vunpack.c.h.b16 %v10113
        %v10320 = vunpack.c.l.b16 %v10114
        %v10321 = vunpack.c.h.b16 %v10114
        %v10322 = vunpack.c.l.b16 %v10115
        %v10323 = vunpack.c.h.b16 %v10115
        %v10324 = vunpack.c.l.b16 %v10116
        %v10325 = vunpack.c.h.b16 %v10116
        %v10326 = vunpack.c.l.b16 %v10117
        %v10327 = vunpack.c.h.b16 %v10117
        %v10328 = vunpack.c.l.b16 %v10118
        %v10329 = vunpack.c.h.b16 %v10118
        %v10330 = vpack.c.b16 %v10206, %v10202
        %v10331 = vpack.c.b16 %v10207, %v10203
        %v10332 = vpack.c.b16 %v10208, %v10204
        %v10333 = vpack.c.b16 %v10209, %v10205
        %v10334 = vpack.c.b16 %v10214, %v10210
        %v10335 = vpack.c.b16 %v10215, %v10211
        %v10336 = vpack.c.b16 %v10216, %v10212
        %v10337 = vpack.c.b16 %v10217, %v10213
        %v10338 = vpack.c.b16 %v10222, %v10218
        %v10339 = vpack.c.b16 %v10223, %v10219
        %v10340 = vpack.c.b16 %v10224, %v10220
        %v10341 = vpack.c.b16 %v10225, %v10221
        %v10342 = vpack.c.b16 %v10230, %v10226
        %v10343 = vpack.c.b16 %v10231, %v10227
        %v10344 = vpack.c.b16 %v10232, %v10228
        %v10345 = vpack.c.b16 %v10233, %v10229
        %v10346 = vpack.c.b16 %v10238, %v10234
        %v10347 = vpack.c.b16 %v10239, %v10235
        %v10348 = vpack.c.b16 %v10240, %v10236
        %v10349 = vpack.c.b16 %v10241, %v10237
        %v10350 = vpack.c.b16 %v10246, %v10242
        %v10351 = vpack.c.b16 %v10247, %v10243
        %v10352 = vpack.c.b16 %v10248, %v10244
        %v10353 = vpack.c.b16 %v10249, %v10245
        %v10354 = vpack.c.b16 %v10254, %v10250
        %v10355 = vpack.c.b16 %v10255, %v10251
        %v10356 = vpack.c.b16 %v10256, %v10252
        %v10357 = vpack.c.b16 %v10257, %v10253
        %v10358 = vpack.c.b16 %v10262, %v10258
        %v10359 = vpack.c.b16 %v10263, %v10259
        %v10360 = vpack.c.b16 %v10264, %v10260
        %v10361 = vpack.c.b16 %v10265, %v10261
        %v10362 = vpack.c.b16 %v10270, %v10266
        %v10363 = vpack.c.b16 %v10271, %v10267
        %v10364 = vpack.c.b16 %v10272, %v10268
        %v10365 = vpack.c.b16 %v10273, %v10269
        %v10366 = vpack.c.b16 %v10278, %v10274
        %v10367 = vpack.c.b16 %v10279, %v10275
        %v10368 = vpack.c.b16 %v10280, %v10276
        %v10369 = vpack.c.b16 %v10281, %v10277
        %v10370 = vpack.c.b16 %v10286, %v10282
        %v10371 = vpack.c.b16 %v10287, %v10283
        %v10372 = vpack.c.b16 %v10288, %v10284
        %v10373 = vpack.c.b16 %v10289, %v10285
        %v10374 = vpack.c.b16 %v10294, %v10290
        %v10375 = vpack.c.b16 %v10295, %v10291
        %v10376 = vpack.c.b16 %v10296, %v10292
        %v10377 = vpack.c.b16 %v10297, %v10293
        %v10378 = vpack.c.b16 %v10302, %v10298
        %v10379 = vpack.c.b16 %v10303, %v10299
        %v10380 = vpack.c.b16 %v10304, %v10300
        %v10381 = vpack.c.b16 %v10305, %v10301
        %v10382 = vpack.c.b16 %v10310, %v10306
        %v10383 = vpack.c.b16 %v10311, %v10307
        %v10384 = vpack.c.b16 %v10312, %v10308
        %v10385 = vpack.c.b16 %v10313, %v10309
        %v10386 = vpack.c.b16 %v10318, %v10314
        %v10387 = vpack.c.b16 %v10319, %v10315
        %v10388 = vpack.c.b16 %v10320, %v10316
        %v10389 = vpack.c.b16 %v10321, %v10317
        %v10390 = vpack.c.b16 %v10326, %v10322
        %v10391 = vpack.c.b16 %v10327, %v10323
        %v10392 = vpack.c.b16 %v10328, %v10324
        %v10393 = vpack.c.b16 %v10329, %v10325
        %10458 = vmatprep.subr.bf16.mxu0 %v10331
        %10459 = vmatpush1.bf16.msra.mxu0 %v10330
        %10460 = vmatprep.subr.bf16.mxu0 %v10335
        %10461 = vmatpush1.bf16.msra.mxu0 %v10334
        %10462 = vmatprep.subr.bf16.mxu0 %v10339
        %10463 = vmatpush1.bf16.msra.mxu0 %v10338
        %10464 = vmatprep.subr.bf16.mxu0 %v10343
        %10465 = vmatpush1.bf16.msra.mxu0 %v10342
        %10466 = vmatprep.subr.bf16.mxu0 %v10347
        %10467 = vmatpush1.bf16.msra.mxu0 %v10346
        %10468 = vmatprep.subr.bf16.mxu0 %v10351
        %10469 = vmatpush1.bf16.msra.mxu0 %v10350
        %10470 = vmatprep.subr.bf16.mxu0 %v10355
        %10471 = vmatpush1.bf16.msra.mxu0 %v10354
        %10472 = vmatprep.subr.bf16.mxu0 %v10359
        %10473 = vmatpush1.bf16.msra.mxu0 %v10358
        %10474 = vmatprep.subr.bf16.mxu0 %v10363
        %10475 = vmatpush1.bf16.msra.mxu0 %v10362
        %10476 = vmatprep.subr.bf16.mxu0 %v10367
        %10477 = vmatpush1.bf16.msra.mxu0 %v10366
        %10478 = vmatprep.subr.bf16.mxu0 %v10371
        %10479 = vmatpush1.bf16.msra.mxu0 %v10370
        %10480 = vmatprep.subr.bf16.mxu0 %v10375
        %10481 = vmatpush1.bf16.msra.mxu0 %v10374
        %10482 = vmatprep.subr.bf16.mxu0 %v10379
        %10483 = vmatpush1.bf16.msra.mxu0 %v10378
        %10484 = vmatprep.subr.bf16.mxu0 %v10383
        %10485 = vmatpush1.bf16.msra.mxu0 %v10382
        %10486 = vmatprep.subr.bf16.mxu0 %v10387
        %10487 = vmatpush1.bf16.msra.mxu0 %v10386
        %10488 = vmatprep.subr.bf16.mxu0 %v10391
        %10489 = vmatpush1.bf16.msra.mxu0 %v10390
        %10490 = vmatprep.mubr.bf16.mxu0 %v10135
        %10491 = vmatmul.mubr.bf16.gmra.mrb[0].mxu0 %v10131
        %v10492 = vpop.f32.mrb[0].mxu0
        %v10493 = vadd.f32 0.0, %v10492
        %v10494 = vpop.f32.mrb[0].mxu0
        %v10495 = vadd.f32 0.0, %v10494
        %v10496 = vpop.f32.mrb[0].mxu0
        %v10497 = vpop.f32.mrb[0].mxu0
        %10498 = vdwg.mxu0
        %10499 = vmatprep.subr.bf16.mxu0 %v10333
        %10500 = vmatpush1.bf16.msra.mxu0 %v10332
        %10501 = vmatprep.subr.bf16.mxu0 %v10337
        %10502 = vmatpush1.bf16.msra.mxu0 %v10336
        %10503 = vmatprep.subr.bf16.mxu0 %v10341
        %10504 = vmatpush1.bf16.msra.mxu0 %v10340
        %10505 = vmatprep.subr.bf16.mxu0 %v10345
        %10506 = vmatpush1.bf16.msra.mxu0 %v10344
        %10507 = vmatprep.subr.bf16.mxu0 %v10349
        %10508 = vmatpush1.bf16.msra.mxu0 %v10348
        %10509 = vmatprep.subr.bf16.mxu0 %v10353
        %10510 = vmatpush1.bf16.msra.mxu0 %v10352
        %10511 = vmatprep.subr.bf16.mxu0 %v10357
        %10512 = vmatpush1.bf16.msra.mxu0 %v10356
        %10513 = vmatprep.subr.bf16.mxu0 %v10361
        %10514 = vmatpush1.bf16.msra.mxu0 %v10360
        %10515 = vmatprep.subr.bf16.mxu0 %v10365
        %10516 = vmatpush1.bf16.msra.mxu0 %v10364
        %10517 = vmatprep.subr.bf16.mxu0 %v10369
        %10518 = vmatpush1.bf16.msra.mxu0 %v10368
        %10519 = vmatprep.subr.bf16.mxu0 %v10373
        %10520 = vmatpush1.bf16.msra.mxu0 %v10372
        %10521 = vmatprep.subr.bf16.mxu0 %v10377
        %10522 = vmatpush1.bf16.msra.mxu0 %v10376
        %10523 = vmatprep.subr.bf16.mxu0 %v10381
        %10524 = vmatpush1.bf16.msra.mxu0 %v10380
        %10525 = vmatprep.subr.bf16.mxu0 %v10385
        %10526 = vmatpush1.bf16.msra.mxu0 %v10384
        %10527 = vmatprep.subr.bf16.mxu0 %v10389
        %10528 = vmatpush1.bf16.msra.mxu0 %v10388
        %10529 = vmatprep.subr.bf16.mxu0 %v10393
        %10530 = vmatpush1.bf16.msra.mxu0 %v10392
        %10531 = vmatprep.mubr.bf16.mxu0 %v10135
        %10532 = vmatmul.mubr.bf16.gmra.mrb[0].mxu0 %v10131
        %v10533 = vpop.f32.mrb[0].mxu0
        %v10534 = vadd.f32 0.0, %v10533
        %v10535 = vpop.f32.mrb[0].mxu0
        %v10536 = vadd.f32 0.0, %v10535
        %v10537 = vpop.f32.mrb[0].mxu0
        %v10538 = vpop.f32.mrb[0].mxu0
        %10539 = vdwg.mxu0
        %v10540 = vadd.f32 %v10050, %v10493
        %v10541 = vadd.f32 %v10051, %v10495
        %v10542 = vadd.f32 %v10052, %v10534
        %v10543 = vadd.f32 %v10053, %v10536
        %v10544 = vld [vmem:[#allocation13] sm:$0xf]
        %v10546 = vlaneseq
        %v10547 = vshrl.u32 %v10546, 7
        %v10548 = vsub.s32 0, %v10547
        %v10549 = vrot.slane %v10544, %v10548
        %v10550 = vlaneseq
        %v10551 = vshrl.u32 %v10550, 7
        %v10552 = vsub.s32 1, %v10551
        %v10553 = vrot.slane %v10544, %v10552
        %v10554 = vlaneseq
        %v10555 = vshrl.u32 %v10554, 7
        %v10556 = vsub.s32 2, %v10555
        %v10557 = vrot.slane %v10544, %v10556
        %v10558 = vlaneseq
        %v10559 = vshrl.u32 %v10558, 7
        %v10560 = vsub.s32 3, %v10559
        %v10561 = vrot.slane %v10544, %v10560
        %v10566 = vadd.f32 %v10540, %v10549
        %v10567 = vadd.f32 %v10541, %v10553
        %v10568 = vadd.f32 %v10542, %v10557
        %v10569 = vadd.f32 %v10543, %v10561
        %v10570 = vmax.f32 %v10566, 0.0
        %v10571 = vmax.f32 %v10567, 0.0
        %v10572 = vmax.f32 %v10568, 0.0
        %v10573 = vmax.f32 %v10569, 0.0
        %v10574 = vpack.c.bf16 %v10570, %v10570
        %v10575 = vpack.c.bf16 %v10571, %v10571
        %v10576 = vpack.c.bf16 %v10572, %v10572
        %v10577 = vpack.c.bf16 %v10573, %v10573
        %v10578 = vld [vmem:[#allocation15] sm:$0xf]
        %v10579 = vld [vmem:[#allocation15 + $0x4] sm:$0xf]
        %v10580 = vld [vmem:[#allocation15 + $0x8] sm:$0xf]
        %v10581 = vld [vmem:[#allocation15 + $0xc] sm:$0xf]
        %v10582 = vld [vmem:[#allocation15 + $0x10] sm:$0xf]
        %v10583 = vld [vmem:[#allocation15 + $0x14] sm:$0xf]
        %v10584 = vld [vmem:[#allocation15 + $0x18] sm:$0xf]
        %v10585 = vld [vmem:[#allocation15 + $0x1c] sm:$0xf]
        %v10586 = vld [vmem:[#allocation15 + $0x20] sm:$0xf]
        %v10587 = vld [vmem:[#allocation15 + $0x24] sm:$0xf]
        %v10588 = vld [vmem:[#allocation15 + $0x28] sm:$0xf]
        %v10589 = vld [vmem:[#allocation15 + $0x2c] sm:$0xf]
        %v10590 = vld [vmem:[#allocation15 + $0x30] sm:$0xf]
        %v10591 = vld [vmem:[#allocation15 + $0x34] sm:$0xf]
        %v10592 = vld [vmem:[#allocation15 + $0x38] sm:$0xf]
        %v10593 = vld [vmem:[#allocation15 + $0x3c] sm:$0xf]
        %v10594 = vld [vmem:[#allocation15 + $0x40] sm:$0xf]
        %v10595 = vld [vmem:[#allocation15 + $0x44] sm:$0xf]
        %v10596 = vld [vmem:[#allocation15 + $0x48] sm:$0xf]
        %v10597 = vld [vmem:[#allocation15 + $0x4c] sm:$0xf]
        %v10598 = vld [vmem:[#allocation15 + $0x50] sm:$0xf]
        %v10599 = vld [vmem:[#allocation15 + $0x54] sm:$0xf]
        %v10600 = vld [vmem:[#allocation15 + $0x58] sm:$0xf]
        %v10601 = vld [vmem:[#allocation15 + $0x5c] sm:$0xf]
        %v10602 = vld [vmem:[#allocation15 + $0x60] sm:$0xf]
        %v10603 = vld [vmem:[#allocation15 + $0x64] sm:$0xf]
        %v10604 = vld [vmem:[#allocation15 + $0x68] sm:$0xf]
        %v10605 = vld [vmem:[#allocation15 + $0x6c] sm:$0xf]
        %v10606 = vld [vmem:[#allocation15 + $0x70] sm:$0xf]
        %v10607 = vld [vmem:[#allocation15 + $0x74] sm:$0xf]
        %v10608 = vld [vmem:[#allocation15 + $0x78] sm:$0xf]
        %v10609 = vld [vmem:[#allocation15 + $0x7c] sm:$0xf]
        %v10610 = vld [vmem:[#allocation15 + $0x80] sm:$0xf]
        %v10611 = vld [vmem:[#allocation15 + $0x84] sm:$0xf]
        %v10612 = vld [vmem:[#allocation15 + $0x88] sm:$0xf]
        %v10613 = vld [vmem:[#allocation15 + $0x8c] sm:$0xf]
        %v10614 = vld [vmem:[#allocation15 + $0x90] sm:$0xf]
        %v10615 = vld [vmem:[#allocation15 + $0x94] sm:$0xf]
        %v10616 = vld [vmem:[#allocation15 + $0x98] sm:$0xf]
        %v10617 = vld [vmem:[#allocation15 + $0x9c] sm:$0xf]
        %v10618 = vld [vmem:[#allocation15 + $0xa0] sm:$0xf]
        %v10619 = vld [vmem:[#allocation15 + $0xa4] sm:$0xf]
        %v10620 = vld [vmem:[#allocation15 + $0xa8] sm:$0xf]
        %v10621 = vld [vmem:[#allocation15 + $0xac] sm:$0xf]
        %v10622 = vld [vmem:[#allocation15 + $0xb0] sm:$0xf]
        %v10623 = vld [vmem:[#allocation15 + $0xb4] sm:$0xf]
        %v10624 = vld [vmem:[#allocation15 + $0xb8] sm:$0xf]
        %v10625 = vld [vmem:[#allocation15 + $0xbc] sm:$0xf]
        %v10626 = vld [vmem:[#allocation15 + $0xc0] sm:$0xf]
        %v10627 = vld [vmem:[#allocation15 + $0xc4] sm:$0xf]
        %v10628 = vld [vmem:[#allocation15 + $0xc8] sm:$0xf]
        %v10629 = vld [vmem:[#allocation15 + $0xcc] sm:$0xf]
        %v10630 = vld [vmem:[#allocation15 + $0xd0] sm:$0xf]
        %v10631 = vld [vmem:[#allocation15 + $0xd4] sm:$0xf]
        %v10632 = vld [vmem:[#allocation15 + $0xd8] sm:$0xf]
        %v10633 = vld [vmem:[#allocation15 + $0xdc] sm:$0xf]
        %v10634 = vld [vmem:[#allocation15 + $0xe0] sm:$0xf]
        %v10635 = vld [vmem:[#allocation15 + $0xe4] sm:$0xf]
        %v10636 = vld [vmem:[#allocation15 + $0xe8] sm:$0xf]
        %v10637 = vld [vmem:[#allocation15 + $0xec] sm:$0xf]
        %v10638 = vld [vmem:[#allocation15 + $0xf0] sm:$0xf]
        %v10639 = vld [vmem:[#allocation15 + $0xf4] sm:$0xf]
        %v10640 = vld [vmem:[#allocation15 + $0xf8] sm:$0xf]
        %v10641 = vld [vmem:[#allocation15 + $0xfc] sm:$0xf]
        %v10642 = vld [vmem:[#allocation16] sm:$0x1]
        %v10707 = vunpack.c.l.b16 %v10578
        %v10708 = vunpack.c.l.b16 %v10579
        %v10709 = vunpack.c.l.b16 %v10580
        %v10710 = vunpack.c.l.b16 %v10581
        %v10711 = vunpack.c.l.b16 %v10582
        %v10712 = vunpack.c.l.b16 %v10583
        %v10713 = vunpack.c.l.b16 %v10584
        %v10714 = vunpack.c.l.b16 %v10585
        %v10715 = vunpack.c.l.b16 %v10586
        %v10716 = vunpack.c.l.b16 %v10587
        %v10717 = vunpack.c.l.b16 %v10588
        %v10718 = vunpack.c.l.b16 %v10589
        %v10719 = vunpack.c.l.b16 %v10590
        %v10720 = vunpack.c.l.b16 %v10591
        %v10721 = vunpack.c.l.b16 %v10592
        %v10722 = vunpack.c.l.b16 %v10593
        %v10723 = vunpack.c.l.b16 %v10594
        %v10724 = vunpack.c.l.b16 %v10595
        %v10725 = vunpack.c.l.b16 %v10596
        %v10726 = vunpack.c.l.b16 %v10597
        %v10727 = vunpack.c.l.b16 %v10598
        %v10728 = vunpack.c.l.b16 %v10599
        %v10729 = vunpack.c.l.b16 %v10600
        %v10730 = vunpack.c.l.b16 %v10601
        %v10731 = vunpack.c.l.b16 %v10602
        %v10732 = vunpack.c.l.b16 %v10603
        %v10733 = vunpack.c.l.b16 %v10604
        %v10734 = vunpack.c.l.b16 %v10605
        %v10735 = vunpack.c.l.b16 %v10606
        %v10736 = vunpack.c.l.b16 %v10607
        %v10737 = vunpack.c.l.b16 %v10608
        %v10738 = vunpack.c.l.b16 %v10609
        %v10739 = vunpack.c.l.b16 %v10610
        %v10740 = vunpack.c.l.b16 %v10611
        %v10741 = vunpack.c.l.b16 %v10612
        %v10742 = vunpack.c.l.b16 %v10613
        %v10743 = vunpack.c.l.b16 %v10614
        %v10744 = vunpack.c.l.b16 %v10615
        %v10745 = vunpack.c.l.b16 %v10616
        %v10746 = vunpack.c.l.b16 %v10617
        %v10747 = vunpack.c.l.b16 %v10618
        %v10748 = vunpack.c.l.b16 %v10619
        %v10749 = vunpack.c.l.b16 %v10620
        %v10750 = vunpack.c.l.b16 %v10621
        %v10751 = vunpack.c.l.b16 %v10622
        %v10752 = vunpack.c.l.b16 %v10623
        %v10753 = vunpack.c.l.b16 %v10624
        %v10754 = vunpack.c.l.b16 %v10625
        %v10755 = vunpack.c.l.b16 %v10626
        %v10756 = vunpack.c.l.b16 %v10627
        %v10757 = vunpack.c.l.b16 %v10628
        %v10758 = vunpack.c.l.b16 %v10629
        %v10759 = vunpack.c.l.b16 %v10630
        %v10760 = vunpack.c.l.b16 %v10631
        %v10761 = vunpack.c.l.b16 %v10632
        %v10762 = vunpack.c.l.b16 %v10633
        %v10763 = vunpack.c.l.b16 %v10634
        %v10764 = vunpack.c.l.b16 %v10635
        %v10765 = vunpack.c.l.b16 %v10636
        %v10766 = vunpack.c.l.b16 %v10637
        %v10767 = vunpack.c.l.b16 %v10638
        %v10768 = vunpack.c.l.b16 %v10639
        %v10769 = vunpack.c.l.b16 %v10640
        %v10770 = vunpack.c.l.b16 %v10641
        %v10771 = vpack.c.b16 %v10708, %v10707
        %v10772 = vpack.c.b16 %v10710, %v10709
        %v10773 = vpack.c.b16 %v10712, %v10711
        %v10774 = vpack.c.b16 %v10714, %v10713
        %v10775 = vpack.c.b16 %v10716, %v10715
        %v10776 = vpack.c.b16 %v10718, %v10717
        %v10777 = vpack.c.b16 %v10720, %v10719
        %v10778 = vpack.c.b16 %v10722, %v10721
        %v10779 = vpack.c.b16 %v10724, %v10723
        %v10780 = vpack.c.b16 %v10726, %v10725
        %v10781 = vpack.c.b16 %v10728, %v10727
        %v10782 = vpack.c.b16 %v10730, %v10729
        %v10783 = vpack.c.b16 %v10732, %v10731
        %v10784 = vpack.c.b16 %v10734, %v10733
        %v10785 = vpack.c.b16 %v10736, %v10735
        %v10786 = vpack.c.b16 %v10738, %v10737
        %v10787 = vpack.c.b16 %v10740, %v10739
        %v10788 = vpack.c.b16 %v10742, %v10741
        %v10789 = vpack.c.b16 %v10744, %v10743
        %v10790 = vpack.c.b16 %v10746, %v10745
        %v10791 = vpack.c.b16 %v10748, %v10747
        %v10792 = vpack.c.b16 %v10750, %v10749
        %v10793 = vpack.c.b16 %v10752, %v10751
        %v10794 = vpack.c.b16 %v10754, %v10753
        %v10795 = vpack.c.b16 %v10756, %v10755
        %v10796 = vpack.c.b16 %v10758, %v10757
        %v10797 = vpack.c.b16 %v10760, %v10759
        %v10798 = vpack.c.b16 %v10762, %v10761
        %v10799 = vpack.c.b16 %v10764, %v10763
        %v10800 = vpack.c.b16 %v10766, %v10765
        %v10801 = vpack.c.b16 %v10768, %v10767
        %v10802 = vpack.c.b16 %v10770, %v10769
        %10835 = vmatprep.subr.bf16.mxu0 0
        %10836 = vmatpush1.bf16.msra.mxu0 %v10771
        %10837 = vmatprep.subr.bf16.mxu0 0
        %10838 = vmatpush1.bf16.msra.mxu0 %v10772
        %10839 = vmatprep.subr.bf16.mxu0 0
        %10840 = vmatpush1.bf16.msra.mxu0 %v10773
        %10841 = vmatprep.subr.bf16.mxu0 0
        %10842 = vmatpush1.bf16.msra.mxu0 %v10774
        %10843 = vmatprep.subr.bf16.mxu0 0
        %10844 = vmatpush1.bf16.msra.mxu0 %v10775
        %10845 = vmatprep.subr.bf16.mxu0 0
        %10846 = vmatpush1.bf16.msra.mxu0 %v10776
        %10847 = vmatprep.subr.bf16.mxu0 0
        %10848 = vmatpush1.bf16.msra.mxu0 %v10777
        %10849 = vmatprep.subr.bf16.mxu0 0
        %10850 = vmatpush1.bf16.msra.mxu0 %v10778
        %10851 = vmatprep.subr.bf16.mxu0 0
        %10852 = vmatpush1.bf16.msra.mxu0 %v10779
        %10853 = vmatprep.subr.bf16.mxu0 0
        %10854 = vmatpush1.bf16.msra.mxu0 %v10780
        %10855 = vmatprep.subr.bf16.mxu0 0
        %10856 = vmatpush1.bf16.msra.mxu0 %v10781
        %10857 = vmatprep.subr.bf16.mxu0 0
        %10858 = vmatpush1.bf16.msra.mxu0 %v10782
        %10859 = vmatprep.subr.bf16.mxu0 0
        %10860 = vmatpush1.bf16.msra.mxu0 %v10783
        %10861 = vmatprep.subr.bf16.mxu0 0
        %10862 = vmatpush1.bf16.msra.mxu0 %v10784
        %10863 = vmatprep.subr.bf16.mxu0 0
        %10864 = vmatpush1.bf16.msra.mxu0 %v10785
        %10865 = vmatprep.subr.bf16.mxu0 0
        %10866 = vmatpush1.bf16.msra.mxu0 %v10786
        %10867 = vmatprep.mubr.bf16.mxu0 %v10575
        %10868 = vmatmul.mubr.bf16.gmra.mrb[0].mxu0 %v10574
        %v10869 = vpop.f32.mrb[0].mxu0
        %v10870 = vadd.f32 %v10642, %v10869
        %v10871 = vpop.f32.mrb[0].mxu0
        %v10872 = vpop.f32.mrb[0].mxu0
        %v10873 = vpop.f32.mrb[0].mxu0
        %10874 = vdwg.mxu0
        %10875 = vmatprep.subr.bf16.mxu0 0
        %10876 = vmatpush1.bf16.msra.mxu0 %v10787
        %10877 = vmatprep.subr.bf16.mxu0 0
        %10878 = vmatpush1.bf16.msra.mxu0 %v10788
        %10879 = vmatprep.subr.bf16.mxu0 0
        %10880 = vmatpush1.bf16.msra.mxu0 %v10789
        %10881 = vmatprep.subr.bf16.mxu0 0
        %10882 = vmatpush1.bf16.msra.mxu0 %v10790
        %10883 = vmatprep.subr.bf16.mxu0 0
        %10884 = vmatpush1.bf16.msra.mxu0 %v10791
        %10885 = vmatprep.subr.bf16.mxu0 0
        %10886 = vmatpush1.bf16.msra.mxu0 %v10792
        %10887 = vmatprep.subr.bf16.mxu0 0
        %10888 = vmatpush1.bf16.msra.mxu0 %v10793
        %10889 = vmatprep.subr.bf16.mxu0 0
        %10890 = vmatpush1.bf16.msra.mxu0 %v10794
        %10891 = vmatprep.subr.bf16.mxu0 0
        %10892 = vmatpush1.bf16.msra.mxu0 %v10795
        %10893 = vmatprep.subr.bf16.mxu0 0
        %10894 = vmatpush1.bf16.msra.mxu0 %v10796
        %10895 = vmatprep.subr.bf16.mxu0 0
        %10896 = vmatpush1.bf16.msra.mxu0 %v10797
        %10897 = vmatprep.subr.bf16.mxu0 0
        %10898 = vmatpush1.bf16.msra.mxu0 %v10798
        %10899 = vmatprep.subr.bf16.mxu0 0
        %10900 = vmatpush1.bf16.msra.mxu0 %v10799
        %10901 = vmatprep.subr.bf16.mxu0 0
        %10902 = vmatpush1.bf16.msra.mxu0 %v10800
        %10903 = vmatprep.subr.bf16.mxu0 0
        %10904 = vmatpush1.bf16.msra.mxu0 %v10801
        %10905 = vmatprep.subr.bf16.mxu0 0
        %10906 = vmatpush1.bf16.msra.mxu0 %v10802
        %10907 = vmatprep.mubr.bf16.mxu0 %v10577
        %10908 = vmatmul.mubr.bf16.gmra.mrb[0].mxu0 %v10576
        %v10909 = vpop.f32.mrb[0].mxu0
        %v10910 = vadd.f32 %v10870, %v10909
        %v10911 = vpop.f32.mrb[0].mxu0
        %v10912 = vpop.f32.mrb[0].mxu0
        %v10913 = vpop.f32.mrb[0].mxu0
        %10914 = vdwg.mxu0
        %v10915 = vlaneseq
        %v10916 = vand.u32 %v10915, 127
        %vm10917 = vcmp.lt.s32.totalorder %v10916, 10
        %v10918 = vsel %vm10917, %v10910, -1e+30
        %vm10919 = vcmask 1040384
        %v10920 = vsel %vm10919, %v10918, -inf
        %10921 = vmax.xlane.f32.xlu0 %v10920
        %v10922 = vpop.xlane.xlu0 %10921
        %v10923 = vsub.f32 %v10918, %v10922
        %v10924 = vmul.f32 %v10923, 1.442695
        %v10925 = vpow.pop %v10924
        %v10926 = vsel %vm10919, %v10925, 0.0
        %10927 = vadd.xlane.f32.xlu0 %v10926
        %v10928 = vpop.xlane.xlu0 %10927
        %v10929 = vlog2.pop %v10928
        %v10930 = vmul.f32 %v10929, 0.6931472
        %v10931 = vsub.f32 %v10923, %v10930
        %10932 = vst [vmem:[%s433] sm:$0x1] %v10931
        %s10933 = sand.u32 %s230, 1
        %s10934 = scalar_lea.sflag [#allocation6], %s10933
        %s10935 = sand.u32 %s230, 1
        %s10936 = scalar_lea.vmem [#allocation18], %s10935
        // Predicated region
        $region89: #{net_forward.1} parent=55 // pred_check
          %p10937 = pneg %p240
        $region90: #{net_forward.1} parent=55 // pred_check_branch
          %10939 = sbr.rel (%p10937) target = $region92
        $region91: #{net_forward.1} parent=55 // pred_region
          %s10941 = ssub.s32 16, 16
          %10942 = vsyncadd %s10934, %s10941
          %s10943 = smul.addr %s28, 16
          %s10944 = scalar_lea.hbm %s9, %s10943
          %s10946 = sshll.u32 %s10936, 4
          %s10947 = int_to_ptr.vmem [resolvable:$true] %s10946
          %10949 = dma.vmem_to_hbm [thread:$0]  %s10947, 16, %s10944, %s10934
        $region92: #{net_forward.1} parent=55 // pred_fallthru
          _
      $region56: #{net_forward.1} parent=5 // pred_fallthru
        _
      %p10950 = scmp.le.s32.totalorder 2, %s23
      // Predicated region
      $region93: #{net_forward.1} parent=5 // pred_check
        %p10951 = pneg %p10950
      $region94: #{net_forward.1} parent=5 // pred_check_branch
        %10953 = sbr.rel (%p10951) target = $region96
      $region95: #{net_forward.1} parent=5 // pred_region
        %s10954 = ssub.s32 %s23, 2
        // Predicated region
        $region97: #{net_forward.1} parent=95 // pred_check
          %p10955 = pneg %p246
        $region98: #{net_forward.1} parent=95 // pred_check_branch
          %10957 = sbr.rel (%p10955) target = $region100
        $region99: #{net_forward.1} parent=95 // pred_region
          %s10958 = sand.u32 %s231, 1
          %s10959 = scalar_lea.sflag [#allocation6], %s10958
          %s10960 = sand.u32 %s231, 1
          %s10961 = scalar_lea.vmem [#allocation18], %s10960
          %10962 = dma.done %s10959, 16
        $region100: #{net_forward.1} parent=95 // pred_fallthru
          _
      $region96: #{net_forward.1} parent=5 // pred_fallthru
        _
    $region6: #{net_forward.1} parent=1 // loop_footer
      %s27 = sadd.s32 1, %s23
    $region7: #{net_forward.1} parent=1 // loop_footer_branch
      %22 = sbr.rel target = $region3
    $region8: #{net_forward.1} parent=1 // loop_exit
      _
    %10963 = vsyncpa [#allocation5], 1
    %s10964 = scalar_lea.sflag [#allocation5], 1
    %10965 = vsyncpa %s10964, 1
    %10966 = vsyncpa [#allocation8], 1
    %10967 = vsyncpa [#allocation11], 1
    %10968 = vsyncpa [#allocation14], 1
    %10969 = vsyncpa [#allocation17], 1
    %10970 = vsyncpa [#allocation6], 1
    %s10971 = scalar_lea.sflag [#allocation6], 1
    %10972 = vsyncpa %s10971, 1

</llo_original>
